<compile_context>
chip_gen: v6e
topology: v6e:2x2x1
jax: 0.10.0
libtpu: 0.0.40
codegen_flags: <defaults>
</compile_context>

<pallas_src>
import functools

import jax
import jax.numpy as jnp
from jax import lax
from jax.experimental import pallas as pl
from jax.experimental.pallas import tpu as pltpu


# --------------------------- layout / tiling helpers ------------------------ #

def _merge_factor(width, channels):
    """How many trailing W columns to fold onto the lane (channel) dim."""
    if channels >= 128 or 128 % channels != 0:
        return 1
    f = 128 // channels
    while f > 1 and width % f != 0:
        f //= 2
    return f


def _pick_tile_h(H, W, C, tile_h_cap=None, budget_bytes=8 << 20):
    """Rows of `mid` per grid step (keeps per-step HBM blocks ~<= budget)."""
    assert H % 2 == 0 and W % 2 == 0, "IAM assumes even spatial dims"
    per_row_bytes = 44 * W * C          # f32 in+out block bytes per mid row (approx)
    th = H
    while th % 4 == 0 and (
            (tile_h_cap is not None and th > tile_h_cap)
            or per_row_bytes * th > budget_bytes):
        th //= 2
    return th


def _split_lanes(x, f, c):
    """(..., n, f*c) -> (..., n*f, c), preserving flat element order."""
    if f == 1:
        return x
    parts = [x[..., j * c:(j + 1) * c] for j in range(f)]
    y = jnp.stack(parts, axis=-2)                       # (..., n, f, c)
    return y.reshape(*x.shape[:-2], x.shape[-2] * f, c)


def _merge_lanes(x, f):
    """(..., n, c) -> (..., n//f, f*c), preserving flat element order."""
    if f == 1:
        return x
    n, c = x.shape[-2], x.shape[-1]
    y = x.reshape(*x.shape[:-2], n // f, f, c)
    parts = [y[..., j, :] for j in range(f)]
    return jnp.concatenate(parts, axis=-1)


# ------------------------------ fused IAM kernel ---------------------------- #

def _iam_kernel(halo_ref, low_ref, mid_ref, high_ref, w_ref, b_ref, wf_ref, bf_ref,
                lowo_ref, mido_ref, higho_ref, *, TH, W, C, fl, fm):
    # halo_ref : (1, 6, W, C)            bf16  [top|bot] x [l_dn, mid, h_up] rows
    # low_ref  : (1, 2TH, 2W/fl, fl*C)   f32   lane-dense `low` tile
    # mid_ref  : (1, TH, W/fm, fm*C)     f32   lane-dense `mid` tile
    # high_ref : (1, TH/2, W/2, C)       f32
    # w_ref    : (27, C, C)              bf16  k = scale*9 + dy*3 + dx
    # b_ref    : (3, 1, C)               f32
    # wf_ref   : (3, C, 2C)              bf16  per-scale rows, N duplicated x2
    # bf_ref   : (1, 2C)                 f32
    M = TH * W
    Wl = (2 * W) // fl

    halo = halo_ref[...].reshape(6, W, C)
    low_m = low_ref[...].reshape(2 * TH, Wl, fl * C)
    mid_m = mid_ref[...].reshape(TH, W // fm, fm * C)
    high_b = high_ref[...].reshape(TH // 2, W // 2, C)

    # ---- decoder glue, folded in-kernel ------------------------------------
    # avgpool2(low) for this tile's rows (straight from the lane-dense layout)
    if fl >= 2:
        lm = low_m.reshape(TH, 2, Wl, fl * C)
        srow = lm[:, 0] + lm[:, 1]                                # sum over H pair
        pairs = [srow[..., (2 * j) * C:(2 * j + 1) * C]
                 + srow[..., (2 * j + 1) * C:(2 * j + 2) * C]
                 for j in range(fl // 2)]                          # sum over W pair
        l_dn = 0.25 * jnp.concatenate(
            [p[:, :, None, :] for p in pairs], axis=2).reshape(TH, W, C)
    else:
        lp = low_m.reshape(TH, 2, W, 2, C)
        l_dn = 0.25 * (lp[:, 0, :, 0] + lp[:, 0, :, 1]
                       + lp[:, 1, :, 0] + lp[:, 1, :, 1])

    # mid in un-merged (TH, W, C) layout for the conv
    mid_f = _split_lanes(mid_m, fm, C)

    # nearest x2 upsample of high for this tile's rows
    h_w = jnp.stack([high_b, high_b], axis=2).reshape(TH // 2, W, C)
    h_up = jnp.stack([h_w, h_w], axis=1).reshape(TH, W, C)

    # ---- three per-scale 3x3 convs: 27 accumulating (M,C)x(C,C) matmuls ----
    zcol = jnp.zeros((TH + 2, 1, C), jnp.bfloat16)
    feats = []
    for s, body in enumerate((l_dn, mid_f, h_up)):
        xs = jnp.concatenate(
            [halo[s][None], body.astype(jnp.bfloat16), halo[3 + s][None]], axis=0)
        xs = jnp.concatenate([zcol, xs, zcol], axis=1)            # (TH+2, W+2, C)
        acc = None
        for dy in range(3):
            for dx in range(3):
                patch = xs[dy:dy + TH, dx:dx + W, :].reshape(M, C)
                part = jnp.dot(patch, w_ref[s * 9 + dy * 3 + dx],
                               preferred_element_type=jnp.float32)
                acc = part if acc is None else acc + part
        feats.append(jnp.maximum(acc + b_ref[s], 0.0))            # (M, C) f32

    # ---- 1x1 fuse conv (N widened to 2C: W-pair duplicate for the low path) -
    fused_dup = jnp.dot(feats[0].astype(jnp.bfloat16), wf_ref[0],
                        preferred_element_type=jnp.float32)
    fused_dup = fused_dup + jnp.dot(feats[1].astype(jnp.bfloat16), wf_ref[1],
                                    preferred_element_type=jnp.float32)
    fused_dup = fused_dup + jnp.dot(feats[2].astype(jnp.bfloat16), wf_ref[2],
                                    preferred_element_type=jnp.float32)
    fused_dup = jnp.maximum(fused_dup + bf_ref[...], 0.0)         # (M, 2C) f32
    fused_hw = fused_dup[:, :C].reshape(TH, W, C)

    # ---- epilogue: all three residual outputs, straight from VMEM ----------
    # mid_out = mid + fused               (lane-dense store)
    mido = mid_m + _merge_lanes(fused_hw, fm)
    mido_ref[...] = mido.reshape(1, TH, W // fm, fm * C).astype(mido_ref.dtype)

    # high_out = high + avgpool2(fused)   (fused never leaves VMEM)
    fp = fused_hw.reshape(TH // 2, 2, W // 2, 2, C)
    f_dn = 0.25 * (fp[:, 0, :, 0] + fp[:, 0, :, 1] + fp[:, 1, :, 0] + fp[:, 1, :, 1])
    higho_ref[...] = (high_b + f_dn).reshape(
        1, TH // 2, W // 2, C).astype(higho_ref.dtype)

    # low_out = low + nearest_up2(fused)  (upsample folded into the store)
    if fl >= 2:
        addl = _merge_lanes(fused_dup.reshape(TH, W, 2 * C), fl // 2)  # (TH, Wl, fl*C)
    else:
        addl = jnp.stack([fused_hw, fused_hw], axis=2).reshape(TH, 2 * W, C)
    lowo = low_m.reshape(TH, 2, Wl, fl * C) + addl[:, None, :, :]
    lowo_ref[...] = lowo.reshape(1, 2 * TH, Wl, fl * C).astype(lowo_ref.dtype)


# ------------------------------- IAM wrapper -------------------------------- #

def _build_halo(low, mid, high, TH, T):
    """Per-tile boundary rows of the concat conv input [l_dn | mid | h_up].

    Shape (B*T, 6, W, C) bf16.  Rows 0..2 = row (t*TH - 1), rows 3..5 =
    row (t*TH + TH); zeros at the image border (= SAME padding rows)."""
    B, H2, W2, C = low.shape
    H, W = H2 // 2, W2 // 2

    def xcat_row(r):
        lr = lax.slice_in_dim(low, 2 * r, 2 * r + 2, axis=1).reshape(B, 2, W, 2, C)
        ldn = 0.25 * (lr[:, 0, :, 0] + lr[:, 0, :, 1] + lr[:, 1, :, 0] + lr[:, 1, :, 1])
        hup = jnp.repeat(high[:, r // 2], 2, axis=1)
        return jnp.stack([ldn, mid[:, r], hup], axis=1)           # (B, 3, W, C)

    zero = jnp.zeros((B, 3, W, C), jnp.float32)
    tiles = []
    for t in range(T):
        top = xcat_row(t * TH - 1) if t > 0 else zero
        bot = xcat_row(t * TH + TH) if t < T - 1 else zero
        tiles.append(jnp.concatenate([top, bot], axis=1))          # (B, 6, W, C)
    halo = jnp.stack(tiles, axis=1)                                # (B, T, 6, W, C)
    return halo.reshape(B * T, 6, W, C).astype(jnp.bfloat16)


def iam_forward(packed, low, mid, high, *, tile_h_cap=None):
    """One IAM level.  low:(B,2H,2W,C), mid:(B,H,W,C), high:(B,H/2,W/2,C) NHWC."""
    B, H2, W2, C = low.shape
    H, W = H2 // 2, W2 // 2
    assert mid.shape == (B, H, W, C) and high.shape == (B, H // 2, W // 2, C)

    TH = _pick_tile_h(H, W, C, tile_h_cap)
    T = H // TH
    fl = _merge_factor(W2, C)            # lane-merge for low/lowo
    fm = _merge_factor(W, C)             # lane-merge for mid/mido
    Wl, Cl = W2 // fl, fl * C
    Wm, Cm = W // fm, fm * C

    halo = _build_halo(low, mid, high, TH, T)          # tiny wrapper-side prep
    low_d = low.reshape(B, H2, Wl, Cl)                 # free HBM lane-dense views
    mid_d = mid.reshape(B, H, Wm, Cm)

    kernel = functools.partial(_iam_kernel, TH=TH, W=W, C=C, fl=fl, fm=fm)

    lowo_d, mido_d, higho = pl.pallas_call(
        kernel,
        out_shape=(
            jax.ShapeDtypeStruct((B, H2, Wl, Cl), low.dtype),
            jax.ShapeDtypeStruct((B, H, Wm, Cm), mid.dtype),
            jax.ShapeDtypeStruct((B, H // 2, W // 2, C), high.dtype),
        ),
        grid=(B, T),
        in_specs=[
            pl.BlockSpec((1, 6, W, C), lambda b, t: (b * T + t, 0, 0, 0)),
            pl.BlockSpec((1, 2 * TH, Wl, Cl), lambda b, t: (b, t, 0, 0)),
            pl.BlockSpec((1, TH, Wm, Cm), lambda b, t: (b, t, 0, 0)),
            pl.BlockSpec((1, TH // 2, W // 2, C), lambda b, t: (b, t, 0, 0)),
            pl.BlockSpec((27, C, C), lambda b, t: (0, 0, 0)),
            pl.BlockSpec((3, 1, C), lambda b, t: (0, 0, 0)),
            pl.BlockSpec((3, C, 2 * C), lambda b, t: (0, 0, 0)),
            pl.BlockSpec((1, 2 * C), lambda b, t: (0, 0)),
        ],
        out_specs=(
            pl.BlockSpec((1, 2 * TH, Wl, Cl), lambda b, t: (b, t, 0, 0)),
            pl.BlockSpec((1, TH, Wm, Cm), lambda b, t: (b, t, 0, 0)),
            pl.BlockSpec((1, TH // 2, W // 2, C), lambda b, t: (b, t, 0, 0)),
        ),
        compiler_params=pltpu.CompilerParams(
            dimension_semantics=("parallel", "parallel"),
            vmem_limit_bytes=64 * 1024 * 1024),
    )(halo, low_d, mid_d, high, packed["w"], packed["b3"], packed["wf"], packed["bf"])

    # TODO(synk): alias low->lowo / mid->mido via input_output_aliases and try
    #             pipeline_mode=pl.Buffered(3) on low/lowo if a trace still
    #             shows exposed DMA; high/higho could also be lane-merged.
    return (lowo_d.reshape(B, H2, W2, C),
            mido_d.reshape(B, H, W, C),
            higho)


# ------------------------------ IAM parameters ------------------------------ #

def init_iam_params(key, C):
    ks = jax.random.split(key, 8)
    w = lambda k, shape: jax.random.normal(k, shape, jnp.float32) * 0.05
    return dict(
        wl=w(ks[0], (3, 3, C, C)), bl=w(ks[1], (C,)),
        wm=w(ks[2], (3, 3, C, C)), bm=w(ks[3], (C,)),
        wh=w(ks[4], (3, 3, C, C)), bh=w(ks[5], (C,)),
        wf=w(ks[6], (3 * C, C)),   bf=w(ks[7], (C,)),
    )


def pack_iam_params(p):
    """bf16 kernel-layout packing.  Done ONCE at init (hoisted out of forward)."""
    C = p["bl"].shape[0]
    w = jnp.stack([p["wl"], p["wm"], p["wh"]], axis=0)           # (3,3,3,C,C)
    w = w.reshape(27, C, C).astype(jnp.bfloat16)                 # k = s*9+dy*3+dx
    b3 = jnp.stack([p["bl"], p["bm"], p["bh"]], axis=0).reshape(3, 1, C)
    wf_dup = jnp.concatenate([p["wf"], p["wf"]], axis=1)         # (3C, 2C)
    wf_dup = wf_dup.reshape(3, C, 2 * C).astype(jnp.bfloat16)    # per-scale rows
    bf_dup = jnp.concatenate([p["bf"], p["bf"]]).reshape(1, 2 * C)
    return dict(w=w, b3=b3.astype(jnp.float32), wf=wf_dup,
                bf=bf_dup.astype(jnp.float32))


# -------------------------------- Decoder ----------------------------------- #

def decoder_forward(packed_list, rgb_features_nchw, *, tile_h_cap=None):
    """packed_list: 3 packed IAM param dicts; rgb_features_nchw: 5 NCHW features."""
    feats = [jnp.transpose(f, (0, 2, 3, 1)) for f in rgb_features_nchw]  # -> NHWC
    # Exact sequential in-place triple update of the PyTorch Decoder:
    feats[2], feats[3], feats[4] = iam_forward(
        packed_list[2], feats[2], feats[3], feats[4], tile_h_cap=tile_h_cap)
    feats[1], feats[2], feats[3] = iam_forward(
        packed_list[1], feats[1], feats[2], feats[3], tile_h_cap=tile_h_cap)
    feats[0], feats[1], feats[2] = iam_forward(
        packed_list[0], feats[0], feats[1], feats[2], tile_h_cap=tile_h_cap)
    return [jnp.transpose(f, (0, 3, 1, 2)) for f in feats]               # -> NCHW


# ------------------------------ pure-JAX reference --------------------------- #

def upsample2_nearest(x):
    return jnp.repeat(jnp.repeat(x, 2, axis=1), 2, axis=2)


def avgpool2(x):
    B, H, W, C = x.shape
    return x.reshape(B, H // 2, 2, W // 2, 2, C).mean(axis=(2, 4))


def _conv3x3_ref(x, w, b):
    y = lax.conv_general_dilated(
        x, w, window_strides=(1, 1), padding="SAME",
        dimension_numbers=("NHWC", "HWIO", "NHWC"))
    return jnp.maximum(y + b[None, None, None, :], 0.0)


def iam_reference(p, low, mid, high):
    l_dn = avgpool2(low)
    h_up = upsample2_nearest(high)
    fl = _conv3x3_ref(l_dn, p["wl"], p["bl"])
    fm = _conv3x3_ref(mid, p["wm"], p["bm"])
    fh = _conv3x3_ref(h_up, p["wh"], p["bh"])
    cat = jnp.concatenate([fl, fm, fh], axis=-1)
    fused = jnp.maximum(
        jnp.einsum("bhwc,cd->bhwd", cat, p["wf"]) + p["bf"][None, None, None, :], 0.0)
    return (low + upsample2_nearest(fused), mid + fused, high + avgpool2(fused))


def decoder_reference(params_list, rgb_features_nchw):
    feats = [jnp.transpose(f, (0, 2, 3, 1)) for f in rgb_features_nchw]
    feats[2], feats[3], feats[4] = iam_reference(params_list[2], feats[2], feats[3], feats[4])
    feats[1], feats[2], feats[3] = iam_reference(params_list[1], feats[1], feats[2], feats[3])
    feats[0], feats[1], feats[2] = iam_reference(params_list[0], feats[0], feats[1], feats[2])
    return [jnp.transpose(f, (0, 3, 1, 2)) for f in feats]


# ---------------------------------- main ------------------------------------ #

if __name__ == "__main__":
    key = jax.random.PRNGKey(0)
    B, C, S0 = 2, 32, 32
    spatials = [S0 // (2 ** i) for i in range(5)]          # [32, 16, 8, 4, 2]

    k_feat, k_par = jax.random.split(key)
    feat_keys = jax.random.split(k_feat, 5)
    rgb_features = [
        jax.random.normal(feat_keys[i], (B, C, s, s), jnp.float32) * 0.5
        for i, s in enumerate(spatials)
    ]
    par_keys = jax.random.split(k_par, 3)
    params_list = [init_iam_params(par_keys[i], C) for i in range(3)]
    packed_list = [pack_iam_params(p) for p in params_list]    # packed once at init

    # Single IAM level check (H=16 mid + tile cap 8 -> 2 row tiles: exercises the
    # halo path).  bf16 MXU operands, f32 accumulation -> loose tolerance.
    feats_nhwc = [jnp.transpose(f, (0, 2, 3, 1)) for f in rgb_features[:3]]
    iam_fn = jax.jit(functools.partial(iam_forward, tile_h_cap=8))
    got = jax.block_until_ready(iam_fn(packed_list[0], *feats_nhwc))
    want = iam_reference(params_list[0], *feats_nhwc)
    for g, r in zip(got, want):
        assert g.shape == r.shape
        err = float(jnp.max(jnp.abs(g - r)))
        assert jnp.allclose(g, r, atol=5e-2, rtol=5e-2), f"IAM mismatch, max err {err}"

    # Full decoder (3 fused pallas_calls) vs full reference.
    dec_fn = jax.jit(functools.partial(decoder_forward, tile_h_cap=8))
    out = jax.block_until_ready(dec_fn(packed_list, rgb_features))
    ref = decoder_reference(params_list, rgb_features)
    for o, r, x in zip(out, ref, rgb_features):
        assert o.shape == x.shape and o.dtype == x.dtype
        assert bool(jnp.all(jnp.isfinite(o)))
        err = float(jnp.max(jnp.abs(o - r)))
        assert jnp.allclose(o, r, atol=5e-2, rtol=5e-2), f"decoder mismatch, max err {err}"

    print("KERNEL_OK")
</pallas_src>

<mosaic_0001>
module attributes {stable_mosaic.version = 11 : i64} {
  func.func @_iam_kernel(%arg0: i32, %arg1: i32, %arg2: memref<1x6x16x32xbf16, #tpu.memory_space<vmem>>, %arg3: memref<1x16x8x128xf32, #tpu.memory_space<vmem>>, %arg4: memref<1x8x4x128xf32, #tpu.memory_space<vmem>>, %arg5: memref<1x4x8x32xf32, #tpu.memory_space<vmem>>, %arg6: memref<27x32x32xbf16, #tpu.memory_space<vmem>>, %arg7: memref<3x1x32xf32, #tpu.memory_space<vmem>>, %arg8: memref<3x32x64xbf16, #tpu.memory_space<vmem>>, %arg9: memref<1x64xf32, #tpu.memory_space<vmem>>, %arg10: memref<1x16x8x128xf32, #tpu.memory_space<vmem>>, %arg11: memref<1x8x4x128xf32, #tpu.memory_space<vmem>>, %arg12: memref<1x4x8x32xf32, #tpu.memory_space<vmem>>) attributes {dimension_semantics = [#tpu.dimension_semantics<parallel>, #tpu.dimension_semantics<parallel>], iteration_bounds = array<i64: 2, 2>, scalar_prefetch = 0 : i64, scratch_operands = 0 : i64, tpu.core_type = #tpu.core_type<tc>, window_params = [{transform_indices = @transform_0, window_bounds = array<i64: 1, 6, 16, 32>}, {transform_indices = @transform_1, window_bounds = array<i64: 1, 16, 8, 128>}, {transform_indices = @transform_2, window_bounds = array<i64: 1, 8, 4, 128>}, {transform_indices = @transform_3, window_bounds = array<i64: 1, 4, 8, 32>}, {pipeline_mode = #tpu.pipeline_mode<synchronous>, transform_indices = @transform_4, window_bounds = array<i64: 27, 32, 32>}, {pipeline_mode = #tpu.pipeline_mode<synchronous>, transform_indices = @transform_5, window_bounds = array<i64: 3, 1, 32>}, {pipeline_mode = #tpu.pipeline_mode<synchronous>, transform_indices = @transform_6, window_bounds = array<i64: 3, 32, 64>}, {pipeline_mode = #tpu.pipeline_mode<synchronous>, transform_indices = @transform_7, window_bounds = array<i64: 1, 64>}, {transform_indices = @transform_8, window_bounds = array<i64: 1, 16, 8, 128>}, {transform_indices = @transform_9, window_bounds = array<i64: 1, 8, 4, 128>}, {transform_indices = @transform_10, window_bounds = array<i64: 1, 4, 8, 32>}]} {
    %c0 = arith.constant 0 : index
    %c0_0 = arith.constant 0 : index
    %c0_1 = arith.constant 0 : index
    %c0_2 = arith.constant 0 : index
    %0 = vector.load %arg2[%c0, %c0_0, %c0_1, %c0_2] : memref<1x6x16x32xbf16, #tpu.memory_space<vmem>>, vector<1x6x16x32xbf16>
    %1 = vector.shape_cast %0 : vector<1x6x16x32xbf16> to vector<6x16x32xbf16>
    %c0_3 = arith.constant 0 : index
    %c0_4 = arith.constant 0 : index
    %c0_5 = arith.constant 0 : index
    %c0_6 = arith.constant 0 : index
    %2 = vector.load %arg3[%c0_3, %c0_4, %c0_5, %c0_6] : memref<1x16x8x128xf32, #tpu.memory_space<vmem>>, vector<1x16x8x128xf32>
    %3 = vector.shape_cast %2 : vector<1x16x8x128xf32> to vector<16x8x128xf32>
    %c0_7 = arith.constant 0 : index
    %c0_8 = arith.constant 0 : index
    %c0_9 = arith.constant 0 : index
    %c0_10 = arith.constant 0 : index
    %4 = vector.load %arg4[%c0_7, %c0_8, %c0_9, %c0_10] : memref<1x8x4x128xf32, #tpu.memory_space<vmem>>, vector<1x8x4x128xf32>
    %5 = vector.shape_cast %4 : vector<1x8x4x128xf32> to vector<8x4x128xf32>
    %c0_11 = arith.constant 0 : index
    %c0_12 = arith.constant 0 : index
    %c0_13 = arith.constant 0 : index
    %c0_14 = arith.constant 0 : index
    %6 = vector.load %arg5[%c0_11, %c0_12, %c0_13, %c0_14] : memref<1x4x8x32xf32, #tpu.memory_space<vmem>>, vector<1x4x8x32xf32>
    %7 = vector.shape_cast %6 : vector<1x4x8x32xf32> to vector<4x8x32xf32>
    %8 = vector.shape_cast %3 : vector<16x8x128xf32> to vector<8x2x8x128xf32>
    %9 = vector.extract_strided_slice %8 {offsets = [0, 0, 0, 0], sizes = [8, 1, 8, 128], strides = [1, 1, 1, 1]} : vector<8x2x8x128xf32> to vector<8x1x8x128xf32>
    %10 = vector.shape_cast %9 : vector<8x1x8x128xf32> to vector<8x8x128xf32>
    %11 = vector.extract_strided_slice %8 {offsets = [0, 1, 0, 0], sizes = [8, 1, 8, 128], strides = [1, 1, 1, 1]} : vector<8x2x8x128xf32> to vector<8x1x8x128xf32>
    %12 = vector.shape_cast %11 : vector<8x1x8x128xf32> to vector<8x8x128xf32>
    %13 = arith.addf %10, %12 : vector<8x8x128xf32>
    %14 = vector.extract_strided_slice %13 {offsets = [0, 0, 0], sizes = [8, 8, 32], strides = [1, 1, 1]} : vector<8x8x128xf32> to vector<8x8x32xf32>
    %15 = vector.extract_strided_slice %13 {offsets = [0, 0, 32], sizes = [8, 8, 32], strides = [1, 1, 1]} : vector<8x8x128xf32> to vector<8x8x32xf32>
    %16 = arith.addf %14, %15 : vector<8x8x32xf32>
    %17 = vector.extract_strided_slice %13 {offsets = [0, 0, 64], sizes = [8, 8, 32], strides = [1, 1, 1]} : vector<8x8x128xf32> to vector<8x8x32xf32>
    %18 = vector.extract_strided_slice %13 {offsets = [0, 0, 96], sizes = [8, 8, 32], strides = [1, 1, 1]} : vector<8x8x128xf32> to vector<8x8x32xf32>
    %19 = arith.addf %17, %18 : vector<8x8x32xf32>
    %20 = vector.shape_cast %16 : vector<8x8x32xf32> to vector<8x8x1x32xf32>
    %21 = vector.shape_cast %19 : vector<8x8x32xf32> to vector<8x8x1x32xf32>
    %22 = tpu.concatenate %20, %21 in 2 : vector<8x8x1x32xf32>, vector<8x8x1x32xf32> -> vector<8x8x2x32xf32>
    %23 = vector.shape_cast %22 : vector<8x8x2x32xf32> to vector<8x16x32xf32>
    %cst = arith.constant 2.500000e-01 : f32
    %24 = vector.broadcast %cst : f32 to vector<8x16x32xf32>
    %25 = arith.mulf %24, %23 : vector<8x16x32xf32>
    %26 = vector.extract_strided_slice %5 {offsets = [0, 0, 0], sizes = [8, 4, 32], strides = [1, 1, 1]} : vector<8x4x128xf32> to vector<8x4x32xf32>
    %27 = vector.extract_strided_slice %5 {offsets = [0, 0, 32], sizes = [8, 4, 32], strides = [1, 1, 1]} : vector<8x4x128xf32> to vector<8x4x32xf32>
    %28 = vector.extract_strided_slice %5 {offsets = [0, 0, 64], sizes = [8, 4, 32], strides = [1, 1, 1]} : vector<8x4x128xf32> to vector<8x4x32xf32>
    %29 = vector.extract_strided_slice %5 {offsets = [0, 0, 96], sizes = [8, 4, 32], strides = [1, 1, 1]} : vector<8x4x128xf32> to vector<8x4x32xf32>
    %30 = vector.shape_cast %26 : vector<8x4x32xf32> to vector<8x4x1x32xf32>
    %31 = vector.shape_cast %27 : vector<8x4x32xf32> to vector<8x4x1x32xf32>
    %32 = vector.shape_cast %28 : vector<8x4x32xf32> to vector<8x4x1x32xf32>
    %33 = vector.shape_cast %29 : vector<8x4x32xf32> to vector<8x4x1x32xf32>
    %34 = tpu.concatenate %30, %31, %32, %33 in 2 : vector<8x4x1x32xf32>, vector<8x4x1x32xf32>, vector<8x4x1x32xf32>, vector<8x4x1x32xf32> -> vector<8x4x4x32xf32>
    %35 = vector.shape_cast %34 : vector<8x4x4x32xf32> to vector<8x16x32xf32>
    %36 = vector.shape_cast %7 : vector<4x8x32xf32> to vector<4x8x1x32xf32>
    %37 = vector.shape_cast %7 : vector<4x8x32xf32> to vector<4x8x1x32xf32>
    %38 = tpu.concatenate %36, %37 in 2 : vector<4x8x1x32xf32>, vector<4x8x1x32xf32> -> vector<4x8x2x32xf32>
    %39 = vector.shape_cast %38 : vector<4x8x2x32xf32> to vector<4x16x32xf32>
    %40 = vector.shape_cast %39 : vector<4x16x32xf32> to vector<4x1x16x32xf32>
    %41 = vector.shape_cast %39 : vector<4x16x32xf32> to vector<4x1x16x32xf32>
    %42 = tpu.concatenate %40, %41 in 1 : vector<4x1x16x32xf32>, vector<4x1x16x32xf32> -> vector<4x2x16x32xf32>
    %43 = vector.shape_cast %42 : vector<4x2x16x32xf32> to vector<8x16x32xf32>
    %cst_15 = arith.constant 0.000000e+00 : bf16
    %44 = vector.broadcast %cst_15 : bf16 to vector<10x1x32xbf16>
    %45 = vector.extract_strided_slice %1 {offsets = [0, 0, 0], sizes = [1, 16, 32], strides = [1, 1, 1]} : vector<6x16x32xbf16> to vector<1x16x32xbf16>
    %46 = vector.shape_cast %45 : vector<1x16x32xbf16> to vector<16x32xbf16>
    %47 = vector.shape_cast %46 : vector<16x32xbf16> to vector<1x16x32xbf16>
    %48 = arith.truncf %25 : vector<8x16x32xf32> to vector<8x16x32xbf16>
    %49 = vector.extract_strided_slice %1 {offsets = [3, 0, 0], sizes = [1, 16, 32], strides = [1, 1, 1]} : vector<6x16x32xbf16> to vector<1x16x32xbf16>
    %50 = vector.shape_cast %49 : vector<1x16x32xbf16> to vector<16x32xbf16>
    %51 = vector.shape_cast %50 : vector<16x32xbf16> to vector<1x16x32xbf16>
    %52 = tpu.concatenate %47, %48, %51 in 0 : vector<1x16x32xbf16>, vector<8x16x32xbf16>, vector<1x16x32xbf16> -> vector<10x16x32xbf16>
    %53 = tpu.concatenate %44, %52, %44 in 1 : vector<10x1x32xbf16>, vector<10x16x32xbf16>, vector<10x1x32xbf16> -> vector<10x18x32xbf16>
    %54 = vector.extract_strided_slice %53 {offsets = [0, 0, 0], sizes = [8, 16, 32], strides = [1, 1, 1]} : vector<10x18x32xbf16> to vector<8x16x32xbf16>
    %55 = vector.shape_cast %54 : vector<8x16x32xbf16> to vector<128x32xbf16>
    %c0_16 = arith.constant 0 : index
    %c0_17 = arith.constant 0 : index
    %c0_18 = arith.constant 0 : index
    %56 = vector.load %arg6[%c0_16, %c0_17, %c0_18] : memref<27x32x32xbf16, #tpu.memory_space<vmem>>, vector<1x32x32xbf16>
    %57 = vector.shape_cast %56 : vector<1x32x32xbf16> to vector<32x32xbf16>
    %cst_19 = arith.constant dense<0.000000e+00> : vector<128x32xf32>
    %58 = tpu.matmul %55, %57, %cst_19 {dimension_numbers = #tpu.dot_dimension_numbers<[1], [0], [0], [1], [0, 0, 1, 1], [], []>} : vector<128x32xbf16>, vector<32x32xbf16>, vector<128x32xf32> -> vector<128x32xf32>
    %59 = vector.extract_strided_slice %53 {offsets = [0, 1, 0], sizes = [8, 16, 32], strides = [1, 1, 1]} : vector<10x18x32xbf16> to vector<8x16x32xbf16>
    %60 = vector.shape_cast %59 : vector<8x16x32xbf16> to vector<128x32xbf16>
    %c1 = arith.constant 1 : index
    %c0_20 = arith.constant 0 : index
    %c0_21 = arith.constant 0 : index
    %61 = vector.load %arg6[%c1, %c0_20, %c0_21] : memref<27x32x32xbf16, #tpu.memory_space<vmem>>, vector<1x32x32xbf16>
    %62 = vector.shape_cast %61 : vector<1x32x32xbf16> to vector<32x32xbf16>
    %cst_22 = arith.constant dense<0.000000e+00> : vector<128x32xf32>
    %63 = tpu.matmul %60, %62, %cst_22 {dimension_numbers = #tpu.dot_dimension_numbers<[1], [0], [0], [1], [0, 0, 1, 1], [], []>} : vector<128x32xbf16>, vector<32x32xbf16>, vector<128x32xf32> -> vector<128x32xf32>
    %64 = arith.addf %58, %63 : vector<128x32xf32>
    %65 = vector.extract_strided_slice %53 {offsets = [0, 2, 0], sizes = [8, 16, 32], strides = [1, 1, 1]} : vector<10x18x32xbf16> to vector<8x16x32xbf16>
    %66 = vector.shape_cast %65 : vector<8x16x32xbf16> to vector<128x32xbf16>
    %c2 = arith.constant 2 : index
    %c0_23 = arith.constant 0 : index
    %c0_24 = arith.constant 0 : index
    %67 = vector.load %arg6[%c2, %c0_23, %c0_24] : memref<27x32x32xbf16, #tpu.memory_space<vmem>>, vector<1x32x32xbf16>
    %68 = vector.shape_cast %67 : vector<1x32x32xbf16> to vector<32x32xbf16>
    %cst_25 = arith.constant dense<0.000000e+00> : vector<128x32xf32>
    %69 = tpu.matmul %66, %68, %cst_25 {dimension_numbers = #tpu.dot_dimension_numbers<[1], [0], [0], [1], [0, 0, 1, 1], [], []>} : vector<128x32xbf16>, vector<32x32xbf16>, vector<128x32xf32> -> vector<128x32xf32>
    %70 = arith.addf %64, %69 : vector<128x32xf32>
    %71 = vector.extract_strided_slice %53 {offsets = [1, 0, 0], sizes = [8, 16, 32], strides = [1, 1, 1]} : vector<10x18x32xbf16> to vector<8x16x32xbf16>
    %72 = vector.shape_cast %71 : vector<8x16x32xbf16> to vector<128x32xbf16>
    %c3 = arith.constant 3 : index
    %c0_26 = arith.constant 0 : index
    %c0_27 = arith.constant 0 : index
    %73 = vector.load %arg6[%c3, %c0_26, %c0_27] : memref<27x32x32xbf16, #tpu.memory_space<vmem>>, vector<1x32x32xbf16>
    %74 = vector.shape_cast %73 : vector<1x32x32xbf16> to vector<32x32xbf16>
    %cst_28 = arith.constant dense<0.000000e+00> : vector<128x32xf32>
    %75 = tpu.matmul %72, %74, %cst_28 {dimension_numbers = #tpu.dot_dimension_numbers<[1], [0], [0], [1], [0, 0, 1, 1], [], []>} : vector<128x32xbf16>, vector<32x32xbf16>, vector<128x32xf32> -> vector<128x32xf32>
    %76 = arith.addf %70, %75 : vector<128x32xf32>
    %77 = vector.extract_strided_slice %53 {offsets = [1, 1, 0], sizes = [8, 16, 32], strides = [1, 1, 1]} : vector<10x18x32xbf16> to vector<8x16x32xbf16>
    %78 = vector.shape_cast %77 : vector<8x16x32xbf16> to vector<128x32xbf16>
    %c4 = arith.constant 4 : index
    %c0_29 = arith.constant 0 : index
    %c0_30 = arith.constant 0 : index
    %79 = vector.load %arg6[%c4, %c0_29, %c0_30] : memref<27x32x32xbf16, #tpu.memory_space<vmem>>, vector<1x32x32xbf16>
    %80 = vector.shape_cast %79 : vector<1x32x32xbf16> to vector<32x32xbf16>
    %cst_31 = arith.constant dense<0.000000e+00> : vector<128x32xf32>
    %81 = tpu.matmul %78, %80, %cst_31 {dimension_numbers = #tpu.dot_dimension_numbers<[1], [0], [0], [1], [0, 0, 1, 1], [], []>} : vector<128x32xbf16>, vector<32x32xbf16>, vector<128x32xf32> -> vector<128x32xf32>
    %82 = arith.addf %76, %81 : vector<128x32xf32>
    %83 = vector.extract_strided_slice %53 {offsets = [1, 2, 0], sizes = [8, 16, 32], strides = [1, 1, 1]} : vector<10x18x32xbf16> to vector<8x16x32xbf16>
    %84 = vector.shape_cast %83 : vector<8x16x32xbf16> to vector<128x32xbf16>
    %c5 = arith.constant 5 : index
    %c0_32 = arith.constant 0 : index
    %c0_33 = arith.constant 0 : index
    %85 = vector.load %arg6[%c5, %c0_32, %c0_33] : memref<27x32x32xbf16, #tpu.memory_space<vmem>>, vector<1x32x32xbf16>
    %86 = vector.shape_cast %85 : vector<1x32x32xbf16> to vector<32x32xbf16>
    %cst_34 = arith.constant dense<0.000000e+00> : vector<128x32xf32>
    %87 = tpu.matmul %84, %86, %cst_34 {dimension_numbers = #tpu.dot_dimension_numbers<[1], [0], [0], [1], [0, 0, 1, 1], [], []>} : vector<128x32xbf16>, vector<32x32xbf16>, vector<128x32xf32> -> vector<128x32xf32>
    %88 = arith.addf %82, %87 : vector<128x32xf32>
    %89 = vector.extract_strided_slice %53 {offsets = [2, 0, 0], sizes = [8, 16, 32], strides = [1, 1, 1]} : vector<10x18x32xbf16> to vector<8x16x32xbf16>
    %90 = vector.shape_cast %89 : vector<8x16x32xbf16> to vector<128x32xbf16>
    %c6 = arith.constant 6 : index
    %c0_35 = arith.constant 0 : index
    %c0_36 = arith.constant 0 : index
    %91 = vector.load %arg6[%c6, %c0_35, %c0_36] : memref<27x32x32xbf16, #tpu.memory_space<vmem>>, vector<1x32x32xbf16>
    %92 = vector.shape_cast %91 : vector<1x32x32xbf16> to vector<32x32xbf16>
    %cst_37 = arith.constant dense<0.000000e+00> : vector<128x32xf32>
    %93 = tpu.matmul %90, %92, %cst_37 {dimension_numbers = #tpu.dot_dimension_numbers<[1], [0], [0], [1], [0, 0, 1, 1], [], []>} : vector<128x32xbf16>, vector<32x32xbf16>, vector<128x32xf32> -> vector<128x32xf32>
    %94 = arith.addf %88, %93 : vector<128x32xf32>
    %95 = vector.extract_strided_slice %53 {offsets = [2, 1, 0], sizes = [8, 16, 32], strides = [1, 1, 1]} : vector<10x18x32xbf16> to vector<8x16x32xbf16>
    %96 = vector.shape_cast %95 : vector<8x16x32xbf16> to vector<128x32xbf16>
    %c7 = arith.constant 7 : index
    %c0_38 = arith.constant 0 : index
    %c0_39 = arith.constant 0 : index
    %97 = vector.load %arg6[%c7, %c0_38, %c0_39] : memref<27x32x32xbf16, #tpu.memory_space<vmem>>, vector<1x32x32xbf16>
    %98 = vector.shape_cast %97 : vector<1x32x32xbf16> to vector<32x32xbf16>
    %cst_40 = arith.constant dense<0.000000e+00> : vector<128x32xf32>
    %99 = tpu.matmul %96, %98, %cst_40 {dimension_numbers = #tpu.dot_dimension_numbers<[1], [0], [0], [1], [0, 0, 1, 1], [], []>} : vector<128x32xbf16>, vector<32x32xbf16>, vector<128x32xf32> -> vector<128x32xf32>
    %100 = arith.addf %94, %99 : vector<128x32xf32>
    %101 = vector.extract_strided_slice %53 {offsets = [2, 2, 0], sizes = [8, 16, 32], strides = [1, 1, 1]} : vector<10x18x32xbf16> to vector<8x16x32xbf16>
    %102 = vector.shape_cast %101 : vector<8x16x32xbf16> to vector<128x32xbf16>
    %c8 = arith.constant 8 : index
    %c0_41 = arith.constant 0 : index
    %c0_42 = arith.constant 0 : index
    %103 = vector.load %arg6[%c8, %c0_41, %c0_42] : memref<27x32x32xbf16, #tpu.memory_space<vmem>>, vector<1x32x32xbf16>
    %104 = vector.shape_cast %103 : vector<1x32x32xbf16> to vector<32x32xbf16>
    %cst_43 = arith.constant dense<0.000000e+00> : vector<128x32xf32>
    %105 = tpu.matmul %102, %104, %cst_43 {dimension_numbers = #tpu.dot_dimension_numbers<[1], [0], [0], [1], [0, 0, 1, 1], [], []>} : vector<128x32xbf16>, vector<32x32xbf16>, vector<128x32xf32> -> vector<128x32xf32>
    %106 = arith.addf %100, %105 : vector<128x32xf32>
    %c0_44 = arith.constant 0 : index
    %c0_45 = arith.constant 0 : index
    %c0_46 = arith.constant 0 : index
    %107 = vector.load %arg7[%c0_44, %c0_45, %c0_46] : memref<3x1x32xf32, #tpu.memory_space<vmem>>, vector<1x1x32xf32>
    %108 = vector.shape_cast %107 : vector<1x1x32xf32> to vector<1x32xf32>
    %109 = vector.broadcast %108 : vector<1x32xf32> to vector<128x32xf32>
    %110 = arith.addf %106, %109 : vector<128x32xf32>
    %cst_47 = arith.constant 0.000000e+00 : f32
    %111 = vector.broadcast %cst_47 : f32 to vector<128x32xf32>
    %112 = arith.maximumf %110, %111 : vector<128x32xf32>
    %113 = vector.extract_strided_slice %1 {offsets = [1, 0, 0], sizes = [1, 16, 32], strides = [1, 1, 1]} : vector<6x16x32xbf16> to vector<1x16x32xbf16>
    %114 = vector.shape_cast %113 : vector<1x16x32xbf16> to vector<16x32xbf16>
    %115 = vector.shape_cast %114 : vector<16x32xbf16> to vector<1x16x32xbf16>
    %116 = arith.truncf %35 : vector<8x16x32xf32> to vector<8x16x32xbf16>
    %117 = vector.extract_strided_slice %1 {offsets = [4, 0, 0], sizes = [1, 16, 32], strides = [1, 1, 1]} : vector<6x16x32xbf16> to vector<1x16x32xbf16>
    %118 = vector.shape_cast %117 : vector<1x16x32xbf16> to vector<16x32xbf16>
    %119 = vector.shape_cast %118 : vector<16x32xbf16> to vector<1x16x32xbf16>
    %120 = tpu.concatenate %115, %116, %119 in 0 : vector<1x16x32xbf16>, vector<8x16x32xbf16>, vector<1x16x32xbf16> -> vector<10x16x32xbf16>
    %121 = tpu.concatenate %44, %120, %44 in 1 : vector<10x1x32xbf16>, vector<10x16x32xbf16>, vector<10x1x32xbf16> -> vector<10x18x32xbf16>
    %122 = vector.extract_strided_slice %121 {offsets = [0, 0, 0], sizes = [8, 16, 32], strides = [1, 1, 1]} : vector<10x18x32xbf16> to vector<8x16x32xbf16>
    %123 = vector.shape_cast %122 : vector<8x16x32xbf16> to vector<128x32xbf16>
    %c9 = arith.constant 9 : index
    %c0_48 = arith.constant 0 : index
    %c0_49 = arith.constant 0 : index
    %124 = vector.load %arg6[%c9, %c0_48, %c0_49] : memref<27x32x32xbf16, #tpu.memory_space<vmem>>, vector<1x32x32xbf16>
    %125 = vector.shape_cast %124 : vector<1x32x32xbf16> to vector<32x32xbf16>
    %cst_50 = arith.constant dense<0.000000e+00> : vector<128x32xf32>
    %126 = tpu.matmul %123, %125, %cst_50 {dimension_numbers = #tpu.dot_dimension_numbers<[1], [0], [0], [1], [0, 0, 1, 1], [], []>} : vector<128x32xbf16>, vector<32x32xbf16>, vector<128x32xf32> -> vector<128x32xf32>
    %127 = vector.extract_strided_slice %121 {offsets = [0, 1, 0], sizes = [8, 16, 32], strides = [1, 1, 1]} : vector<10x18x32xbf16> to vector<8x16x32xbf16>
    %128 = vector.shape_cast %127 : vector<8x16x32xbf16> to vector<128x32xbf16>
    %c10 = arith.constant 10 : index
    %c0_51 = arith.constant 0 : index
    %c0_52 = arith.constant 0 : index
    %129 = vector.load %arg6[%c10, %c0_51, %c0_52] : memref<27x32x32xbf16, #tpu.memory_space<vmem>>, vector<1x32x32xbf16>
    %130 = vector.shape_cast %129 : vector<1x32x32xbf16> to vector<32x32xbf16>
    %cst_53 = arith.constant dense<0.000000e+00> : vector<128x32xf32>
    %131 = tpu.matmul %128, %130, %cst_53 {dimension_numbers = #tpu.dot_dimension_numbers<[1], [0], [0], [1], [0, 0, 1, 1], [], []>} : vector<128x32xbf16>, vector<32x32xbf16>, vector<128x32xf32> -> vector<128x32xf32>
    %132 = arith.addf %126, %131 : vector<128x32xf32>
    %133 = vector.extract_strided_slice %121 {offsets = [0, 2, 0], sizes = [8, 16, 32], strides = [1, 1, 1]} : vector<10x18x32xbf16> to vector<8x16x32xbf16>
    %134 = vector.shape_cast %133 : vector<8x16x32xbf16> to vector<128x32xbf16>
    %c11 = arith.constant 11 : index
    %c0_54 = arith.constant 0 : index
    %c0_55 = arith.constant 0 : index
    %135 = vector.load %arg6[%c11, %c0_54, %c0_55] : memref<27x32x32xbf16, #tpu.memory_space<vmem>>, vector<1x32x32xbf16>
    %136 = vector.shape_cast %135 : vector<1x32x32xbf16> to vector<32x32xbf16>
    %cst_56 = arith.constant dense<0.000000e+00> : vector<128x32xf32>
    %137 = tpu.matmul %134, %136, %cst_56 {dimension_numbers = #tpu.dot_dimension_numbers<[1], [0], [0], [1], [0, 0, 1, 1], [], []>} : vector<128x32xbf16>, vector<32x32xbf16>, vector<128x32xf32> -> vector<128x32xf32>
    %138 = arith.addf %132, %137 : vector<128x32xf32>
    %139 = vector.extract_strided_slice %121 {offsets = [1, 0, 0], sizes = [8, 16, 32], strides = [1, 1, 1]} : vector<10x18x32xbf16> to vector<8x16x32xbf16>
    %140 = vector.shape_cast %139 : vector<8x16x32xbf16> to vector<128x32xbf16>
    %c12 = arith.constant 12 : index
    %c0_57 = arith.constant 0 : index
    %c0_58 = arith.constant 0 : index
    %141 = vector.load %arg6[%c12, %c0_57, %c0_58] : memref<27x32x32xbf16, #tpu.memory_space<vmem>>, vector<1x32x32xbf16>
    %142 = vector.shape_cast %141 : vector<1x32x32xbf16> to vector<32x32xbf16>
    %cst_59 = arith.constant dense<0.000000e+00> : vector<128x32xf32>
    %143 = tpu.matmul %140, %142, %cst_59 {dimension_numbers = #tpu.dot_dimension_numbers<[1], [0], [0], [1], [0, 0, 1, 1], [], []>} : vector<128x32xbf16>, vector<32x32xbf16>, vector<128x32xf32> -> vector<128x32xf32>
    %144 = arith.addf %138, %143 : vector<128x32xf32>
    %145 = vector.extract_strided_slice %121 {offsets = [1, 1, 0], sizes = [8, 16, 32], strides = [1, 1, 1]} : vector<10x18x32xbf16> to vector<8x16x32xbf16>
    %146 = vector.shape_cast %145 : vector<8x16x32xbf16> to vector<128x32xbf16>
    %c13 = arith.constant 13 : index
    %c0_60 = arith.constant 0 : index
    %c0_61 = arith.constant 0 : index
    %147 = vector.load %arg6[%c13, %c0_60, %c0_61] : memref<27x32x32xbf16, #tpu.memory_space<vmem>>, vector<1x32x32xbf16>
    %148 = vector.shape_cast %147 : vector<1x32x32xbf16> to vector<32x32xbf16>
    %cst_62 = arith.constant dense<0.000000e+00> : vector<128x32xf32>
    %149 = tpu.matmul %146, %148, %cst_62 {dimension_numbers = #tpu.dot_dimension_numbers<[1], [0], [0], [1], [0, 0, 1, 1], [], []>} : vector<128x32xbf16>, vector<32x32xbf16>, vector<128x32xf32> -> vector<128x32xf32>
    %150 = arith.addf %144, %149 : vector<128x32xf32>
    %151 = vector.extract_strided_slice %121 {offsets = [1, 2, 0], sizes = [8, 16, 32], strides = [1, 1, 1]} : vector<10x18x32xbf16> to vector<8x16x32xbf16>
    %152 = vector.shape_cast %151 : vector<8x16x32xbf16> to vector<128x32xbf16>
    %c14 = arith.constant 14 : index
    %c0_63 = arith.constant 0 : index
    %c0_64 = arith.constant 0 : index
    %153 = vector.load %arg6[%c14, %c0_63, %c0_64] : memref<27x32x32xbf16, #tpu.memory_space<vmem>>, vector<1x32x32xbf16>
    %154 = vector.shape_cast %153 : vector<1x32x32xbf16> to vector<32x32xbf16>
    %cst_65 = arith.constant dense<0.000000e+00> : vector<128x32xf32>
    %155 = tpu.matmul %152, %154, %cst_65 {dimension_numbers = #tpu.dot_dimension_numbers<[1], [0], [0], [1], [0, 0, 1, 1], [], []>} : vector<128x32xbf16>, vector<32x32xbf16>, vector<128x32xf32> -> vector<128x32xf32>
    %156 = arith.addf %150, %155 : vector<128x32xf32>
    %157 = vector.extract_strided_slice %121 {offsets = [2, 0, 0], sizes = [8, 16, 32], strides = [1, 1, 1]} : vector<10x18x32xbf16> to vector<8x16x32xbf16>
    %158 = vector.shape_cast %157 : vector<8x16x32xbf16> to vector<128x32xbf16>
    %c15 = arith.constant 15 : index
    %c0_66 = arith.constant 0 : index
    %c0_67 = arith.constant 0 : index
    %159 = vector.load %arg6[%c15, %c0_66, %c0_67] : memref<27x32x32xbf16, #tpu.memory_space<vmem>>, vector<1x32x32xbf16>
    %160 = vector.shape_cast %159 : vector<1x32x32xbf16> to vector<32x32xbf16>
    %cst_68 = arith.constant dense<0.000000e+00> : vector<128x32xf32>
    %161 = tpu.matmul %158, %160, %cst_68 {dimension_numbers = #tpu.dot_dimension_numbers<[1], [0], [0], [1], [0, 0, 1, 1], [], []>} : vector<128x32xbf16>, vector<32x32xbf16>, vector<128x32xf32> -> vector<128x32xf32>
    %162 = arith.addf %156, %161 : vector<128x32xf32>
    %163 = vector.extract_strided_slice %121 {offsets = [2, 1, 0], sizes = [8, 16, 32], strides = [1, 1, 1]} : vector<10x18x32xbf16> to vector<8x16x32xbf16>
    %164 = vector.shape_cast %163 : vector<8x16x32xbf16> to vector<128x32xbf16>
    %c16 = arith.constant 16 : index
    %c0_69 = arith.constant 0 : index
    %c0_70 = arith.constant 0 : index
    %165 = vector.load %arg6[%c16, %c0_69, %c0_70] : memref<27x32x32xbf16, #tpu.memory_space<vmem>>, vector<1x32x32xbf16>
    %166 = vector.shape_cast %165 : vector<1x32x32xbf16> to vector<32x32xbf16>
    %cst_71 = arith.constant dense<0.000000e+00> : vector<128x32xf32>
    %167 = tpu.matmul %164, %166, %cst_71 {dimension_numbers = #tpu.dot_dimension_numbers<[1], [0], [0], [1], [0, 0, 1, 1], [], []>} : vector<128x32xbf16>, vector<32x32xbf16>, vector<128x32xf32> -> vector<128x32xf32>
    %168 = arith.addf %162, %167 : vector<128x32xf32>
    %169 = vector.extract_strided_slice %121 {offsets = [2, 2, 0], sizes = [8, 16, 32], strides = [1, 1, 1]} : vector<10x18x32xbf16> to vector<8x16x32xbf16>
    %170 = vector.shape_cast %169 : vector<8x16x32xbf16> to vector<128x32xbf16>
    %c17 = arith.constant 17 : index
    %c0_72 = arith.constant 0 : index
    %c0_73 = arith.constant 0 : index
    %171 = vector.load %arg6[%c17, %c0_72, %c0_73] : memref<27x32x32xbf16, #tpu.memory_space<vmem>>, vector<1x32x32xbf16>
    %172 = vector.shape_cast %171 : vector<1x32x32xbf16> to vector<32x32xbf16>
    %cst_74 = arith.constant dense<0.000000e+00> : vector<128x32xf32>
    %173 = tpu.matmul %170, %172, %cst_74 {dimension_numbers = #tpu.dot_dimension_numbers<[1], [0], [0], [1], [0, 0, 1, 1], [], []>} : vector<128x32xbf16>, vector<32x32xbf16>, vector<128x32xf32> -> vector<128x32xf32>
    %174 = arith.addf %168, %173 : vector<128x32xf32>
    %c1_75 = arith.constant 1 : index
    %c0_76 = arith.constant 0 : index
    %c0_77 = arith.constant 0 : index
    %175 = vector.load %arg7[%c1_75, %c0_76, %c0_77] : memref<3x1x32xf32, #tpu.memory_space<vmem>>, vector<1x1x32xf32>
    %176 = vector.shape_cast %175 : vector<1x1x32xf32> to vector<1x32xf32>
    %177 = vector.broadcast %176 : vector<1x32xf32> to vector<128x32xf32>
    %178 = arith.addf %174, %177 : vector<128x32xf32>
    %cst_78 = arith.constant 0.000000e+00 : f32
    %179 = vector.broadcast %cst_78 : f32 to vector<128x32xf32>
    %180 = arith.maximumf %178, %179 : vector<128x32xf32>
    %181 = vector.extract_strided_slice %1 {offsets = [2, 0, 0], sizes = [1, 16, 32], strides = [1, 1, 1]} : vector<6x16x32xbf16> to vector<1x16x32xbf16>
    %182 = vector.shape_cast %181 : vector<1x16x32xbf16> to vector<16x32xbf16>
    %183 = vector.shape_cast %182 : vector<16x32xbf16> to vector<1x16x32xbf16>
    %184 = arith.truncf %43 : vector<8x16x32xf32> to vector<8x16x32xbf16>
    %185 = vector.extract_strided_slice %1 {offsets = [5, 0, 0], sizes = [1, 16, 32], strides = [1, 1, 1]} : vector<6x16x32xbf16> to vector<1x16x32xbf16>
    %186 = vector.shape_cast %185 : vector<1x16x32xbf16> to vector<16x32xbf16>
    %187 = vector.shape_cast %186 : vector<16x32xbf16> to vector<1x16x32xbf16>
    %188 = tpu.concatenate %183, %184, %187 in 0 : vector<1x16x32xbf16>, vector<8x16x32xbf16>, vector<1x16x32xbf16> -> vector<10x16x32xbf16>
    %189 = tpu.concatenate %44, %188, %44 in 1 : vector<10x1x32xbf16>, vector<10x16x32xbf16>, vector<10x1x32xbf16> -> vector<10x18x32xbf16>
    %190 = vector.extract_strided_slice %189 {offsets = [0, 0, 0], sizes = [8, 16, 32], strides = [1, 1, 1]} : vector<10x18x32xbf16> to vector<8x16x32xbf16>
    %191 = vector.shape_cast %190 : vector<8x16x32xbf16> to vector<128x32xbf16>
    %c18 = arith.constant 18 : index
    %c0_79 = arith.constant 0 : index
    %c0_80 = arith.constant 0 : index
    %192 = vector.load %arg6[%c18, %c0_79, %c0_80] : memref<27x32x32xbf16, #tpu.memory_space<vmem>>, vector<1x32x32xbf16>
    %193 = vector.shape_cast %192 : vector<1x32x32xbf16> to vector<32x32xbf16>
    %cst_81 = arith.constant dense<0.000000e+00> : vector<128x32xf32>
    %194 = tpu.matmul %191, %193, %cst_81 {dimension_numbers = #tpu.dot_dimension_numbers<[1], [0], [0], [1], [0, 0, 1, 1], [], []>} : vector<128x32xbf16>, vector<32x32xbf16>, vector<128x32xf32> -> vector<128x32xf32>
    %195 = vector.extract_strided_slice %189 {offsets = [0, 1, 0], sizes = [8, 16, 32], strides = [1, 1, 1]} : vector<10x18x32xbf16> to vector<8x16x32xbf16>
    %196 = vector.shape_cast %195 : vector<8x16x32xbf16> to vector<128x32xbf16>
    %c19 = arith.constant 19 : index
    %c0_82 = arith.constant 0 : index
    %c0_83 = arith.constant 0 : index
    %197 = vector.load %arg6[%c19, %c0_82, %c0_83] : memref<27x32x32xbf16, #tpu.memory_space<vmem>>, vector<1x32x32xbf16>
    %198 = vector.shape_cast %197 : vector<1x32x32xbf16> to vector<32x32xbf16>
    %cst_84 = arith.constant dense<0.000000e+00> : vector<128x32xf32>
    %199 = tpu.matmul %196, %198, %cst_84 {dimension_numbers = #tpu.dot_dimension_numbers<[1], [0], [0], [1], [0, 0, 1, 1], [], []>} : vector<128x32xbf16>, vector<32x32xbf16>, vector<128x32xf32> -> vector<128x32xf32>
    %200 = arith.addf %194, %199 : vector<128x32xf32>
    %201 = vector.extract_strided_slice %189 {offsets = [0, 2, 0], sizes = [8, 16, 32], strides = [1, 1, 1]} : vector<10x18x32xbf16> to vector<8x16x32xbf16>
    %202 = vector.shape_cast %201 : vector<8x16x32xbf16> to vector<128x32xbf16>
    %c20 = arith.constant 20 : index
    %c0_85 = arith.constant 0 : index
    %c0_86 = arith.constant 0 : index
    %203 = vector.load %arg6[%c20, %c0_85, %c0_86] : memref<27x32x32xbf16, #tpu.memory_space<vmem>>, vector<1x32x32xbf16>
    %204 = vector.shape_cast %203 : vector<1x32x32xbf16> to vector<32x32xbf16>
    %cst_87 = arith.constant dense<0.000000e+00> : vector<128x32xf32>
    %205 = tpu.matmul %202, %204, %cst_87 {dimension_numbers = #tpu.dot_dimension_numbers<[1], [0], [0], [1], [0, 0, 1, 1], [], []>} : vector<128x32xbf16>, vector<32x32xbf16>, vector<128x32xf32> -> vector<128x32xf32>
    %206 = arith.addf %200, %205 : vector<128x32xf32>
    %207 = vector.extract_strided_slice %189 {offsets = [1, 0, 0], sizes = [8, 16, 32], strides = [1, 1, 1]} : vector<10x18x32xbf16> to vector<8x16x32xbf16>
    %208 = vector.shape_cast %207 : vector<8x16x32xbf16> to vector<128x32xbf16>
    %c21 = arith.constant 21 : index
    %c0_88 = arith.constant 0 : index
    %c0_89 = arith.constant 0 : index
    %209 = vector.load %arg6[%c21, %c0_88, %c0_89] : memref<27x32x32xbf16, #tpu.memory_space<vmem>>, vector<1x32x32xbf16>
    %210 = vector.shape_cast %209 : vector<1x32x32xbf16> to vector<32x32xbf16>
    %cst_90 = arith.constant dense<0.000000e+00> : vector<128x32xf32>
    %211 = tpu.matmul %208, %210, %cst_90 {dimension_numbers = #tpu.dot_dimension_numbers<[1], [0], [0], [1], [0, 0, 1, 1], [], []>} : vector<128x32xbf16>, vector<32x32xbf16>, vector<128x32xf32> -> vector<128x32xf32>
    %212 = arith.addf %206, %211 : vector<128x32xf32>
    %213 = vector.extract_strided_slice %189 {offsets = [1, 1, 0], sizes = [8, 16, 32], strides = [1, 1, 1]} : vector<10x18x32xbf16> to vector<8x16x32xbf16>
    %214 = vector.shape_cast %213 : vector<8x16x32xbf16> to vector<128x32xbf16>
    %c22 = arith.constant 22 : index
    %c0_91 = arith.constant 0 : index
    %c0_92 = arith.constant 0 : index
    %215 = vector.load %arg6[%c22, %c0_91, %c0_92] : memref<27x32x32xbf16, #tpu.memory_space<vmem>>, vector<1x32x32xbf16>
    %216 = vector.shape_cast %215 : vector<1x32x32xbf16> to vector<32x32xbf16>
    %cst_93 = arith.constant dense<0.000000e+00> : vector<128x32xf32>
    %217 = tpu.matmul %214, %216, %cst_93 {dimension_numbers = #tpu.dot_dimension_numbers<[1], [0], [0], [1], [0, 0, 1, 1], [], []>} : vector<128x32xbf16>, vector<32x32xbf16>, vector<128x32xf32> -> vector<128x32xf32>
    %218 = arith.addf %212, %217 : vector<128x32xf32>
    %219 = vector.extract_strided_slice %189 {offsets = [1, 2, 0], sizes = [8, 16, 32], strides = [1, 1, 1]} : vector<10x18x32xbf16> to vector<8x16x32xbf16>
    %220 = vector.shape_cast %219 : vector<8x16x32xbf16> to vector<128x32xbf16>
    %c23 = arith.constant 23 : index
    %c0_94 = arith.constant 0 : index
    %c0_95 = arith.constant 0 : index
    %221 = vector.load %arg6[%c23, %c0_94, %c0_95] : memref<27x32x32xbf16, #tpu.memory_space<vmem>>, vector<1x32x32xbf16>
    %222 = vector.shape_cast %221 : vector<1x32x32xbf16> to vector<32x32xbf16>
    %cst_96 = arith.constant dense<0.000000e+00> : vector<128x32xf32>
    %223 = tpu.matmul %220, %222, %cst_96 {dimension_numbers = #tpu.dot_dimension_numbers<[1], [0], [0], [1], [0, 0, 1, 1], [], []>} : vector<128x32xbf16>, vector<32x32xbf16>, vector<128x32xf32> -> vector<128x32xf32>
    %224 = arith.addf %218, %223 : vector<128x32xf32>
    %225 = vector.extract_strided_slice %189 {offsets = [2, 0, 0], sizes = [8, 16, 32], strides = [1, 1, 1]} : vector<10x18x32xbf16> to vector<8x16x32xbf16>
    %226 = vector.shape_cast %225 : vector<8x16x32xbf16> to vector<128x32xbf16>
    %c24 = arith.constant 24 : index
    %c0_97 = arith.constant 0 : index
    %c0_98 = arith.constant 0 : index
    %227 = vector.load %arg6[%c24, %c0_97, %c0_98] : memref<27x32x32xbf16, #tpu.memory_space<vmem>>, vector<1x32x32xbf16>
    %228 = vector.shape_cast %227 : vector<1x32x32xbf16> to vector<32x32xbf16>
    %cst_99 = arith.constant dense<0.000000e+00> : vector<128x32xf32>
    %229 = tpu.matmul %226, %228, %cst_99 {dimension_numbers = #tpu.dot_dimension_numbers<[1], [0], [0], [1], [0, 0, 1, 1], [], []>} : vector<128x32xbf16>, vector<32x32xbf16>, vector<128x32xf32> -> vector<128x32xf32>
    %230 = arith.addf %224, %229 : vector<128x32xf32>
    %231 = vector.extract_strided_slice %189 {offsets = [2, 1, 0], sizes = [8, 16, 32], strides = [1, 1, 1]} : vector<10x18x32xbf16> to vector<8x16x32xbf16>
    %232 = vector.shape_cast %231 : vector<8x16x32xbf16> to vector<128x32xbf16>
    %c25 = arith.constant 25 : index
    %c0_100 = arith.constant 0 : index
    %c0_101 = arith.constant 0 : index
    %233 = vector.load %arg6[%c25, %c0_100, %c0_101] : memref<27x32x32xbf16, #tpu.memory_space<vmem>>, vector<1x32x32xbf16>
    %234 = vector.shape_cast %233 : vector<1x32x32xbf16> to vector<32x32xbf16>
    %cst_102 = arith.constant dense<0.000000e+00> : vector<128x32xf32>
    %235 = tpu.matmul %232, %234, %cst_102 {dimension_numbers = #tpu.dot_dimension_numbers<[1], [0], [0], [1], [0, 0, 1, 1], [], []>} : vector<128x32xbf16>, vector<32x32xbf16>, vector<128x32xf32> -> vector<128x32xf32>
    %236 = arith.addf %230, %235 : vector<128x32xf32>
    %237 = vector.extract_strided_slice %189 {offsets = [2, 2, 0], sizes = [8, 16, 32], strides = [1, 1, 1]} : vector<10x18x32xbf16> to vector<8x16x32xbf16>
    %238 = vector.shape_cast %237 : vector<8x16x32xbf16> to vector<128x32xbf16>
    %c26 = arith.constant 26 : index
    %c0_103 = arith.constant 0 : index
    %c0_104 = arith.constant 0 : index
    %239 = vector.load %arg6[%c26, %c0_103, %c0_104] : memref<27x32x32xbf16, #tpu.memory_space<vmem>>, vector<1x32x32xbf16>
    %240 = vector.shape_cast %239 : vector<1x32x32xbf16> to vector<32x32xbf16>
    %cst_105 = arith.constant dense<0.000000e+00> : vector<128x32xf32>
    %241 = tpu.matmul %238, %240, %cst_105 {dimension_numbers = #tpu.dot_dimension_numbers<[1], [0], [0], [1], [0, 0, 1, 1], [], []>} : vector<128x32xbf16>, vector<32x32xbf16>, vector<128x32xf32> -> vector<128x32xf32>
    %242 = arith.addf %236, %241 : vector<128x32xf32>
    %c2_106 = arith.constant 2 : index
    %c0_107 = arith.constant 0 : index
    %c0_108 = arith.constant 0 : index
    %243 = vector.load %arg7[%c2_106, %c0_107, %c0_108] : memref<3x1x32xf32, #tpu.memory_space<vmem>>, vector<1x1x32xf32>
    %244 = vector.shape_cast %243 : vector<1x1x32xf32> to vector<1x32xf32>
    %245 = vector.broadcast %244 : vector<1x32xf32> to vector<128x32xf32>
    %246 = arith.addf %242, %245 : vector<128x32xf32>
    %cst_109 = arith.constant 0.000000e+00 : f32
    %247 = vector.broadcast %cst_109 : f32 to vector<128x32xf32>
    %248 = arith.maximumf %246, %247 : vector<128x32xf32>
    %249 = arith.truncf %112 : vector<128x32xf32> to vector<128x32xbf16>
    %c0_110 = arith.constant 0 : index
    %c0_111 = arith.constant 0 : index
    %c0_112 = arith.constant 0 : index
    %250 = vector.load %arg8[%c0_110, %c0_111, %c0_112] : memref<3x32x64xbf16, #tpu.memory_space<vmem>>, vector<1x32x64xbf16>
    %251 = vector.shape_cast %250 : vector<1x32x64xbf16> to vector<32x64xbf16>
    %cst_113 = arith.constant dense<0.000000e+00> : vector<128x64xf32>
    %252 = tpu.matmul %249, %251, %cst_113 {dimension_numbers = #tpu.dot_dimension_numbers<[1], [0], [0], [1], [0, 0, 1, 1], [], []>} : vector<128x32xbf16>, vector<32x64xbf16>, vector<128x64xf32> -> vector<128x64xf32>
    %253 = arith.truncf %180 : vector<128x32xf32> to vector<128x32xbf16>
    %c1_114 = arith.constant 1 : index
    %c0_115 = arith.constant 0 : index
    %c0_116 = arith.constant 0 : index
    %254 = vector.load %arg8[%c1_114, %c0_115, %c0_116] : memref<3x32x64xbf16, #tpu.memory_space<vmem>>, vector<1x32x64xbf16>
    %255 = vector.shape_cast %254 : vector<1x32x64xbf16> to vector<32x64xbf16>
    %cst_117 = arith.constant dense<0.000000e+00> : vector<128x64xf32>
    %256 = tpu.matmul %253, %255, %cst_117 {dimension_numbers = #tpu.dot_dimension_numbers<[1], [0], [0], [1], [0, 0, 1, 1], [], []>} : vector<128x32xbf16>, vector<32x64xbf16>, vector<128x64xf32> -> vector<128x64xf32>
    %257 = arith.addf %252, %256 : vector<128x64xf32>
    %258 = arith.truncf %248 : vector<128x32xf32> to vector<128x32xbf16>
    %c2_118 = arith.constant 2 : index
    %c0_119 = arith.constant 0 : index
    %c0_120 = arith.constant 0 : index
    %259 = vector.load %arg8[%c2_118, %c0_119, %c0_120] : memref<3x32x64xbf16, #tpu.memory_space<vmem>>, vector<1x32x64xbf16>
    %260 = vector.shape_cast %259 : vector<1x32x64xbf16> to vector<32x64xbf16>
    %cst_121 = arith.constant dense<0.000000e+00> : vector<128x64xf32>
    %261 = tpu.matmul %258, %260, %cst_121 {dimension_numbers = #tpu.dot_dimension_numbers<[1], [0], [0], [1], [0, 0, 1, 1], [], []>} : vector<128x32xbf16>, vector<32x64xbf16>, vector<128x64xf32> -> vector<128x64xf32>
    %262 = arith.addf %257, %261 : vector<128x64xf32>
    %c0_122 = arith.constant 0 : index
    %c0_123 = arith.constant 0 : index
    %263 = vector.load %arg9[%c0_122, %c0_123] : memref<1x64xf32, #tpu.memory_space<vmem>>, vector<1x64xf32>
    %264 = vector.broadcast %263 : vector<1x64xf32> to vector<128x64xf32>
    %265 = arith.addf %262, %264 : vector<128x64xf32>
    %cst_124 = arith.constant 0.000000e+00 : f32
    %266 = vector.broadcast %cst_124 : f32 to vector<128x64xf32>
    %267 = arith.maximumf %265, %266 : vector<128x64xf32>
    %268 = vector.extract_strided_slice %267 {offsets = [0, 0], sizes = [128, 32], strides = [1, 1]} : vector<128x64xf32> to vector<128x32xf32>
    %269 = vector.shape_cast %268 : vector<128x32xf32> to vector<8x16x32xf32>
    %270 = vector.shape_cast %269 : vector<8x16x32xf32> to vector<8x4x4x32xf32>
    %271 = vector.extract_strided_slice %270 {offsets = [0, 0, 0, 0], sizes = [8, 4, 1, 32], strides = [1, 1, 1, 1]} : vector<8x4x4x32xf32> to vector<8x4x1x32xf32>
    %272 = vector.shape_cast %271 : vector<8x4x1x32xf32> to vector<8x4x32xf32>
    %273 = vector.extract_strided_slice %270 {offsets = [0, 0, 1, 0], sizes = [8, 4, 1, 32], strides = [1, 1, 1, 1]} : vector<8x4x4x32xf32> to vector<8x4x1x32xf32>
    %274 = vector.shape_cast %273 : vector<8x4x1x32xf32> to vector<8x4x32xf32>
    %275 = vector.extract_strided_slice %270 {offsets = [0, 0, 2, 0], sizes = [8, 4, 1, 32], strides = [1, 1, 1, 1]} : vector<8x4x4x32xf32> to vector<8x4x1x32xf32>
    %276 = vector.shape_cast %275 : vector<8x4x1x32xf32> to vector<8x4x32xf32>
    %277 = vector.extract_strided_slice %270 {offsets = [0, 0, 3, 0], sizes = [8, 4, 1, 32], strides = [1, 1, 1, 1]} : vector<8x4x4x32xf32> to vector<8x4x1x32xf32>
    %278 = vector.shape_cast %277 : vector<8x4x1x32xf32> to vector<8x4x32xf32>
    %279 = tpu.concatenate %272, %274, %276, %278 in 2 : vector<8x4x32xf32>, vector<8x4x32xf32>, vector<8x4x32xf32>, vector<8x4x32xf32> -> vector<8x4x128xf32>
    %280 = arith.addf %5, %279 : vector<8x4x128xf32>
    %281 = vector.shape_cast %280 : vector<8x4x128xf32> to vector<1x8x4x128xf32>
    %c0_125 = arith.constant 0 : index
    %c0_126 = arith.constant 0 : index
    %c0_127 = arith.constant 0 : index
    %c0_128 = arith.constant 0 : index
    %282 = vector.load %arg11[%c0_125, %c0_126, %c0_127, %c0_128] : memref<1x8x4x128xf32, #tpu.memory_space<vmem>>, vector<1x8x4x128xf32>
    tpu.vector_store %arg11[%c0_125, %c0_126, %c0_127, %c0_128], %281 {strides = array<i32>} : memref<1x8x4x128xf32, #tpu.memory_space<vmem>>, vector<1x8x4x128xf32>,
    %283 = vector.shape_cast %269 : vector<8x16x32xf32> to vector<4x2x8x2x32xf32>
    %284 = vector.extract_strided_slice %283 {offsets = [0, 0, 0, 0, 0], sizes = [4, 1, 8, 1, 32], strides = [1, 1, 1, 1, 1]} : vector<4x2x8x2x32xf32> to vector<4x1x8x1x32xf32>
    %285 = vector.shape_cast %284 : vector<4x1x8x1x32xf32> to vector<4x8x32xf32>
    %286 = vector.extract_strided_slice %283 {offsets = [0, 0, 0, 1, 0], sizes = [4, 1, 8, 1, 32], strides = [1, 1, 1, 1, 1]} : vector<4x2x8x2x32xf32> to vector<4x1x8x1x32xf32>
    %287 = vector.shape_cast %286 : vector<4x1x8x1x32xf32> to vector<4x8x32xf32>
    %288 = arith.addf %285, %287 : vector<4x8x32xf32>
    %289 = vector.extract_strided_slice %283 {offsets = [0, 1, 0, 0, 0], sizes = [4, 1, 8, 1, 32], strides = [1, 1, 1, 1, 1]} : vector<4x2x8x2x32xf32> to vector<4x1x8x1x32xf32>
    %290 = vector.shape_cast %289 : vector<4x1x8x1x32xf32> to vector<4x8x32xf32>
    %291 = arith.addf %288, %290 : vector<4x8x32xf32>
    %292 = vector.extract_strided_slice %283 {offsets = [0, 1, 0, 1, 0], sizes = [4, 1, 8, 1, 32], strides = [1, 1, 1, 1, 1]} : vector<4x2x8x2x32xf32> to vector<4x1x8x1x32xf32>
    %293 = vector.shape_cast %292 : vector<4x1x8x1x32xf32> to vector<4x8x32xf32>
    %294 = arith.addf %291, %293 : vector<4x8x32xf32>
    %cst_129 = arith.constant 2.500000e-01 : f32
    %295 = vector.broadcast %cst_129 : f32 to vector<4x8x32xf32>
    %296 = arith.mulf %295, %294 : vector<4x8x32xf32>
    %297 = arith.addf %7, %296 : vector<4x8x32xf32>
    %298 = vector.shape_cast %297 : vector<4x8x32xf32> to vector<1x4x8x32xf32>
    %c0_130 = arith.constant 0 : index
    %c0_131 = arith.constant 0 : index
    %c0_132 = arith.constant 0 : index
    %c0_133 = arith.constant 0 : index
    %299 = vector.load %arg12[%c0_130, %c0_131, %c0_132, %c0_133] : memref<1x4x8x32xf32, #tpu.memory_space<vmem>>, vector<1x4x8x32xf32>
    tpu.vector_store %arg12[%c0_130, %c0_131, %c0_132, %c0_133], %298 {strides = array<i32>} : memref<1x4x8x32xf32, #tpu.memory_space<vmem>>, vector<1x4x8x32xf32>,
    %300 = vector.shape_cast %267 : vector<128x64xf32> to vector<8x16x64xf32>
    %301 = vector.shape_cast %300 : vector<8x16x64xf32> to vector<8x8x2x64xf32>
    %302 = vector.extract_strided_slice %301 {offsets = [0, 0, 0, 0], sizes = [8, 8, 1, 64], strides = [1, 1, 1, 1]} : vector<8x8x2x64xf32> to vector<8x8x1x64xf32>
    %303 = vector.shape_cast %302 : vector<8x8x1x64xf32> to vector<8x8x64xf32>
    %304 = vector.extract_strided_slice %301 {offsets = [0, 0, 1, 0], sizes = [8, 8, 1, 64], strides = [1, 1, 1, 1]} : vector<8x8x2x64xf32> to vector<8x8x1x64xf32>
    %305 = vector.shape_cast %304 : vector<8x8x1x64xf32> to vector<8x8x64xf32>
    %306 = tpu.concatenate %303, %305 in 2 : vector<8x8x64xf32>, vector<8x8x64xf32> -> vector<8x8x128xf32>
    %307 = vector.shape_cast %3 : vector<16x8x128xf32> to vector<8x2x8x128xf32>
    %308 = vector.shape_cast %306 : vector<8x8x128xf32> to vector<8x1x8x128xf32>
    %309 = vector.broadcast %308 : vector<8x1x8x128xf32> to vector<8x2x8x128xf32>
    %310 = arith.addf %307, %309 : vector<8x2x8x128xf32>
    %311 = vector.shape_cast %310 : vector<8x2x8x128xf32> to vector<1x16x8x128xf32>
    %c0_134 = arith.constant 0 : index
    %c0_135 = arith.constant 0 : index
    %c0_136 = arith.constant 0 : index
    %c0_137 = arith.constant 0 : index
    %312 = vector.load %arg10[%c0_134, %c0_135, %c0_136, %c0_137] : memref<1x16x8x128xf32, #tpu.memory_space<vmem>>, vector<1x16x8x128xf32>
    tpu.vector_store %arg10[%c0_134, %c0_135, %c0_136, %c0_137], %311 {strides = array<i32>} : memref<1x16x8x128xf32, #tpu.memory_space<vmem>>, vector<1x16x8x128xf32>,
    return
  }
  func.func @transform_0(%arg0: i32, %arg1: i32) -> (i32, i32, i32, i32) {
    %c2_i32 = arith.constant 2 : i32
    %0 = arith.muli %arg0, %c2_i32 : i32
    %1 = arith.addi %0, %arg1 : i32
    %c0_i32 = arith.constant 0 : i32
    %c0_i32_0 = arith.constant 0 : i32
    %c0_i32_1 = arith.constant 0 : i32
    %c0_i32_2 = arith.constant 0 : i32
    return %1, %c0_i32, %c0_i32_0, %c0_i32_1 : i32, i32, i32, i32
  }
  func.func @transform_1(%arg0: i32, %arg1: i32) -> (i32, i32, i32, i32) {
    %c0_i32 = arith.constant 0 : i32
    %c0_i32_0 = arith.constant 0 : i32
    %c0_i32_1 = arith.constant 0 : i32
    return %arg0, %arg1, %c0_i32, %c0_i32_0 : i32, i32, i32, i32
  }
  func.func @transform_2(%arg0: i32, %arg1: i32) -> (i32, i32, i32, i32) {
    %c0_i32 = arith.constant 0 : i32
    %c0_i32_0 = arith.constant 0 : i32
    %c0_i32_1 = arith.constant 0 : i32
    return %arg0, %arg1, %c0_i32, %c0_i32_0 : i32, i32, i32, i32
  }
  func.func @transform_3(%arg0: i32, %arg1: i32) -> (i32, i32, i32, i32) {
    %c0_i32 = arith.constant 0 : i32
    %c0_i32_0 = arith.constant 0 : i32
    %c0_i32_1 = arith.constant 0 : i32
    return %arg0, %arg1, %c0_i32, %c0_i32_0 : i32, i32, i32, i32
  }
  func.func @transform_4(%arg0: i32, %arg1: i32) -> (i32, i32, i32) {
    %c0_i32 = arith.constant 0 : i32
    %c0_i32_0 = arith.constant 0 : i32
    %c0_i32_1 = arith.constant 0 : i32
    %c0_i32_2 = arith.constant 0 : i32
    return %c0_i32, %c0_i32_0, %c0_i32_1 : i32, i32, i32
  }
  func.func @transform_5(%arg0: i32, %arg1: i32) -> (i32, i32, i32) {
    %c0_i32 = arith.constant 0 : i32
    %c0_i32_0 = arith.constant 0 : i32
    %c0_i32_1 = arith.constant 0 : i32
    %c0_i32_2 = arith.constant 0 : i32
    return %c0_i32, %c0_i32_0, %c0_i32_1 : i32, i32, i32
  }
  func.func @transform_6(%arg0: i32, %arg1: i32) -> (i32, i32, i32) {
    %c0_i32 = arith.constant 0 : i32
    %c0_i32_0 = arith.constant 0 : i32
    %c0_i32_1 = arith.constant 0 : i32
    %c0_i32_2 = arith.constant 0 : i32
    return %c0_i32, %c0_i32_0, %c0_i32_1 : i32, i32, i32
  }
  func.func @transform_7(%arg0: i32, %arg1: i32) -> (i32, i32) {
    %c0_i32 = arith.constant 0 : i32
    %c0_i32_0 = arith.constant 0 : i32
    %c0_i32_1 = arith.constant 0 : i32
    return %c0_i32, %c0_i32_0 : i32, i32
  }
  func.func @transform_8(%arg0: i32, %arg1: i32) -> (i32, i32, i32, i32) {
    %c0_i32 = arith.constant 0 : i32
    %c0_i32_0 = arith.constant 0 : i32
    %c0_i32_1 = arith.constant 0 : i32
    return %arg0, %arg1, %c0_i32, %c0_i32_0 : i32, i32, i32, i32
  }
  func.func @transform_9(%arg0: i32, %arg1: i32) -> (i32, i32, i32, i32) {
    %c0_i32 = arith.constant 0 : i32
    %c0_i32_0 = arith.constant 0 : i32
    %c0_i32_1 = arith.constant 0 : i32
    return %arg0, %arg1, %c0_i32, %c0_i32_0 : i32, i32, i32, i32
  }
  func.func @transform_10(%arg0: i32, %arg1: i32) -> (i32, i32, i32, i32) {
    %c0_i32 = arith.constant 0 : i32
    %c0_i32_0 = arith.constant 0 : i32
    %c0_i32_1 = arith.constant 0 : i32
    return %arg0, %arg1, %c0_i32, %c0_i32_0 : i32, i32, i32, i32
  }
}

</mosaic_0001>

<llo_original>
// kernel: iam_forward.1
$region0: #{iam_forward.1}
  #allocation0 [shape = 'u32[]', space=smem, size = 0x4, offset = 0x4, fixed_abs, tag = 'smem constant byte address 0x4 - core index']
  #allocation1 [shape = 'u32[144,128]{1,0:T(1,128)}', space=vmem, size = 0x12000, scoped, tag = 'internal scratch']
  %s0 = inlined_call_operand.vmem [shape: bf16[4,6,16,32], index: 0, kind: input, shape index: {}]
  %s1 = inlined_call_operand.vmem [shape: f32[2,32,8,128], index: 1, kind: input, shape index: {}]
  %s2 = inlined_call_operand.vmem [shape: f32[2,16,4,128], index: 2, kind: input, shape index: {}]
  %s3 = inlined_call_operand.vmem [shape: f32[2,8,8,32], index: 3, kind: input, shape index: {}]
  %s4 = inlined_call_operand.vmem [shape: bf16[27,32,32], index: 4, kind: input, shape index: {}]
  %s5 = inlined_call_operand.vmem [shape: f32[3,1,32], index: 5, kind: input, shape index: {}]
  %s6 = inlined_call_operand.vmem [shape: bf16[3,32,64], index: 6, kind: input, shape index: {}]
  %s7 = inlined_call_operand.vmem [shape: f32[1,64], index: 7, kind: input, shape index: {}]
  %s8 = inlined_call_operand.vmem [shape: f32[2,32,8,128], index: 8, kind: output, shape index: {0}]
  %s9 = inlined_call_operand.vmem [shape: f32[2,16,4,128], index: 9, kind: output, shape index: {1}]
  %s10 = inlined_call_operand.hbm [shape: f32[2,8,8,32], index: 10, kind: output, shape index: {2}]
  %11 = xla_tuple %s8, %s9, %s10
  %s12 = sld [smem:[#allocation0]]
  $region81: #{iam_forward.1} parent=0
    _
  %s14 = ssub.s32 1, %s12
  %s15 = scalar_select 0, %s14, %s12
  $region1: #{iam_forward.1} parent=0
    #allocation2 [shape = 'u8[32768]{0}', space=vmem, size = 0x8000, scoped, tag = 'output window, operand 2']
    #allocation3 [shape = 's32[2]{0}', space=sflag, size = 0x8, scoped, tag = 'scoped memory for iam_forward.1']
    %16 = vsyncpa [#allocation3], 0
    %s17 = scalar_lea.sflag [#allocation3], 1
    %18 = vsyncpa %s17, 0
    loop: start=0, step=1, limit=6
    $region2: #{iam_forward.1} parent=1 // loop_pre_header
      _
    $region3: #{iam_forward.1} parent=1 // loop_header
      %s20 = sphi 0, %s24
      %p21 = scmp.ge.s32.totalorder %s20, 6
      %s27 = sphi 0, %s39
      %s28 = sphi 0, %s35
      %s29 = sphi 0, %s27
      %s30 = sphi 0, %s28
      %s31 = sphi 0, %s29
      %s32 = sphi 0, %s30
      %s46 = sphi 0, %s48
      %s49 = sphi 0, %s46
      %s50 = sphi 0, %s49
      %s66 = sphi 0, %s50
      %s74 = sphi 0, %s76
      %s77 = sphi 0, %s74
      %s78 = sphi 0, %s77
      %s94 = sphi 0, %s78
      %s102 = sphi 0, %s104
      %s105 = sphi 0, %s102
      %s106 = sphi 0, %s105
      %s122 = sphi 0, %s106
      %s130 = sphi 0, %s132
      %s133 = sphi 0, %s130
      %s134 = sphi 0, %s133
      %s150 = sphi 0, %s134
      %s154 = sphi 0, %s154
      %s156 = sphi 0, %s154
      %s157 = sphi 0, %s156
      %s171 = sphi 0, %s157
      %s175 = sphi 0, %s175
      %s177 = sphi 0, %s175
      %s178 = sphi 0, %s177
      %s192 = sphi 0, %s178
      %s196 = sphi 0, %s196
      %s198 = sphi 0, %s196
      %s199 = sphi 0, %s198
      %s213 = sphi 0, %s199
      %s217 = sphi 0, %s217
      %s219 = sphi 0, %s217
      %s220 = sphi 0, %s219
      %s234 = sphi 0, %s220
      %s242 = sphi 0, %s244
      %s245 = sphi 0, %s242
      %s246 = sphi 0, %s245
      %s262 = sphi 0, %s246
      %s270 = sphi 0, %s272
      %s273 = sphi 0, %s270
      %s274 = sphi 0, %s273
      %s290 = sphi 0, %s274
      %s298 = sphi 0, %s300
      %s301 = sphi 0, %s298
      %s302 = sphi 0, %s301
      %s318 = sphi 0, %s302
    $region4: #{iam_forward.1} parent=1 // loop_header_branch
      %23 = sbr.rel (%p21) target = $region8
    $region5: #{iam_forward.1} parent=1 // loop_body
      %s25 = ssub.s32 %s20, 1
      %s26 = ssub.s32 %s20, 2
      %s33 = sadd.s32 1, %s28
      %p34 = scmp.ge.s32.totalorder %s33, 2
      %s35 = scalar_select %p34, 0, %s33
      %s36 = sadd.s32 1, %s27
      %s37 = scalar_select %p34, %s36, %s27
      %p38 = scmp.ge.s32.totalorder %s37, 2
      %s39 = scalar_select %p38, 0, %s37
      %s40 = smul.u32 %s27, 2
      %s41 = sadd.s32 %s40, %s28
      %s42 = smul.u32 %s39, 2
      %s43 = sadd.s32 %s42, %s35
      %s44 = ssub.s32 %s41, %s43
      %p45 = scmp.eq.s32.totalorder %s44, 0
      %s47 = sadd.s32 %s46, 1
      %s48 = scalar_select %p45, %s46, %s47
      %p51 = pneg %p45
      %p52 = scmp.eq.s32.totalorder %s20, 3
      %p53 = por %p51, %p52
      %p54 = scmp.ne.s32.totalorder %s46, %s49
      %p55 = scmp.eq.s32.totalorder %s20, 0
      %p56 = por %p54, %p55
      %p57 = scmp.ne.s32.totalorder %s46, %s49
      %p58 = scmp.eq.s32.totalorder %s25, 3
      %p59 = por %p57, %p58
      %p60 = scmp.ne.s32.totalorder %s49, %s50
      %p61 = scmp.eq.s32.totalorder %s25, 0
      %p62 = por %p60, %p61
      %p63 = scmp.ne.s32.totalorder %s49, %s50
      %p64 = scmp.eq.s32.totalorder %s26, 3
      %p65 = por %p63, %p64
      %p67 = scmp.ne.s32.totalorder %s50, %s66
      %p68 = scmp.eq.s32.totalorder %s26, 0
      %p69 = por %p67, %p68
      %s70 = ssub.s32 %s27, %s39
      %s71 = ssub.s32 %s28, %s35
      %s72 = sor.u32 %s70, %s71
      %p73 = scmp.eq.s32.totalorder %s72, 0
      %s75 = sadd.s32 %s74, 1
      %s76 = scalar_select %p73, %s74, %s75
      %p79 = pneg %p73
      %p80 = scmp.eq.s32.totalorder %s20, 3
      %p81 = por %p79, %p80
      %p82 = scmp.ne.s32.totalorder %s74, %s77
      %p83 = scmp.eq.s32.totalorder %s20, 0
      %p84 = por %p82, %p83
      %p85 = scmp.ne.s32.totalorder %s74, %s77
      %p86 = scmp.eq.s32.totalorder %s25, 3
      %p87 = por %p85, %p86
      %p88 = scmp.ne.s32.totalorder %s77, %s78
      %p89 = scmp.eq.s32.totalorder %s25, 0
      %p90 = por %p88, %p89
      %p91 = scmp.ne.s32.totalorder %s77, %s78
      %p92 = scmp.eq.s32.totalorder %s26, 3
      %p93 = por %p91, %p92
      %p95 = scmp.ne.s32.totalorder %s78, %s94
      %p96 = scmp.eq.s32.totalorder %s26, 0
      %p97 = por %p95, %p96
      %s98 = ssub.s32 %s27, %s39
      %s99 = ssub.s32 %s28, %s35
      %s100 = sor.u32 %s98, %s99
      %p101 = scmp.eq.s32.totalorder %s100, 0
      %s103 = sadd.s32 %s102, 1
      %s104 = scalar_select %p101, %s102, %s103
      %p107 = pneg %p101
      %p108 = scmp.eq.s32.totalorder %s20, 3
      %p109 = por %p107, %p108
      %p110 = scmp.ne.s32.totalorder %s102, %s105
      %p111 = scmp.eq.s32.totalorder %s20, 0
      %p112 = por %p110, %p111
      %p113 = scmp.ne.s32.totalorder %s102, %s105
      %p114 = scmp.eq.s32.totalorder %s25, 3
      %p115 = por %p113, %p114
      %p116 = scmp.ne.s32.totalorder %s105, %s106
      %p117 = scmp.eq.s32.totalorder %s25, 0
      %p118 = por %p116, %p117
      %p119 = scmp.ne.s32.totalorder %s105, %s106
      %p120 = scmp.eq.s32.totalorder %s26, 3
      %p121 = por %p119, %p120
      %p123 = scmp.ne.s32.totalorder %s106, %s122
      %p124 = scmp.eq.s32.totalorder %s26, 0
      %p125 = por %p123, %p124
      %s126 = ssub.s32 %s27, %s39
      %s127 = ssub.s32 %s28, %s35
      %s128 = sor.u32 %s126, %s127
      %p129 = scmp.eq.s32.totalorder %s128, 0
      %s131 = sadd.s32 %s130, 1
      %s132 = scalar_select %p129, %s130, %s131
      %p135 = pneg %p129
      %p136 = scmp.eq.s32.totalorder %s20, 3
      %p137 = por %p135, %p136
      %p138 = scmp.ne.s32.totalorder %s130, %s133
      %p139 = scmp.eq.s32.totalorder %s20, 0
      %p140 = por %p138, %p139
      %p141 = scmp.ne.s32.totalorder %s130, %s133
      %p142 = scmp.eq.s32.totalorder %s25, 3
      %p143 = por %p141, %p142
      %p144 = scmp.ne.s32.totalorder %s133, %s134
      %p145 = scmp.eq.s32.totalorder %s25, 0
      %p146 = por %p144, %p145
      %p147 = scmp.ne.s32.totalorder %s133, %s134
      %p148 = scmp.eq.s32.totalorder %s26, 3
      %p149 = por %p147, %p148
      %p151 = scmp.ne.s32.totalorder %s134, %s150
      %p152 = scmp.eq.s32.totalorder %s26, 0
      %p153 = por %p151, %p152
      %s155 = sadd.s32 %s154, 1
      %p158 = scmp.eq.s32.totalorder %s20, 3
      %p159 = scmp.ne.s32.totalorder %s154, %s156
      %p160 = scmp.eq.s32.totalorder %s20, 0
      %p161 = por %p159, %p160
      %p162 = scmp.ne.s32.totalorder %s154, %s156
      %p163 = scmp.eq.s32.totalorder %s25, 3
      %p164 = por %p162, %p163
      %p165 = scmp.ne.s32.totalorder %s156, %s157
      %p166 = scmp.eq.s32.totalorder %s25, 0
      %p167 = por %p165, %p166
      %p168 = scmp.ne.s32.totalorder %s156, %s157
      %p169 = scmp.eq.s32.totalorder %s26, 3
      %p170 = por %p168, %p169
      %p172 = scmp.ne.s32.totalorder %s157, %s171
      %p173 = scmp.eq.s32.totalorder %s26, 0
      %p174 = por %p172, %p173
      %s176 = sadd.s32 %s175, 1
      %p179 = scmp.eq.s32.totalorder %s20, 3
      %p180 = scmp.ne.s32.totalorder %s175, %s177
      %p181 = scmp.eq.s32.totalorder %s20, 0
      %p182 = por %p180, %p181
      %p183 = scmp.ne.s32.totalorder %s175, %s177
      %p184 = scmp.eq.s32.totalorder %s25, 3
      %p185 = por %p183, %p184
      %p186 = scmp.ne.s32.totalorder %s177, %s178
      %p187 = scmp.eq.s32.totalorder %s25, 0
      %p188 = por %p186, %p187
      %p189 = scmp.ne.s32.totalorder %s177, %s178
      %p190 = scmp.eq.s32.totalorder %s26, 3
      %p191 = por %p189, %p190
      %p193 = scmp.ne.s32.totalorder %s178, %s192
      %p194 = scmp.eq.s32.totalorder %s26, 0
      %p195 = por %p193, %p194
      %s197 = sadd.s32 %s196, 1
      %p200 = scmp.eq.s32.totalorder %s20, 3
      %p201 = scmp.ne.s32.totalorder %s196, %s198
      %p202 = scmp.eq.s32.totalorder %s20, 0
      %p203 = por %p201, %p202
      %p204 = scmp.ne.s32.totalorder %s196, %s198
      %p205 = scmp.eq.s32.totalorder %s25, 3
      %p206 = por %p204, %p205
      %p207 = scmp.ne.s32.totalorder %s198, %s199
      %p208 = scmp.eq.s32.totalorder %s25, 0
      %p209 = por %p207, %p208
      %p210 = scmp.ne.s32.totalorder %s198, %s199
      %p211 = scmp.eq.s32.totalorder %s26, 3
      %p212 = por %p210, %p211
      %p214 = scmp.ne.s32.totalorder %s199, %s213
      %p215 = scmp.eq.s32.totalorder %s26, 0
      %p216 = por %p214, %p215
      %s218 = sadd.s32 %s217, 1
      %p221 = scmp.eq.s32.totalorder %s20, 3
      %p222 = scmp.ne.s32.totalorder %s217, %s219
      %p223 = scmp.eq.s32.totalorder %s20, 0
      %p224 = por %p222, %p223
      %p225 = scmp.ne.s32.totalorder %s217, %s219
      %p226 = scmp.eq.s32.totalorder %s25, 3
      %p227 = por %p225, %p226
      %p228 = scmp.ne.s32.totalorder %s219, %s220
      %p229 = scmp.eq.s32.totalorder %s25, 0
      %p230 = por %p228, %p229
      %p231 = scmp.ne.s32.totalorder %s219, %s220
      %p232 = scmp.eq.s32.totalorder %s26, 3
      %p233 = por %p231, %p232
      %p235 = scmp.ne.s32.totalorder %s220, %s234
      %p236 = scmp.eq.s32.totalorder %s26, 0
      %p237 = por %p235, %p236
      %s238 = ssub.s32 %s27, %s39
      %s239 = ssub.s32 %s28, %s35
      %s240 = sor.u32 %s238, %s239
      %p241 = scmp.eq.s32.totalorder %s240, 0
      %s243 = sadd.s32 %s242, 1
      %s244 = scalar_select %p241, %s242, %s243
      %p247 = pneg %p241
      %p248 = scmp.eq.s32.totalorder %s20, 3
      %p249 = por %p247, %p248
      %p250 = scmp.ne.s32.totalorder %s242, %s245
      %p251 = scmp.eq.s32.totalorder %s20, 0
      %p252 = por %p250, %p251
      %p253 = scmp.ne.s32.totalorder %s242, %s245
      %p254 = scmp.eq.s32.totalorder %s25, 3
      %p255 = por %p253, %p254
      %p256 = scmp.ne.s32.totalorder %s245, %s246
      %p257 = scmp.eq.s32.totalorder %s25, 0
      %p258 = por %p256, %p257
      %p259 = scmp.ne.s32.totalorder %s245, %s246
      %p260 = scmp.eq.s32.totalorder %s26, 3
      %p261 = por %p259, %p260
      %p263 = scmp.ne.s32.totalorder %s246, %s262
      %p264 = scmp.eq.s32.totalorder %s26, 0
      %p265 = por %p263, %p264
      %s266 = ssub.s32 %s27, %s39
      %s267 = ssub.s32 %s28, %s35
      %s268 = sor.u32 %s266, %s267
      %p269 = scmp.eq.s32.totalorder %s268, 0
      %s271 = sadd.s32 %s270, 1
      %s272 = scalar_select %p269, %s270, %s271
      %p275 = pneg %p269
      %p276 = scmp.eq.s32.totalorder %s20, 3
      %p277 = por %p275, %p276
      %p278 = scmp.ne.s32.totalorder %s270, %s273
      %p279 = scmp.eq.s32.totalorder %s20, 0
      %p280 = por %p278, %p279
      %p281 = scmp.ne.s32.totalorder %s270, %s273
      %p282 = scmp.eq.s32.totalorder %s25, 3
      %p283 = por %p281, %p282
      %p284 = scmp.ne.s32.totalorder %s273, %s274
      %p285 = scmp.eq.s32.totalorder %s25, 0
      %p286 = por %p284, %p285
      %p287 = scmp.ne.s32.totalorder %s273, %s274
      %p288 = scmp.eq.s32.totalorder %s26, 3
      %p289 = por %p287, %p288
      %p291 = scmp.ne.s32.totalorder %s274, %s290
      %p292 = scmp.eq.s32.totalorder %s26, 0
      %p293 = por %p291, %p292
      %s294 = ssub.s32 %s27, %s39
      %s295 = ssub.s32 %s28, %s35
      %s296 = sor.u32 %s294, %s295
      %p297 = scmp.eq.s32.totalorder %s296, 0
      %s299 = sadd.s32 %s298, 1
      %s300 = scalar_select %p297, %s298, %s299
      %p303 = pneg %p297
      %p304 = scmp.eq.s32.totalorder %s20, 3
      %p305 = por %p303, %p304
      %p306 = scmp.ne.s32.totalorder %s298, %s301
      %p307 = scmp.eq.s32.totalorder %s20, 0
      %p308 = por %p306, %p307
      %p309 = scmp.ne.s32.totalorder %s298, %s301
      %p310 = scmp.eq.s32.totalorder %s25, 3
      %p311 = por %p309, %p310
      %p312 = scmp.ne.s32.totalorder %s301, %s302
      %p313 = scmp.eq.s32.totalorder %s25, 0
      %p314 = por %p312, %p313
      %p315 = scmp.ne.s32.totalorder %s301, %s302
      %p316 = scmp.eq.s32.totalorder %s26, 3
      %p317 = por %p315, %p316
      %p319 = scmp.ne.s32.totalorder %s302, %s318
      %p320 = scmp.eq.s32.totalorder %s26, 0
      %p321 = por %p319, %p320
      %p322 = scmp.le.s32.totalorder 1, %s20
      %p323 = scmp.lt.s32.totalorder %s20, 5
      %p324 = pnand %p322, %p323
      %p325 = pneg %p324
      // Predicated region
      $region9: #{iam_forward.1} parent=5 // pred_check
        _
      $region10: #{iam_forward.1} parent=5 // pred_check_branch
        %327 = sbr.rel (%p324) target = $region12
      $region11: #{iam_forward.1} parent=5 // pred_region
        %s328 = ssub.s32 %s20, 1
        // Predicated region
        $region13: #{iam_forward.1} parent=11 // pred_check
          %p329 = pneg %p167
        $region14: #{iam_forward.1} parent=11 // pred_check_branch
          %331 = sbr.rel (%p329) target = $region16
        $region15: #{iam_forward.1} parent=11 // pred_region
          _
        $region16: #{iam_forward.1} parent=11 // pred_fallthru
          _
        // Predicated region
        $region17: #{iam_forward.1} parent=11 // pred_check
          %p332 = pneg %p188
        $region18: #{iam_forward.1} parent=11 // pred_check_branch
          %334 = sbr.rel (%p332) target = $region20
        $region19: #{iam_forward.1} parent=11 // pred_region
          _
        $region20: #{iam_forward.1} parent=11 // pred_fallthru
          _
        // Predicated region
        $region21: #{iam_forward.1} parent=11 // pred_check
          %p335 = pneg %p209
        $region22: #{iam_forward.1} parent=11 // pred_check_branch
          %337 = sbr.rel (%p335) target = $region24
        $region23: #{iam_forward.1} parent=11 // pred_region
          _
        $region24: #{iam_forward.1} parent=11 // pred_fallthru
          _
        // Predicated region
        $region25: #{iam_forward.1} parent=11 // pred_check
          %p338 = pneg %p230
        $region26: #{iam_forward.1} parent=11 // pred_check_branch
          %340 = sbr.rel (%p338) target = $region28
        $region27: #{iam_forward.1} parent=11 // pred_region
          _
        $region28: #{iam_forward.1} parent=11 // pred_fallthru
          _
      $region12: #{iam_forward.1} parent=5 // pred_fallthru
        _
      %p341 = scmp.lt.s32.totalorder %s20, 4
      // Predicated region
      $region29: #{iam_forward.1} parent=5 // pred_check
        %p342 = pneg %p341
      $region30: #{iam_forward.1} parent=5 // pred_check_branch
        %344 = sbr.rel (%p342) target = $region32
      $region31: #{iam_forward.1} parent=5 // pred_region
        // Predicated region
        $region33: #{iam_forward.1} parent=31 // pred_check
          %p345 = pneg %p56
        $region34: #{iam_forward.1} parent=31 // pred_check_branch
          %347 = sbr.rel (%p345) target = $region36
        $region35: #{iam_forward.1} parent=31 // pred_region
          %s348 = smul.u32 %s27, 2
          %s349 = sadd.s32 %s348, %s28
          %p350 = scmp.lt.s32.totalorder %s349, 3
          %s351 = scalar_select %p350, %s349, 3
          %s352 = smul.addr %s351, 12
          %s353 = smul.addr %s352, 4
          %s354 = scalar_lea.vmem %s0, %s353
          %s355 = smul.u32 %s27, 2
          %s356 = sadd.s32 %s355, %s28
        $region36: #{iam_forward.1} parent=31 // pred_fallthru
          _
        // Predicated region
        $region37: #{iam_forward.1} parent=31 // pred_check
          %p357 = pneg %p84
        $region38: #{iam_forward.1} parent=31 // pred_check_branch
          %359 = sbr.rel (%p357) target = $region40
        $region39: #{iam_forward.1} parent=31 // pred_region
          %s360 = smul.u32 16, %s28
          %p361 = scmp.lt.s32.totalorder %s27, 1
          %s362 = scalar_select %p361, %s27, 1
          %p363 = scmp.lt.s32.totalorder %s360, 31
          %s364 = scalar_select %p363, %s360, 31
          %s365 = smul.addr %s362, 32
          %s366 = sadd.s32 %s364, %s365
          %s367 = smul.addr %s366, 8
          %s368 = scalar_lea.vmem %s1, %s367
          %s369 = smul.u32 16, %s28
        $region40: #{iam_forward.1} parent=31 // pred_fallthru
          _
        // Predicated region
        $region41: #{iam_forward.1} parent=31 // pred_check
          %p370 = pneg %p112
        $region42: #{iam_forward.1} parent=31 // pred_check_branch
          %372 = sbr.rel (%p370) target = $region44
        $region43: #{iam_forward.1} parent=31 // pred_region
          %s373 = smul.u32 8, %s28
          %p374 = scmp.lt.s32.totalorder %s27, 1
          %s375 = scalar_select %p374, %s27, 1
          %p376 = scmp.lt.s32.totalorder %s373, 15
          %s377 = scalar_select %p376, %s373, 15
          %s378 = smul.addr %s375, 16
          %s379 = sadd.s32 %s377, %s378
          %s380 = smul.addr %s379, 4
          %s381 = scalar_lea.vmem %s2, %s380
          %s382 = smul.u32 8, %s28
        $region44: #{iam_forward.1} parent=31 // pred_fallthru
          _
        // Predicated region
        $region45: #{iam_forward.1} parent=31 // pred_check
          %p383 = pneg %p140
        $region46: #{iam_forward.1} parent=31 // pred_check_branch
          %385 = sbr.rel (%p383) target = $region48
        $region47: #{iam_forward.1} parent=31 // pred_region
          %s386 = smul.u32 4, %s28
          %p387 = scmp.lt.s32.totalorder %s27, 1
          %s388 = scalar_select %p387, %s27, 1
          %p389 = scmp.lt.s32.totalorder %s386, 7
          %s390 = scalar_select %p389, %s386, 7
          %s391 = smul.addr %s388, 8
          %s392 = sadd.s32 %s390, %s391
          %s393 = smul.addr %s392, 8
          %s394 = scalar_lea.vmem %s3, %s393
          %s395 = smul.u32 4, %s28
        $region48: #{iam_forward.1} parent=31 // pred_fallthru
          _
      $region32: #{iam_forward.1} parent=5 // pred_fallthru
        _
      %p396 = scmp.le.s32.totalorder 1, %s20
      %p397 = scmp.lt.s32.totalorder %s20, 5
      %p398 = pnand %p396, %p397
      %p399 = pneg %p398
      // Predicated region
      $region49: #{iam_forward.1} parent=5 // pred_check
        _
      $region50: #{iam_forward.1} parent=5 // pred_check_branch
        %401 = sbr.rel (%p398) target = $region52
      $region51: #{iam_forward.1} parent=5 // pred_region
        %s402 = ssub.s32 %s20, 1
        %s403 = smul.u32 %s29, 2
        %s404 = sadd.s32 %s403, %s30
        %p405 = scmp.lt.s32.totalorder %s404, 3
        %s406 = scalar_select %p405, %s404, 3
        %s407 = smul.addr %s406, 12
        %s408 = smul.addr %s407, 4
        %s409 = scalar_lea.vmem %s0, %s408
        %p410 = pneg %p62
        %p411 = pneg %p59
        %s412 = smul.u32 16, %s30
        %p413 = scmp.lt.s32.totalorder %s29, 1
        %s414 = scalar_select %p413, %s29, 1
        %p415 = scmp.lt.s32.totalorder %s412, 31
        %s416 = scalar_select %p415, %s412, 31
        %s417 = smul.addr %s414, 32
        %s418 = sadd.s32 %s416, %s417
        %s419 = smul.addr %s418, 8
        %s420 = scalar_lea.vmem %s1, %s419
        %p421 = pneg %p90
        %p422 = pneg %p87
        %s423 = smul.u32 8, %s30
        %p424 = scmp.lt.s32.totalorder %s29, 1
        %s425 = scalar_select %p424, %s29, 1
        %p426 = scmp.lt.s32.totalorder %s423, 15
        %s427 = scalar_select %p426, %s423, 15
        %s428 = smul.addr %s425, 16
        %s429 = sadd.s32 %s427, %s428
        %s430 = smul.addr %s429, 4
        %s431 = scalar_lea.vmem %s2, %s430
        %p432 = pneg %p118
        %p433 = pneg %p115
        %s434 = smul.u32 4, %s30
        %p435 = scmp.lt.s32.totalorder %s29, 1
        %s436 = scalar_select %p435, %s29, 1
        %p437 = scmp.lt.s32.totalorder %s434, 7
        %s438 = scalar_select %p437, %s434, 7
        %s439 = smul.addr %s436, 8
        %s440 = sadd.s32 %s438, %s439
        %s441 = smul.addr %s440, 8
        %s442 = scalar_lea.vmem %s3, %s441
        %p443 = pneg %p146
        %p444 = pneg %p143
        %p445 = pneg %p167
        %p446 = pneg %p164
        %p447 = pneg %p188
        %p448 = pneg %p185
        %p449 = pneg %p209
        %p450 = pneg %p206
        %p451 = pneg %p230
        %p452 = pneg %p227
        %p453 = pneg %p258
        %p454 = pneg %p255
        %s455 = smul.u32 16, %s30
        %p456 = scmp.lt.s32.totalorder %s29, 1
        %s457 = scalar_select %p456, %s29, 1
        %p458 = scmp.lt.s32.totalorder %s455, 31
        %s459 = scalar_select %p458, %s455, 31
        %s460 = smul.addr %s457, 32
        %s461 = sadd.s32 %s459, %s460
        %s462 = smul.addr %s461, 8
        %s463 = scalar_lea.vmem %s8, %s462
        %p464 = pneg %p286
        %p465 = pneg %p283
        %s466 = smul.u32 8, %s30
        %p467 = scmp.lt.s32.totalorder %s29, 1
        %s468 = scalar_select %p467, %s29, 1
        %p469 = scmp.lt.s32.totalorder %s466, 15
        %s470 = scalar_select %p469, %s466, 15
        %s471 = smul.addr %s468, 16
        %s472 = sadd.s32 %s470, %s471
        %s473 = smul.addr %s472, 4
        %s474 = scalar_lea.vmem %s9, %s473
        %p475 = pneg %p314
        %p476 = pneg %p311
        %s477 = sand.u32 %s301, 1
        %s478 = scalar_lea.sflag [#allocation3], %s477
        %s479 = sand.u32 %s301, 1
        %s480 = smul.addr %s479, 32
        %s481 = scalar_lea.vmem [#allocation2], %s480
        %s482 = smul.u32 %s29, 2
        %s483 = sadd.s32 %s482, %s30
        %p484 = scmp.lt.s32.totalorder %s483, 3
        %s485 = scalar_select %p484, %s483, 3
        %s486 = smul.addr %s485, 12
        %s487 = smul.addr %s486, 4
        %s488 = scalar_lea.vmem %s0, %s487
        %s489 = smul.u32 %s29, 2
        %s490 = sadd.s32 %s489, %s30
        %s491 = smul.u32 16, %s30
        %p492 = scmp.lt.s32.totalorder %s29, 1
        %s493 = scalar_select %p492, %s29, 1
        %p494 = scmp.lt.s32.totalorder %s491, 31
        %s495 = scalar_select %p494, %s491, 31
        %s496 = smul.addr %s493, 32
        %s497 = sadd.s32 %s495, %s496
        %s498 = smul.addr %s497, 8
        %s499 = scalar_lea.vmem %s1, %s498
        %s500 = smul.u32 16, %s30
        %s501 = smul.u32 8, %s30
        %p502 = scmp.lt.s32.totalorder %s29, 1
        %s503 = scalar_select %p502, %s29, 1
        %p504 = scmp.lt.s32.totalorder %s501, 15
        %s505 = scalar_select %p504, %s501, 15
        %s506 = smul.addr %s503, 16
        %s507 = sadd.s32 %s505, %s506
        %s508 = smul.addr %s507, 4
        %s509 = scalar_lea.vmem %s2, %s508
        %s510 = smul.u32 8, %s30
        %s511 = smul.u32 4, %s30
        %p512 = scmp.lt.s32.totalorder %s29, 1
        %s513 = scalar_select %p512, %s29, 1
        %p514 = scmp.lt.s32.totalorder %s511, 7
        %s515 = scalar_select %p514, %s511, 7
        %s516 = smul.addr %s513, 8
        %s517 = sadd.s32 %s515, %s516
        %s518 = smul.addr %s517, 8
        %s519 = scalar_lea.vmem %s3, %s518
        %s520 = smul.u32 4, %s30
        %s521 = smul.u32 16, %s30
        %p522 = scmp.lt.s32.totalorder %s29, 1
        %s523 = scalar_select %p522, %s29, 1
        %p524 = scmp.lt.s32.totalorder %s521, 31
        %s525 = scalar_select %p524, %s521, 31
        %s526 = smul.addr %s523, 32
        %s527 = sadd.s32 %s525, %s526
        %s528 = smul.addr %s527, 8
        %s529 = scalar_lea.vmem %s8, %s528
        %s530 = smul.u32 16, %s30
        %s531 = smul.u32 8, %s30
        %p532 = scmp.lt.s32.totalorder %s29, 1
        %s533 = scalar_select %p532, %s29, 1
        %p534 = scmp.lt.s32.totalorder %s531, 15
        %s535 = scalar_select %p534, %s531, 15
        %s536 = smul.addr %s533, 16
        %s537 = sadd.s32 %s535, %s536
        %s538 = smul.addr %s537, 4
        %s539 = scalar_lea.vmem %s9, %s538
        %s540 = smul.u32 8, %s30
        %s541 = smul.u32 4, %s30
        %v543 = vld [vmem:[%s488] sm:$0xf]
        %v544 = vld [vmem:[%s488 + $0x4] sm:$0xf]
        %v545 = vld [vmem:[%s488 + $0x8] sm:$0xf]
        %v546 = vld [vmem:[%s488 + $0xc] sm:$0xf]
        %v547 = vld [vmem:[%s488 + $0x10] sm:$0xf]
        %v548 = vld [vmem:[%s488 + $0x14] sm:$0xf]
        %v549 = vld [vmem:[%s488 + $0x18] sm:$0xf]
        %v550 = vld [vmem:[%s488 + $0x1c] sm:$0xf]
        %v551 = vld [vmem:[%s488 + $0x20] sm:$0xf]
        %v552 = vld [vmem:[%s488 + $0x24] sm:$0xf]
        %v553 = vld [vmem:[%s488 + $0x28] sm:$0xf]
        %v554 = vld [vmem:[%s488 + $0x2c] sm:$0xf]
        %v555 = vld [vmem:[%s499] sm:$0xff]
        %v556 = vld [vmem:[%s499 + $0x8] sm:$0xff]
        %v557 = vld [vmem:[%s499 + $0x10] sm:$0xff]
        %v558 = vld [vmem:[%s499 + $0x18] sm:$0xff]
        %v559 = vld [vmem:[%s499 + $0x20] sm:$0xff]
        %v560 = vld [vmem:[%s499 + $0x28] sm:$0xff]
        %v561 = vld [vmem:[%s499 + $0x30] sm:$0xff]
        %v562 = vld [vmem:[%s499 + $0x38] sm:$0xff]
        %v563 = vld [vmem:[%s499 + $0x40] sm:$0xff]
        %v564 = vld [vmem:[%s499 + $0x48] sm:$0xff]
        %v565 = vld [vmem:[%s499 + $0x50] sm:$0xff]
        %v566 = vld [vmem:[%s499 + $0x58] sm:$0xff]
        %v567 = vld [vmem:[%s499 + $0x60] sm:$0xff]
        %v568 = vld [vmem:[%s499 + $0x68] sm:$0xff]
        %v569 = vld [vmem:[%s499 + $0x70] sm:$0xff]
        %v570 = vld [vmem:[%s499 + $0x78] sm:$0xff]
        %v571 = vld [vmem:[%s509] sm:$0xf]
        %v572 = vld [vmem:[%s509 + $0x4] sm:$0xf]
        %v573 = vld [vmem:[%s509 + $0x8] sm:$0xf]
        %v574 = vld [vmem:[%s509 + $0xc] sm:$0xf]
        %v575 = vld [vmem:[%s509 + $0x10] sm:$0xf]
        %v576 = vld [vmem:[%s509 + $0x14] sm:$0xf]
        %v577 = vld [vmem:[%s509 + $0x18] sm:$0xf]
        %v578 = vld [vmem:[%s509 + $0x1c] sm:$0xf]
        %v579 = vld [vmem:[%s519] sm:$0xff]
        %v580 = vld [vmem:[%s519 + $0x8] sm:$0xff]
        %v581 = vld [vmem:[%s519 + $0x10] sm:$0xff]
        %v582 = vld [vmem:[%s519 + $0x18] sm:$0xff]
        %v583 = vadd.f32 %v555, %v556
        %v584 = vadd.f32 %v557, %v558
        %v585 = vadd.f32 %v559, %v560
        %v586 = vadd.f32 %v561, %v562
        %v587 = vadd.f32 %v563, %v564
        %v588 = vadd.f32 %v565, %v566
        %v589 = vadd.f32 %v567, %v568
        %v590 = vadd.f32 %v569, %v570
        %599 = vrot.lane.b32.xlu0 %v583, 96
        %v600 = vpop.permute.xlu0 %599
        %601 = vrot.lane.b32.xlu0 %v584, 96
        %v602 = vpop.permute.xlu0 %601
        %603 = vrot.lane.b32.xlu0 %v585, 96
        %v604 = vpop.permute.xlu0 %603
        %605 = vrot.lane.b32.xlu0 %v586, 96
        %v606 = vpop.permute.xlu0 %605
        %607 = vrot.lane.b32.xlu0 %v587, 96
        %v608 = vpop.permute.xlu0 %607
        %609 = vrot.lane.b32.xlu0 %v588, 96
        %v610 = vpop.permute.xlu0 %609
        %611 = vrot.lane.b32.xlu0 %v589, 96
        %v612 = vpop.permute.xlu0 %611
        %613 = vrot.lane.b32.xlu0 %v590, 96
        %v614 = vpop.permute.xlu0 %613
        %v623 = vadd.f32 %v583, %v600
        %v624 = vadd.f32 %v584, %v602
        %v625 = vadd.f32 %v585, %v604
        %v626 = vadd.f32 %v586, %v606
        %v627 = vadd.f32 %v587, %v608
        %v628 = vadd.f32 %v588, %v610
        %v629 = vadd.f32 %v589, %v612
        %v630 = vadd.f32 %v590, %v614
        %v639 = vcombine.high %v623, %v623
        %v641 = vunpack.c.l.s4 1966171168
        %v642 = vunpack.c.0.s8 %v641
        %v643 = vlaneseq
        %v644 = vshrl.u32 %v643, 7
        %v645 = vsub.s32 %v642, %v644
        %v646 = vrot.slane %v623, %v645
        %v648 = vunpack.c.l.s4 1966171168
        %v649 = vunpack.c.0.s8 %v648
        %v650 = vlaneseq
        %v651 = vshrl.u32 %v650, 7
        %v652 = vsub.s32 %v649, %v651
        %v653 = vrot.slane %v639, %v652
        %v654 = vcombine.high %v646, %v646
        %v655 = vcombine.high %v653, %v653
        %v657 = vunpack.c.l.s4 1966171168
        %v658 = vunpack.c.0.s8 %v657
        %v659 = vlaneseq
        %v660 = vshrl.u32 %v659, 7
        %v661 = vsub.s32 %v658, %v660
        %v662 = vrot.slane %v646, %v661
        %v664 = vunpack.c.l.s4 1966171168
        %v665 = vunpack.c.0.s8 %v664
        %v666 = vlaneseq
        %v667 = vshrl.u32 %v666, 7
        %v668 = vsub.s32 %v665, %v667
        %v669 = vrot.slane %v653, %v668
        %v671 = vunpack.c.l.s4 1966171168
        %v672 = vunpack.c.0.s8 %v671
        %v673 = vlaneseq
        %v674 = vshrl.u32 %v673, 7
        %v675 = vsub.s32 %v672, %v674
        %v676 = vrot.slane %v654, %v675
        %v678 = vunpack.c.l.s4 1966171168
        %v679 = vunpack.c.0.s8 %v678
        %v680 = vlaneseq
        %v681 = vshrl.u32 %v680, 7
        %v682 = vsub.s32 %v679, %v681
        %v683 = vrot.slane %v655, %v682
        %v684 = vcombine.high %v662, %v662
        %v685 = vcombine.high %v669, %v669
        %v686 = vcombine.high %v676, %v676
        %v687 = vcombine.high %v683, %v683
        %v688 = vcombine.high %v624, %v624
        %v690 = vunpack.c.l.s4 1966171168
        %v691 = vunpack.c.0.s8 %v690
        %v692 = vlaneseq
        %v693 = vshrl.u32 %v692, 7
        %v694 = vsub.s32 %v691, %v693
        %v695 = vrot.slane %v624, %v694
        %v697 = vunpack.c.l.s4 1966171168
        %v698 = vunpack.c.0.s8 %v697
        %v699 = vlaneseq
        %v700 = vshrl.u32 %v699, 7
        %v701 = vsub.s32 %v698, %v700
        %v702 = vrot.slane %v688, %v701
        %v703 = vcombine.high %v695, %v695
        %v704 = vcombine.high %v702, %v702
        %v706 = vunpack.c.l.s4 1966171168
        %v707 = vunpack.c.0.s8 %v706
        %v708 = vlaneseq
        %v709 = vshrl.u32 %v708, 7
        %v710 = vsub.s32 %v707, %v709
        %v711 = vrot.slane %v695, %v710
        %v713 = vunpack.c.l.s4 1966171168
        %v714 = vunpack.c.0.s8 %v713
        %v715 = vlaneseq
        %v716 = vshrl.u32 %v715, 7
        %v717 = vsub.s32 %v714, %v716
        %v718 = vrot.slane %v702, %v717
        %v720 = vunpack.c.l.s4 1966171168
        %v721 = vunpack.c.0.s8 %v720
        %v722 = vlaneseq
        %v723 = vshrl.u32 %v722, 7
        %v724 = vsub.s32 %v721, %v723
        %v725 = vrot.slane %v703, %v724
        %v727 = vunpack.c.l.s4 1966171168
        %v728 = vunpack.c.0.s8 %v727
        %v729 = vlaneseq
        %v730 = vshrl.u32 %v729, 7
        %v731 = vsub.s32 %v728, %v730
        %v732 = vrot.slane %v704, %v731
        %v733 = vcombine.high %v711, %v711
        %v734 = vcombine.high %v718, %v718
        %v735 = vcombine.high %v725, %v725
        %v736 = vcombine.high %v732, %v732
        %v737 = vcombine.high %v625, %v625
        %v739 = vunpack.c.l.s4 1966171168
        %v740 = vunpack.c.0.s8 %v739
        %v741 = vlaneseq
        %v742 = vshrl.u32 %v741, 7
        %v743 = vsub.s32 %v740, %v742
        %v744 = vrot.slane %v625, %v743
        %v746 = vunpack.c.l.s4 1966171168
        %v747 = vunpack.c.0.s8 %v746
        %v748 = vlaneseq
        %v749 = vshrl.u32 %v748, 7
        %v750 = vsub.s32 %v747, %v749
        %v751 = vrot.slane %v737, %v750
        %v752 = vcombine.high %v744, %v744
        %v753 = vcombine.high %v751, %v751
        %v755 = vunpack.c.l.s4 1966171168
        %v756 = vunpack.c.0.s8 %v755
        %v757 = vlaneseq
        %v758 = vshrl.u32 %v757, 7
        %v759 = vsub.s32 %v756, %v758
        %v760 = vrot.slane %v744, %v759
        %v762 = vunpack.c.l.s4 1966171168
        %v763 = vunpack.c.0.s8 %v762
        %v764 = vlaneseq
        %v765 = vshrl.u32 %v764, 7
        %v766 = vsub.s32 %v763, %v765
        %v767 = vrot.slane %v751, %v766
        %v769 = vunpack.c.l.s4 1966171168
        %v770 = vunpack.c.0.s8 %v769
        %v771 = vlaneseq
        %v772 = vshrl.u32 %v771, 7
        %v773 = vsub.s32 %v770, %v772
        %v774 = vrot.slane %v752, %v773
        %v776 = vunpack.c.l.s4 1966171168
        %v777 = vunpack.c.0.s8 %v776
        %v778 = vlaneseq
        %v779 = vshrl.u32 %v778, 7
        %v780 = vsub.s32 %v777, %v779
        %v781 = vrot.slane %v753, %v780
        %v782 = vcombine.high %v760, %v760
        %v783 = vcombine.high %v767, %v767
        %v784 = vcombine.high %v774, %v774
        %v785 = vcombine.high %v781, %v781
        %v786 = vcombine.high %v626, %v626
        %v788 = vunpack.c.l.s4 1966171168
        %v789 = vunpack.c.0.s8 %v788
        %v790 = vlaneseq
        %v791 = vshrl.u32 %v790, 7
        %v792 = vsub.s32 %v789, %v791
        %v793 = vrot.slane %v626, %v792
        %v795 = vunpack.c.l.s4 1966171168
        %v796 = vunpack.c.0.s8 %v795
        %v797 = vlaneseq
        %v798 = vshrl.u32 %v797, 7
        %v799 = vsub.s32 %v796, %v798
        %v800 = vrot.slane %v786, %v799
        %v801 = vcombine.high %v793, %v793
        %v802 = vcombine.high %v800, %v800
        %v804 = vunpack.c.l.s4 1966171168
        %v805 = vunpack.c.0.s8 %v804
        %v806 = vlaneseq
        %v807 = vshrl.u32 %v806, 7
        %v808 = vsub.s32 %v805, %v807
        %v809 = vrot.slane %v793, %v808
        %v811 = vunpack.c.l.s4 1966171168
        %v812 = vunpack.c.0.s8 %v811
        %v813 = vlaneseq
        %v814 = vshrl.u32 %v813, 7
        %v815 = vsub.s32 %v812, %v814
        %v816 = vrot.slane %v800, %v815
        %v818 = vunpack.c.l.s4 1966171168
        %v819 = vunpack.c.0.s8 %v818
        %v820 = vlaneseq
        %v821 = vshrl.u32 %v820, 7
        %v822 = vsub.s32 %v819, %v821
        %v823 = vrot.slane %v801, %v822
        %v825 = vunpack.c.l.s4 1966171168
        %v826 = vunpack.c.0.s8 %v825
        %v827 = vlaneseq
        %v828 = vshrl.u32 %v827, 7
        %v829 = vsub.s32 %v826, %v828
        %v830 = vrot.slane %v802, %v829
        %v831 = vcombine.high %v809, %v809
        %v832 = vcombine.high %v816, %v816
        %v833 = vcombine.high %v823, %v823
        %v834 = vcombine.high %v830, %v830
        %v835 = vcombine.high %v627, %v627
        %v837 = vunpack.c.l.s4 1966171168
        %v838 = vunpack.c.0.s8 %v837
        %v839 = vlaneseq
        %v840 = vshrl.u32 %v839, 7
        %v841 = vsub.s32 %v838, %v840
        %v842 = vrot.slane %v627, %v841
        %v844 = vunpack.c.l.s4 1966171168
        %v845 = vunpack.c.0.s8 %v844
        %v846 = vlaneseq
        %v847 = vshrl.u32 %v846, 7
        %v848 = vsub.s32 %v845, %v847
        %v849 = vrot.slane %v835, %v848
        %v850 = vcombine.high %v842, %v842
        %v851 = vcombine.high %v849, %v849
        %v853 = vunpack.c.l.s4 1966171168
        %v854 = vunpack.c.0.s8 %v853
        %v855 = vlaneseq
        %v856 = vshrl.u32 %v855, 7
        %v857 = vsub.s32 %v854, %v856
        %v858 = vrot.slane %v842, %v857
        %v860 = vunpack.c.l.s4 1966171168
        %v861 = vunpack.c.0.s8 %v860
        %v862 = vlaneseq
        %v863 = vshrl.u32 %v862, 7
        %v864 = vsub.s32 %v861, %v863
        %v865 = vrot.slane %v849, %v864
        %v867 = vunpack.c.l.s4 1966171168
        %v868 = vunpack.c.0.s8 %v867
        %v869 = vlaneseq
        %v870 = vshrl.u32 %v869, 7
        %v871 = vsub.s32 %v868, %v870
        %v872 = vrot.slane %v850, %v871
        %v874 = vunpack.c.l.s4 1966171168
        %v875 = vunpack.c.0.s8 %v874
        %v876 = vlaneseq
        %v877 = vshrl.u32 %v876, 7
        %v878 = vsub.s32 %v875, %v877
        %v879 = vrot.slane %v851, %v878
        %v880 = vcombine.high %v858, %v858
        %v881 = vcombine.high %v865, %v865
        %v882 = vcombine.high %v872, %v872
        %v883 = vcombine.high %v879, %v879
        %v884 = vcombine.high %v628, %v628
        %v886 = vunpack.c.l.s4 1966171168
        %v887 = vunpack.c.0.s8 %v886
        %v888 = vlaneseq
        %v889 = vshrl.u32 %v888, 7
        %v890 = vsub.s32 %v887, %v889
        %v891 = vrot.slane %v628, %v890
        %v893 = vunpack.c.l.s4 1966171168
        %v894 = vunpack.c.0.s8 %v893
        %v895 = vlaneseq
        %v896 = vshrl.u32 %v895, 7
        %v897 = vsub.s32 %v894, %v896
        %v898 = vrot.slane %v884, %v897
        %v899 = vcombine.high %v891, %v891
        %v900 = vcombine.high %v898, %v898
        %v902 = vunpack.c.l.s4 1966171168
        %v903 = vunpack.c.0.s8 %v902
        %v904 = vlaneseq
        %v905 = vshrl.u32 %v904, 7
        %v906 = vsub.s32 %v903, %v905
        %v907 = vrot.slane %v891, %v906
        %v909 = vunpack.c.l.s4 1966171168
        %v910 = vunpack.c.0.s8 %v909
        %v911 = vlaneseq
        %v912 = vshrl.u32 %v911, 7
        %v913 = vsub.s32 %v910, %v912
        %v914 = vrot.slane %v898, %v913
        %v916 = vunpack.c.l.s4 1966171168
        %v917 = vunpack.c.0.s8 %v916
        %v918 = vlaneseq
        %v919 = vshrl.u32 %v918, 7
        %v920 = vsub.s32 %v917, %v919
        %v921 = vrot.slane %v899, %v920
        %v923 = vunpack.c.l.s4 1966171168
        %v924 = vunpack.c.0.s8 %v923
        %v925 = vlaneseq
        %v926 = vshrl.u32 %v925, 7
        %v927 = vsub.s32 %v924, %v926
        %v928 = vrot.slane %v900, %v927
        %v929 = vcombine.high %v907, %v907
        %v930 = vcombine.high %v914, %v914
        %v931 = vcombine.high %v921, %v921
        %v932 = vcombine.high %v928, %v928
        %v933 = vcombine.high %v629, %v629
        %v935 = vunpack.c.l.s4 1966171168
        %v936 = vunpack.c.0.s8 %v935
        %v937 = vlaneseq
        %v938 = vshrl.u32 %v937, 7
        %v939 = vsub.s32 %v936, %v938
        %v940 = vrot.slane %v629, %v939
        %v942 = vunpack.c.l.s4 1966171168
        %v943 = vunpack.c.0.s8 %v942
        %v944 = vlaneseq
        %v945 = vshrl.u32 %v944, 7
        %v946 = vsub.s32 %v943, %v945
        %v947 = vrot.slane %v933, %v946
        %v948 = vcombine.high %v940, %v940
        %v949 = vcombine.high %v947, %v947
        %v951 = vunpack.c.l.s4 1966171168
        %v952 = vunpack.c.0.s8 %v951
        %v953 = vlaneseq
        %v954 = vshrl.u32 %v953, 7
        %v955 = vsub.s32 %v952, %v954
        %v956 = vrot.slane %v940, %v955
        %v958 = vunpack.c.l.s4 1966171168
        %v959 = vunpack.c.0.s8 %v958
        %v960 = vlaneseq
        %v961 = vshrl.u32 %v960, 7
        %v962 = vsub.s32 %v959, %v961
        %v963 = vrot.slane %v947, %v962
        %v965 = vunpack.c.l.s4 1966171168
        %v966 = vunpack.c.0.s8 %v965
        %v967 = vlaneseq
        %v968 = vshrl.u32 %v967, 7
        %v969 = vsub.s32 %v966, %v968
        %v970 = vrot.slane %v948, %v969
        %v972 = vunpack.c.l.s4 1966171168
        %v973 = vunpack.c.0.s8 %v972
        %v974 = vlaneseq
        %v975 = vshrl.u32 %v974, 7
        %v976 = vsub.s32 %v973, %v975
        %v977 = vrot.slane %v949, %v976
        %v978 = vcombine.high %v956, %v956
        %v979 = vcombine.high %v963, %v963
        %v980 = vcombine.high %v970, %v970
        %v981 = vcombine.high %v977, %v977
        %v982 = vcombine.high %v630, %v630
        %v984 = vunpack.c.l.s4 1966171168
        %v985 = vunpack.c.0.s8 %v984
        %v986 = vlaneseq
        %v987 = vshrl.u32 %v986, 7
        %v988 = vsub.s32 %v985, %v987
        %v989 = vrot.slane %v630, %v988
        %v991 = vunpack.c.l.s4 1966171168
        %v992 = vunpack.c.0.s8 %v991
        %v993 = vlaneseq
        %v994 = vshrl.u32 %v993, 7
        %v995 = vsub.s32 %v992, %v994
        %v996 = vrot.slane %v982, %v995
        %v997 = vcombine.high %v989, %v989
        %v998 = vcombine.high %v996, %v996
        %v1000 = vunpack.c.l.s4 1966171168
        %v1001 = vunpack.c.0.s8 %v1000
        %v1002 = vlaneseq
        %v1003 = vshrl.u32 %v1002, 7
        %v1004 = vsub.s32 %v1001, %v1003
        %v1005 = vrot.slane %v989, %v1004
        %v1007 = vunpack.c.l.s4 1966171168
        %v1008 = vunpack.c.0.s8 %v1007
        %v1009 = vlaneseq
        %v1010 = vshrl.u32 %v1009, 7
        %v1011 = vsub.s32 %v1008, %v1010
        %v1012 = vrot.slane %v996, %v1011
        %v1014 = vunpack.c.l.s4 1966171168
        %v1015 = vunpack.c.0.s8 %v1014
        %v1016 = vlaneseq
        %v1017 = vshrl.u32 %v1016, 7
        %v1018 = vsub.s32 %v1015, %v1017
        %v1019 = vrot.slane %v997, %v1018
        %v1021 = vunpack.c.l.s4 1966171168
        %v1022 = vunpack.c.0.s8 %v1021
        %v1023 = vlaneseq
        %v1024 = vshrl.u32 %v1023, 7
        %v1025 = vsub.s32 %v1022, %v1024
        %v1026 = vrot.slane %v998, %v1025
        %v1027 = vcombine.high %v1005, %v1005
        %v1028 = vcombine.high %v1012, %v1012
        %v1029 = vcombine.high %v1019, %v1019
        %v1030 = vcombine.high %v1026, %v1026
        %v1095 = vlaneseq
        %v1096 = vshrl.u32 %v1095, 7
        %v1097 = vsub.s32 0, %v1096
        %v1098 = vrot.slane %v662, %v1097
        %v1099 = vlaneseq
        %v1100 = vshrl.u32 %v1099, 7
        %v1101 = vsub.s32 0, %v1100
        %v1102 = vrot.slane %v676, %v1101
        %v1103 = vlaneseq
        %v1104 = vshrl.u32 %v1103, 7
        %v1105 = vsub.s32 0, %v1104
        %v1106 = vrot.slane %v684, %v1105
        %v1107 = vlaneseq
        %v1108 = vshrl.u32 %v1107, 7
        %v1109 = vsub.s32 0, %v1108
        %v1110 = vrot.slane %v686, %v1109
        %v1111 = vlaneseq
        %v1112 = vshrl.u32 %v1111, 7
        %v1113 = vsub.s32 0, %v1112
        %v1114 = vrot.slane %v669, %v1113
        %v1115 = vlaneseq
        %v1116 = vshrl.u32 %v1115, 7
        %v1117 = vsub.s32 0, %v1116
        %v1118 = vrot.slane %v683, %v1117
        %v1119 = vlaneseq
        %v1120 = vshrl.u32 %v1119, 7
        %v1121 = vsub.s32 0, %v1120
        %v1122 = vrot.slane %v685, %v1121
        %v1123 = vlaneseq
        %v1124 = vshrl.u32 %v1123, 7
        %v1125 = vsub.s32 0, %v1124
        %v1126 = vrot.slane %v687, %v1125
        %v1127 = vlaneseq
        %v1128 = vshrl.u32 %v1127, 7
        %v1129 = vsub.s32 0, %v1128
        %v1130 = vrot.slane %v711, %v1129
        %v1131 = vlaneseq
        %v1132 = vshrl.u32 %v1131, 7
        %v1133 = vsub.s32 0, %v1132
        %v1134 = vrot.slane %v725, %v1133
        %v1135 = vlaneseq
        %v1136 = vshrl.u32 %v1135, 7
        %v1137 = vsub.s32 0, %v1136
        %v1138 = vrot.slane %v733, %v1137
        %v1139 = vlaneseq
        %v1140 = vshrl.u32 %v1139, 7
        %v1141 = vsub.s32 0, %v1140
        %v1142 = vrot.slane %v735, %v1141
        %v1143 = vlaneseq
        %v1144 = vshrl.u32 %v1143, 7
        %v1145 = vsub.s32 0, %v1144
        %v1146 = vrot.slane %v718, %v1145
        %v1147 = vlaneseq
        %v1148 = vshrl.u32 %v1147, 7
        %v1149 = vsub.s32 0, %v1148
        %v1150 = vrot.slane %v732, %v1149
        %v1151 = vlaneseq
        %v1152 = vshrl.u32 %v1151, 7
        %v1153 = vsub.s32 0, %v1152
        %v1154 = vrot.slane %v734, %v1153
        %v1155 = vlaneseq
        %v1156 = vshrl.u32 %v1155, 7
        %v1157 = vsub.s32 0, %v1156
        %v1158 = vrot.slane %v736, %v1157
        %v1159 = vlaneseq
        %v1160 = vshrl.u32 %v1159, 7
        %v1161 = vsub.s32 0, %v1160
        %v1162 = vrot.slane %v760, %v1161
        %v1163 = vlaneseq
        %v1164 = vshrl.u32 %v1163, 7
        %v1165 = vsub.s32 0, %v1164
        %v1166 = vrot.slane %v774, %v1165
        %v1167 = vlaneseq
        %v1168 = vshrl.u32 %v1167, 7
        %v1169 = vsub.s32 0, %v1168
        %v1170 = vrot.slane %v782, %v1169
        %v1171 = vlaneseq
        %v1172 = vshrl.u32 %v1171, 7
        %v1173 = vsub.s32 0, %v1172
        %v1174 = vrot.slane %v784, %v1173
        %v1175 = vlaneseq
        %v1176 = vshrl.u32 %v1175, 7
        %v1177 = vsub.s32 0, %v1176
        %v1178 = vrot.slane %v767, %v1177
        %v1179 = vlaneseq
        %v1180 = vshrl.u32 %v1179, 7
        %v1181 = vsub.s32 0, %v1180
        %v1182 = vrot.slane %v781, %v1181
        %v1183 = vlaneseq
        %v1184 = vshrl.u32 %v1183, 7
        %v1185 = vsub.s32 0, %v1184
        %v1186 = vrot.slane %v783, %v1185
        %v1187 = vlaneseq
        %v1188 = vshrl.u32 %v1187, 7
        %v1189 = vsub.s32 0, %v1188
        %v1190 = vrot.slane %v785, %v1189
        %v1191 = vlaneseq
        %v1192 = vshrl.u32 %v1191, 7
        %v1193 = vsub.s32 0, %v1192
        %v1194 = vrot.slane %v809, %v1193
        %v1195 = vlaneseq
        %v1196 = vshrl.u32 %v1195, 7
        %v1197 = vsub.s32 0, %v1196
        %v1198 = vrot.slane %v823, %v1197
        %v1199 = vlaneseq
        %v1200 = vshrl.u32 %v1199, 7
        %v1201 = vsub.s32 0, %v1200
        %v1202 = vrot.slane %v831, %v1201
        %v1203 = vlaneseq
        %v1204 = vshrl.u32 %v1203, 7
        %v1205 = vsub.s32 0, %v1204
        %v1206 = vrot.slane %v833, %v1205
        %v1207 = vlaneseq
        %v1208 = vshrl.u32 %v1207, 7
        %v1209 = vsub.s32 0, %v1208
        %v1210 = vrot.slane %v816, %v1209
        %v1211 = vlaneseq
        %v1212 = vshrl.u32 %v1211, 7
        %v1213 = vsub.s32 0, %v1212
        %v1214 = vrot.slane %v830, %v1213
        %v1215 = vlaneseq
        %v1216 = vshrl.u32 %v1215, 7
        %v1217 = vsub.s32 0, %v1216
        %v1218 = vrot.slane %v832, %v1217
        %v1219 = vlaneseq
        %v1220 = vshrl.u32 %v1219, 7
        %v1221 = vsub.s32 0, %v1220
        %v1222 = vrot.slane %v834, %v1221
        %v1223 = vlaneseq
        %v1224 = vshrl.u32 %v1223, 7
        %v1225 = vsub.s32 0, %v1224
        %v1226 = vrot.slane %v858, %v1225
        %v1227 = vlaneseq
        %v1228 = vshrl.u32 %v1227, 7
        %v1229 = vsub.s32 0, %v1228
        %v1230 = vrot.slane %v872, %v1229
        %v1231 = vlaneseq
        %v1232 = vshrl.u32 %v1231, 7
        %v1233 = vsub.s32 0, %v1232
        %v1234 = vrot.slane %v880, %v1233
        %v1235 = vlaneseq
        %v1236 = vshrl.u32 %v1235, 7
        %v1237 = vsub.s32 0, %v1236
        %v1238 = vrot.slane %v882, %v1237
        %v1239 = vlaneseq
        %v1240 = vshrl.u32 %v1239, 7
        %v1241 = vsub.s32 0, %v1240
        %v1242 = vrot.slane %v865, %v1241
        %v1243 = vlaneseq
        %v1244 = vshrl.u32 %v1243, 7
        %v1245 = vsub.s32 0, %v1244
        %v1246 = vrot.slane %v879, %v1245
        %v1247 = vlaneseq
        %v1248 = vshrl.u32 %v1247, 7
        %v1249 = vsub.s32 0, %v1248
        %v1250 = vrot.slane %v881, %v1249
        %v1251 = vlaneseq
        %v1252 = vshrl.u32 %v1251, 7
        %v1253 = vsub.s32 0, %v1252
        %v1254 = vrot.slane %v883, %v1253
        %v1255 = vlaneseq
        %v1256 = vshrl.u32 %v1255, 7
        %v1257 = vsub.s32 0, %v1256
        %v1258 = vrot.slane %v907, %v1257
        %v1259 = vlaneseq
        %v1260 = vshrl.u32 %v1259, 7
        %v1261 = vsub.s32 0, %v1260
        %v1262 = vrot.slane %v921, %v1261
        %v1263 = vlaneseq
        %v1264 = vshrl.u32 %v1263, 7
        %v1265 = vsub.s32 0, %v1264
        %v1266 = vrot.slane %v929, %v1265
        %v1267 = vlaneseq
        %v1268 = vshrl.u32 %v1267, 7
        %v1269 = vsub.s32 0, %v1268
        %v1270 = vrot.slane %v931, %v1269
        %v1271 = vlaneseq
        %v1272 = vshrl.u32 %v1271, 7
        %v1273 = vsub.s32 0, %v1272
        %v1274 = vrot.slane %v914, %v1273
        %v1275 = vlaneseq
        %v1276 = vshrl.u32 %v1275, 7
        %v1277 = vsub.s32 0, %v1276
        %v1278 = vrot.slane %v928, %v1277
        %v1279 = vlaneseq
        %v1280 = vshrl.u32 %v1279, 7
        %v1281 = vsub.s32 0, %v1280
        %v1282 = vrot.slane %v930, %v1281
        %v1283 = vlaneseq
        %v1284 = vshrl.u32 %v1283, 7
        %v1285 = vsub.s32 0, %v1284
        %v1286 = vrot.slane %v932, %v1285
        %v1287 = vlaneseq
        %v1288 = vshrl.u32 %v1287, 7
        %v1289 = vsub.s32 0, %v1288
        %v1290 = vrot.slane %v956, %v1289
        %v1291 = vlaneseq
        %v1292 = vshrl.u32 %v1291, 7
        %v1293 = vsub.s32 0, %v1292
        %v1294 = vrot.slane %v970, %v1293
        %v1295 = vlaneseq
        %v1296 = vshrl.u32 %v1295, 7
        %v1297 = vsub.s32 0, %v1296
        %v1298 = vrot.slane %v978, %v1297
        %v1299 = vlaneseq
        %v1300 = vshrl.u32 %v1299, 7
        %v1301 = vsub.s32 0, %v1300
        %v1302 = vrot.slane %v980, %v1301
        %v1303 = vlaneseq
        %v1304 = vshrl.u32 %v1303, 7
        %v1305 = vsub.s32 0, %v1304
        %v1306 = vrot.slane %v963, %v1305
        %v1307 = vlaneseq
        %v1308 = vshrl.u32 %v1307, 7
        %v1309 = vsub.s32 0, %v1308
        %v1310 = vrot.slane %v977, %v1309
        %v1311 = vlaneseq
        %v1312 = vshrl.u32 %v1311, 7
        %v1313 = vsub.s32 0, %v1312
        %v1314 = vrot.slane %v979, %v1313
        %v1315 = vlaneseq
        %v1316 = vshrl.u32 %v1315, 7
        %v1317 = vsub.s32 0, %v1316
        %v1318 = vrot.slane %v981, %v1317
        %v1319 = vlaneseq
        %v1320 = vshrl.u32 %v1319, 7
        %v1321 = vsub.s32 0, %v1320
        %v1322 = vrot.slane %v1005, %v1321
        %v1323 = vlaneseq
        %v1324 = vshrl.u32 %v1323, 7
        %v1325 = vsub.s32 0, %v1324
        %v1326 = vrot.slane %v1019, %v1325
        %v1327 = vlaneseq
        %v1328 = vshrl.u32 %v1327, 7
        %v1329 = vsub.s32 0, %v1328
        %v1330 = vrot.slane %v1027, %v1329
        %v1331 = vlaneseq
        %v1332 = vshrl.u32 %v1331, 7
        %v1333 = vsub.s32 0, %v1332
        %v1334 = vrot.slane %v1029, %v1333
        %v1335 = vlaneseq
        %v1336 = vshrl.u32 %v1335, 7
        %v1337 = vsub.s32 0, %v1336
        %v1338 = vrot.slane %v1012, %v1337
        %v1339 = vlaneseq
        %v1340 = vshrl.u32 %v1339, 7
        %v1341 = vsub.s32 0, %v1340
        %v1342 = vrot.slane %v1026, %v1341
        %v1343 = vlaneseq
        %v1344 = vshrl.u32 %v1343, 7
        %v1345 = vsub.s32 0, %v1344
        %v1346 = vrot.slane %v1028, %v1345
        %v1347 = vlaneseq
        %v1348 = vshrl.u32 %v1347, 7
        %v1349 = vsub.s32 0, %v1348
        %v1350 = vrot.slane %v1030, %v1349
        %1351 = vrot.lane.b32.xlu0 %v1098, 64
        %v1352 = vpop.permute.xlu0 %1351
        %1353 = vrot.lane.b32.xlu0 %v1102, 64
        %v1354 = vpop.permute.xlu0 %1353
        %1355 = vrot.lane.b32.xlu0 %v1106, 64
        %v1356 = vpop.permute.xlu0 %1355
        %1357 = vrot.lane.b32.xlu0 %v1110, 64
        %v1358 = vpop.permute.xlu0 %1357
        %1359 = vrot.lane.b32.xlu0 %v1114, 64
        %v1360 = vpop.permute.xlu0 %1359
        %1361 = vrot.lane.b32.xlu0 %v1118, 64
        %v1362 = vpop.permute.xlu0 %1361
        %1363 = vrot.lane.b32.xlu0 %v1122, 64
        %v1364 = vpop.permute.xlu0 %1363
        %1365 = vrot.lane.b32.xlu0 %v1126, 64
        %v1366 = vpop.permute.xlu0 %1365
        %1367 = vrot.lane.b32.xlu0 %v1130, 64
        %v1368 = vpop.permute.xlu0 %1367
        %1369 = vrot.lane.b32.xlu0 %v1134, 64
        %v1370 = vpop.permute.xlu0 %1369
        %1371 = vrot.lane.b32.xlu0 %v1138, 64
        %v1372 = vpop.permute.xlu0 %1371
        %1373 = vrot.lane.b32.xlu0 %v1142, 64
        %v1374 = vpop.permute.xlu0 %1373
        %1375 = vrot.lane.b32.xlu0 %v1146, 64
        %v1376 = vpop.permute.xlu0 %1375
        %1377 = vrot.lane.b32.xlu0 %v1150, 64
        %v1378 = vpop.permute.xlu0 %1377
        %1379 = vrot.lane.b32.xlu0 %v1154, 64
        %v1380 = vpop.permute.xlu0 %1379
        %1381 = vrot.lane.b32.xlu0 %v1158, 64
        %v1382 = vpop.permute.xlu0 %1381
        %1383 = vrot.lane.b32.xlu0 %v1162, 64
        %v1384 = vpop.permute.xlu0 %1383
        %1385 = vrot.lane.b32.xlu0 %v1166, 64
        %v1386 = vpop.permute.xlu0 %1385
        %1387 = vrot.lane.b32.xlu0 %v1170, 64
        %v1388 = vpop.permute.xlu0 %1387
        %1389 = vrot.lane.b32.xlu0 %v1174, 64
        %v1390 = vpop.permute.xlu0 %1389
        %1391 = vrot.lane.b32.xlu0 %v1178, 64
        %v1392 = vpop.permute.xlu0 %1391
        %1393 = vrot.lane.b32.xlu0 %v1182, 64
        %v1394 = vpop.permute.xlu0 %1393
        %1395 = vrot.lane.b32.xlu0 %v1186, 64
        %v1396 = vpop.permute.xlu0 %1395
        %1397 = vrot.lane.b32.xlu0 %v1190, 64
        %v1398 = vpop.permute.xlu0 %1397
        %1399 = vrot.lane.b32.xlu0 %v1194, 64
        %v1400 = vpop.permute.xlu0 %1399
        %1401 = vrot.lane.b32.xlu0 %v1198, 64
        %v1402 = vpop.permute.xlu0 %1401
        %1403 = vrot.lane.b32.xlu0 %v1202, 64
        %v1404 = vpop.permute.xlu0 %1403
        %1405 = vrot.lane.b32.xlu0 %v1206, 64
        %v1406 = vpop.permute.xlu0 %1405
        %1407 = vrot.lane.b32.xlu0 %v1210, 64
        %v1408 = vpop.permute.xlu0 %1407
        %1409 = vrot.lane.b32.xlu0 %v1214, 64
        %v1410 = vpop.permute.xlu0 %1409
        %1411 = vrot.lane.b32.xlu0 %v1218, 64
        %v1412 = vpop.permute.xlu0 %1411
        %1413 = vrot.lane.b32.xlu0 %v1222, 64
        %v1414 = vpop.permute.xlu0 %1413
        %1415 = vrot.lane.b32.xlu0 %v1226, 64
        %v1416 = vpop.permute.xlu0 %1415
        %1417 = vrot.lane.b32.xlu0 %v1230, 64
        %v1418 = vpop.permute.xlu0 %1417
        %1419 = vrot.lane.b32.xlu0 %v1234, 64
        %v1420 = vpop.permute.xlu0 %1419
        %1421 = vrot.lane.b32.xlu0 %v1238, 64
        %v1422 = vpop.permute.xlu0 %1421
        %1423 = vrot.lane.b32.xlu0 %v1242, 64
        %v1424 = vpop.permute.xlu0 %1423
        %1425 = vrot.lane.b32.xlu0 %v1246, 64
        %v1426 = vpop.permute.xlu0 %1425
        %1427 = vrot.lane.b32.xlu0 %v1250, 64
        %v1428 = vpop.permute.xlu0 %1427
        %1429 = vrot.lane.b32.xlu0 %v1254, 64
        %v1430 = vpop.permute.xlu0 %1429
        %1431 = vrot.lane.b32.xlu0 %v1258, 64
        %v1432 = vpop.permute.xlu0 %1431
        %1433 = vrot.lane.b32.xlu0 %v1262, 64
        %v1434 = vpop.permute.xlu0 %1433
        %1435 = vrot.lane.b32.xlu0 %v1266, 64
        %v1436 = vpop.permute.xlu0 %1435
        %1437 = vrot.lane.b32.xlu0 %v1270, 64
        %v1438 = vpop.permute.xlu0 %1437
        %1439 = vrot.lane.b32.xlu0 %v1274, 64
        %v1440 = vpop.permute.xlu0 %1439
        %1441 = vrot.lane.b32.xlu0 %v1278, 64
        %v1442 = vpop.permute.xlu0 %1441
        %1443 = vrot.lane.b32.xlu0 %v1282, 64
        %v1444 = vpop.permute.xlu0 %1443
        %1445 = vrot.lane.b32.xlu0 %v1286, 64
        %v1446 = vpop.permute.xlu0 %1445
        %1447 = vrot.lane.b32.xlu0 %v1290, 64
        %v1448 = vpop.permute.xlu0 %1447
        %1449 = vrot.lane.b32.xlu0 %v1294, 64
        %v1450 = vpop.permute.xlu0 %1449
        %1451 = vrot.lane.b32.xlu0 %v1298, 64
        %v1452 = vpop.permute.xlu0 %1451
        %1453 = vrot.lane.b32.xlu0 %v1302, 64
        %v1454 = vpop.permute.xlu0 %1453
        %1455 = vrot.lane.b32.xlu0 %v1306, 64
        %v1456 = vpop.permute.xlu0 %1455
        %1457 = vrot.lane.b32.xlu0 %v1310, 64
        %v1458 = vpop.permute.xlu0 %1457
        %1459 = vrot.lane.b32.xlu0 %v1314, 64
        %v1460 = vpop.permute.xlu0 %1459
        %1461 = vrot.lane.b32.xlu0 %v1318, 64
        %v1462 = vpop.permute.xlu0 %1461
        %1463 = vrot.lane.b32.xlu0 %v1322, 64
        %v1464 = vpop.permute.xlu0 %1463
        %1465 = vrot.lane.b32.xlu0 %v1326, 64
        %v1466 = vpop.permute.xlu0 %1465
        %1467 = vrot.lane.b32.xlu0 %v1330, 64
        %v1468 = vpop.permute.xlu0 %1467
        %1469 = vrot.lane.b32.xlu0 %v1334, 64
        %v1470 = vpop.permute.xlu0 %1469
        %1471 = vrot.lane.b32.xlu0 %v1338, 64
        %v1472 = vpop.permute.xlu0 %1471
        %1473 = vrot.lane.b32.xlu0 %v1342, 64
        %v1474 = vpop.permute.xlu0 %1473
        %1475 = vrot.lane.b32.xlu0 %v1346, 64
        %v1476 = vpop.permute.xlu0 %1475
        %1477 = vrot.lane.b32.xlu0 %v1350, 64
        %v1478 = vpop.permute.xlu0 %1477
        %vm1543 = vcmask 1040384
        %v1544 = vsel %vm1543, %v662, %v1352
        %v1545 = vsel %vm1543, %v676, %v1354
        %v1546 = vsel %vm1543, %v684, %v1356
        %v1547 = vsel %vm1543, %v686, %v1358
        %v1548 = vsel %vm1543, %v669, %v1360
        %v1549 = vsel %vm1543, %v683, %v1362
        %v1550 = vsel %vm1543, %v685, %v1364
        %v1551 = vsel %vm1543, %v687, %v1366
        %v1552 = vsel %vm1543, %v711, %v1368
        %v1553 = vsel %vm1543, %v725, %v1370
        %v1554 = vsel %vm1543, %v733, %v1372
        %v1555 = vsel %vm1543, %v735, %v1374
        %v1556 = vsel %vm1543, %v718, %v1376
        %v1557 = vsel %vm1543, %v732, %v1378
        %v1558 = vsel %vm1543, %v734, %v1380
        %v1559 = vsel %vm1543, %v736, %v1382
        %v1560 = vsel %vm1543, %v760, %v1384
        %v1561 = vsel %vm1543, %v774, %v1386
        %v1562 = vsel %vm1543, %v782, %v1388
        %v1563 = vsel %vm1543, %v784, %v1390
        %v1564 = vsel %vm1543, %v767, %v1392
        %v1565 = vsel %vm1543, %v781, %v1394
        %v1566 = vsel %vm1543, %v783, %v1396
        %v1567 = vsel %vm1543, %v785, %v1398
        %v1568 = vsel %vm1543, %v809, %v1400
        %v1569 = vsel %vm1543, %v823, %v1402
        %v1570 = vsel %vm1543, %v831, %v1404
        %v1571 = vsel %vm1543, %v833, %v1406
        %v1572 = vsel %vm1543, %v816, %v1408
        %v1573 = vsel %vm1543, %v830, %v1410
        %v1574 = vsel %vm1543, %v832, %v1412
        %v1575 = vsel %vm1543, %v834, %v1414
        %v1576 = vsel %vm1543, %v858, %v1416
        %v1577 = vsel %vm1543, %v872, %v1418
        %v1578 = vsel %vm1543, %v880, %v1420
        %v1579 = vsel %vm1543, %v882, %v1422
        %v1580 = vsel %vm1543, %v865, %v1424
        %v1581 = vsel %vm1543, %v879, %v1426
        %v1582 = vsel %vm1543, %v881, %v1428
        %v1583 = vsel %vm1543, %v883, %v1430
        %v1584 = vsel %vm1543, %v907, %v1432
        %v1585 = vsel %vm1543, %v921, %v1434
        %v1586 = vsel %vm1543, %v929, %v1436
        %v1587 = vsel %vm1543, %v931, %v1438
        %v1588 = vsel %vm1543, %v914, %v1440
        %v1589 = vsel %vm1543, %v928, %v1442
        %v1590 = vsel %vm1543, %v930, %v1444
        %v1591 = vsel %vm1543, %v932, %v1446
        %v1592 = vsel %vm1543, %v956, %v1448
        %v1593 = vsel %vm1543, %v970, %v1450
        %v1594 = vsel %vm1543, %v978, %v1452
        %v1595 = vsel %vm1543, %v980, %v1454
        %v1596 = vsel %vm1543, %v963, %v1456
        %v1597 = vsel %vm1543, %v977, %v1458
        %v1598 = vsel %vm1543, %v979, %v1460
        %v1599 = vsel %vm1543, %v981, %v1462
        %v1600 = vsel %vm1543, %v1005, %v1464
        %v1601 = vsel %vm1543, %v1019, %v1466
        %v1602 = vsel %vm1543, %v1027, %v1468
        %v1603 = vsel %vm1543, %v1029, %v1470
        %v1604 = vsel %vm1543, %v1012, %v1472
        %v1605 = vsel %vm1543, %v1026, %v1474
        %v1606 = vsel %vm1543, %v1028, %v1476
        %v1607 = vsel %vm1543, %v1030, %v1478
        %v1608 = vmul.f32 %v1544, 0.25
        %v1609 = vmul.f32 %v1545, 0.25
        %v1610 = vmul.f32 %v1546, 0.25
        %v1611 = vmul.f32 %v1547, 0.25
        %v1612 = vmul.f32 %v1548, 0.25
        %v1613 = vmul.f32 %v1549, 0.25
        %v1614 = vmul.f32 %v1550, 0.25
        %v1615 = vmul.f32 %v1551, 0.25
        %v1616 = vmul.f32 %v1552, 0.25
        %v1617 = vmul.f32 %v1553, 0.25
        %v1618 = vmul.f32 %v1554, 0.25
        %v1619 = vmul.f32 %v1555, 0.25
        %v1620 = vmul.f32 %v1556, 0.25
        %v1621 = vmul.f32 %v1557, 0.25
        %v1622 = vmul.f32 %v1558, 0.25
        %v1623 = vmul.f32 %v1559, 0.25
        %v1624 = vmul.f32 %v1560, 0.25
        %v1625 = vmul.f32 %v1561, 0.25
        %v1626 = vmul.f32 %v1562, 0.25
        %v1627 = vmul.f32 %v1563, 0.25
        %v1628 = vmul.f32 %v1564, 0.25
        %v1629 = vmul.f32 %v1565, 0.25
        %v1630 = vmul.f32 %v1566, 0.25
        %v1631 = vmul.f32 %v1567, 0.25
        %v1632 = vmul.f32 %v1568, 0.25
        %v1633 = vmul.f32 %v1569, 0.25
        %v1634 = vmul.f32 %v1570, 0.25
        %v1635 = vmul.f32 %v1571, 0.25
        %v1636 = vmul.f32 %v1572, 0.25
        %v1637 = vmul.f32 %v1573, 0.25
        %v1638 = vmul.f32 %v1574, 0.25
        %v1639 = vmul.f32 %v1575, 0.25
        %v1640 = vmul.f32 %v1576, 0.25
        %v1641 = vmul.f32 %v1577, 0.25
        %v1642 = vmul.f32 %v1578, 0.25
        %v1643 = vmul.f32 %v1579, 0.25
        %v1644 = vmul.f32 %v1580, 0.25
        %v1645 = vmul.f32 %v1581, 0.25
        %v1646 = vmul.f32 %v1582, 0.25
        %v1647 = vmul.f32 %v1583, 0.25
        %v1648 = vmul.f32 %v1584, 0.25
        %v1649 = vmul.f32 %v1585, 0.25
        %v1650 = vmul.f32 %v1586, 0.25
        %v1651 = vmul.f32 %v1587, 0.25
        %v1652 = vmul.f32 %v1588, 0.25
        %v1653 = vmul.f32 %v1589, 0.25
        %v1654 = vmul.f32 %v1590, 0.25
        %v1655 = vmul.f32 %v1591, 0.25
        %v1656 = vmul.f32 %v1592, 0.25
        %v1657 = vmul.f32 %v1593, 0.25
        %v1658 = vmul.f32 %v1594, 0.25
        %v1659 = vmul.f32 %v1595, 0.25
        %v1660 = vmul.f32 %v1596, 0.25
        %v1661 = vmul.f32 %v1597, 0.25
        %v1662 = vmul.f32 %v1598, 0.25
        %v1663 = vmul.f32 %v1599, 0.25
        %v1664 = vmul.f32 %v1600, 0.25
        %v1665 = vmul.f32 %v1601, 0.25
        %v1666 = vmul.f32 %v1602, 0.25
        %v1667 = vmul.f32 %v1603, 0.25
        %v1668 = vmul.f32 %v1604, 0.25
        %v1669 = vmul.f32 %v1605, 0.25
        %v1670 = vmul.f32 %v1606, 0.25
        %v1671 = vmul.f32 %v1607, 0.25
        %v1681 = vunpack.c.l.s4 1966171168
        %v1682 = vunpack.c.0.s8 %v1681
        %v1683 = vlaneseq
        %v1684 = vshrl.u32 %v1683, 7
        %v1685 = vsub.s32 %v1682, %v1684
        %v1686 = vrot.slane %v571, %v1685
        %v1687 = vcombine.high %v1686, %v1686
        %v1689 = vunpack.c.l.s4 1966171168
        %v1690 = vunpack.c.0.s8 %v1689
        %v1691 = vlaneseq
        %v1692 = vshrl.u32 %v1691, 7
        %v1693 = vsub.s32 %v1690, %v1692
        %v1694 = vrot.slane %v1686, %v1693
        %v1696 = vunpack.c.l.s4 1966171168
        %v1697 = vunpack.c.0.s8 %v1696
        %v1698 = vlaneseq
        %v1699 = vshrl.u32 %v1698, 7
        %v1700 = vsub.s32 %v1697, %v1699
        %v1701 = vrot.slane %v1687, %v1700
        %v1702 = vcombine.high %v1694, %v1694
        %v1703 = vcombine.high %v1701, %v1701
        %v1705 = vunpack.c.l.s4 1966171168
        %v1706 = vunpack.c.0.s8 %v1705
        %v1707 = vlaneseq
        %v1708 = vshrl.u32 %v1707, 7
        %v1709 = vsub.s32 %v1706, %v1708
        %v1710 = vrot.slane %v572, %v1709
        %v1711 = vcombine.high %v1710, %v1710
        %v1713 = vunpack.c.l.s4 1966171168
        %v1714 = vunpack.c.0.s8 %v1713
        %v1715 = vlaneseq
        %v1716 = vshrl.u32 %v1715, 7
        %v1717 = vsub.s32 %v1714, %v1716
        %v1718 = vrot.slane %v1710, %v1717
        %v1720 = vunpack.c.l.s4 1966171168
        %v1721 = vunpack.c.0.s8 %v1720
        %v1722 = vlaneseq
        %v1723 = vshrl.u32 %v1722, 7
        %v1724 = vsub.s32 %v1721, %v1723
        %v1725 = vrot.slane %v1711, %v1724
        %v1726 = vcombine.high %v1718, %v1718
        %v1727 = vcombine.high %v1725, %v1725
        %v1729 = vunpack.c.l.s4 1966171168
        %v1730 = vunpack.c.0.s8 %v1729
        %v1731 = vlaneseq
        %v1732 = vshrl.u32 %v1731, 7
        %v1733 = vsub.s32 %v1730, %v1732
        %v1734 = vrot.slane %v573, %v1733
        %v1735 = vcombine.high %v1734, %v1734
        %v1737 = vunpack.c.l.s4 1966171168
        %v1738 = vunpack.c.0.s8 %v1737
        %v1739 = vlaneseq
        %v1740 = vshrl.u32 %v1739, 7
        %v1741 = vsub.s32 %v1738, %v1740
        %v1742 = vrot.slane %v1734, %v1741
        %v1744 = vunpack.c.l.s4 1966171168
        %v1745 = vunpack.c.0.s8 %v1744
        %v1746 = vlaneseq
        %v1747 = vshrl.u32 %v1746, 7
        %v1748 = vsub.s32 %v1745, %v1747
        %v1749 = vrot.slane %v1735, %v1748
        %v1750 = vcombine.high %v1742, %v1742
        %v1751 = vcombine.high %v1749, %v1749
        %v1753 = vunpack.c.l.s4 1966171168
        %v1754 = vunpack.c.0.s8 %v1753
        %v1755 = vlaneseq
        %v1756 = vshrl.u32 %v1755, 7
        %v1757 = vsub.s32 %v1754, %v1756
        %v1758 = vrot.slane %v574, %v1757
        %v1759 = vcombine.high %v1758, %v1758
        %v1761 = vunpack.c.l.s4 1966171168
        %v1762 = vunpack.c.0.s8 %v1761
        %v1763 = vlaneseq
        %v1764 = vshrl.u32 %v1763, 7
        %v1765 = vsub.s32 %v1762, %v1764
        %v1766 = vrot.slane %v1758, %v1765
        %v1768 = vunpack.c.l.s4 1966171168
        %v1769 = vunpack.c.0.s8 %v1768
        %v1770 = vlaneseq
        %v1771 = vshrl.u32 %v1770, 7
        %v1772 = vsub.s32 %v1769, %v1771
        %v1773 = vrot.slane %v1759, %v1772
        %v1774 = vcombine.high %v1766, %v1766
        %v1775 = vcombine.high %v1773, %v1773
        %v1777 = vunpack.c.l.s4 1966171168
        %v1778 = vunpack.c.0.s8 %v1777
        %v1779 = vlaneseq
        %v1780 = vshrl.u32 %v1779, 7
        %v1781 = vsub.s32 %v1778, %v1780
        %v1782 = vrot.slane %v575, %v1781
        %v1783 = vcombine.high %v1782, %v1782
        %v1785 = vunpack.c.l.s4 1966171168
        %v1786 = vunpack.c.0.s8 %v1785
        %v1787 = vlaneseq
        %v1788 = vshrl.u32 %v1787, 7
        %v1789 = vsub.s32 %v1786, %v1788
        %v1790 = vrot.slane %v1782, %v1789
        %v1792 = vunpack.c.l.s4 1966171168
        %v1793 = vunpack.c.0.s8 %v1792
        %v1794 = vlaneseq
        %v1795 = vshrl.u32 %v1794, 7
        %v1796 = vsub.s32 %v1793, %v1795
        %v1797 = vrot.slane %v1783, %v1796
        %v1798 = vcombine.high %v1790, %v1790
        %v1799 = vcombine.high %v1797, %v1797
        %v1801 = vunpack.c.l.s4 1966171168
        %v1802 = vunpack.c.0.s8 %v1801
        %v1803 = vlaneseq
        %v1804 = vshrl.u32 %v1803, 7
        %v1805 = vsub.s32 %v1802, %v1804
        %v1806 = vrot.slane %v576, %v1805
        %v1807 = vcombine.high %v1806, %v1806
        %v1809 = vunpack.c.l.s4 1966171168
        %v1810 = vunpack.c.0.s8 %v1809
        %v1811 = vlaneseq
        %v1812 = vshrl.u32 %v1811, 7
        %v1813 = vsub.s32 %v1810, %v1812
        %v1814 = vrot.slane %v1806, %v1813
        %v1816 = vunpack.c.l.s4 1966171168
        %v1817 = vunpack.c.0.s8 %v1816
        %v1818 = vlaneseq
        %v1819 = vshrl.u32 %v1818, 7
        %v1820 = vsub.s32 %v1817, %v1819
        %v1821 = vrot.slane %v1807, %v1820
        %v1822 = vcombine.high %v1814, %v1814
        %v1823 = vcombine.high %v1821, %v1821
        %v1825 = vunpack.c.l.s4 1966171168
        %v1826 = vunpack.c.0.s8 %v1825
        %v1827 = vlaneseq
        %v1828 = vshrl.u32 %v1827, 7
        %v1829 = vsub.s32 %v1826, %v1828
        %v1830 = vrot.slane %v577, %v1829
        %v1831 = vcombine.high %v1830, %v1830
        %v1833 = vunpack.c.l.s4 1966171168
        %v1834 = vunpack.c.0.s8 %v1833
        %v1835 = vlaneseq
        %v1836 = vshrl.u32 %v1835, 7
        %v1837 = vsub.s32 %v1834, %v1836
        %v1838 = vrot.slane %v1830, %v1837
        %v1840 = vunpack.c.l.s4 1966171168
        %v1841 = vunpack.c.0.s8 %v1840
        %v1842 = vlaneseq
        %v1843 = vshrl.u32 %v1842, 7
        %v1844 = vsub.s32 %v1841, %v1843
        %v1845 = vrot.slane %v1831, %v1844
        %v1846 = vcombine.high %v1838, %v1838
        %v1847 = vcombine.high %v1845, %v1845
        %v1849 = vunpack.c.l.s4 1966171168
        %v1850 = vunpack.c.0.s8 %v1849
        %v1851 = vlaneseq
        %v1852 = vshrl.u32 %v1851, 7
        %v1853 = vsub.s32 %v1850, %v1852
        %v1854 = vrot.slane %v578, %v1853
        %v1855 = vcombine.high %v1854, %v1854
        %v1857 = vunpack.c.l.s4 1966171168
        %v1858 = vunpack.c.0.s8 %v1857
        %v1859 = vlaneseq
        %v1860 = vshrl.u32 %v1859, 7
        %v1861 = vsub.s32 %v1858, %v1860
        %v1862 = vrot.slane %v1854, %v1861
        %v1864 = vunpack.c.l.s4 1966171168
        %v1865 = vunpack.c.0.s8 %v1864
        %v1866 = vlaneseq
        %v1867 = vshrl.u32 %v1866, 7
        %v1868 = vsub.s32 %v1865, %v1867
        %v1869 = vrot.slane %v1855, %v1868
        %v1870 = vcombine.high %v1862, %v1862
        %v1871 = vcombine.high %v1869, %v1869
        %v1904 = vlaneseq
        %v1905 = vshrl.u32 %v1904, 7
        %v1906 = vsub.s32 0, %v1905
        %v1907 = vrot.slane %v1694, %v1906
        %v1908 = vlaneseq
        %v1909 = vshrl.u32 %v1908, 7
        %v1910 = vsub.s32 0, %v1909
        %v1911 = vrot.slane %v1701, %v1910
        %v1912 = vlaneseq
        %v1913 = vshrl.u32 %v1912, 7
        %v1914 = vsub.s32 0, %v1913
        %v1915 = vrot.slane %v1702, %v1914
        %v1916 = vlaneseq
        %v1917 = vshrl.u32 %v1916, 7
        %v1918 = vsub.s32 0, %v1917
        %v1919 = vrot.slane %v1703, %v1918
        %v1920 = vlaneseq
        %v1921 = vshrl.u32 %v1920, 7
        %v1922 = vsub.s32 0, %v1921
        %v1923 = vrot.slane %v1718, %v1922
        %v1924 = vlaneseq
        %v1925 = vshrl.u32 %v1924, 7
        %v1926 = vsub.s32 0, %v1925
        %v1927 = vrot.slane %v1725, %v1926
        %v1928 = vlaneseq
        %v1929 = vshrl.u32 %v1928, 7
        %v1930 = vsub.s32 0, %v1929
        %v1931 = vrot.slane %v1726, %v1930
        %v1932 = vlaneseq
        %v1933 = vshrl.u32 %v1932, 7
        %v1934 = vsub.s32 0, %v1933
        %v1935 = vrot.slane %v1727, %v1934
        %v1936 = vlaneseq
        %v1937 = vshrl.u32 %v1936, 7
        %v1938 = vsub.s32 0, %v1937
        %v1939 = vrot.slane %v1742, %v1938
        %v1940 = vlaneseq
        %v1941 = vshrl.u32 %v1940, 7
        %v1942 = vsub.s32 0, %v1941
        %v1943 = vrot.slane %v1749, %v1942
        %v1944 = vlaneseq
        %v1945 = vshrl.u32 %v1944, 7
        %v1946 = vsub.s32 0, %v1945
        %v1947 = vrot.slane %v1750, %v1946
        %v1948 = vlaneseq
        %v1949 = vshrl.u32 %v1948, 7
        %v1950 = vsub.s32 0, %v1949
        %v1951 = vrot.slane %v1751, %v1950
        %v1952 = vlaneseq
        %v1953 = vshrl.u32 %v1952, 7
        %v1954 = vsub.s32 0, %v1953
        %v1955 = vrot.slane %v1766, %v1954
        %v1956 = vlaneseq
        %v1957 = vshrl.u32 %v1956, 7
        %v1958 = vsub.s32 0, %v1957
        %v1959 = vrot.slane %v1773, %v1958
        %v1960 = vlaneseq
        %v1961 = vshrl.u32 %v1960, 7
        %v1962 = vsub.s32 0, %v1961
        %v1963 = vrot.slane %v1774, %v1962
        %v1964 = vlaneseq
        %v1965 = vshrl.u32 %v1964, 7
        %v1966 = vsub.s32 0, %v1965
        %v1967 = vrot.slane %v1775, %v1966
        %v1968 = vlaneseq
        %v1969 = vshrl.u32 %v1968, 7
        %v1970 = vsub.s32 0, %v1969
        %v1971 = vrot.slane %v1790, %v1970
        %v1972 = vlaneseq
        %v1973 = vshrl.u32 %v1972, 7
        %v1974 = vsub.s32 0, %v1973
        %v1975 = vrot.slane %v1797, %v1974
        %v1976 = vlaneseq
        %v1977 = vshrl.u32 %v1976, 7
        %v1978 = vsub.s32 0, %v1977
        %v1979 = vrot.slane %v1798, %v1978
        %v1980 = vlaneseq
        %v1981 = vshrl.u32 %v1980, 7
        %v1982 = vsub.s32 0, %v1981
        %v1983 = vrot.slane %v1799, %v1982
        %v1984 = vlaneseq
        %v1985 = vshrl.u32 %v1984, 7
        %v1986 = vsub.s32 0, %v1985
        %v1987 = vrot.slane %v1814, %v1986
        %v1988 = vlaneseq
        %v1989 = vshrl.u32 %v1988, 7
        %v1990 = vsub.s32 0, %v1989
        %v1991 = vrot.slane %v1821, %v1990
        %v1992 = vlaneseq
        %v1993 = vshrl.u32 %v1992, 7
        %v1994 = vsub.s32 0, %v1993
        %v1995 = vrot.slane %v1822, %v1994
        %v1996 = vlaneseq
        %v1997 = vshrl.u32 %v1996, 7
        %v1998 = vsub.s32 0, %v1997
        %v1999 = vrot.slane %v1823, %v1998
        %v2000 = vlaneseq
        %v2001 = vshrl.u32 %v2000, 7
        %v2002 = vsub.s32 0, %v2001
        %v2003 = vrot.slane %v1838, %v2002
        %v2004 = vlaneseq
        %v2005 = vshrl.u32 %v2004, 7
        %v2006 = vsub.s32 0, %v2005
        %v2007 = vrot.slane %v1845, %v2006
        %v2008 = vlaneseq
        %v2009 = vshrl.u32 %v2008, 7
        %v2010 = vsub.s32 0, %v2009
        %v2011 = vrot.slane %v1846, %v2010
        %v2012 = vlaneseq
        %v2013 = vshrl.u32 %v2012, 7
        %v2014 = vsub.s32 0, %v2013
        %v2015 = vrot.slane %v1847, %v2014
        %v2016 = vlaneseq
        %v2017 = vshrl.u32 %v2016, 7
        %v2018 = vsub.s32 0, %v2017
        %v2019 = vrot.slane %v1862, %v2018
        %v2020 = vlaneseq
        %v2021 = vshrl.u32 %v2020, 7
        %v2022 = vsub.s32 0, %v2021
        %v2023 = vrot.slane %v1869, %v2022
        %v2024 = vlaneseq
        %v2025 = vshrl.u32 %v2024, 7
        %v2026 = vsub.s32 0, %v2025
        %v2027 = vrot.slane %v1870, %v2026
        %v2028 = vlaneseq
        %v2029 = vshrl.u32 %v2028, 7
        %v2030 = vsub.s32 0, %v2029
        %v2031 = vrot.slane %v1871, %v2030
        %2032 = vrot.lane.b32.xlu0 %v1907, 96
        %v2033 = vpop.permute.xlu0 %2032
        %2034 = vrot.lane.b32.xlu0 %v1911, 96
        %v2035 = vpop.permute.xlu0 %2034
        %2036 = vrot.lane.b32.xlu0 %v1915, 96
        %v2037 = vpop.permute.xlu0 %2036
        %2038 = vrot.lane.b32.xlu0 %v1919, 96
        %v2039 = vpop.permute.xlu0 %2038
        %2040 = vrot.lane.b32.xlu0 %v1923, 96
        %v2041 = vpop.permute.xlu0 %2040
        %2042 = vrot.lane.b32.xlu0 %v1927, 96
        %v2043 = vpop.permute.xlu0 %2042
        %2044 = vrot.lane.b32.xlu0 %v1931, 96
        %v2045 = vpop.permute.xlu0 %2044
        %2046 = vrot.lane.b32.xlu0 %v1935, 96
        %v2047 = vpop.permute.xlu0 %2046
        %2048 = vrot.lane.b32.xlu0 %v1939, 96
        %v2049 = vpop.permute.xlu0 %2048
        %2050 = vrot.lane.b32.xlu0 %v1943, 96
        %v2051 = vpop.permute.xlu0 %2050
        %2052 = vrot.lane.b32.xlu0 %v1947, 96
        %v2053 = vpop.permute.xlu0 %2052
        %2054 = vrot.lane.b32.xlu0 %v1951, 96
        %v2055 = vpop.permute.xlu0 %2054
        %2056 = vrot.lane.b32.xlu0 %v1955, 96
        %v2057 = vpop.permute.xlu0 %2056
        %2058 = vrot.lane.b32.xlu0 %v1959, 96
        %v2059 = vpop.permute.xlu0 %2058
        %2060 = vrot.lane.b32.xlu0 %v1963, 96
        %v2061 = vpop.permute.xlu0 %2060
        %2062 = vrot.lane.b32.xlu0 %v1967, 96
        %v2063 = vpop.permute.xlu0 %2062
        %2064 = vrot.lane.b32.xlu0 %v1971, 96
        %v2065 = vpop.permute.xlu0 %2064
        %2066 = vrot.lane.b32.xlu0 %v1975, 96
        %v2067 = vpop.permute.xlu0 %2066
        %2068 = vrot.lane.b32.xlu0 %v1979, 96
        %v2069 = vpop.permute.xlu0 %2068
        %2070 = vrot.lane.b32.xlu0 %v1983, 96
        %v2071 = vpop.permute.xlu0 %2070
        %2072 = vrot.lane.b32.xlu0 %v1987, 96
        %v2073 = vpop.permute.xlu0 %2072
        %2074 = vrot.lane.b32.xlu0 %v1991, 96
        %v2075 = vpop.permute.xlu0 %2074
        %2076 = vrot.lane.b32.xlu0 %v1995, 96
        %v2077 = vpop.permute.xlu0 %2076
        %2078 = vrot.lane.b32.xlu0 %v1999, 96
        %v2079 = vpop.permute.xlu0 %2078
        %2080 = vrot.lane.b32.xlu0 %v2003, 96
        %v2081 = vpop.permute.xlu0 %2080
        %2082 = vrot.lane.b32.xlu0 %v2007, 96
        %v2083 = vpop.permute.xlu0 %2082
        %2084 = vrot.lane.b32.xlu0 %v2011, 96
        %v2085 = vpop.permute.xlu0 %2084
        %2086 = vrot.lane.b32.xlu0 %v2015, 96
        %v2087 = vpop.permute.xlu0 %2086
        %2088 = vrot.lane.b32.xlu0 %v2019, 96
        %v2089 = vpop.permute.xlu0 %2088
        %2090 = vrot.lane.b32.xlu0 %v2023, 96
        %v2091 = vpop.permute.xlu0 %2090
        %2092 = vrot.lane.b32.xlu0 %v2027, 96
        %v2093 = vpop.permute.xlu0 %2092
        %2094 = vrot.lane.b32.xlu0 %v2031, 96
        %v2095 = vpop.permute.xlu0 %2094
        %2128 = vrot.lane.b32.xlu0 %v1907, 64
        %v2129 = vpop.permute.xlu0 %2128
        %2130 = vrot.lane.b32.xlu0 %v1911, 64
        %v2131 = vpop.permute.xlu0 %2130
        %2132 = vrot.lane.b32.xlu0 %v1915, 64
        %v2133 = vpop.permute.xlu0 %2132
        %2134 = vrot.lane.b32.xlu0 %v1919, 64
        %v2135 = vpop.permute.xlu0 %2134
        %2136 = vrot.lane.b32.xlu0 %v1923, 64
        %v2137 = vpop.permute.xlu0 %2136
        %2138 = vrot.lane.b32.xlu0 %v1927, 64
        %v2139 = vpop.permute.xlu0 %2138
        %2140 = vrot.lane.b32.xlu0 %v1931, 64
        %v2141 = vpop.permute.xlu0 %2140
        %2142 = vrot.lane.b32.xlu0 %v1935, 64
        %v2143 = vpop.permute.xlu0 %2142
        %2144 = vrot.lane.b32.xlu0 %v1939, 64
        %v2145 = vpop.permute.xlu0 %2144
        %2146 = vrot.lane.b32.xlu0 %v1943, 64
        %v2147 = vpop.permute.xlu0 %2146
        %2148 = vrot.lane.b32.xlu0 %v1947, 64
        %v2149 = vpop.permute.xlu0 %2148
        %2150 = vrot.lane.b32.xlu0 %v1951, 64
        %v2151 = vpop.permute.xlu0 %2150
        %2152 = vrot.lane.b32.xlu0 %v1955, 64
        %v2153 = vpop.permute.xlu0 %2152
        %2154 = vrot.lane.b32.xlu0 %v1959, 64
        %v2155 = vpop.permute.xlu0 %2154
        %2156 = vrot.lane.b32.xlu0 %v1963, 64
        %v2157 = vpop.permute.xlu0 %2156
        %2158 = vrot.lane.b32.xlu0 %v1967, 64
        %v2159 = vpop.permute.xlu0 %2158
        %2160 = vrot.lane.b32.xlu0 %v1971, 64
        %v2161 = vpop.permute.xlu0 %2160
        %2162 = vrot.lane.b32.xlu0 %v1975, 64
        %v2163 = vpop.permute.xlu0 %2162
        %2164 = vrot.lane.b32.xlu0 %v1979, 64
        %v2165 = vpop.permute.xlu0 %2164
        %2166 = vrot.lane.b32.xlu0 %v1983, 64
        %v2167 = vpop.permute.xlu0 %2166
        %2168 = vrot.lane.b32.xlu0 %v1987, 64
        %v2169 = vpop.permute.xlu0 %2168
        %2170 = vrot.lane.b32.xlu0 %v1991, 64
        %v2171 = vpop.permute.xlu0 %2170
        %2172 = vrot.lane.b32.xlu0 %v1995, 64
        %v2173 = vpop.permute.xlu0 %2172
        %2174 = vrot.lane.b32.xlu0 %v1999, 64
        %v2175 = vpop.permute.xlu0 %2174
        %2176 = vrot.lane.b32.xlu0 %v2003, 64
        %v2177 = vpop.permute.xlu0 %2176
        %2178 = vrot.lane.b32.xlu0 %v2007, 64
        %v2179 = vpop.permute.xlu0 %2178
        %2180 = vrot.lane.b32.xlu0 %v2011, 64
        %v2181 = vpop.permute.xlu0 %2180
        %2182 = vrot.lane.b32.xlu0 %v2015, 64
        %v2183 = vpop.permute.xlu0 %2182
        %2184 = vrot.lane.b32.xlu0 %v2019, 64
        %v2185 = vpop.permute.xlu0 %2184
        %2186 = vrot.lane.b32.xlu0 %v2023, 64
        %v2187 = vpop.permute.xlu0 %2186
        %2188 = vrot.lane.b32.xlu0 %v2027, 64
        %v2189 = vpop.permute.xlu0 %2188
        %2190 = vrot.lane.b32.xlu0 %v2031, 64
        %v2191 = vpop.permute.xlu0 %2190
        %2224 = vrot.lane.b32.xlu0 %v1907, 32
        %v2225 = vpop.permute.xlu0 %2224
        %2226 = vrot.lane.b32.xlu0 %v1911, 32
        %v2227 = vpop.permute.xlu0 %2226
        %2228 = vrot.lane.b32.xlu0 %v1915, 32
        %v2229 = vpop.permute.xlu0 %2228
        %2230 = vrot.lane.b32.xlu0 %v1919, 32
        %v2231 = vpop.permute.xlu0 %2230
        %2232 = vrot.lane.b32.xlu0 %v1923, 32
        %v2233 = vpop.permute.xlu0 %2232
        %2234 = vrot.lane.b32.xlu0 %v1927, 32
        %v2235 = vpop.permute.xlu0 %2234
        %2236 = vrot.lane.b32.xlu0 %v1931, 32
        %v2237 = vpop.permute.xlu0 %2236
        %2238 = vrot.lane.b32.xlu0 %v1935, 32
        %v2239 = vpop.permute.xlu0 %2238
        %2240 = vrot.lane.b32.xlu0 %v1939, 32
        %v2241 = vpop.permute.xlu0 %2240
        %2242 = vrot.lane.b32.xlu0 %v1943, 32
        %v2243 = vpop.permute.xlu0 %2242
        %2244 = vrot.lane.b32.xlu0 %v1947, 32
        %v2245 = vpop.permute.xlu0 %2244
        %2246 = vrot.lane.b32.xlu0 %v1951, 32
        %v2247 = vpop.permute.xlu0 %2246
        %2248 = vrot.lane.b32.xlu0 %v1955, 32
        %v2249 = vpop.permute.xlu0 %2248
        %2250 = vrot.lane.b32.xlu0 %v1959, 32
        %v2251 = vpop.permute.xlu0 %2250
        %2252 = vrot.lane.b32.xlu0 %v1963, 32
        %v2253 = vpop.permute.xlu0 %2252
        %2254 = vrot.lane.b32.xlu0 %v1967, 32
        %v2255 = vpop.permute.xlu0 %2254
        %2256 = vrot.lane.b32.xlu0 %v1971, 32
        %v2257 = vpop.permute.xlu0 %2256
        %2258 = vrot.lane.b32.xlu0 %v1975, 32
        %v2259 = vpop.permute.xlu0 %2258
        %2260 = vrot.lane.b32.xlu0 %v1979, 32
        %v2261 = vpop.permute.xlu0 %2260
        %2262 = vrot.lane.b32.xlu0 %v1983, 32
        %v2263 = vpop.permute.xlu0 %2262
        %2264 = vrot.lane.b32.xlu0 %v1987, 32
        %v2265 = vpop.permute.xlu0 %2264
        %2266 = vrot.lane.b32.xlu0 %v1991, 32
        %v2267 = vpop.permute.xlu0 %2266
        %2268 = vrot.lane.b32.xlu0 %v1995, 32
        %v2269 = vpop.permute.xlu0 %2268
        %2270 = vrot.lane.b32.xlu0 %v1999, 32
        %v2271 = vpop.permute.xlu0 %2270
        %2272 = vrot.lane.b32.xlu0 %v2003, 32
        %v2273 = vpop.permute.xlu0 %2272
        %2274 = vrot.lane.b32.xlu0 %v2007, 32
        %v2275 = vpop.permute.xlu0 %2274
        %2276 = vrot.lane.b32.xlu0 %v2011, 32
        %v2277 = vpop.permute.xlu0 %2276
        %2278 = vrot.lane.b32.xlu0 %v2015, 32
        %v2279 = vpop.permute.xlu0 %2278
        %2280 = vrot.lane.b32.xlu0 %v2019, 32
        %v2281 = vpop.permute.xlu0 %2280
        %2282 = vrot.lane.b32.xlu0 %v2023, 32
        %v2283 = vpop.permute.xlu0 %2282
        %2284 = vrot.lane.b32.xlu0 %v2027, 32
        %v2285 = vpop.permute.xlu0 %2284
        %2286 = vrot.lane.b32.xlu0 %v2031, 32
        %v2287 = vpop.permute.xlu0 %2286
        %v2320 = vsel %vm1543, %v1694, %v2033
        %v2321 = vsel %vm1543, %v1701, %v2035
        %v2322 = vsel %vm1543, %v1702, %v2037
        %v2323 = vsel %vm1543, %v1703, %v2039
        %v2324 = vsel %vm1543, %v1718, %v2041
        %v2325 = vsel %vm1543, %v1725, %v2043
        %v2326 = vsel %vm1543, %v1726, %v2045
        %v2327 = vsel %vm1543, %v1727, %v2047
        %v2328 = vsel %vm1543, %v1742, %v2049
        %v2329 = vsel %vm1543, %v1749, %v2051
        %v2330 = vsel %vm1543, %v1750, %v2053
        %v2331 = vsel %vm1543, %v1751, %v2055
        %v2332 = vsel %vm1543, %v1766, %v2057
        %v2333 = vsel %vm1543, %v1773, %v2059
        %v2334 = vsel %vm1543, %v1774, %v2061
        %v2335 = vsel %vm1543, %v1775, %v2063
        %v2336 = vsel %vm1543, %v1790, %v2065
        %v2337 = vsel %vm1543, %v1797, %v2067
        %v2338 = vsel %vm1543, %v1798, %v2069
        %v2339 = vsel %vm1543, %v1799, %v2071
        %v2340 = vsel %vm1543, %v1814, %v2073
        %v2341 = vsel %vm1543, %v1821, %v2075
        %v2342 = vsel %vm1543, %v1822, %v2077
        %v2343 = vsel %vm1543, %v1823, %v2079
        %v2344 = vsel %vm1543, %v1838, %v2081
        %v2345 = vsel %vm1543, %v1845, %v2083
        %v2346 = vsel %vm1543, %v1846, %v2085
        %v2347 = vsel %vm1543, %v1847, %v2087
        %v2348 = vsel %vm1543, %v1862, %v2089
        %v2349 = vsel %vm1543, %v1869, %v2091
        %v2350 = vsel %vm1543, %v1870, %v2093
        %v2351 = vsel %vm1543, %v1871, %v2095
        %vm2352 = vcmask 1041408
        %v2353 = vsel %vm2352, %v2320, %v2129
        %v2354 = vsel %vm2352, %v2321, %v2131
        %v2355 = vsel %vm2352, %v2322, %v2133
        %v2356 = vsel %vm2352, %v2323, %v2135
        %v2357 = vsel %vm2352, %v2324, %v2137
        %v2358 = vsel %vm2352, %v2325, %v2139
        %v2359 = vsel %vm2352, %v2326, %v2141
        %v2360 = vsel %vm2352, %v2327, %v2143
        %v2361 = vsel %vm2352, %v2328, %v2145
        %v2362 = vsel %vm2352, %v2329, %v2147
        %v2363 = vsel %vm2352, %v2330, %v2149
        %v2364 = vsel %vm2352, %v2331, %v2151
        %v2365 = vsel %vm2352, %v2332, %v2153
        %v2366 = vsel %vm2352, %v2333, %v2155
        %v2367 = vsel %vm2352, %v2334, %v2157
        %v2368 = vsel %vm2352, %v2335, %v2159
        %v2369 = vsel %vm2352, %v2336, %v2161
        %v2370 = vsel %vm2352, %v2337, %v2163
        %v2371 = vsel %vm2352, %v2338, %v2165
        %v2372 = vsel %vm2352, %v2339, %v2167
        %v2373 = vsel %vm2352, %v2340, %v2169
        %v2374 = vsel %vm2352, %v2341, %v2171
        %v2375 = vsel %vm2352, %v2342, %v2173
        %v2376 = vsel %vm2352, %v2343, %v2175
        %v2377 = vsel %vm2352, %v2344, %v2177
        %v2378 = vsel %vm2352, %v2345, %v2179
        %v2379 = vsel %vm2352, %v2346, %v2181
        %v2380 = vsel %vm2352, %v2347, %v2183
        %v2381 = vsel %vm2352, %v2348, %v2185
        %v2382 = vsel %vm2352, %v2349, %v2187
        %v2383 = vsel %vm2352, %v2350, %v2189
        %v2384 = vsel %vm2352, %v2351, %v2191
        %vm2385 = vcmask 1042432
        %v2386 = vsel %vm2385, %v2353, %v2225
        %v2387 = vsel %vm2385, %v2354, %v2227
        %v2388 = vsel %vm2385, %v2355, %v2229
        %v2389 = vsel %vm2385, %v2356, %v2231
        %v2390 = vsel %vm2385, %v2357, %v2233
        %v2391 = vsel %vm2385, %v2358, %v2235
        %v2392 = vsel %vm2385, %v2359, %v2237
        %v2393 = vsel %vm2385, %v2360, %v2239
        %v2394 = vsel %vm2385, %v2361, %v2241
        %v2395 = vsel %vm2385, %v2362, %v2243
        %v2396 = vsel %vm2385, %v2363, %v2245
        %v2397 = vsel %vm2385, %v2364, %v2247
        %v2398 = vsel %vm2385, %v2365, %v2249
        %v2399 = vsel %vm2385, %v2366, %v2251
        %v2400 = vsel %vm2385, %v2367, %v2253
        %v2401 = vsel %vm2385, %v2368, %v2255
        %v2402 = vsel %vm2385, %v2369, %v2257
        %v2403 = vsel %vm2385, %v2370, %v2259
        %v2404 = vsel %vm2385, %v2371, %v2261
        %v2405 = vsel %vm2385, %v2372, %v2263
        %v2406 = vsel %vm2385, %v2373, %v2265
        %v2407 = vsel %vm2385, %v2374, %v2267
        %v2408 = vsel %vm2385, %v2375, %v2269
        %v2409 = vsel %vm2385, %v2376, %v2271
        %v2410 = vsel %vm2385, %v2377, %v2273
        %v2411 = vsel %vm2385, %v2378, %v2275
        %v2412 = vsel %vm2385, %v2379, %v2277
        %v2413 = vsel %vm2385, %v2380, %v2279
        %v2414 = vsel %vm2385, %v2381, %v2281
        %v2415 = vsel %vm2385, %v2382, %v2283
        %v2416 = vsel %vm2385, %v2383, %v2285
        %v2417 = vsel %vm2385, %v2384, %v2287
        %v2422 = vcombine.high %v579, %v579
        %v2424 = vunpack.c.l.s4 1966171168
        %v2425 = vunpack.c.0.s8 %v2424
        %v2426 = vlaneseq
        %v2427 = vshrl.u32 %v2426, 7
        %v2428 = vsub.s32 %v2425, %v2427
        %v2429 = vrot.slane %v579, %v2428
        %v2431 = vunpack.c.l.s4 1966171168
        %v2432 = vunpack.c.0.s8 %v2431
        %v2433 = vlaneseq
        %v2434 = vshrl.u32 %v2433, 7
        %v2435 = vsub.s32 %v2432, %v2434
        %v2436 = vrot.slane %v2422, %v2435
        %v2437 = vcombine.high %v2429, %v2429
        %v2438 = vcombine.high %v2436, %v2436
        %v2440 = vunpack.c.l.s4 1966171168
        %v2441 = vunpack.c.0.s8 %v2440
        %v2442 = vlaneseq
        %v2443 = vshrl.u32 %v2442, 7
        %v2444 = vsub.s32 %v2441, %v2443
        %v2445 = vrot.slane %v2429, %v2444
        %v2447 = vunpack.c.l.s4 1966171168
        %v2448 = vunpack.c.0.s8 %v2447
        %v2449 = vlaneseq
        %v2450 = vshrl.u32 %v2449, 7
        %v2451 = vsub.s32 %v2448, %v2450
        %v2452 = vrot.slane %v2436, %v2451
        %v2454 = vunpack.c.l.s4 1966171168
        %v2455 = vunpack.c.0.s8 %v2454
        %v2456 = vlaneseq
        %v2457 = vshrl.u32 %v2456, 7
        %v2458 = vsub.s32 %v2455, %v2457
        %v2459 = vrot.slane %v2437, %v2458
        %v2461 = vunpack.c.l.s4 1966171168
        %v2462 = vunpack.c.0.s8 %v2461
        %v2463 = vlaneseq
        %v2464 = vshrl.u32 %v2463, 7
        %v2465 = vsub.s32 %v2462, %v2464
        %v2466 = vrot.slane %v2438, %v2465
        %v2467 = vcombine.high %v2445, %v2445
        %v2468 = vcombine.high %v2452, %v2452
        %v2469 = vcombine.high %v2459, %v2459
        %v2470 = vcombine.high %v2466, %v2466
        %v2471 = vcombine.high %v580, %v580
        %v2473 = vunpack.c.l.s4 1966171168
        %v2474 = vunpack.c.0.s8 %v2473
        %v2475 = vlaneseq
        %v2476 = vshrl.u32 %v2475, 7
        %v2477 = vsub.s32 %v2474, %v2476
        %v2478 = vrot.slane %v580, %v2477
        %v2480 = vunpack.c.l.s4 1966171168
        %v2481 = vunpack.c.0.s8 %v2480
        %v2482 = vlaneseq
        %v2483 = vshrl.u32 %v2482, 7
        %v2484 = vsub.s32 %v2481, %v2483
        %v2485 = vrot.slane %v2471, %v2484
        %v2486 = vcombine.high %v2478, %v2478
        %v2487 = vcombine.high %v2485, %v2485
        %v2489 = vunpack.c.l.s4 1966171168
        %v2490 = vunpack.c.0.s8 %v2489
        %v2491 = vlaneseq
        %v2492 = vshrl.u32 %v2491, 7
        %v2493 = vsub.s32 %v2490, %v2492
        %v2494 = vrot.slane %v2478, %v2493
        %v2496 = vunpack.c.l.s4 1966171168
        %v2497 = vunpack.c.0.s8 %v2496
        %v2498 = vlaneseq
        %v2499 = vshrl.u32 %v2498, 7
        %v2500 = vsub.s32 %v2497, %v2499
        %v2501 = vrot.slane %v2485, %v2500
        %v2503 = vunpack.c.l.s4 1966171168
        %v2504 = vunpack.c.0.s8 %v2503
        %v2505 = vlaneseq
        %v2506 = vshrl.u32 %v2505, 7
        %v2507 = vsub.s32 %v2504, %v2506
        %v2508 = vrot.slane %v2486, %v2507
        %v2510 = vunpack.c.l.s4 1966171168
        %v2511 = vunpack.c.0.s8 %v2510
        %v2512 = vlaneseq
        %v2513 = vshrl.u32 %v2512, 7
        %v2514 = vsub.s32 %v2511, %v2513
        %v2515 = vrot.slane %v2487, %v2514
        %v2516 = vcombine.high %v2494, %v2494
        %v2517 = vcombine.high %v2501, %v2501
        %v2518 = vcombine.high %v2508, %v2508
        %v2519 = vcombine.high %v2515, %v2515
        %v2520 = vcombine.high %v581, %v581
        %v2522 = vunpack.c.l.s4 1966171168
        %v2523 = vunpack.c.0.s8 %v2522
        %v2524 = vlaneseq
        %v2525 = vshrl.u32 %v2524, 7
        %v2526 = vsub.s32 %v2523, %v2525
        %v2527 = vrot.slane %v581, %v2526
        %v2529 = vunpack.c.l.s4 1966171168
        %v2530 = vunpack.c.0.s8 %v2529
        %v2531 = vlaneseq
        %v2532 = vshrl.u32 %v2531, 7
        %v2533 = vsub.s32 %v2530, %v2532
        %v2534 = vrot.slane %v2520, %v2533
        %v2535 = vcombine.high %v2527, %v2527
        %v2536 = vcombine.high %v2534, %v2534
        %v2538 = vunpack.c.l.s4 1966171168
        %v2539 = vunpack.c.0.s8 %v2538
        %v2540 = vlaneseq
        %v2541 = vshrl.u32 %v2540, 7
        %v2542 = vsub.s32 %v2539, %v2541
        %v2543 = vrot.slane %v2527, %v2542
        %v2545 = vunpack.c.l.s4 1966171168
        %v2546 = vunpack.c.0.s8 %v2545
        %v2547 = vlaneseq
        %v2548 = vshrl.u32 %v2547, 7
        %v2549 = vsub.s32 %v2546, %v2548
        %v2550 = vrot.slane %v2534, %v2549
        %v2552 = vunpack.c.l.s4 1966171168
        %v2553 = vunpack.c.0.s8 %v2552
        %v2554 = vlaneseq
        %v2555 = vshrl.u32 %v2554, 7
        %v2556 = vsub.s32 %v2553, %v2555
        %v2557 = vrot.slane %v2535, %v2556
        %v2559 = vunpack.c.l.s4 1966171168
        %v2560 = vunpack.c.0.s8 %v2559
        %v2561 = vlaneseq
        %v2562 = vshrl.u32 %v2561, 7
        %v2563 = vsub.s32 %v2560, %v2562
        %v2564 = vrot.slane %v2536, %v2563
        %v2565 = vcombine.high %v2543, %v2543
        %v2566 = vcombine.high %v2550, %v2550
        %v2567 = vcombine.high %v2557, %v2557
        %v2568 = vcombine.high %v2564, %v2564
        %v2569 = vcombine.high %v582, %v582
        %v2571 = vunpack.c.l.s4 1966171168
        %v2572 = vunpack.c.0.s8 %v2571
        %v2573 = vlaneseq
        %v2574 = vshrl.u32 %v2573, 7
        %v2575 = vsub.s32 %v2572, %v2574
        %v2576 = vrot.slane %v582, %v2575
        %v2578 = vunpack.c.l.s4 1966171168
        %v2579 = vunpack.c.0.s8 %v2578
        %v2580 = vlaneseq
        %v2581 = vshrl.u32 %v2580, 7
        %v2582 = vsub.s32 %v2579, %v2581
        %v2583 = vrot.slane %v2569, %v2582
        %v2584 = vcombine.high %v2576, %v2576
        %v2585 = vcombine.high %v2583, %v2583
        %v2587 = vunpack.c.l.s4 1966171168
        %v2588 = vunpack.c.0.s8 %v2587
        %v2589 = vlaneseq
        %v2590 = vshrl.u32 %v2589, 7
        %v2591 = vsub.s32 %v2588, %v2590
        %v2592 = vrot.slane %v2576, %v2591
        %v2594 = vunpack.c.l.s4 1966171168
        %v2595 = vunpack.c.0.s8 %v2594
        %v2596 = vlaneseq
        %v2597 = vshrl.u32 %v2596, 7
        %v2598 = vsub.s32 %v2595, %v2597
        %v2599 = vrot.slane %v2583, %v2598
        %v2601 = vunpack.c.l.s4 1966171168
        %v2602 = vunpack.c.0.s8 %v2601
        %v2603 = vlaneseq
        %v2604 = vshrl.u32 %v2603, 7
        %v2605 = vsub.s32 %v2602, %v2604
        %v2606 = vrot.slane %v2584, %v2605
        %v2608 = vunpack.c.l.s4 1966171168
        %v2609 = vunpack.c.0.s8 %v2608
        %v2610 = vlaneseq
        %v2611 = vshrl.u32 %v2610, 7
        %v2612 = vsub.s32 %v2609, %v2611
        %v2613 = vrot.slane %v2585, %v2612
        %v2614 = vcombine.high %v2592, %v2592
        %v2615 = vcombine.high %v2599, %v2599
        %v2616 = vcombine.high %v2606, %v2606
        %v2617 = vcombine.high %v2613, %v2613
        %v2650 = vlaneseq
        %v2651 = vshrl.u32 %v2650, 7
        %v2652 = vsub.s32 0, %v2651
        %v2653 = vrot.slane %v2445, %v2652
        %v2654 = vlaneseq
        %v2655 = vshrl.u32 %v2654, 7
        %v2656 = vsub.s32 0, %v2655
        %v2657 = vrot.slane %v2459, %v2656
        %v2658 = vlaneseq
        %v2659 = vshrl.u32 %v2658, 7
        %v2660 = vsub.s32 0, %v2659
        %v2661 = vrot.slane %v2467, %v2660
        %v2662 = vlaneseq
        %v2663 = vshrl.u32 %v2662, 7
        %v2664 = vsub.s32 0, %v2663
        %v2665 = vrot.slane %v2469, %v2664
        %v2666 = vlaneseq
        %v2667 = vshrl.u32 %v2666, 7
        %v2668 = vsub.s32 0, %v2667
        %v2669 = vrot.slane %v2452, %v2668
        %v2670 = vlaneseq
        %v2671 = vshrl.u32 %v2670, 7
        %v2672 = vsub.s32 0, %v2671
        %v2673 = vrot.slane %v2466, %v2672
        %v2674 = vlaneseq
        %v2675 = vshrl.u32 %v2674, 7
        %v2676 = vsub.s32 0, %v2675
        %v2677 = vrot.slane %v2468, %v2676
        %v2678 = vlaneseq
        %v2679 = vshrl.u32 %v2678, 7
        %v2680 = vsub.s32 0, %v2679
        %v2681 = vrot.slane %v2470, %v2680
        %v2682 = vlaneseq
        %v2683 = vshrl.u32 %v2682, 7
        %v2684 = vsub.s32 0, %v2683
        %v2685 = vrot.slane %v2494, %v2684
        %v2686 = vlaneseq
        %v2687 = vshrl.u32 %v2686, 7
        %v2688 = vsub.s32 0, %v2687
        %v2689 = vrot.slane %v2508, %v2688
        %v2690 = vlaneseq
        %v2691 = vshrl.u32 %v2690, 7
        %v2692 = vsub.s32 0, %v2691
        %v2693 = vrot.slane %v2516, %v2692
        %v2694 = vlaneseq
        %v2695 = vshrl.u32 %v2694, 7
        %v2696 = vsub.s32 0, %v2695
        %v2697 = vrot.slane %v2518, %v2696
        %v2698 = vlaneseq
        %v2699 = vshrl.u32 %v2698, 7
        %v2700 = vsub.s32 0, %v2699
        %v2701 = vrot.slane %v2501, %v2700
        %v2702 = vlaneseq
        %v2703 = vshrl.u32 %v2702, 7
        %v2704 = vsub.s32 0, %v2703
        %v2705 = vrot.slane %v2515, %v2704
        %v2706 = vlaneseq
        %v2707 = vshrl.u32 %v2706, 7
        %v2708 = vsub.s32 0, %v2707
        %v2709 = vrot.slane %v2517, %v2708
        %v2710 = vlaneseq
        %v2711 = vshrl.u32 %v2710, 7
        %v2712 = vsub.s32 0, %v2711
        %v2713 = vrot.slane %v2519, %v2712
        %v2714 = vlaneseq
        %v2715 = vshrl.u32 %v2714, 7
        %v2716 = vsub.s32 0, %v2715
        %v2717 = vrot.slane %v2543, %v2716
        %v2718 = vlaneseq
        %v2719 = vshrl.u32 %v2718, 7
        %v2720 = vsub.s32 0, %v2719
        %v2721 = vrot.slane %v2557, %v2720
        %v2722 = vlaneseq
        %v2723 = vshrl.u32 %v2722, 7
        %v2724 = vsub.s32 0, %v2723
        %v2725 = vrot.slane %v2565, %v2724
        %v2726 = vlaneseq
        %v2727 = vshrl.u32 %v2726, 7
        %v2728 = vsub.s32 0, %v2727
        %v2729 = vrot.slane %v2567, %v2728
        %v2730 = vlaneseq
        %v2731 = vshrl.u32 %v2730, 7
        %v2732 = vsub.s32 0, %v2731
        %v2733 = vrot.slane %v2550, %v2732
        %v2734 = vlaneseq
        %v2735 = vshrl.u32 %v2734, 7
        %v2736 = vsub.s32 0, %v2735
        %v2737 = vrot.slane %v2564, %v2736
        %v2738 = vlaneseq
        %v2739 = vshrl.u32 %v2738, 7
        %v2740 = vsub.s32 0, %v2739
        %v2741 = vrot.slane %v2566, %v2740
        %v2742 = vlaneseq
        %v2743 = vshrl.u32 %v2742, 7
        %v2744 = vsub.s32 0, %v2743
        %v2745 = vrot.slane %v2568, %v2744
        %v2746 = vlaneseq
        %v2747 = vshrl.u32 %v2746, 7
        %v2748 = vsub.s32 0, %v2747
        %v2749 = vrot.slane %v2592, %v2748
        %v2750 = vlaneseq
        %v2751 = vshrl.u32 %v2750, 7
        %v2752 = vsub.s32 0, %v2751
        %v2753 = vrot.slane %v2606, %v2752
        %v2754 = vlaneseq
        %v2755 = vshrl.u32 %v2754, 7
        %v2756 = vsub.s32 0, %v2755
        %v2757 = vrot.slane %v2614, %v2756
        %v2758 = vlaneseq
        %v2759 = vshrl.u32 %v2758, 7
        %v2760 = vsub.s32 0, %v2759
        %v2761 = vrot.slane %v2616, %v2760
        %v2762 = vlaneseq
        %v2763 = vshrl.u32 %v2762, 7
        %v2764 = vsub.s32 0, %v2763
        %v2765 = vrot.slane %v2599, %v2764
        %v2766 = vlaneseq
        %v2767 = vshrl.u32 %v2766, 7
        %v2768 = vsub.s32 0, %v2767
        %v2769 = vrot.slane %v2613, %v2768
        %v2770 = vlaneseq
        %v2771 = vshrl.u32 %v2770, 7
        %v2772 = vsub.s32 0, %v2771
        %v2773 = vrot.slane %v2615, %v2772
        %v2774 = vlaneseq
        %v2775 = vshrl.u32 %v2774, 7
        %v2776 = vsub.s32 0, %v2775
        %v2777 = vrot.slane %v2617, %v2776
        %v2810 = vsel %vm1543, %v2445, %v2653
        %v2811 = vsel %vm1543, %v2459, %v2657
        %v2812 = vsel %vm1543, %v2467, %v2661
        %v2813 = vsel %vm1543, %v2469, %v2665
        %v2814 = vsel %vm1543, %v2452, %v2669
        %v2815 = vsel %vm1543, %v2466, %v2673
        %v2816 = vsel %vm1543, %v2468, %v2677
        %v2817 = vsel %vm1543, %v2470, %v2681
        %v2818 = vsel %vm1543, %v2494, %v2685
        %v2819 = vsel %vm1543, %v2508, %v2689
        %v2820 = vsel %vm1543, %v2516, %v2693
        %v2821 = vsel %vm1543, %v2518, %v2697
        %v2822 = vsel %vm1543, %v2501, %v2701
        %v2823 = vsel %vm1543, %v2515, %v2705
        %v2824 = vsel %vm1543, %v2517, %v2709
        %v2825 = vsel %vm1543, %v2519, %v2713
        %v2826 = vsel %vm1543, %v2543, %v2717
        %v2827 = vsel %vm1543, %v2557, %v2721
        %v2828 = vsel %vm1543, %v2565, %v2725
        %v2829 = vsel %vm1543, %v2567, %v2729
        %v2830 = vsel %vm1543, %v2550, %v2733
        %v2831 = vsel %vm1543, %v2564, %v2737
        %v2832 = vsel %vm1543, %v2566, %v2741
        %v2833 = vsel %vm1543, %v2568, %v2745
        %v2834 = vsel %vm1543, %v2592, %v2749
        %v2835 = vsel %vm1543, %v2606, %v2753
        %v2836 = vsel %vm1543, %v2614, %v2757
        %v2837 = vsel %vm1543, %v2616, %v2761
        %v2838 = vsel %vm1543, %v2599, %v2765
        %v2839 = vsel %vm1543, %v2613, %v2769
        %v2840 = vsel %vm1543, %v2615, %v2773
        %v2841 = vsel %vm1543, %v2617, %v2777
        %v2906 = vcombine.low %v1608, %v1609
        %v2907 = vcombine.low %v1610, %v1611
        %v2909 = vunpack.c.l.s4 1983009808
        %v2910 = vunpack.c.0.s8 %v2909
        %v2911 = vlaneseq
        %v2912 = vshrl.u32 %v2911, 7
        %v2913 = vsub.s32 %v2910, %v2912
        %v2914 = vrot.slane %v2906, %v2913
        %v2916 = vunpack.c.l.s4 1983009808
        %v2917 = vunpack.c.0.s8 %v2916
        %v2918 = vlaneseq
        %v2919 = vshrl.u32 %v2918, 7
        %v2920 = vsub.s32 %v2917, %v2919
        %v2921 = vrot.slane %v2907, %v2920
        %v2922 = vcombine.low %v2914, %v2921
        %v2923 = vcombine.low %v1612, %v1613
        %v2924 = vcombine.low %v1614, %v1615
        %v2926 = vunpack.c.l.s4 1983009808
        %v2927 = vunpack.c.0.s8 %v2926
        %v2928 = vlaneseq
        %v2929 = vshrl.u32 %v2928, 7
        %v2930 = vsub.s32 %v2927, %v2929
        %v2931 = vrot.slane %v2923, %v2930
        %v2933 = vunpack.c.l.s4 1983009808
        %v2934 = vunpack.c.0.s8 %v2933
        %v2935 = vlaneseq
        %v2936 = vshrl.u32 %v2935, 7
        %v2937 = vsub.s32 %v2934, %v2936
        %v2938 = vrot.slane %v2924, %v2937
        %v2939 = vcombine.low %v2931, %v2938
        %v2940 = vcombine.low %v1616, %v1617
        %v2941 = vcombine.low %v1618, %v1619
        %v2943 = vunpack.c.l.s4 1983009808
        %v2944 = vunpack.c.0.s8 %v2943
        %v2945 = vlaneseq
        %v2946 = vshrl.u32 %v2945, 7
        %v2947 = vsub.s32 %v2944, %v2946
        %v2948 = vrot.slane %v2940, %v2947
        %v2950 = vunpack.c.l.s4 1983009808
        %v2951 = vunpack.c.0.s8 %v2950
        %v2952 = vlaneseq
        %v2953 = vshrl.u32 %v2952, 7
        %v2954 = vsub.s32 %v2951, %v2953
        %v2955 = vrot.slane %v2941, %v2954
        %v2956 = vcombine.low %v2948, %v2955
        %v2957 = vcombine.low %v1620, %v1621
        %v2958 = vcombine.low %v1622, %v1623
        %v2960 = vunpack.c.l.s4 1983009808
        %v2961 = vunpack.c.0.s8 %v2960
        %v2962 = vlaneseq
        %v2963 = vshrl.u32 %v2962, 7
        %v2964 = vsub.s32 %v2961, %v2963
        %v2965 = vrot.slane %v2957, %v2964
        %v2967 = vunpack.c.l.s4 1983009808
        %v2968 = vunpack.c.0.s8 %v2967
        %v2969 = vlaneseq
        %v2970 = vshrl.u32 %v2969, 7
        %v2971 = vsub.s32 %v2968, %v2970
        %v2972 = vrot.slane %v2958, %v2971
        %v2973 = vcombine.low %v2965, %v2972
        %v2974 = vcombine.low %v1624, %v1625
        %v2975 = vcombine.low %v1626, %v1627
        %v2977 = vunpack.c.l.s4 1983009808
        %v2978 = vunpack.c.0.s8 %v2977
        %v2979 = vlaneseq
        %v2980 = vshrl.u32 %v2979, 7
        %v2981 = vsub.s32 %v2978, %v2980
        %v2982 = vrot.slane %v2974, %v2981
        %v2984 = vunpack.c.l.s4 1983009808
        %v2985 = vunpack.c.0.s8 %v2984
        %v2986 = vlaneseq
        %v2987 = vshrl.u32 %v2986, 7
        %v2988 = vsub.s32 %v2985, %v2987
        %v2989 = vrot.slane %v2975, %v2988
        %v2990 = vcombine.low %v2982, %v2989
        %v2991 = vcombine.low %v1628, %v1629
        %v2992 = vcombine.low %v1630, %v1631
        %v2994 = vunpack.c.l.s4 1983009808
        %v2995 = vunpack.c.0.s8 %v2994
        %v2996 = vlaneseq
        %v2997 = vshrl.u32 %v2996, 7
        %v2998 = vsub.s32 %v2995, %v2997
        %v2999 = vrot.slane %v2991, %v2998
        %v3001 = vunpack.c.l.s4 1983009808
        %v3002 = vunpack.c.0.s8 %v3001
        %v3003 = vlaneseq
        %v3004 = vshrl.u32 %v3003, 7
        %v3005 = vsub.s32 %v3002, %v3004
        %v3006 = vrot.slane %v2992, %v3005
        %v3007 = vcombine.low %v2999, %v3006
        %v3008 = vcombine.low %v1632, %v1633
        %v3009 = vcombine.low %v1634, %v1635
        %v3011 = vunpack.c.l.s4 1983009808
        %v3012 = vunpack.c.0.s8 %v3011
        %v3013 = vlaneseq
        %v3014 = vshrl.u32 %v3013, 7
        %v3015 = vsub.s32 %v3012, %v3014
        %v3016 = vrot.slane %v3008, %v3015
        %v3018 = vunpack.c.l.s4 1983009808
        %v3019 = vunpack.c.0.s8 %v3018
        %v3020 = vlaneseq
        %v3021 = vshrl.u32 %v3020, 7
        %v3022 = vsub.s32 %v3019, %v3021
        %v3023 = vrot.slane %v3009, %v3022
        %v3024 = vcombine.low %v3016, %v3023
        %v3025 = vcombine.low %v1636, %v1637
        %v3026 = vcombine.low %v1638, %v1639
        %v3028 = vunpack.c.l.s4 1983009808
        %v3029 = vunpack.c.0.s8 %v3028
        %v3030 = vlaneseq
        %v3031 = vshrl.u32 %v3030, 7
        %v3032 = vsub.s32 %v3029, %v3031
        %v3033 = vrot.slane %v3025, %v3032
        %v3035 = vunpack.c.l.s4 1983009808
        %v3036 = vunpack.c.0.s8 %v3035
        %v3037 = vlaneseq
        %v3038 = vshrl.u32 %v3037, 7
        %v3039 = vsub.s32 %v3036, %v3038
        %v3040 = vrot.slane %v3026, %v3039
        %v3041 = vcombine.low %v3033, %v3040
        %v3042 = vcombine.low %v1640, %v1641
        %v3043 = vcombine.low %v1642, %v1643
        %v3045 = vunpack.c.l.s4 1983009808
        %v3046 = vunpack.c.0.s8 %v3045
        %v3047 = vlaneseq
        %v3048 = vshrl.u32 %v3047, 7
        %v3049 = vsub.s32 %v3046, %v3048
        %v3050 = vrot.slane %v3042, %v3049
        %v3052 = vunpack.c.l.s4 1983009808
        %v3053 = vunpack.c.0.s8 %v3052
        %v3054 = vlaneseq
        %v3055 = vshrl.u32 %v3054, 7
        %v3056 = vsub.s32 %v3053, %v3055
        %v3057 = vrot.slane %v3043, %v3056
        %v3058 = vcombine.low %v3050, %v3057
        %v3059 = vcombine.low %v1644, %v1645
        %v3060 = vcombine.low %v1646, %v1647
        %v3062 = vunpack.c.l.s4 1983009808
        %v3063 = vunpack.c.0.s8 %v3062
        %v3064 = vlaneseq
        %v3065 = vshrl.u32 %v3064, 7
        %v3066 = vsub.s32 %v3063, %v3065
        %v3067 = vrot.slane %v3059, %v3066
        %v3069 = vunpack.c.l.s4 1983009808
        %v3070 = vunpack.c.0.s8 %v3069
        %v3071 = vlaneseq
        %v3072 = vshrl.u32 %v3071, 7
        %v3073 = vsub.s32 %v3070, %v3072
        %v3074 = vrot.slane %v3060, %v3073
        %v3075 = vcombine.low %v3067, %v3074
        %v3076 = vcombine.low %v1648, %v1649
        %v3077 = vcombine.low %v1650, %v1651
        %v3079 = vunpack.c.l.s4 1983009808
        %v3080 = vunpack.c.0.s8 %v3079
        %v3081 = vlaneseq
        %v3082 = vshrl.u32 %v3081, 7
        %v3083 = vsub.s32 %v3080, %v3082
        %v3084 = vrot.slane %v3076, %v3083
        %v3086 = vunpack.c.l.s4 1983009808
        %v3087 = vunpack.c.0.s8 %v3086
        %v3088 = vlaneseq
        %v3089 = vshrl.u32 %v3088, 7
        %v3090 = vsub.s32 %v3087, %v3089
        %v3091 = vrot.slane %v3077, %v3090
        %v3092 = vcombine.low %v3084, %v3091
        %v3093 = vcombine.low %v1652, %v1653
        %v3094 = vcombine.low %v1654, %v1655
        %v3096 = vunpack.c.l.s4 1983009808
        %v3097 = vunpack.c.0.s8 %v3096
        %v3098 = vlaneseq
        %v3099 = vshrl.u32 %v3098, 7
        %v3100 = vsub.s32 %v3097, %v3099
        %v3101 = vrot.slane %v3093, %v3100
        %v3103 = vunpack.c.l.s4 1983009808
        %v3104 = vunpack.c.0.s8 %v3103
        %v3105 = vlaneseq
        %v3106 = vshrl.u32 %v3105, 7
        %v3107 = vsub.s32 %v3104, %v3106
        %v3108 = vrot.slane %v3094, %v3107
        %v3109 = vcombine.low %v3101, %v3108
        %v3110 = vcombine.low %v1656, %v1657
        %v3111 = vcombine.low %v1658, %v1659
        %v3113 = vunpack.c.l.s4 1983009808
        %v3114 = vunpack.c.0.s8 %v3113
        %v3115 = vlaneseq
        %v3116 = vshrl.u32 %v3115, 7
        %v3117 = vsub.s32 %v3114, %v3116
        %v3118 = vrot.slane %v3110, %v3117
        %v3120 = vunpack.c.l.s4 1983009808
        %v3121 = vunpack.c.0.s8 %v3120
        %v3122 = vlaneseq
        %v3123 = vshrl.u32 %v3122, 7
        %v3124 = vsub.s32 %v3121, %v3123
        %v3125 = vrot.slane %v3111, %v3124
        %v3126 = vcombine.low %v3118, %v3125
        %v3127 = vcombine.low %v1660, %v1661
        %v3128 = vcombine.low %v1662, %v1663
        %v3130 = vunpack.c.l.s4 1983009808
        %v3131 = vunpack.c.0.s8 %v3130
        %v3132 = vlaneseq
        %v3133 = vshrl.u32 %v3132, 7
        %v3134 = vsub.s32 %v3131, %v3133
        %v3135 = vrot.slane %v3127, %v3134
        %v3137 = vunpack.c.l.s4 1983009808
        %v3138 = vunpack.c.0.s8 %v3137
        %v3139 = vlaneseq
        %v3140 = vshrl.u32 %v3139, 7
        %v3141 = vsub.s32 %v3138, %v3140
        %v3142 = vrot.slane %v3128, %v3141
        %v3143 = vcombine.low %v3135, %v3142
        %v3144 = vcombine.low %v1664, %v1665
        %v3145 = vcombine.low %v1666, %v1667
        %v3147 = vunpack.c.l.s4 1983009808
        %v3148 = vunpack.c.0.s8 %v3147
        %v3149 = vlaneseq
        %v3150 = vshrl.u32 %v3149, 7
        %v3151 = vsub.s32 %v3148, %v3150
        %v3152 = vrot.slane %v3144, %v3151
        %v3154 = vunpack.c.l.s4 1983009808
        %v3155 = vunpack.c.0.s8 %v3154
        %v3156 = vlaneseq
        %v3157 = vshrl.u32 %v3156, 7
        %v3158 = vsub.s32 %v3155, %v3157
        %v3159 = vrot.slane %v3145, %v3158
        %v3160 = vcombine.low %v3152, %v3159
        %v3161 = vcombine.low %v1668, %v1669
        %v3162 = vcombine.low %v1670, %v1671
        %v3164 = vunpack.c.l.s4 1983009808
        %v3165 = vunpack.c.0.s8 %v3164
        %v3166 = vlaneseq
        %v3167 = vshrl.u32 %v3166, 7
        %v3168 = vsub.s32 %v3165, %v3167
        %v3169 = vrot.slane %v3161, %v3168
        %v3171 = vunpack.c.l.s4 1983009808
        %v3172 = vunpack.c.0.s8 %v3171
        %v3173 = vlaneseq
        %v3174 = vshrl.u32 %v3173, 7
        %v3175 = vsub.s32 %v3172, %v3174
        %v3176 = vrot.slane %v3162, %v3175
        %v3177 = vcombine.low %v3169, %v3176
        %v3194 = vpack.c.bf16 %v2939, %v2922
        %v3195 = vpack.c.bf16 %v2973, %v2956
        %v3196 = vpack.c.bf16 %v3007, %v2990
        %v3197 = vpack.c.bf16 %v3041, %v3024
        %v3198 = vpack.c.bf16 %v3075, %v3058
        %v3199 = vpack.c.bf16 %v3109, %v3092
        %v3200 = vpack.c.bf16 %v3143, %v3126
        %v3201 = vpack.c.bf16 %v3177, %v3160
        %v3210 = vunpack.c.l.b16 %v3194
        %v3211 = vunpack.c.h.b16 %v3194
        %v3212 = vunpack.c.l.b16 %v3195
        %v3213 = vunpack.c.h.b16 %v3195
        %v3214 = vunpack.c.l.b16 %v3196
        %v3215 = vunpack.c.h.b16 %v3196
        %v3216 = vunpack.c.l.b16 %v3197
        %v3217 = vunpack.c.h.b16 %v3197
        %v3218 = vunpack.c.l.b16 %v3198
        %v3219 = vunpack.c.h.b16 %v3198
        %v3220 = vunpack.c.l.b16 %v3199
        %v3221 = vunpack.c.h.b16 %v3199
        %v3222 = vunpack.c.l.b16 %v3200
        %v3223 = vunpack.c.h.b16 %v3200
        %v3224 = vunpack.c.l.b16 %v3201
        %v3225 = vunpack.c.h.b16 %v3201
        %v3230 = vunpack.c.l.b16 %v543
        %v3231 = vunpack.c.l.b16 %v544
        %v3232 = vunpack.c.l.b16 %v549
        %v3233 = vunpack.c.l.b16 %v550
        %v3234 = vpack.c.b16 %v3231, %v3230
        %v3235 = vpack.c.b16 %v3211, %v3210
        %v3236 = vpack.c.b16 %v3213, %v3212
        %v3237 = vpack.c.b16 %v3215, %v3214
        %v3238 = vpack.c.b16 %v3217, %v3216
        %v3239 = vpack.c.b16 %v3219, %v3218
        %v3240 = vpack.c.b16 %v3221, %v3220
        %v3241 = vpack.c.b16 %v3223, %v3222
        %v3242 = vpack.c.b16 %v3225, %v3224
        %v3243 = vpack.c.b16 %v3233, %v3232
        %v3245 = vshrl.u32 %v3234, 16
        %v3247 = vrot.slane %v3245, 7
        %v3248 = vshll.u32 %v3234, 16
        %v3250 = vor.u32 %v3247, %v3248
        %v3252 = vshrl.u32 %v3235, 16
        %v3254 = vrot.slane %v3252, 7
        %v3255 = vshll.u32 %v3235, 16
        %v3257 = vor.u32 %v3254, %v3255
        %v3259 = vshrl.u32 %v3236, 16
        %v3261 = vrot.slane %v3259, 7
        %v3262 = vshll.u32 %v3236, 16
        %v3264 = vor.u32 %v3261, %v3262
        %v3266 = vshrl.u32 %v3237, 16
        %v3268 = vrot.slane %v3266, 7
        %v3269 = vshll.u32 %v3237, 16
        %v3271 = vor.u32 %v3268, %v3269
        %v3273 = vshrl.u32 %v3238, 16
        %v3275 = vrot.slane %v3273, 7
        %v3276 = vshll.u32 %v3238, 16
        %v3278 = vor.u32 %v3275, %v3276
        %v3280 = vshrl.u32 %v3239, 16
        %v3282 = vrot.slane %v3280, 7
        %v3283 = vshll.u32 %v3239, 16
        %v3285 = vor.u32 %v3282, %v3283
        %v3287 = vshrl.u32 %v3240, 16
        %v3289 = vrot.slane %v3287, 7
        %v3290 = vshll.u32 %v3240, 16
        %v3292 = vor.u32 %v3289, %v3290
        %v3294 = vshrl.u32 %v3241, 16
        %v3296 = vrot.slane %v3294, 7
        %v3297 = vshll.u32 %v3241, 16
        %v3299 = vor.u32 %v3296, %v3297
        %v3301 = vshrl.u32 %v3242, 16
        %v3303 = vrot.slane %v3301, 7
        %v3304 = vshll.u32 %v3242, 16
        %v3306 = vor.u32 %v3303, %v3304
        %v3308 = vshrl.u32 %v3243, 16
        %v3310 = vrot.slane %v3308, 7
        %v3311 = vshll.u32 %v3243, 16
        %v3313 = vor.u32 %v3310, %v3311
        %vm3334 = vcmask 1040384
        %vm3335 = vsmask.f32 256
        %vm3336 = vmand %vm3334, %vm3335
        %v3337 = vsel %vm3336, 0, %v3250
        %v3338 = vsel %vm3336, 0, %v3257
        %v3339 = vsel %vm3336, 0, %v3264
        %v3340 = vsel %vm3336, 0, %v3271
        %v3341 = vsel %vm3336, 0, %v3278
        %v3342 = vsel %vm3336, 0, %v3285
        %v3343 = vsel %vm3336, 0, %v3292
        %v3344 = vsel %vm3336, 0, %v3299
        %v3345 = vsel %vm3336, 0, %v3306
        %v3346 = vsel %vm3336, 0, %v3313
        %v3347 = vsel %vm3336, %v3247, 0
        %v3348 = vsel %vm3336, %v3254, 0
        %v3349 = vsel %vm3336, %v3261, 0
        %v3350 = vsel %vm3336, %v3268, 0
        %v3351 = vsel %vm3336, %v3275, 0
        %v3352 = vsel %vm3336, %v3282, 0
        %v3353 = vsel %vm3336, %v3289, 0
        %v3354 = vsel %vm3336, %v3296, 0
        %v3355 = vsel %vm3336, %v3303, 0
        %v3356 = vsel %vm3336, %v3310, 0
        %v3357 = vld [vmem:[%s4] sm:$0xf]
        %v3358 = vld [vmem:[%s4 + $0x4] sm:$0xf]
        %v3359 = vld [vmem:[%s4 + $0x8] sm:$0xf]
        %v3360 = vld [vmem:[%s4 + $0xc] sm:$0xf]
        %vm3361 = vsmask.f32 7424
        %v3363 = vshrl.u32 %v3337, 16
        %v3365 = vshll.u32 %v3337, 16
        %v3367 = vrot.slane %v3365, 1
        %v3368 = vor.u32 %v3363, %v3367
        %v3370 = vshll.u32 %v3347, 16
        %v3372 = vrot.slane %v3370, 1
        %v3373 = vsel %vm3361, %v3368, %v3372
        %v3375 = vshrl.u32 %v3338, 16
        %v3377 = vshll.u32 %v3338, 16
        %v3379 = vrot.slane %v3377, 1
        %v3380 = vor.u32 %v3375, %v3379
        %v3382 = vshll.u32 %v3348, 16
        %v3384 = vrot.slane %v3382, 1
        %v3385 = vsel %vm3361, %v3380, %v3384
        %v3387 = vshrl.u32 %v3339, 16
        %v3389 = vshll.u32 %v3339, 16
        %v3391 = vrot.slane %v3389, 1
        %v3392 = vor.u32 %v3387, %v3391
        %v3394 = vshll.u32 %v3349, 16
        %v3396 = vrot.slane %v3394, 1
        %v3397 = vsel %vm3361, %v3392, %v3396
        %v3399 = vshrl.u32 %v3340, 16
        %v3401 = vshll.u32 %v3340, 16
        %v3403 = vrot.slane %v3401, 1
        %v3404 = vor.u32 %v3399, %v3403
        %v3406 = vshll.u32 %v3350, 16
        %v3408 = vrot.slane %v3406, 1
        %v3409 = vsel %vm3361, %v3404, %v3408
        %v3411 = vshrl.u32 %v3341, 16
        %v3413 = vshll.u32 %v3341, 16
        %v3415 = vrot.slane %v3413, 1
        %v3416 = vor.u32 %v3411, %v3415
        %v3418 = vshll.u32 %v3351, 16
        %v3420 = vrot.slane %v3418, 1
        %v3421 = vsel %vm3361, %v3416, %v3420
        %v3423 = vshrl.u32 %v3342, 16
        %v3425 = vshll.u32 %v3342, 16
        %v3427 = vrot.slane %v3425, 1
        %v3428 = vor.u32 %v3423, %v3427
        %v3430 = vshll.u32 %v3352, 16
        %v3432 = vrot.slane %v3430, 1
        %v3433 = vsel %vm3361, %v3428, %v3432
        %v3435 = vshrl.u32 %v3343, 16
        %v3437 = vshll.u32 %v3343, 16
        %v3439 = vrot.slane %v3437, 1
        %v3440 = vor.u32 %v3435, %v3439
        %v3442 = vshll.u32 %v3353, 16
        %v3444 = vrot.slane %v3442, 1
        %v3445 = vsel %vm3361, %v3440, %v3444
        %v3447 = vshrl.u32 %v3344, 16
        %v3449 = vshll.u32 %v3344, 16
        %v3451 = vrot.slane %v3449, 1
        %v3452 = vor.u32 %v3447, %v3451
        %v3454 = vshll.u32 %v3354, 16
        %v3456 = vrot.slane %v3454, 1
        %v3457 = vsel %vm3361, %v3452, %v3456
        %s3458 = scalar_lea.vmem %s4, 16
        %v3459 = vld [vmem:[%s3458] sm:$0xf]
        %v3460 = vld [vmem:[%s3458 + $0x4] sm:$0xf]
        %v3461 = vld [vmem:[%s3458 + $0x8] sm:$0xf]
        %v3462 = vld [vmem:[%s3458 + $0xc] sm:$0xf]
        %v3467 = vunpack.c.l.b16 %v3459
        %v3468 = vunpack.c.l.b16 %v3460
        %v3469 = vunpack.c.l.b16 %v3461
        %v3470 = vunpack.c.l.b16 %v3462
        %v3471 = vpack.c.b16 %v3468, %v3467
        %v3472 = vpack.c.b16 %v3470, %v3469
        %vm3475 = vcmask 261120
        %v3477 = vsel %vm3475, %v3373, 0
        %v3480 = vsel %vm3475, %v3385, 0
        %v3483 = vsel %vm3475, %v3397, 0
        %v3486 = vsel %vm3475, %v3409, 0
        %v3489 = vsel %vm3475, %v3421, 0
        %v3492 = vsel %vm3475, %v3433, 0
        %v3495 = vsel %vm3475, %v3445, 0
        %v3498 = vsel %vm3475, %v3457, 0
        %3500 = vmatprep.subr.bf16.mxu0 0
        %3501 = vmatpush1.bf16.msra.mxu0 0
        %3502 = vmatprep.subr.bf16.mxu0 0
        %3503 = vmatpush1.bf16.msra.mxu0 0
        %3504 = vmatprep.subr.bf16.mxu0 0
        %3505 = vmatpush1.bf16.msra.mxu0 0
        %3506 = vmatprep.subr.bf16.mxu0 0
        %3507 = vmatpush1.bf16.msra.mxu0 0
        %3508 = vmatprep.subr.bf16.mxu0 0
        %3509 = vmatpush1.bf16.msra.mxu0 0
        %3510 = vmatprep.subr.bf16.mxu0 0
        %3511 = vmatpush1.bf16.msra.mxu0 0
        %3512 = vmatprep.subr.bf16.mxu0 0
        %3513 = vmatpush1.bf16.msra.mxu0 %v3472
        %3514 = vmatprep.subr.bf16.mxu0 0
        %3515 = vmatpush1.bf16.msra.mxu0 %v3471
        %3516 = vmatprep.subr.bf16.mxu0 0
        %3517 = vmatpush2.bf16.msra.mxu0 0
        %3518 = vmatprep.subr.bf16.mxu0 0
        %3519 = vmatpush2.bf16.msra.mxu0 0
        %3520 = vmatprep.subr.bf16.mxu0 0
        %3521 = vmatpush2.bf16.msra.mxu0 0
        %3522 = vmatprep.subr.bf16.mxu0 0
        %3523 = vmatpush2.bf16.msra.mxu0 0
        %3524 = vmatprep.subr.bf16.mxu0 0
        %3525 = vmatpush2.bf16.msra.mxu0 0
        %3526 = vmatprep.subr.bf16.mxu0 0
        %3527 = vmatpush2.bf16.msra.mxu0 0
        %3528 = vmatprep.subr.bf16.mxu0 0
        %3529 = vmatpush2.bf16.msra.mxu0 0
        %3530 = vmatprep.subr.bf16.mxu0 0
        %3531 = vmatpush2.bf16.msra.mxu0 0
        %3532 = vmatprep.mubr.bf16.mxu0 0
        %3533 = vmatmul.mubr.bf16.gmra.mxu0 %v3477
        %v3534 = vpop.f32.mrf.mxu0
        %v3535 = vadd.f32 0.0, %v3534
        %v3536 = vpop.f32.mrf.mxu0
        %v3537 = vpop.f32.mrf.mxu0
        %v3538 = vadd.f32 0.0, %v3537
        %v3539 = vpop.f32.mrf.mxu0
        %3540 = vmatprep.mubr.bf16.mxu0 0
        %3541 = vmatmul.mubr.bf16.gmra.mxu0 %v3480
        %v3542 = vpop.f32.mrf.mxu0
        %v3543 = vadd.f32 0.0, %v3542
        %v3544 = vpop.f32.mrf.mxu0
        %v3545 = vpop.f32.mrf.mxu0
        %v3546 = vadd.f32 0.0, %v3545
        %v3547 = vpop.f32.mrf.mxu0
        %3548 = vmatprep.mubr.bf16.mxu0 0
        %3549 = vmatmul.mubr.bf16.gmra.mxu0 %v3483
        %v3550 = vpop.f32.mrf.mxu0
        %v3551 = vadd.f32 0.0, %v3550
        %v3552 = vpop.f32.mrf.mxu0
        %v3553 = vpop.f32.mrf.mxu0
        %v3554 = vadd.f32 0.0, %v3553
        %v3555 = vpop.f32.mrf.mxu0
        %3556 = vmatprep.mubr.bf16.mxu0 0
        %3557 = vmatmul.mubr.bf16.gmra.mxu0 %v3486
        %v3558 = vpop.f32.mrf.mxu0
        %v3559 = vadd.f32 0.0, %v3558
        %v3560 = vpop.f32.mrf.mxu0
        %v3561 = vpop.f32.mrf.mxu0
        %v3562 = vadd.f32 0.0, %v3561
        %v3563 = vpop.f32.mrf.mxu0
        %3564 = vmatprep.mubr.bf16.mxu0 0
        %3565 = vmatmul.mubr.bf16.gmra.mxu0 %v3489
        %v3566 = vpop.f32.mrf.mxu0
        %v3567 = vadd.f32 0.0, %v3566
        %v3568 = vpop.f32.mrf.mxu0
        %v3569 = vpop.f32.mrf.mxu0
        %v3570 = vadd.f32 0.0, %v3569
        %v3571 = vpop.f32.mrf.mxu0
        %3572 = vmatprep.mubr.bf16.mxu0 0
        %3573 = vmatmul.mubr.bf16.gmra.mxu0 %v3492
        %v3574 = vpop.f32.mrf.mxu0
        %v3575 = vadd.f32 0.0, %v3574
        %v3576 = vpop.f32.mrf.mxu0
        %v3577 = vpop.f32.mrf.mxu0
        %v3578 = vadd.f32 0.0, %v3577
        %v3579 = vpop.f32.mrf.mxu0
        %3580 = vmatprep.mubr.bf16.mxu0 0
        %3581 = vmatmul.mubr.bf16.gmra.mxu0 %v3495
        %v3582 = vpop.f32.mrf.mxu0
        %v3583 = vadd.f32 0.0, %v3582
        %v3584 = vpop.f32.mrf.mxu0
        %v3585 = vpop.f32.mrf.mxu0
        %v3586 = vadd.f32 0.0, %v3585
        %v3587 = vpop.f32.mrf.mxu0
        %3588 = vmatprep.mubr.bf16.mxu0 0
        %3589 = vmatmul.mubr.bf16.gmra.mxu0 %v3498
        %v3590 = vpop.f32.mrf.mxu0
        %v3591 = vadd.f32 0.0, %v3590
        %v3592 = vpop.f32.mrf.mxu0
        %v3593 = vpop.f32.mrf.mxu0
        %v3594 = vadd.f32 0.0, %v3593
        %v3595 = vpop.f32.mrf.mxu0
        %3596 = vdwg.mxu0
        %v3601 = vunpack.c.l.b16 %v3357
        %v3602 = vunpack.c.l.b16 %v3358
        %v3603 = vunpack.c.l.b16 %v3359
        %v3604 = vunpack.c.l.b16 %v3360
        %v3605 = vpack.c.b16 %v3602, %v3601
        %v3606 = vpack.c.b16 %v3604, %v3603
        %v3609 = vsel %vm3475, %v3337, 0
        %v3611 = vsel %vm3475, %v3338, 0
        %v3613 = vsel %vm3475, %v3339, 0
        %v3615 = vsel %vm3475, %v3340, 0
        %v3617 = vsel %vm3475, %v3341, 0
        %v3619 = vsel %vm3475, %v3342, 0
        %v3621 = vsel %vm3475, %v3343, 0
        %v3623 = vsel %vm3475, %v3344, 0
        %3625 = vmatprep.subr.bf16.mxu0 0
        %3626 = vmatpush1.bf16.msra.mxu0 0
        %3627 = vmatprep.subr.bf16.mxu0 0
        %3628 = vmatpush1.bf16.msra.mxu0 0
        %3629 = vmatprep.subr.bf16.mxu0 0
        %3630 = vmatpush1.bf16.msra.mxu0 0
        %3631 = vmatprep.subr.bf16.mxu0 0
        %3632 = vmatpush1.bf16.msra.mxu0 0
        %3633 = vmatprep.subr.bf16.mxu0 0
        %3634 = vmatpush1.bf16.msra.mxu0 0
        %3635 = vmatprep.subr.bf16.mxu0 0
        %3636 = vmatpush1.bf16.msra.mxu0 0
        %3637 = vmatprep.subr.bf16.mxu0 0
        %3638 = vmatpush1.bf16.msra.mxu0 %v3606
        %3639 = vmatprep.subr.bf16.mxu0 0
        %3640 = vmatpush1.bf16.msra.mxu0 %v3605
        %3641 = vmatprep.subr.bf16.mxu0 0
        %3642 = vmatpush2.bf16.msra.mxu0 0
        %3643 = vmatprep.subr.bf16.mxu0 0
        %3644 = vmatpush2.bf16.msra.mxu0 0
        %3645 = vmatprep.subr.bf16.mxu0 0
        %3646 = vmatpush2.bf16.msra.mxu0 0
        %3647 = vmatprep.subr.bf16.mxu0 0
        %3648 = vmatpush2.bf16.msra.mxu0 0
        %3649 = vmatprep.subr.bf16.mxu0 0
        %3650 = vmatpush2.bf16.msra.mxu0 0
        %3651 = vmatprep.subr.bf16.mxu0 0
        %3652 = vmatpush2.bf16.msra.mxu0 0
        %3653 = vmatprep.subr.bf16.mxu0 0
        %3654 = vmatpush2.bf16.msra.mxu0 0
        %3655 = vmatprep.subr.bf16.mxu0 0
        %3656 = vmatpush2.bf16.msra.mxu0 0
        %3657 = vmatprep.mubr.bf16.mxu0 0
        %3658 = vmatmul.mubr.bf16.gmra.mxu0 %v3609
        %v3659 = vpop.f32.mrf.mxu0
        %v3660 = vadd.f32 %v3535, %v3659
        %v3661 = vpop.f32.mrf.mxu0
        %v3662 = vpop.f32.mrf.mxu0
        %v3663 = vadd.f32 %v3538, %v3662
        %v3664 = vpop.f32.mrf.mxu0
        %3665 = vmatprep.mubr.bf16.mxu0 0
        %3666 = vmatmul.mubr.bf16.gmra.mxu0 %v3611
        %v3667 = vpop.f32.mrf.mxu0
        %v3668 = vadd.f32 %v3543, %v3667
        %v3669 = vpop.f32.mrf.mxu0
        %v3670 = vpop.f32.mrf.mxu0
        %v3671 = vadd.f32 %v3546, %v3670
        %v3672 = vpop.f32.mrf.mxu0
        %3673 = vmatprep.mubr.bf16.mxu0 0
        %3674 = vmatmul.mubr.bf16.gmra.mxu0 %v3613
        %v3675 = vpop.f32.mrf.mxu0
        %v3676 = vadd.f32 %v3551, %v3675
        %v3677 = vpop.f32.mrf.mxu0
        %v3678 = vpop.f32.mrf.mxu0
        %v3679 = vadd.f32 %v3554, %v3678
        %v3680 = vpop.f32.mrf.mxu0
        %3681 = vmatprep.mubr.bf16.mxu0 0
        %3682 = vmatmul.mubr.bf16.gmra.mxu0 %v3615
        %v3683 = vpop.f32.mrf.mxu0
        %v3684 = vadd.f32 %v3559, %v3683
        %v3685 = vpop.f32.mrf.mxu0
        %v3686 = vpop.f32.mrf.mxu0
        %v3687 = vadd.f32 %v3562, %v3686
        %v3688 = vpop.f32.mrf.mxu0
        %3689 = vmatprep.mubr.bf16.mxu0 0
        %3690 = vmatmul.mubr.bf16.gmra.mxu0 %v3617
        %v3691 = vpop.f32.mrf.mxu0
        %v3692 = vadd.f32 %v3567, %v3691
        %v3693 = vpop.f32.mrf.mxu0
        %v3694 = vpop.f32.mrf.mxu0
        %v3695 = vadd.f32 %v3570, %v3694
        %v3696 = vpop.f32.mrf.mxu0
        %3697 = vmatprep.mubr.bf16.mxu0 0
        %3698 = vmatmul.mubr.bf16.gmra.mxu0 %v3619
        %v3699 = vpop.f32.mrf.mxu0
        %v3700 = vadd.f32 %v3575, %v3699
        %v3701 = vpop.f32.mrf.mxu0
        %v3702 = vpop.f32.mrf.mxu0
        %v3703 = vadd.f32 %v3578, %v3702
        %v3704 = vpop.f32.mrf.mxu0
        %3705 = vmatprep.mubr.bf16.mxu0 0
        %3706 = vmatmul.mubr.bf16.gmra.mxu0 %v3621
        %v3707 = vpop.f32.mrf.mxu0
        %v3708 = vadd.f32 %v3583, %v3707
        %v3709 = vpop.f32.mrf.mxu0
        %v3710 = vpop.f32.mrf.mxu0
        %v3711 = vadd.f32 %v3586, %v3710
        %v3712 = vpop.f32.mrf.mxu0
        %3713 = vmatprep.mubr.bf16.mxu0 0
        %3714 = vmatmul.mubr.bf16.gmra.mxu0 %v3623
        %v3715 = vpop.f32.mrf.mxu0
        %v3716 = vadd.f32 %v3591, %v3715
        %v3717 = vpop.f32.mrf.mxu0
        %v3718 = vpop.f32.mrf.mxu0
        %v3719 = vadd.f32 %v3594, %v3718
        %v3720 = vpop.f32.mrf.mxu0
        %3721 = vdwg.mxu0
        %vm3738 = vcmask 1046528
        %v3739 = vrot.slane %v3337, 1
        %v3740 = vrot.slane %v3347, 1
        %v3741 = vsel %vm3738, %v3739, %v3740
        %v3742 = vrot.slane %v3338, 1
        %v3743 = vrot.slane %v3348, 1
        %v3744 = vsel %vm3738, %v3742, %v3743
        %v3745 = vrot.slane %v3339, 1
        %v3746 = vrot.slane %v3349, 1
        %v3747 = vsel %vm3738, %v3745, %v3746
        %v3748 = vrot.slane %v3340, 1
        %v3749 = vrot.slane %v3350, 1
        %v3750 = vsel %vm3738, %v3748, %v3749
        %v3751 = vrot.slane %v3341, 1
        %v3752 = vrot.slane %v3351, 1
        %v3753 = vsel %vm3738, %v3751, %v3752
        %v3754 = vrot.slane %v3342, 1
        %v3755 = vrot.slane %v3352, 1
        %v3756 = vsel %vm3738, %v3754, %v3755
        %v3757 = vrot.slane %v3343, 1
        %v3758 = vrot.slane %v3353, 1
        %v3759 = vsel %vm3738, %v3757, %v3758
        %v3760 = vrot.slane %v3344, 1
        %v3761 = vrot.slane %v3354, 1
        %v3762 = vsel %vm3738, %v3760, %v3761
        %s3763 = scalar_lea.vmem %s4, 32
        %v3764 = vld [vmem:[%s3763] sm:$0xf]
        %v3765 = vld [vmem:[%s3763 + $0x4] sm:$0xf]
        %v3766 = vld [vmem:[%s3763 + $0x8] sm:$0xf]
        %v3767 = vld [vmem:[%s3763 + $0xc] sm:$0xf]
        %v3772 = vunpack.c.l.b16 %v3764
        %v3773 = vunpack.c.l.b16 %v3765
        %v3774 = vunpack.c.l.b16 %v3766
        %v3775 = vunpack.c.l.b16 %v3767
        %v3776 = vpack.c.b16 %v3773, %v3772
        %v3777 = vpack.c.b16 %v3775, %v3774
        %v3781 = vsel %vm3475, %v3741, 0
        %v3784 = vsel %vm3475, %v3744, 0
        %v3787 = vsel %vm3475, %v3747, 0
        %v3790 = vsel %vm3475, %v3750, 0
        %v3793 = vsel %vm3475, %v3753, 0
        %v3796 = vsel %vm3475, %v3756, 0
        %v3799 = vsel %vm3475, %v3759, 0
        %v3802 = vsel %vm3475, %v3762, 0
        %3804 = vmatprep.subr.bf16.mxu0 0
        %3805 = vmatpush1.bf16.msra.mxu0 0
        %3806 = vmatprep.subr.bf16.mxu0 0
        %3807 = vmatpush1.bf16.msra.mxu0 0
        %3808 = vmatprep.subr.bf16.mxu0 0
        %3809 = vmatpush1.bf16.msra.mxu0 0
        %3810 = vmatprep.subr.bf16.mxu0 0
        %3811 = vmatpush1.bf16.msra.mxu0 0
        %3812 = vmatprep.subr.bf16.mxu0 0
        %3813 = vmatpush1.bf16.msra.mxu0 0
        %3814 = vmatprep.subr.bf16.mxu0 0
        %3815 = vmatpush1.bf16.msra.mxu0 0
        %3816 = vmatprep.subr.bf16.mxu0 0
        %3817 = vmatpush1.bf16.msra.mxu0 %v3777
        %3818 = vmatprep.subr.bf16.mxu0 0
        %3819 = vmatpush1.bf16.msra.mxu0 %v3776
        %3820 = vmatprep.subr.bf16.mxu0 0
        %3821 = vmatpush2.bf16.msra.mxu0 0
        %3822 = vmatprep.subr.bf16.mxu0 0
        %3823 = vmatpush2.bf16.msra.mxu0 0
        %3824 = vmatprep.subr.bf16.mxu0 0
        %3825 = vmatpush2.bf16.msra.mxu0 0
        %3826 = vmatprep.subr.bf16.mxu0 0
        %3827 = vmatpush2.bf16.msra.mxu0 0
        %3828 = vmatprep.subr.bf16.mxu0 0
        %3829 = vmatpush2.bf16.msra.mxu0 0
        %3830 = vmatprep.subr.bf16.mxu0 0
        %3831 = vmatpush2.bf16.msra.mxu0 0
        %3832 = vmatprep.subr.bf16.mxu0 0
        %3833 = vmatpush2.bf16.msra.mxu0 0
        %3834 = vmatprep.subr.bf16.mxu0 0
        %3835 = vmatpush2.bf16.msra.mxu0 0
        %3836 = vmatprep.mubr.bf16.mxu0 0
        %3837 = vmatmul.mubr.bf16.gmra.mxu0 %v3781
        %v3838 = vpop.f32.mrf.mxu0
        %v3839 = vadd.f32 0.0, %v3838
        %v3840 = vpop.f32.mrf.mxu0
        %v3841 = vpop.f32.mrf.mxu0
        %v3842 = vadd.f32 0.0, %v3841
        %v3843 = vpop.f32.mrf.mxu0
        %3844 = vmatprep.mubr.bf16.mxu0 0
        %3845 = vmatmul.mubr.bf16.gmra.mxu0 %v3784
        %v3846 = vpop.f32.mrf.mxu0
        %v3847 = vadd.f32 0.0, %v3846
        %v3848 = vpop.f32.mrf.mxu0
        %v3849 = vpop.f32.mrf.mxu0
        %v3850 = vadd.f32 0.0, %v3849
        %v3851 = vpop.f32.mrf.mxu0
        %3852 = vmatprep.mubr.bf16.mxu0 0
        %3853 = vmatmul.mubr.bf16.gmra.mxu0 %v3787
        %v3854 = vpop.f32.mrf.mxu0
        %v3855 = vadd.f32 0.0, %v3854
        %v3856 = vpop.f32.mrf.mxu0
        %v3857 = vpop.f32.mrf.mxu0
        %v3858 = vadd.f32 0.0, %v3857
        %v3859 = vpop.f32.mrf.mxu0
        %3860 = vmatprep.mubr.bf16.mxu0 0
        %3861 = vmatmul.mubr.bf16.gmra.mxu0 %v3790
        %v3862 = vpop.f32.mrf.mxu0
        %v3863 = vadd.f32 0.0, %v3862
        %v3864 = vpop.f32.mrf.mxu0
        %v3865 = vpop.f32.mrf.mxu0
        %v3866 = vadd.f32 0.0, %v3865
        %v3867 = vpop.f32.mrf.mxu0
        %3868 = vmatprep.mubr.bf16.mxu0 0
        %3869 = vmatmul.mubr.bf16.gmra.mxu0 %v3793
        %v3870 = vpop.f32.mrf.mxu0
        %v3871 = vadd.f32 0.0, %v3870
        %v3872 = vpop.f32.mrf.mxu0
        %v3873 = vpop.f32.mrf.mxu0
        %v3874 = vadd.f32 0.0, %v3873
        %v3875 = vpop.f32.mrf.mxu0
        %3876 = vmatprep.mubr.bf16.mxu0 0
        %3877 = vmatmul.mubr.bf16.gmra.mxu0 %v3796
        %v3878 = vpop.f32.mrf.mxu0
        %v3879 = vadd.f32 0.0, %v3878
        %v3880 = vpop.f32.mrf.mxu0
        %v3881 = vpop.f32.mrf.mxu0
        %v3882 = vadd.f32 0.0, %v3881
        %v3883 = vpop.f32.mrf.mxu0
        %3884 = vmatprep.mubr.bf16.mxu0 0
        %3885 = vmatmul.mubr.bf16.gmra.mxu0 %v3799
        %v3886 = vpop.f32.mrf.mxu0
        %v3887 = vadd.f32 0.0, %v3886
        %v3888 = vpop.f32.mrf.mxu0
        %v3889 = vpop.f32.mrf.mxu0
        %v3890 = vadd.f32 0.0, %v3889
        %v3891 = vpop.f32.mrf.mxu0
        %3892 = vmatprep.mubr.bf16.mxu0 0
        %3893 = vmatmul.mubr.bf16.gmra.mxu0 %v3802
        %v3894 = vpop.f32.mrf.mxu0
        %v3895 = vadd.f32 0.0, %v3894
        %v3896 = vpop.f32.mrf.mxu0
        %v3897 = vpop.f32.mrf.mxu0
        %v3898 = vadd.f32 0.0, %v3897
        %v3899 = vpop.f32.mrf.mxu0
        %3900 = vdwg.mxu0
        %v3901 = vadd.f32 %v3660, %v3839
        %v3902 = vadd.f32 %v3663, %v3842
        %v3903 = vadd.f32 %v3668, %v3847
        %v3904 = vadd.f32 %v3671, %v3850
        %v3905 = vadd.f32 %v3676, %v3855
        %v3906 = vadd.f32 %v3679, %v3858
        %v3907 = vadd.f32 %v3684, %v3863
        %v3908 = vadd.f32 %v3687, %v3866
        %v3909 = vadd.f32 %v3692, %v3871
        %v3910 = vadd.f32 %v3695, %v3874
        %v3911 = vadd.f32 %v3700, %v3879
        %v3912 = vadd.f32 %v3703, %v3882
        %v3913 = vadd.f32 %v3708, %v3887
        %v3914 = vadd.f32 %v3711, %v3890
        %v3915 = vadd.f32 %v3716, %v3895
        %v3916 = vadd.f32 %v3719, %v3898
        %s3917 = scalar_lea.vmem %s4, 48
        %v3918 = vld [vmem:[%s3917] sm:$0xf]
        %v3919 = vld [vmem:[%s3917 + $0x4] sm:$0xf]
        %v3920 = vld [vmem:[%s3917 + $0x8] sm:$0xf]
        %v3921 = vld [vmem:[%s3917 + $0xc] sm:$0xf]
        %v3926 = vunpack.c.l.b16 %v3918
        %v3927 = vunpack.c.l.b16 %v3919
        %v3928 = vunpack.c.l.b16 %v3920
        %v3929 = vunpack.c.l.b16 %v3921
        %v3930 = vpack.c.b16 %v3927, %v3926
        %v3931 = vpack.c.b16 %v3929, %v3928
        %v3935 = vsel %vm3475, %v3345, 0
        %3937 = vmatprep.subr.bf16.mxu0 0
        %3938 = vmatpush1.bf16.msra.mxu0 0
        %3939 = vmatprep.subr.bf16.mxu0 0
        %3940 = vmatpush1.bf16.msra.mxu0 0
        %3941 = vmatprep.subr.bf16.mxu0 0
        %3942 = vmatpush1.bf16.msra.mxu0 0
        %3943 = vmatprep.subr.bf16.mxu0 0
        %3944 = vmatpush1.bf16.msra.mxu0 0
        %3945 = vmatprep.subr.bf16.mxu0 0
        %3946 = vmatpush1.bf16.msra.mxu0 0
        %3947 = vmatprep.subr.bf16.mxu0 0
        %3948 = vmatpush1.bf16.msra.mxu0 0
        %3949 = vmatprep.subr.bf16.mxu0 0
        %3950 = vmatpush1.bf16.msra.mxu0 %v3931
        %3951 = vmatprep.subr.bf16.mxu0 0
        %3952 = vmatpush1.bf16.msra.mxu0 %v3930
        %3953 = vmatprep.subr.bf16.mxu0 0
        %3954 = vmatpush2.bf16.msra.mxu0 0
        %3955 = vmatprep.subr.bf16.mxu0 0
        %3956 = vmatpush2.bf16.msra.mxu0 0
        %3957 = vmatprep.subr.bf16.mxu0 0
        %3958 = vmatpush2.bf16.msra.mxu0 0
        %3959 = vmatprep.subr.bf16.mxu0 0
        %3960 = vmatpush2.bf16.msra.mxu0 0
        %3961 = vmatprep.subr.bf16.mxu0 0
        %3962 = vmatpush2.bf16.msra.mxu0 0
        %3963 = vmatprep.subr.bf16.mxu0 0
        %3964 = vmatpush2.bf16.msra.mxu0 0
        %3965 = vmatprep.subr.bf16.mxu0 0
        %3966 = vmatpush2.bf16.msra.mxu0 0
        %3967 = vmatprep.subr.bf16.mxu0 0
        %3968 = vmatpush2.bf16.msra.mxu0 0
        %3969 = vmatprep.mubr.bf16.mxu0 0
        %3970 = vmatmul.mubr.bf16.gmra.mxu0 %v3611
        %v3971 = vpop.f32.mrf.mxu0
        %v3972 = vadd.f32 0.0, %v3971
        %v3973 = vpop.f32.mrf.mxu0
        %v3974 = vpop.f32.mrf.mxu0
        %v3975 = vadd.f32 0.0, %v3974
        %v3976 = vpop.f32.mrf.mxu0
        %3977 = vmatprep.mubr.bf16.mxu0 0
        %3978 = vmatmul.mubr.bf16.gmra.mxu0 %v3613
        %v3979 = vpop.f32.mrf.mxu0
        %v3980 = vadd.f32 0.0, %v3979
        %v3981 = vpop.f32.mrf.mxu0
        %v3982 = vpop.f32.mrf.mxu0
        %v3983 = vadd.f32 0.0, %v3982
        %v3984 = vpop.f32.mrf.mxu0
        %3985 = vmatprep.mubr.bf16.mxu0 0
        %3986 = vmatmul.mubr.bf16.gmra.mxu0 %v3615
        %v3987 = vpop.f32.mrf.mxu0
        %v3988 = vadd.f32 0.0, %v3987
        %v3989 = vpop.f32.mrf.mxu0
        %v3990 = vpop.f32.mrf.mxu0
        %v3991 = vadd.f32 0.0, %v3990
        %v3992 = vpop.f32.mrf.mxu0
        %3993 = vmatprep.mubr.bf16.mxu0 0
        %3994 = vmatmul.mubr.bf16.gmra.mxu0 %v3617
        %v3995 = vpop.f32.mrf.mxu0
        %v3996 = vadd.f32 0.0, %v3995
        %v3997 = vpop.f32.mrf.mxu0
        %v3998 = vpop.f32.mrf.mxu0
        %v3999 = vadd.f32 0.0, %v3998
        %v4000 = vpop.f32.mrf.mxu0
        %4001 = vmatprep.mubr.bf16.mxu0 0
        %4002 = vmatmul.mubr.bf16.gmra.mxu0 %v3619
        %v4003 = vpop.f32.mrf.mxu0
        %v4004 = vadd.f32 0.0, %v4003
        %v4005 = vpop.f32.mrf.mxu0
        %v4006 = vpop.f32.mrf.mxu0
        %v4007 = vadd.f32 0.0, %v4006
        %v4008 = vpop.f32.mrf.mxu0
        %4009 = vmatprep.mubr.bf16.mxu0 0
        %4010 = vmatmul.mubr.bf16.gmra.mxu0 %v3621
        %v4011 = vpop.f32.mrf.mxu0
        %v4012 = vadd.f32 0.0, %v4011
        %v4013 = vpop.f32.mrf.mxu0
        %v4014 = vpop.f32.mrf.mxu0
        %v4015 = vadd.f32 0.0, %v4014
        %v4016 = vpop.f32.mrf.mxu0
        %4017 = vmatprep.mubr.bf16.mxu0 0
        %4018 = vmatmul.mubr.bf16.gmra.mxu0 %v3623
        %v4019 = vpop.f32.mrf.mxu0
        %v4020 = vadd.f32 0.0, %v4019
        %v4021 = vpop.f32.mrf.mxu0
        %v4022 = vpop.f32.mrf.mxu0
        %v4023 = vadd.f32 0.0, %v4022
        %v4024 = vpop.f32.mrf.mxu0
        %4025 = vmatprep.mubr.bf16.mxu0 0
        %4026 = vmatmul.mubr.bf16.gmra.mxu0 %v3935
        %v4027 = vpop.f32.mrf.mxu0
        %v4028 = vadd.f32 0.0, %v4027
        %v4029 = vpop.f32.mrf.mxu0
        %v4030 = vpop.f32.mrf.mxu0
        %v4031 = vadd.f32 0.0, %v4030
        %v4032 = vpop.f32.mrf.mxu0
        %4033 = vdwg.mxu0
        %v4034 = vadd.f32 %v3901, %v3972
        %v4035 = vadd.f32 %v3902, %v3975
        %v4036 = vadd.f32 %v3903, %v3980
        %v4037 = vadd.f32 %v3904, %v3983
        %v4038 = vadd.f32 %v3905, %v3988
        %v4039 = vadd.f32 %v3906, %v3991
        %v4040 = vadd.f32 %v3907, %v3996
        %v4041 = vadd.f32 %v3908, %v3999
        %v4042 = vadd.f32 %v3909, %v4004
        %v4043 = vadd.f32 %v3910, %v4007
        %v4044 = vadd.f32 %v3911, %v4012
        %v4045 = vadd.f32 %v3912, %v4015
        %v4046 = vadd.f32 %v3913, %v4020
        %v4047 = vadd.f32 %v3914, %v4023
        %v4048 = vadd.f32 %v3915, %v4028
        %v4049 = vadd.f32 %v3916, %v4031
        %v4050 = vshrl.u32 %v3345, 16
        %v4052 = vshll.u32 %v3345, 16
        %v4054 = vrot.slane %v4052, 1
        %v4055 = vor.u32 %v4050, %v4054
        %v4057 = vshll.u32 %v3355, 16
        %v4059 = vrot.slane %v4057, 1
        %v4060 = vsel %vm3361, %v4055, %v4059
        %s4061 = scalar_lea.vmem %s4, 64
        %v4062 = vld [vmem:[%s4061] sm:$0xf]
        %v4063 = vld [vmem:[%s4061 + $0x4] sm:$0xf]
        %v4064 = vld [vmem:[%s4061 + $0x8] sm:$0xf]
        %v4065 = vld [vmem:[%s4061 + $0xc] sm:$0xf]
        %v4070 = vunpack.c.l.b16 %v4062
        %v4071 = vunpack.c.l.b16 %v4063
        %v4072 = vunpack.c.l.b16 %v4064
        %v4073 = vunpack.c.l.b16 %v4065
        %v4074 = vpack.c.b16 %v4071, %v4070
        %v4075 = vpack.c.b16 %v4073, %v4072
        %v4079 = vsel %vm3475, %v4060, 0
        %4081 = vmatprep.subr.bf16.mxu0 0
        %4082 = vmatpush1.bf16.msra.mxu0 0
        %4083 = vmatprep.subr.bf16.mxu0 0
        %4084 = vmatpush1.bf16.msra.mxu0 0
        %4085 = vmatprep.subr.bf16.mxu0 0
        %4086 = vmatpush1.bf16.msra.mxu0 0
        %4087 = vmatprep.subr.bf16.mxu0 0
        %4088 = vmatpush1.bf16.msra.mxu0 0
        %4089 = vmatprep.subr.bf16.mxu0 0
        %4090 = vmatpush1.bf16.msra.mxu0 0
        %4091 = vmatprep.subr.bf16.mxu0 0
        %4092 = vmatpush1.bf16.msra.mxu0 0
        %4093 = vmatprep.subr.bf16.mxu0 0
        %4094 = vmatpush1.bf16.msra.mxu0 %v4075
        %4095 = vmatprep.subr.bf16.mxu0 0
        %4096 = vmatpush1.bf16.msra.mxu0 %v4074
        %4097 = vmatprep.subr.bf16.mxu0 0
        %4098 = vmatpush2.bf16.msra.mxu0 0
        %4099 = vmatprep.subr.bf16.mxu0 0
        %4100 = vmatpush2.bf16.msra.mxu0 0
        %4101 = vmatprep.subr.bf16.mxu0 0
        %4102 = vmatpush2.bf16.msra.mxu0 0
        %4103 = vmatprep.subr.bf16.mxu0 0
        %4104 = vmatpush2.bf16.msra.mxu0 0
        %4105 = vmatprep.subr.bf16.mxu0 0
        %4106 = vmatpush2.bf16.msra.mxu0 0
        %4107 = vmatprep.subr.bf16.mxu0 0
        %4108 = vmatpush2.bf16.msra.mxu0 0
        %4109 = vmatprep.subr.bf16.mxu0 0
        %4110 = vmatpush2.bf16.msra.mxu0 0
        %4111 = vmatprep.subr.bf16.mxu0 0
        %4112 = vmatpush2.bf16.msra.mxu0 0
        %4113 = vmatprep.mubr.bf16.mxu0 0
        %4114 = vmatmul.mubr.bf16.gmra.mxu0 %v3480
        %v4115 = vpop.f32.mrf.mxu0
        %v4116 = vadd.f32 0.0, %v4115
        %v4117 = vpop.f32.mrf.mxu0
        %v4118 = vpop.f32.mrf.mxu0
        %v4119 = vadd.f32 0.0, %v4118
        %v4120 = vpop.f32.mrf.mxu0
        %4121 = vmatprep.mubr.bf16.mxu0 0
        %4122 = vmatmul.mubr.bf16.gmra.mxu0 %v3483
        %v4123 = vpop.f32.mrf.mxu0
        %v4124 = vadd.f32 0.0, %v4123
        %v4125 = vpop.f32.mrf.mxu0
        %v4126 = vpop.f32.mrf.mxu0
        %v4127 = vadd.f32 0.0, %v4126
        %v4128 = vpop.f32.mrf.mxu0
        %4129 = vmatprep.mubr.bf16.mxu0 0
        %4130 = vmatmul.mubr.bf16.gmra.mxu0 %v3486
        %v4131 = vpop.f32.mrf.mxu0
        %v4132 = vadd.f32 0.0, %v4131
        %v4133 = vpop.f32.mrf.mxu0
        %v4134 = vpop.f32.mrf.mxu0
        %v4135 = vadd.f32 0.0, %v4134
        %v4136 = vpop.f32.mrf.mxu0
        %4137 = vmatprep.mubr.bf16.mxu0 0
        %4138 = vmatmul.mubr.bf16.gmra.mxu0 %v3489
        %v4139 = vpop.f32.mrf.mxu0
        %v4140 = vadd.f32 0.0, %v4139
        %v4141 = vpop.f32.mrf.mxu0
        %v4142 = vpop.f32.mrf.mxu0
        %v4143 = vadd.f32 0.0, %v4142
        %v4144 = vpop.f32.mrf.mxu0
        %4145 = vmatprep.mubr.bf16.mxu0 0
        %4146 = vmatmul.mubr.bf16.gmra.mxu0 %v3492
        %v4147 = vpop.f32.mrf.mxu0
        %v4148 = vadd.f32 0.0, %v4147
        %v4149 = vpop.f32.mrf.mxu0
        %v4150 = vpop.f32.mrf.mxu0
        %v4151 = vadd.f32 0.0, %v4150
        %v4152 = vpop.f32.mrf.mxu0
        %4153 = vmatprep.mubr.bf16.mxu0 0
        %4154 = vmatmul.mubr.bf16.gmra.mxu0 %v3495
        %v4155 = vpop.f32.mrf.mxu0
        %v4156 = vadd.f32 0.0, %v4155
        %v4157 = vpop.f32.mrf.mxu0
        %v4158 = vpop.f32.mrf.mxu0
        %v4159 = vadd.f32 0.0, %v4158
        %v4160 = vpop.f32.mrf.mxu0
        %4161 = vmatprep.mubr.bf16.mxu0 0
        %4162 = vmatmul.mubr.bf16.gmra.mxu0 %v3498
        %v4163 = vpop.f32.mrf.mxu0
        %v4164 = vadd.f32 0.0, %v4163
        %v4165 = vpop.f32.mrf.mxu0
        %v4166 = vpop.f32.mrf.mxu0
        %v4167 = vadd.f32 0.0, %v4166
        %v4168 = vpop.f32.mrf.mxu0
        %4169 = vmatprep.mubr.bf16.mxu0 0
        %4170 = vmatmul.mubr.bf16.gmra.mxu0 %v4079
        %v4171 = vpop.f32.mrf.mxu0
        %v4172 = vadd.f32 0.0, %v4171
        %v4173 = vpop.f32.mrf.mxu0
        %v4174 = vpop.f32.mrf.mxu0
        %v4175 = vadd.f32 0.0, %v4174
        %v4176 = vpop.f32.mrf.mxu0
        %4177 = vdwg.mxu0
        %v4178 = vadd.f32 %v4034, %v4116
        %v4179 = vadd.f32 %v4035, %v4119
        %v4180 = vadd.f32 %v4036, %v4124
        %v4181 = vadd.f32 %v4037, %v4127
        %v4182 = vadd.f32 %v4038, %v4132
        %v4183 = vadd.f32 %v4039, %v4135
        %v4184 = vadd.f32 %v4040, %v4140
        %v4185 = vadd.f32 %v4041, %v4143
        %v4186 = vadd.f32 %v4042, %v4148
        %v4187 = vadd.f32 %v4043, %v4151
        %v4188 = vadd.f32 %v4044, %v4156
        %v4189 = vadd.f32 %v4045, %v4159
        %v4190 = vadd.f32 %v4046, %v4164
        %v4191 = vadd.f32 %v4047, %v4167
        %v4192 = vadd.f32 %v4048, %v4172
        %v4193 = vadd.f32 %v4049, %v4175
        %v4196 = vrot.slane %v3345, 1
        %v4197 = vrot.slane %v3355, 1
        %v4198 = vsel %vm3738, %v4196, %v4197
        %s4199 = scalar_lea.vmem %s4, 80
        %v4200 = vld [vmem:[%s4199] sm:$0xf]
        %v4201 = vld [vmem:[%s4199 + $0x4] sm:$0xf]
        %v4202 = vld [vmem:[%s4199 + $0x8] sm:$0xf]
        %v4203 = vld [vmem:[%s4199 + $0xc] sm:$0xf]
        %v4208 = vunpack.c.l.b16 %v4200
        %v4209 = vunpack.c.l.b16 %v4201
        %v4210 = vunpack.c.l.b16 %v4202
        %v4211 = vunpack.c.l.b16 %v4203
        %v4212 = vpack.c.b16 %v4209, %v4208
        %v4213 = vpack.c.b16 %v4211, %v4210
        %v4217 = vsel %vm3475, %v4198, 0
        %4219 = vmatprep.subr.bf16.mxu0 0
        %4220 = vmatpush1.bf16.msra.mxu0 0
        %4221 = vmatprep.subr.bf16.mxu0 0
        %4222 = vmatpush1.bf16.msra.mxu0 0
        %4223 = vmatprep.subr.bf16.mxu0 0
        %4224 = vmatpush1.bf16.msra.mxu0 0
        %4225 = vmatprep.subr.bf16.mxu0 0
        %4226 = vmatpush1.bf16.msra.mxu0 0
        %4227 = vmatprep.subr.bf16.mxu0 0
        %4228 = vmatpush1.bf16.msra.mxu0 0
        %4229 = vmatprep.subr.bf16.mxu0 0
        %4230 = vmatpush1.bf16.msra.mxu0 0
        %4231 = vmatprep.subr.bf16.mxu0 0
        %4232 = vmatpush1.bf16.msra.mxu0 %v4213
        %4233 = vmatprep.subr.bf16.mxu0 0
        %4234 = vmatpush1.bf16.msra.mxu0 %v4212
        %4235 = vmatprep.subr.bf16.mxu0 0
        %4236 = vmatpush2.bf16.msra.mxu0 0
        %4237 = vmatprep.subr.bf16.mxu0 0
        %4238 = vmatpush2.bf16.msra.mxu0 0
        %4239 = vmatprep.subr.bf16.mxu0 0
        %4240 = vmatpush2.bf16.msra.mxu0 0
        %4241 = vmatprep.subr.bf16.mxu0 0
        %4242 = vmatpush2.bf16.msra.mxu0 0
        %4243 = vmatprep.subr.bf16.mxu0 0
        %4244 = vmatpush2.bf16.msra.mxu0 0
        %4245 = vmatprep.subr.bf16.mxu0 0
        %4246 = vmatpush2.bf16.msra.mxu0 0
        %4247 = vmatprep.subr.bf16.mxu0 0
        %4248 = vmatpush2.bf16.msra.mxu0 0
        %4249 = vmatprep.subr.bf16.mxu0 0
        %4250 = vmatpush2.bf16.msra.mxu0 0
        %4251 = vmatprep.mubr.bf16.mxu0 0
        %4252 = vmatmul.mubr.bf16.gmra.mxu0 %v3784
        %v4253 = vpop.f32.mrf.mxu0
        %v4254 = vadd.f32 0.0, %v4253
        %v4255 = vpop.f32.mrf.mxu0
        %v4256 = vpop.f32.mrf.mxu0
        %v4257 = vadd.f32 0.0, %v4256
        %v4258 = vpop.f32.mrf.mxu0
        %4259 = vmatprep.mubr.bf16.mxu0 0
        %4260 = vmatmul.mubr.bf16.gmra.mxu0 %v3787
        %v4261 = vpop.f32.mrf.mxu0
        %v4262 = vadd.f32 0.0, %v4261
        %v4263 = vpop.f32.mrf.mxu0
        %v4264 = vpop.f32.mrf.mxu0
        %v4265 = vadd.f32 0.0, %v4264
        %v4266 = vpop.f32.mrf.mxu0
        %4267 = vmatprep.mubr.bf16.mxu0 0
        %4268 = vmatmul.mubr.bf16.gmra.mxu0 %v3790
        %v4269 = vpop.f32.mrf.mxu0
        %v4270 = vadd.f32 0.0, %v4269
        %v4271 = vpop.f32.mrf.mxu0
        %v4272 = vpop.f32.mrf.mxu0
        %v4273 = vadd.f32 0.0, %v4272
        %v4274 = vpop.f32.mrf.mxu0
        %4275 = vmatprep.mubr.bf16.mxu0 0
        %4276 = vmatmul.mubr.bf16.gmra.mxu0 %v3793
        %v4277 = vpop.f32.mrf.mxu0
        %v4278 = vadd.f32 0.0, %v4277
        %v4279 = vpop.f32.mrf.mxu0
        %v4280 = vpop.f32.mrf.mxu0
        %v4281 = vadd.f32 0.0, %v4280
        %v4282 = vpop.f32.mrf.mxu0
        %4283 = vmatprep.mubr.bf16.mxu0 0
        %4284 = vmatmul.mubr.bf16.gmra.mxu0 %v3796
        %v4285 = vpop.f32.mrf.mxu0
        %v4286 = vadd.f32 0.0, %v4285
        %v4287 = vpop.f32.mrf.mxu0
        %v4288 = vpop.f32.mrf.mxu0
        %v4289 = vadd.f32 0.0, %v4288
        %v4290 = vpop.f32.mrf.mxu0
        %4291 = vmatprep.mubr.bf16.mxu0 0
        %4292 = vmatmul.mubr.bf16.gmra.mxu0 %v3799
        %v4293 = vpop.f32.mrf.mxu0
        %v4294 = vadd.f32 0.0, %v4293
        %v4295 = vpop.f32.mrf.mxu0
        %v4296 = vpop.f32.mrf.mxu0
        %v4297 = vadd.f32 0.0, %v4296
        %v4298 = vpop.f32.mrf.mxu0
        %4299 = vmatprep.mubr.bf16.mxu0 0
        %4300 = vmatmul.mubr.bf16.gmra.mxu0 %v3802
        %v4301 = vpop.f32.mrf.mxu0
        %v4302 = vadd.f32 0.0, %v4301
        %v4303 = vpop.f32.mrf.mxu0
        %v4304 = vpop.f32.mrf.mxu0
        %v4305 = vadd.f32 0.0, %v4304
        %v4306 = vpop.f32.mrf.mxu0
        %4307 = vmatprep.mubr.bf16.mxu0 0
        %4308 = vmatmul.mubr.bf16.gmra.mxu0 %v4217
        %v4309 = vpop.f32.mrf.mxu0
        %v4310 = vadd.f32 0.0, %v4309
        %v4311 = vpop.f32.mrf.mxu0
        %v4312 = vpop.f32.mrf.mxu0
        %v4313 = vadd.f32 0.0, %v4312
        %v4314 = vpop.f32.mrf.mxu0
        %4315 = vdwg.mxu0
        %v4316 = vadd.f32 %v4178, %v4254
        %v4317 = vadd.f32 %v4179, %v4257
        %v4318 = vadd.f32 %v4180, %v4262
        %v4319 = vadd.f32 %v4181, %v4265
        %v4320 = vadd.f32 %v4182, %v4270
        %v4321 = vadd.f32 %v4183, %v4273
        %v4322 = vadd.f32 %v4184, %v4278
        %v4323 = vadd.f32 %v4185, %v4281
        %v4324 = vadd.f32 %v4186, %v4286
        %v4325 = vadd.f32 %v4187, %v4289
        %v4326 = vadd.f32 %v4188, %v4294
        %v4327 = vadd.f32 %v4189, %v4297
        %v4328 = vadd.f32 %v4190, %v4302
        %v4329 = vadd.f32 %v4191, %v4305
        %v4330 = vadd.f32 %v4192, %v4310
        %v4331 = vadd.f32 %v4193, %v4313
        %s4332 = scalar_lea.vmem %s4, 96
        %v4333 = vld [vmem:[%s4332] sm:$0xf]
        %v4334 = vld [vmem:[%s4332 + $0x4] sm:$0xf]
        %v4335 = vld [vmem:[%s4332 + $0x8] sm:$0xf]
        %v4336 = vld [vmem:[%s4332 + $0xc] sm:$0xf]
        %v4341 = vunpack.c.l.b16 %v4333
        %v4342 = vunpack.c.l.b16 %v4334
        %v4343 = vunpack.c.l.b16 %v4335
        %v4344 = vunpack.c.l.b16 %v4336
        %v4345 = vpack.c.b16 %v4342, %v4341
        %v4346 = vpack.c.b16 %v4344, %v4343
        %v4350 = vsel %vm3475, %v3346, 0
        %4352 = vmatprep.subr.bf16.mxu0 0
        %4353 = vmatpush1.bf16.msra.mxu0 0
        %4354 = vmatprep.subr.bf16.mxu0 0
        %4355 = vmatpush1.bf16.msra.mxu0 0
        %4356 = vmatprep.subr.bf16.mxu0 0
        %4357 = vmatpush1.bf16.msra.mxu0 0
        %4358 = vmatprep.subr.bf16.mxu0 0
        %4359 = vmatpush1.bf16.msra.mxu0 0
        %4360 = vmatprep.subr.bf16.mxu0 0
        %4361 = vmatpush1.bf16.msra.mxu0 0
        %4362 = vmatprep.subr.bf16.mxu0 0
        %4363 = vmatpush1.bf16.msra.mxu0 0
        %4364 = vmatprep.subr.bf16.mxu0 0
        %4365 = vmatpush1.bf16.msra.mxu0 %v4346
        %4366 = vmatprep.subr.bf16.mxu0 0
        %4367 = vmatpush1.bf16.msra.mxu0 %v4345
        %4368 = vmatprep.subr.bf16.mxu0 0
        %4369 = vmatpush2.bf16.msra.mxu0 0
        %4370 = vmatprep.subr.bf16.mxu0 0
        %4371 = vmatpush2.bf16.msra.mxu0 0
        %4372 = vmatprep.subr.bf16.mxu0 0
        %4373 = vmatpush2.bf16.msra.mxu0 0
        %4374 = vmatprep.subr.bf16.mxu0 0
        %4375 = vmatpush2.bf16.msra.mxu0 0
        %4376 = vmatprep.subr.bf16.mxu0 0
        %4377 = vmatpush2.bf16.msra.mxu0 0
        %4378 = vmatprep.subr.bf16.mxu0 0
        %4379 = vmatpush2.bf16.msra.mxu0 0
        %4380 = vmatprep.subr.bf16.mxu0 0
        %4381 = vmatpush2.bf16.msra.mxu0 0
        %4382 = vmatprep.subr.bf16.mxu0 0
        %4383 = vmatpush2.bf16.msra.mxu0 0
        %4384 = vmatprep.mubr.bf16.mxu0 0
        %4385 = vmatmul.mubr.bf16.gmra.mxu0 %v3613
        %v4386 = vpop.f32.mrf.mxu0
        %v4387 = vadd.f32 0.0, %v4386
        %v4388 = vpop.f32.mrf.mxu0
        %v4389 = vpop.f32.mrf.mxu0
        %v4390 = vadd.f32 0.0, %v4389
        %v4391 = vpop.f32.mrf.mxu0
        %4392 = vmatprep.mubr.bf16.mxu0 0
        %4393 = vmatmul.mubr.bf16.gmra.mxu0 %v3615
        %v4394 = vpop.f32.mrf.mxu0
        %v4395 = vadd.f32 0.0, %v4394
        %v4396 = vpop.f32.mrf.mxu0
        %v4397 = vpop.f32.mrf.mxu0
        %v4398 = vadd.f32 0.0, %v4397
        %v4399 = vpop.f32.mrf.mxu0
        %4400 = vmatprep.mubr.bf16.mxu0 0
        %4401 = vmatmul.mubr.bf16.gmra.mxu0 %v3617
        %v4402 = vpop.f32.mrf.mxu0
        %v4403 = vadd.f32 0.0, %v4402
        %v4404 = vpop.f32.mrf.mxu0
        %v4405 = vpop.f32.mrf.mxu0
        %v4406 = vadd.f32 0.0, %v4405
        %v4407 = vpop.f32.mrf.mxu0
        %4408 = vmatprep.mubr.bf16.mxu0 0
        %4409 = vmatmul.mubr.bf16.gmra.mxu0 %v3619
        %v4410 = vpop.f32.mrf.mxu0
        %v4411 = vadd.f32 0.0, %v4410
        %v4412 = vpop.f32.mrf.mxu0
        %v4413 = vpop.f32.mrf.mxu0
        %v4414 = vadd.f32 0.0, %v4413
        %v4415 = vpop.f32.mrf.mxu0
        %4416 = vmatprep.mubr.bf16.mxu0 0
        %4417 = vmatmul.mubr.bf16.gmra.mxu0 %v3621
        %v4418 = vpop.f32.mrf.mxu0
        %v4419 = vadd.f32 0.0, %v4418
        %v4420 = vpop.f32.mrf.mxu0
        %v4421 = vpop.f32.mrf.mxu0
        %v4422 = vadd.f32 0.0, %v4421
        %v4423 = vpop.f32.mrf.mxu0
        %4424 = vmatprep.mubr.bf16.mxu0 0
        %4425 = vmatmul.mubr.bf16.gmra.mxu0 %v3623
        %v4426 = vpop.f32.mrf.mxu0
        %v4427 = vadd.f32 0.0, %v4426
        %v4428 = vpop.f32.mrf.mxu0
        %v4429 = vpop.f32.mrf.mxu0
        %v4430 = vadd.f32 0.0, %v4429
        %v4431 = vpop.f32.mrf.mxu0
        %4432 = vmatprep.mubr.bf16.mxu0 0
        %4433 = vmatmul.mubr.bf16.gmra.mxu0 %v3935
        %v4434 = vpop.f32.mrf.mxu0
        %v4435 = vadd.f32 0.0, %v4434
        %v4436 = vpop.f32.mrf.mxu0
        %v4437 = vpop.f32.mrf.mxu0
        %v4438 = vadd.f32 0.0, %v4437
        %v4439 = vpop.f32.mrf.mxu0
        %4440 = vmatprep.mubr.bf16.mxu0 0
        %4441 = vmatmul.mubr.bf16.gmra.mxu0 %v4350
        %v4442 = vpop.f32.mrf.mxu0
        %v4443 = vadd.f32 0.0, %v4442
        %v4444 = vpop.f32.mrf.mxu0
        %v4445 = vpop.f32.mrf.mxu0
        %v4446 = vadd.f32 0.0, %v4445
        %v4447 = vpop.f32.mrf.mxu0
        %4448 = vdwg.mxu0
        %v4449 = vadd.f32 %v4316, %v4387
        %v4450 = vadd.f32 %v4317, %v4390
        %v4451 = vadd.f32 %v4318, %v4395
        %v4452 = vadd.f32 %v4319, %v4398
        %v4453 = vadd.f32 %v4320, %v4403
        %v4454 = vadd.f32 %v4321, %v4406
        %v4455 = vadd.f32 %v4322, %v4411
        %v4456 = vadd.f32 %v4323, %v4414
        %v4457 = vadd.f32 %v4324, %v4419
        %v4458 = vadd.f32 %v4325, %v4422
        %v4459 = vadd.f32 %v4326, %v4427
        %v4460 = vadd.f32 %v4327, %v4430
        %v4461 = vadd.f32 %v4328, %v4435
        %v4462 = vadd.f32 %v4329, %v4438
        %v4463 = vadd.f32 %v4330, %v4443
        %v4464 = vadd.f32 %v4331, %v4446
        %v4465 = vshrl.u32 %v3346, 16
        %v4467 = vshll.u32 %v3346, 16
        %v4469 = vrot.slane %v4467, 1
        %v4470 = vor.u32 %v4465, %v4469
        %v4472 = vshll.u32 %v3356, 16
        %v4474 = vrot.slane %v4472, 1
        %v4475 = vsel %vm3361, %v4470, %v4474
        %s4476 = scalar_lea.vmem %s4, 112
        %v4477 = vld [vmem:[%s4476] sm:$0xf]
        %v4478 = vld [vmem:[%s4476 + $0x4] sm:$0xf]
        %v4479 = vld [vmem:[%s4476 + $0x8] sm:$0xf]
        %v4480 = vld [vmem:[%s4476 + $0xc] sm:$0xf]
        %v4485 = vunpack.c.l.b16 %v4477
        %v4486 = vunpack.c.l.b16 %v4478
        %v4487 = vunpack.c.l.b16 %v4479
        %v4488 = vunpack.c.l.b16 %v4480
        %v4489 = vpack.c.b16 %v4486, %v4485
        %v4490 = vpack.c.b16 %v4488, %v4487
        %v4494 = vsel %vm3475, %v4475, 0
        %4496 = vmatprep.subr.bf16.mxu0 0
        %4497 = vmatpush1.bf16.msra.mxu0 0
        %4498 = vmatprep.subr.bf16.mxu0 0
        %4499 = vmatpush1.bf16.msra.mxu0 0
        %4500 = vmatprep.subr.bf16.mxu0 0
        %4501 = vmatpush1.bf16.msra.mxu0 0
        %4502 = vmatprep.subr.bf16.mxu0 0
        %4503 = vmatpush1.bf16.msra.mxu0 0
        %4504 = vmatprep.subr.bf16.mxu0 0
        %4505 = vmatpush1.bf16.msra.mxu0 0
        %4506 = vmatprep.subr.bf16.mxu0 0
        %4507 = vmatpush1.bf16.msra.mxu0 0
        %4508 = vmatprep.subr.bf16.mxu0 0
        %4509 = vmatpush1.bf16.msra.mxu0 %v4490
        %4510 = vmatprep.subr.bf16.mxu0 0
        %4511 = vmatpush1.bf16.msra.mxu0 %v4489
        %4512 = vmatprep.subr.bf16.mxu0 0
        %4513 = vmatpush2.bf16.msra.mxu0 0
        %4514 = vmatprep.subr.bf16.mxu0 0
        %4515 = vmatpush2.bf16.msra.mxu0 0
        %4516 = vmatprep.subr.bf16.mxu0 0
        %4517 = vmatpush2.bf16.msra.mxu0 0
        %4518 = vmatprep.subr.bf16.mxu0 0
        %4519 = vmatpush2.bf16.msra.mxu0 0
        %4520 = vmatprep.subr.bf16.mxu0 0
        %4521 = vmatpush2.bf16.msra.mxu0 0
        %4522 = vmatprep.subr.bf16.mxu0 0
        %4523 = vmatpush2.bf16.msra.mxu0 0
        %4524 = vmatprep.subr.bf16.mxu0 0
        %4525 = vmatpush2.bf16.msra.mxu0 0
        %4526 = vmatprep.subr.bf16.mxu0 0
        %4527 = vmatpush2.bf16.msra.mxu0 0
        %4528 = vmatprep.mubr.bf16.mxu0 0
        %4529 = vmatmul.mubr.bf16.gmra.mxu0 %v3483
        %v4530 = vpop.f32.mrf.mxu0
        %v4531 = vadd.f32 0.0, %v4530
        %v4532 = vpop.f32.mrf.mxu0
        %v4533 = vpop.f32.mrf.mxu0
        %v4534 = vadd.f32 0.0, %v4533
        %v4535 = vpop.f32.mrf.mxu0
        %4536 = vmatprep.mubr.bf16.mxu0 0
        %4537 = vmatmul.mubr.bf16.gmra.mxu0 %v3486
        %v4538 = vpop.f32.mrf.mxu0
        %v4539 = vadd.f32 0.0, %v4538
        %v4540 = vpop.f32.mrf.mxu0
        %v4541 = vpop.f32.mrf.mxu0
        %v4542 = vadd.f32 0.0, %v4541
        %v4543 = vpop.f32.mrf.mxu0
        %4544 = vmatprep.mubr.bf16.mxu0 0
        %4545 = vmatmul.mubr.bf16.gmra.mxu0 %v3489
        %v4546 = vpop.f32.mrf.mxu0
        %v4547 = vadd.f32 0.0, %v4546
        %v4548 = vpop.f32.mrf.mxu0
        %v4549 = vpop.f32.mrf.mxu0
        %v4550 = vadd.f32 0.0, %v4549
        %v4551 = vpop.f32.mrf.mxu0
        %4552 = vmatprep.mubr.bf16.mxu0 0
        %4553 = vmatmul.mubr.bf16.gmra.mxu0 %v3492
        %v4554 = vpop.f32.mrf.mxu0
        %v4555 = vadd.f32 0.0, %v4554
        %v4556 = vpop.f32.mrf.mxu0
        %v4557 = vpop.f32.mrf.mxu0
        %v4558 = vadd.f32 0.0, %v4557
        %v4559 = vpop.f32.mrf.mxu0
        %4560 = vmatprep.mubr.bf16.mxu0 0
        %4561 = vmatmul.mubr.bf16.gmra.mxu0 %v3495
        %v4562 = vpop.f32.mrf.mxu0
        %v4563 = vadd.f32 0.0, %v4562
        %v4564 = vpop.f32.mrf.mxu0
        %v4565 = vpop.f32.mrf.mxu0
        %v4566 = vadd.f32 0.0, %v4565
        %v4567 = vpop.f32.mrf.mxu0
        %4568 = vmatprep.mubr.bf16.mxu0 0
        %4569 = vmatmul.mubr.bf16.gmra.mxu0 %v3498
        %v4570 = vpop.f32.mrf.mxu0
        %v4571 = vadd.f32 0.0, %v4570
        %v4572 = vpop.f32.mrf.mxu0
        %v4573 = vpop.f32.mrf.mxu0
        %v4574 = vadd.f32 0.0, %v4573
        %v4575 = vpop.f32.mrf.mxu0
        %4576 = vmatprep.mubr.bf16.mxu0 0
        %4577 = vmatmul.mubr.bf16.gmra.mxu0 %v4079
        %v4578 = vpop.f32.mrf.mxu0
        %v4579 = vadd.f32 0.0, %v4578
        %v4580 = vpop.f32.mrf.mxu0
        %v4581 = vpop.f32.mrf.mxu0
        %v4582 = vadd.f32 0.0, %v4581
        %v4583 = vpop.f32.mrf.mxu0
        %4584 = vmatprep.mubr.bf16.mxu0 0
        %4585 = vmatmul.mubr.bf16.gmra.mxu0 %v4494
        %v4586 = vpop.f32.mrf.mxu0
        %v4587 = vadd.f32 0.0, %v4586
        %v4588 = vpop.f32.mrf.mxu0
        %v4589 = vpop.f32.mrf.mxu0
        %v4590 = vadd.f32 0.0, %v4589
        %v4591 = vpop.f32.mrf.mxu0
        %4592 = vdwg.mxu0
        %v4593 = vadd.f32 %v4449, %v4531
        %v4594 = vadd.f32 %v4450, %v4534
        %v4595 = vadd.f32 %v4451, %v4539
        %v4596 = vadd.f32 %v4452, %v4542
        %v4597 = vadd.f32 %v4453, %v4547
        %v4598 = vadd.f32 %v4454, %v4550
        %v4599 = vadd.f32 %v4455, %v4555
        %v4600 = vadd.f32 %v4456, %v4558
        %v4601 = vadd.f32 %v4457, %v4563
        %v4602 = vadd.f32 %v4458, %v4566
        %v4603 = vadd.f32 %v4459, %v4571
        %v4604 = vadd.f32 %v4460, %v4574
        %v4605 = vadd.f32 %v4461, %v4579
        %v4606 = vadd.f32 %v4462, %v4582
        %v4607 = vadd.f32 %v4463, %v4587
        %v4608 = vadd.f32 %v4464, %v4590
        %v4611 = vrot.slane %v3346, 1
        %v4612 = vrot.slane %v3356, 1
        %v4613 = vsel %vm3738, %v4611, %v4612
        %s4614 = scalar_lea.vmem %s4, 128
        %v4615 = vld [vmem:[%s4614] sm:$0xf]
        %v4616 = vld [vmem:[%s4614 + $0x4] sm:$0xf]
        %v4617 = vld [vmem:[%s4614 + $0x8] sm:$0xf]
        %v4618 = vld [vmem:[%s4614 + $0xc] sm:$0xf]
        %v4623 = vunpack.c.l.b16 %v4615
        %v4624 = vunpack.c.l.b16 %v4616
        %v4625 = vunpack.c.l.b16 %v4617
        %v4626 = vunpack.c.l.b16 %v4618
        %v4627 = vpack.c.b16 %v4624, %v4623
        %v4628 = vpack.c.b16 %v4626, %v4625
        %v4632 = vsel %vm3475, %v4613, 0
        %4634 = vmatprep.subr.bf16.mxu0 0
        %4635 = vmatpush1.bf16.msra.mxu0 0
        %4636 = vmatprep.subr.bf16.mxu0 0
        %4637 = vmatpush1.bf16.msra.mxu0 0
        %4638 = vmatprep.subr.bf16.mxu0 0
        %4639 = vmatpush1.bf16.msra.mxu0 0
        %4640 = vmatprep.subr.bf16.mxu0 0
        %4641 = vmatpush1.bf16.msra.mxu0 0
        %4642 = vmatprep.subr.bf16.mxu0 0
        %4643 = vmatpush1.bf16.msra.mxu0 0
        %4644 = vmatprep.subr.bf16.mxu0 0
        %4645 = vmatpush1.bf16.msra.mxu0 0
        %4646 = vmatprep.subr.bf16.mxu0 0
        %4647 = vmatpush1.bf16.msra.mxu0 %v4628
        %4648 = vmatprep.subr.bf16.mxu0 0
        %4649 = vmatpush1.bf16.msra.mxu0 %v4627
        %4650 = vmatprep.subr.bf16.mxu0 0
        %4651 = vmatpush2.bf16.msra.mxu0 0
        %4652 = vmatprep.subr.bf16.mxu0 0
        %4653 = vmatpush2.bf16.msra.mxu0 0
        %4654 = vmatprep.subr.bf16.mxu0 0
        %4655 = vmatpush2.bf16.msra.mxu0 0
        %4656 = vmatprep.subr.bf16.mxu0 0
        %4657 = vmatpush2.bf16.msra.mxu0 0
        %4658 = vmatprep.subr.bf16.mxu0 0
        %4659 = vmatpush2.bf16.msra.mxu0 0
        %4660 = vmatprep.subr.bf16.mxu0 0
        %4661 = vmatpush2.bf16.msra.mxu0 0
        %4662 = vmatprep.subr.bf16.mxu0 0
        %4663 = vmatpush2.bf16.msra.mxu0 0
        %4664 = vmatprep.subr.bf16.mxu0 0
        %4665 = vmatpush2.bf16.msra.mxu0 0
        %4666 = vmatprep.mubr.bf16.mxu0 0
        %4667 = vmatmul.mubr.bf16.gmra.mxu0 %v3787
        %v4668 = vpop.f32.mrf.mxu0
        %v4669 = vadd.f32 0.0, %v4668
        %v4670 = vpop.f32.mrf.mxu0
        %v4671 = vpop.f32.mrf.mxu0
        %v4672 = vadd.f32 0.0, %v4671
        %v4673 = vpop.f32.mrf.mxu0
        %4674 = vmatprep.mubr.bf16.mxu0 0
        %4675 = vmatmul.mubr.bf16.gmra.mxu0 %v3790
        %v4676 = vpop.f32.mrf.mxu0
        %v4677 = vadd.f32 0.0, %v4676
        %v4678 = vpop.f32.mrf.mxu0
        %v4679 = vpop.f32.mrf.mxu0
        %v4680 = vadd.f32 0.0, %v4679
        %v4681 = vpop.f32.mrf.mxu0
        %4682 = vmatprep.mubr.bf16.mxu0 0
        %4683 = vmatmul.mubr.bf16.gmra.mxu0 %v3793
        %v4684 = vpop.f32.mrf.mxu0
        %v4685 = vadd.f32 0.0, %v4684
        %v4686 = vpop.f32.mrf.mxu0
        %v4687 = vpop.f32.mrf.mxu0
        %v4688 = vadd.f32 0.0, %v4687
        %v4689 = vpop.f32.mrf.mxu0
        %4690 = vmatprep.mubr.bf16.mxu0 0
        %4691 = vmatmul.mubr.bf16.gmra.mxu0 %v3796
        %v4692 = vpop.f32.mrf.mxu0
        %v4693 = vadd.f32 0.0, %v4692
        %v4694 = vpop.f32.mrf.mxu0
        %v4695 = vpop.f32.mrf.mxu0
        %v4696 = vadd.f32 0.0, %v4695
        %v4697 = vpop.f32.mrf.mxu0
        %4698 = vmatprep.mubr.bf16.mxu0 0
        %4699 = vmatmul.mubr.bf16.gmra.mxu0 %v3799
        %v4700 = vpop.f32.mrf.mxu0
        %v4701 = vadd.f32 0.0, %v4700
        %v4702 = vpop.f32.mrf.mxu0
        %v4703 = vpop.f32.mrf.mxu0
        %v4704 = vadd.f32 0.0, %v4703
        %v4705 = vpop.f32.mrf.mxu0
        %4706 = vmatprep.mubr.bf16.mxu0 0
        %4707 = vmatmul.mubr.bf16.gmra.mxu0 %v3802
        %v4708 = vpop.f32.mrf.mxu0
        %v4709 = vadd.f32 0.0, %v4708
        %v4710 = vpop.f32.mrf.mxu0
        %v4711 = vpop.f32.mrf.mxu0
        %v4712 = vadd.f32 0.0, %v4711
        %v4713 = vpop.f32.mrf.mxu0
        %4714 = vmatprep.mubr.bf16.mxu0 0
        %4715 = vmatmul.mubr.bf16.gmra.mxu0 %v4217
        %v4716 = vpop.f32.mrf.mxu0
        %v4717 = vadd.f32 0.0, %v4716
        %v4718 = vpop.f32.mrf.mxu0
        %v4719 = vpop.f32.mrf.mxu0
        %v4720 = vadd.f32 0.0, %v4719
        %v4721 = vpop.f32.mrf.mxu0
        %4722 = vmatprep.mubr.bf16.mxu0 0
        %4723 = vmatmul.mubr.bf16.gmra.mxu0 %v4632
        %v4724 = vpop.f32.mrf.mxu0
        %v4725 = vadd.f32 0.0, %v4724
        %v4726 = vpop.f32.mrf.mxu0
        %v4727 = vpop.f32.mrf.mxu0
        %v4728 = vadd.f32 0.0, %v4727
        %v4729 = vpop.f32.mrf.mxu0
        %4730 = vdwg.mxu0
        %v4731 = vadd.f32 %v4593, %v4669
        %v4732 = vadd.f32 %v4594, %v4672
        %v4733 = vadd.f32 %v4595, %v4677
        %v4734 = vadd.f32 %v4596, %v4680
        %v4735 = vadd.f32 %v4597, %v4685
        %v4736 = vadd.f32 %v4598, %v4688
        %v4737 = vadd.f32 %v4599, %v4693
        %v4738 = vadd.f32 %v4600, %v4696
        %v4739 = vadd.f32 %v4601, %v4701
        %v4740 = vadd.f32 %v4602, %v4704
        %v4741 = vadd.f32 %v4603, %v4709
        %v4742 = vadd.f32 %v4604, %v4712
        %v4743 = vadd.f32 %v4605, %v4717
        %v4744 = vadd.f32 %v4606, %v4720
        %v4745 = vadd.f32 %v4607, %v4725
        %v4746 = vadd.f32 %v4608, %v4728
        %v4747 = vld [vmem:[%s5] sm:$0x1]
        %v4749 = vlaneseq
        %v4750 = vshrl.u32 %v4749, 7
        %v4751 = vsub.s32 0, %v4750
        %v4752 = vrot.slane %v4747, %v4751
        %v4754 = vadd.f32 %v4731, %v4752
        %v4755 = vadd.f32 %v4732, %v4752
        %v4756 = vadd.f32 %v4733, %v4752
        %v4757 = vadd.f32 %v4734, %v4752
        %v4758 = vadd.f32 %v4735, %v4752
        %v4759 = vadd.f32 %v4736, %v4752
        %v4760 = vadd.f32 %v4737, %v4752
        %v4761 = vadd.f32 %v4738, %v4752
        %v4762 = vadd.f32 %v4739, %v4752
        %v4763 = vadd.f32 %v4740, %v4752
        %v4764 = vadd.f32 %v4741, %v4752
        %v4765 = vadd.f32 %v4742, %v4752
        %v4766 = vadd.f32 %v4743, %v4752
        %v4767 = vadd.f32 %v4744, %v4752
        %v4768 = vadd.f32 %v4745, %v4752
        %v4769 = vadd.f32 %v4746, %v4752
        %v4770 = vmax.f32 %v4754, 0.0
        %v4771 = vmax.f32 %v4755, 0.0
        %v4772 = vmax.f32 %v4756, 0.0
        %v4773 = vmax.f32 %v4757, 0.0
        %v4774 = vmax.f32 %v4758, 0.0
        %v4775 = vmax.f32 %v4759, 0.0
        %v4776 = vmax.f32 %v4760, 0.0
        %v4777 = vmax.f32 %v4761, 0.0
        %v4778 = vmax.f32 %v4762, 0.0
        %v4779 = vmax.f32 %v4763, 0.0
        %v4780 = vmax.f32 %v4764, 0.0
        %v4781 = vmax.f32 %v4765, 0.0
        %v4782 = vmax.f32 %v4766, 0.0
        %v4783 = vmax.f32 %v4767, 0.0
        %v4784 = vmax.f32 %v4768, 0.0
        %v4785 = vmax.f32 %v4769, 0.0
        %v4818 = vcombine.low %v2386, %v2387
        %v4819 = vcombine.low %v2388, %v2389
        %v4820 = vcombine.low %v2390, %v2391
        %v4821 = vcombine.low %v2392, %v2393
        %v4822 = vcombine.low %v2394, %v2395
        %v4823 = vcombine.low %v2396, %v2397
        %v4824 = vcombine.low %v2398, %v2399
        %v4825 = vcombine.low %v2400, %v2401
        %v4826 = vcombine.low %v2402, %v2403
        %v4827 = vcombine.low %v2404, %v2405
        %v4828 = vcombine.low %v2406, %v2407
        %v4829 = vcombine.low %v2408, %v2409
        %v4830 = vcombine.low %v2410, %v2411
        %v4831 = vcombine.low %v2412, %v2413
        %v4832 = vcombine.low %v2414, %v2415
        %v4833 = vcombine.low %v2416, %v2417
        %v4850 = vpack.c.bf16 %v4819, %v4818
        %v4851 = vpack.c.bf16 %v4821, %v4820
        %v4852 = vpack.c.bf16 %v4823, %v4822
        %v4853 = vpack.c.bf16 %v4825, %v4824
        %v4854 = vpack.c.bf16 %v4827, %v4826
        %v4855 = vpack.c.bf16 %v4829, %v4828
        %v4856 = vpack.c.bf16 %v4831, %v4830
        %v4857 = vpack.c.bf16 %v4833, %v4832
        %v4866 = vunpack.c.l.b16 %v4850
        %v4867 = vunpack.c.h.b16 %v4850
        %v4868 = vunpack.c.l.b16 %v4851
        %v4869 = vunpack.c.h.b16 %v4851
        %v4870 = vunpack.c.l.b16 %v4852
        %v4871 = vunpack.c.h.b16 %v4852
        %v4872 = vunpack.c.l.b16 %v4853
        %v4873 = vunpack.c.h.b16 %v4853
        %v4874 = vunpack.c.l.b16 %v4854
        %v4875 = vunpack.c.h.b16 %v4854
        %v4876 = vunpack.c.l.b16 %v4855
        %v4877 = vunpack.c.h.b16 %v4855
        %v4878 = vunpack.c.l.b16 %v4856
        %v4879 = vunpack.c.h.b16 %v4856
        %v4880 = vunpack.c.l.b16 %v4857
        %v4881 = vunpack.c.h.b16 %v4857
        %v4886 = vunpack.c.l.b16 %v545
        %v4887 = vunpack.c.l.b16 %v546
        %v4888 = vunpack.c.l.b16 %v551
        %v4889 = vunpack.c.l.b16 %v552
        %v4890 = vpack.c.b16 %v4887, %v4886
        %v4891 = vpack.c.b16 %v4867, %v4866
        %v4892 = vpack.c.b16 %v4869, %v4868
        %v4893 = vpack.c.b16 %v4871, %v4870
        %v4894 = vpack.c.b16 %v4873, %v4872
        %v4895 = vpack.c.b16 %v4875, %v4874
        %v4896 = vpack.c.b16 %v4877, %v4876
        %v4897 = vpack.c.b16 %v4879, %v4878
        %v4898 = vpack.c.b16 %v4881, %v4880
        %v4899 = vpack.c.b16 %v4889, %v4888
        %v4901 = vshrl.u32 %v4890, 16
        %v4903 = vrot.slane %v4901, 7
        %v4904 = vshll.u32 %v4890, 16
        %v4906 = vor.u32 %v4903, %v4904
        %v4908 = vshrl.u32 %v4891, 16
        %v4910 = vrot.slane %v4908, 7
        %v4911 = vshll.u32 %v4891, 16
        %v4913 = vor.u32 %v4910, %v4911
        %v4915 = vshrl.u32 %v4892, 16
        %v4917 = vrot.slane %v4915, 7
        %v4918 = vshll.u32 %v4892, 16
        %v4920 = vor.u32 %v4917, %v4918
        %v4922 = vshrl.u32 %v4893, 16
        %v4924 = vrot.slane %v4922, 7
        %v4925 = vshll.u32 %v4893, 16
        %v4927 = vor.u32 %v4924, %v4925
        %v4929 = vshrl.u32 %v4894, 16
        %v4931 = vrot.slane %v4929, 7
        %v4932 = vshll.u32 %v4894, 16
        %v4934 = vor.u32 %v4931, %v4932
        %v4936 = vshrl.u32 %v4895, 16
        %v4938 = vrot.slane %v4936, 7
        %v4939 = vshll.u32 %v4895, 16
        %v4941 = vor.u32 %v4938, %v4939
        %v4943 = vshrl.u32 %v4896, 16
        %v4945 = vrot.slane %v4943, 7
        %v4946 = vshll.u32 %v4896, 16
        %v4948 = vor.u32 %v4945, %v4946
        %v4950 = vshrl.u32 %v4897, 16
        %v4952 = vrot.slane %v4950, 7
        %v4953 = vshll.u32 %v4897, 16
        %v4955 = vor.u32 %v4952, %v4953
        %v4957 = vshrl.u32 %v4898, 16
        %v4959 = vrot.slane %v4957, 7
        %v4960 = vshll.u32 %v4898, 16
        %v4962 = vor.u32 %v4959, %v4960
        %v4964 = vshrl.u32 %v4899, 16
        %v4966 = vrot.slane %v4964, 7
        %v4967 = vshll.u32 %v4899, 16
        %v4969 = vor.u32 %v4966, %v4967
        %v4990 = vsel %vm3336, 0, %v4906
        %v4991 = vsel %vm3336, 0, %v4913
        %v4992 = vsel %vm3336, 0, %v4920
        %v4993 = vsel %vm3336, 0, %v4927
        %v4994 = vsel %vm3336, 0, %v4934
        %v4995 = vsel %vm3336, 0, %v4941
        %v4996 = vsel %vm3336, 0, %v4948
        %v4997 = vsel %vm3336, 0, %v4955
        %v4998 = vsel %vm3336, 0, %v4962
        %v4999 = vsel %vm3336, 0, %v4969
        %v5000 = vsel %vm3336, %v4903, 0
        %v5001 = vsel %vm3336, %v4910, 0
        %v5002 = vsel %vm3336, %v4917, 0
        %v5003 = vsel %vm3336, %v4924, 0
        %v5004 = vsel %vm3336, %v4931, 0
        %v5005 = vsel %vm3336, %v4938, 0
        %v5006 = vsel %vm3336, %v4945, 0
        %v5007 = vsel %vm3336, %v4952, 0
        %v5008 = vsel %vm3336, %v4959, 0
        %v5009 = vsel %vm3336, %v4966, 0
        %s5010 = scalar_lea.vmem %s4, 144
        %v5011 = vld [vmem:[%s5010] sm:$0xf]
        %v5012 = vld [vmem:[%s5010 + $0x4] sm:$0xf]
        %v5013 = vld [vmem:[%s5010 + $0x8] sm:$0xf]
        %v5014 = vld [vmem:[%s5010 + $0xc] sm:$0xf]
        %v5016 = vshrl.u32 %v4990, 16
        %v5018 = vshll.u32 %v4990, 16
        %v5020 = vrot.slane %v5018, 1
        %v5021 = vor.u32 %v5016, %v5020
        %v5023 = vshll.u32 %v5000, 16
        %v5025 = vrot.slane %v5023, 1
        %v5026 = vsel %vm3361, %v5021, %v5025
        %v5028 = vshrl.u32 %v4991, 16
        %v5030 = vshll.u32 %v4991, 16
        %v5032 = vrot.slane %v5030, 1
        %v5033 = vor.u32 %v5028, %v5032
        %v5035 = vshll.u32 %v5001, 16
        %v5037 = vrot.slane %v5035, 1
        %v5038 = vsel %vm3361, %v5033, %v5037
        %v5040 = vshrl.u32 %v4992, 16
        %v5042 = vshll.u32 %v4992, 16
        %v5044 = vrot.slane %v5042, 1
        %v5045 = vor.u32 %v5040, %v5044
        %v5047 = vshll.u32 %v5002, 16
        %v5049 = vrot.slane %v5047, 1
        %v5050 = vsel %vm3361, %v5045, %v5049
        %v5052 = vshrl.u32 %v4993, 16
        %v5054 = vshll.u32 %v4993, 16
        %v5056 = vrot.slane %v5054, 1
        %v5057 = vor.u32 %v5052, %v5056
        %v5059 = vshll.u32 %v5003, 16
        %v5061 = vrot.slane %v5059, 1
        %v5062 = vsel %vm3361, %v5057, %v5061
        %v5064 = vshrl.u32 %v4994, 16
        %v5066 = vshll.u32 %v4994, 16
        %v5068 = vrot.slane %v5066, 1
        %v5069 = vor.u32 %v5064, %v5068
        %v5071 = vshll.u32 %v5004, 16
        %v5073 = vrot.slane %v5071, 1
        %v5074 = vsel %vm3361, %v5069, %v5073
        %v5076 = vshrl.u32 %v4995, 16
        %v5078 = vshll.u32 %v4995, 16
        %v5080 = vrot.slane %v5078, 1
        %v5081 = vor.u32 %v5076, %v5080
        %v5083 = vshll.u32 %v5005, 16
        %v5085 = vrot.slane %v5083, 1
        %v5086 = vsel %vm3361, %v5081, %v5085
        %v5088 = vshrl.u32 %v4996, 16
        %v5090 = vshll.u32 %v4996, 16
        %v5092 = vrot.slane %v5090, 1
        %v5093 = vor.u32 %v5088, %v5092
        %v5095 = vshll.u32 %v5006, 16
        %v5097 = vrot.slane %v5095, 1
        %v5098 = vsel %vm3361, %v5093, %v5097
        %v5100 = vshrl.u32 %v4997, 16
        %v5102 = vshll.u32 %v4997, 16
        %v5104 = vrot.slane %v5102, 1
        %v5105 = vor.u32 %v5100, %v5104
        %v5107 = vshll.u32 %v5007, 16
        %v5109 = vrot.slane %v5107, 1
        %v5110 = vsel %vm3361, %v5105, %v5109
        %s5111 = scalar_lea.vmem %s4, 160
        %v5112 = vld [vmem:[%s5111] sm:$0xf]
        %v5113 = vld [vmem:[%s5111 + $0x4] sm:$0xf]
        %v5114 = vld [vmem:[%s5111 + $0x8] sm:$0xf]
        %v5115 = vld [vmem:[%s5111 + $0xc] sm:$0xf]
        %v5120 = vunpack.c.l.b16 %v5112
        %v5121 = vunpack.c.l.b16 %v5113
        %v5122 = vunpack.c.l.b16 %v5114
        %v5123 = vunpack.c.l.b16 %v5115
        %v5124 = vpack.c.b16 %v5121, %v5120
        %v5125 = vpack.c.b16 %v5123, %v5122
        %v5129 = vsel %vm3475, %v5026, 0
        %v5132 = vsel %vm3475, %v5038, 0
        %v5135 = vsel %vm3475, %v5050, 0
        %v5138 = vsel %vm3475, %v5062, 0
        %v5141 = vsel %vm3475, %v5074, 0
        %v5144 = vsel %vm3475, %v5086, 0
        %v5147 = vsel %vm3475, %v5098, 0
        %v5150 = vsel %vm3475, %v5110, 0
        %5152 = vmatprep.subr.bf16.mxu0 0
        %5153 = vmatpush1.bf16.msra.mxu0 0
        %5154 = vmatprep.subr.bf16.mxu0 0
        %5155 = vmatpush1.bf16.msra.mxu0 0
        %5156 = vmatprep.subr.bf16.mxu0 0
        %5157 = vmatpush1.bf16.msra.mxu0 0
        %5158 = vmatprep.subr.bf16.mxu0 0
        %5159 = vmatpush1.bf16.msra.mxu0 0
        %5160 = vmatprep.subr.bf16.mxu0 0
        %5161 = vmatpush1.bf16.msra.mxu0 0
        %5162 = vmatprep.subr.bf16.mxu0 0
        %5163 = vmatpush1.bf16.msra.mxu0 0
        %5164 = vmatprep.subr.bf16.mxu0 0
        %5165 = vmatpush1.bf16.msra.mxu0 %v5125
        %5166 = vmatprep.subr.bf16.mxu0 0
        %5167 = vmatpush1.bf16.msra.mxu0 %v5124
        %5168 = vmatprep.subr.bf16.mxu0 0
        %5169 = vmatpush2.bf16.msra.mxu0 0
        %5170 = vmatprep.subr.bf16.mxu0 0
        %5171 = vmatpush2.bf16.msra.mxu0 0
        %5172 = vmatprep.subr.bf16.mxu0 0
        %5173 = vmatpush2.bf16.msra.mxu0 0
        %5174 = vmatprep.subr.bf16.mxu0 0
        %5175 = vmatpush2.bf16.msra.mxu0 0
        %5176 = vmatprep.subr.bf16.mxu0 0
        %5177 = vmatpush2.bf16.msra.mxu0 0
        %5178 = vmatprep.subr.bf16.mxu0 0
        %5179 = vmatpush2.bf16.msra.mxu0 0
        %5180 = vmatprep.subr.bf16.mxu0 0
        %5181 = vmatpush2.bf16.msra.mxu0 0
        %5182 = vmatprep.subr.bf16.mxu0 0
        %5183 = vmatpush2.bf16.msra.mxu0 0
        %5184 = vmatprep.mubr.bf16.mxu0 0
        %5185 = vmatmul.mubr.bf16.gmra.mxu0 %v5129
        %v5186 = vpop.f32.mrf.mxu0
        %v5187 = vadd.f32 0.0, %v5186
        %v5188 = vpop.f32.mrf.mxu0
        %v5189 = vpop.f32.mrf.mxu0
        %v5190 = vadd.f32 0.0, %v5189
        %v5191 = vpop.f32.mrf.mxu0
        %5192 = vmatprep.mubr.bf16.mxu0 0
        %5193 = vmatmul.mubr.bf16.gmra.mxu0 %v5132
        %v5194 = vpop.f32.mrf.mxu0
        %v5195 = vadd.f32 0.0, %v5194
        %v5196 = vpop.f32.mrf.mxu0
        %v5197 = vpop.f32.mrf.mxu0
        %v5198 = vadd.f32 0.0, %v5197
        %v5199 = vpop.f32.mrf.mxu0
        %5200 = vmatprep.mubr.bf16.mxu0 0
        %5201 = vmatmul.mubr.bf16.gmra.mxu0 %v5135
        %v5202 = vpop.f32.mrf.mxu0
        %v5203 = vadd.f32 0.0, %v5202
        %v5204 = vpop.f32.mrf.mxu0
        %v5205 = vpop.f32.mrf.mxu0
        %v5206 = vadd.f32 0.0, %v5205
        %v5207 = vpop.f32.mrf.mxu0
        %5208 = vmatprep.mubr.bf16.mxu0 0
        %5209 = vmatmul.mubr.bf16.gmra.mxu0 %v5138
        %v5210 = vpop.f32.mrf.mxu0
        %v5211 = vadd.f32 0.0, %v5210
        %v5212 = vpop.f32.mrf.mxu0
        %v5213 = vpop.f32.mrf.mxu0
        %v5214 = vadd.f32 0.0, %v5213
        %v5215 = vpop.f32.mrf.mxu0
        %5216 = vmatprep.mubr.bf16.mxu0 0
        %5217 = vmatmul.mubr.bf16.gmra.mxu0 %v5141
        %v5218 = vpop.f32.mrf.mxu0
        %v5219 = vadd.f32 0.0, %v5218
        %v5220 = vpop.f32.mrf.mxu0
        %v5221 = vpop.f32.mrf.mxu0
        %v5222 = vadd.f32 0.0, %v5221
        %v5223 = vpop.f32.mrf.mxu0
        %5224 = vmatprep.mubr.bf16.mxu0 0
        %5225 = vmatmul.mubr.bf16.gmra.mxu0 %v5144
        %v5226 = vpop.f32.mrf.mxu0
        %v5227 = vadd.f32 0.0, %v5226
        %v5228 = vpop.f32.mrf.mxu0
        %v5229 = vpop.f32.mrf.mxu0
        %v5230 = vadd.f32 0.0, %v5229
        %v5231 = vpop.f32.mrf.mxu0
        %5232 = vmatprep.mubr.bf16.mxu0 0
        %5233 = vmatmul.mubr.bf16.gmra.mxu0 %v5147
        %v5234 = vpop.f32.mrf.mxu0
        %v5235 = vadd.f32 0.0, %v5234
        %v5236 = vpop.f32.mrf.mxu0
        %v5237 = vpop.f32.mrf.mxu0
        %v5238 = vadd.f32 0.0, %v5237
        %v5239 = vpop.f32.mrf.mxu0
        %5240 = vmatprep.mubr.bf16.mxu0 0
        %5241 = vmatmul.mubr.bf16.gmra.mxu0 %v5150
        %v5242 = vpop.f32.mrf.mxu0
        %v5243 = vadd.f32 0.0, %v5242
        %v5244 = vpop.f32.mrf.mxu0
        %v5245 = vpop.f32.mrf.mxu0
        %v5246 = vadd.f32 0.0, %v5245
        %v5247 = vpop.f32.mrf.mxu0
        %5248 = vdwg.mxu0
        %v5253 = vunpack.c.l.b16 %v5011
        %v5254 = vunpack.c.l.b16 %v5012
        %v5255 = vunpack.c.l.b16 %v5013
        %v5256 = vunpack.c.l.b16 %v5014
        %v5257 = vpack.c.b16 %v5254, %v5253
        %v5258 = vpack.c.b16 %v5256, %v5255
        %v5261 = vsel %vm3475, %v4990, 0
        %v5263 = vsel %vm3475, %v4991, 0
        %v5265 = vsel %vm3475, %v4992, 0
        %v5267 = vsel %vm3475, %v4993, 0
        %v5269 = vsel %vm3475, %v4994, 0
        %v5271 = vsel %vm3475, %v4995, 0
        %v5273 = vsel %vm3475, %v4996, 0
        %v5275 = vsel %vm3475, %v4997, 0
        %5277 = vmatprep.subr.bf16.mxu0 0
        %5278 = vmatpush1.bf16.msra.mxu0 0
        %5279 = vmatprep.subr.bf16.mxu0 0
        %5280 = vmatpush1.bf16.msra.mxu0 0
        %5281 = vmatprep.subr.bf16.mxu0 0
        %5282 = vmatpush1.bf16.msra.mxu0 0
        %5283 = vmatprep.subr.bf16.mxu0 0
        %5284 = vmatpush1.bf16.msra.mxu0 0
        %5285 = vmatprep.subr.bf16.mxu0 0
        %5286 = vmatpush1.bf16.msra.mxu0 0
        %5287 = vmatprep.subr.bf16.mxu0 0
        %5288 = vmatpush1.bf16.msra.mxu0 0
        %5289 = vmatprep.subr.bf16.mxu0 0
        %5290 = vmatpush1.bf16.msra.mxu0 %v5258
        %5291 = vmatprep.subr.bf16.mxu0 0
        %5292 = vmatpush1.bf16.msra.mxu0 %v5257
        %5293 = vmatprep.subr.bf16.mxu0 0
        %5294 = vmatpush2.bf16.msra.mxu0 0
        %5295 = vmatprep.subr.bf16.mxu0 0
        %5296 = vmatpush2.bf16.msra.mxu0 0
        %5297 = vmatprep.subr.bf16.mxu0 0
        %5298 = vmatpush2.bf16.msra.mxu0 0
        %5299 = vmatprep.subr.bf16.mxu0 0
        %5300 = vmatpush2.bf16.msra.mxu0 0
        %5301 = vmatprep.subr.bf16.mxu0 0
        %5302 = vmatpush2.bf16.msra.mxu0 0
        %5303 = vmatprep.subr.bf16.mxu0 0
        %5304 = vmatpush2.bf16.msra.mxu0 0
        %5305 = vmatprep.subr.bf16.mxu0 0
        %5306 = vmatpush2.bf16.msra.mxu0 0
        %5307 = vmatprep.subr.bf16.mxu0 0
        %5308 = vmatpush2.bf16.msra.mxu0 0
        %5309 = vmatprep.mubr.bf16.mxu0 0
        %5310 = vmatmul.mubr.bf16.gmra.mxu0 %v5261
        %v5311 = vpop.f32.mrf.mxu0
        %v5312 = vadd.f32 %v5187, %v5311
        %v5313 = vpop.f32.mrf.mxu0
        %v5314 = vpop.f32.mrf.mxu0
        %v5315 = vadd.f32 %v5190, %v5314
        %v5316 = vpop.f32.mrf.mxu0
        %5317 = vmatprep.mubr.bf16.mxu0 0
        %5318 = vmatmul.mubr.bf16.gmra.mxu0 %v5263
        %v5319 = vpop.f32.mrf.mxu0
        %v5320 = vadd.f32 %v5195, %v5319
        %v5321 = vpop.f32.mrf.mxu0
        %v5322 = vpop.f32.mrf.mxu0
        %v5323 = vadd.f32 %v5198, %v5322
        %v5324 = vpop.f32.mrf.mxu0
        %5325 = vmatprep.mubr.bf16.mxu0 0
        %5326 = vmatmul.mubr.bf16.gmra.mxu0 %v5265
        %v5327 = vpop.f32.mrf.mxu0
        %v5328 = vadd.f32 %v5203, %v5327
        %v5329 = vpop.f32.mrf.mxu0
        %v5330 = vpop.f32.mrf.mxu0
        %v5331 = vadd.f32 %v5206, %v5330
        %v5332 = vpop.f32.mrf.mxu0
        %5333 = vmatprep.mubr.bf16.mxu0 0
        %5334 = vmatmul.mubr.bf16.gmra.mxu0 %v5267
        %v5335 = vpop.f32.mrf.mxu0
        %v5336 = vadd.f32 %v5211, %v5335
        %v5337 = vpop.f32.mrf.mxu0
        %v5338 = vpop.f32.mrf.mxu0
        %v5339 = vadd.f32 %v5214, %v5338
        %v5340 = vpop.f32.mrf.mxu0
        %5341 = vmatprep.mubr.bf16.mxu0 0
        %5342 = vmatmul.mubr.bf16.gmra.mxu0 %v5269
        %v5343 = vpop.f32.mrf.mxu0
        %v5344 = vadd.f32 %v5219, %v5343
        %v5345 = vpop.f32.mrf.mxu0
        %v5346 = vpop.f32.mrf.mxu0
        %v5347 = vadd.f32 %v5222, %v5346
        %v5348 = vpop.f32.mrf.mxu0
        %5349 = vmatprep.mubr.bf16.mxu0 0
        %5350 = vmatmul.mubr.bf16.gmra.mxu0 %v5271
        %v5351 = vpop.f32.mrf.mxu0
        %v5352 = vadd.f32 %v5227, %v5351
        %v5353 = vpop.f32.mrf.mxu0
        %v5354 = vpop.f32.mrf.mxu0
        %v5355 = vadd.f32 %v5230, %v5354
        %v5356 = vpop.f32.mrf.mxu0
        %5357 = vmatprep.mubr.bf16.mxu0 0
        %5358 = vmatmul.mubr.bf16.gmra.mxu0 %v5273
        %v5359 = vpop.f32.mrf.mxu0
        %v5360 = vadd.f32 %v5235, %v5359
        %v5361 = vpop.f32.mrf.mxu0
        %v5362 = vpop.f32.mrf.mxu0
        %v5363 = vadd.f32 %v5238, %v5362
        %v5364 = vpop.f32.mrf.mxu0
        %5365 = vmatprep.mubr.bf16.mxu0 0
        %5366 = vmatmul.mubr.bf16.gmra.mxu0 %v5275
        %v5367 = vpop.f32.mrf.mxu0
        %v5368 = vadd.f32 %v5243, %v5367
        %v5369 = vpop.f32.mrf.mxu0
        %v5370 = vpop.f32.mrf.mxu0
        %v5371 = vadd.f32 %v5246, %v5370
        %v5372 = vpop.f32.mrf.mxu0
        %5373 = vdwg.mxu0
        %v5390 = vrot.slane %v4990, 1
        %v5391 = vrot.slane %v5000, 1
        %v5392 = vsel %vm3738, %v5390, %v5391
        %v5393 = vrot.slane %v4991, 1
        %v5394 = vrot.slane %v5001, 1
        %v5395 = vsel %vm3738, %v5393, %v5394
        %v5396 = vrot.slane %v4992, 1
        %v5397 = vrot.slane %v5002, 1
        %v5398 = vsel %vm3738, %v5396, %v5397
        %v5399 = vrot.slane %v4993, 1
        %v5400 = vrot.slane %v5003, 1
        %v5401 = vsel %vm3738, %v5399, %v5400
        %v5402 = vrot.slane %v4994, 1
        %v5403 = vrot.slane %v5004, 1
        %v5404 = vsel %vm3738, %v5402, %v5403
        %v5405 = vrot.slane %v4995, 1
        %v5406 = vrot.slane %v5005, 1
        %v5407 = vsel %vm3738, %v5405, %v5406
        %v5408 = vrot.slane %v4996, 1
        %v5409 = vrot.slane %v5006, 1
        %v5410 = vsel %vm3738, %v5408, %v5409
        %v5411 = vrot.slane %v4997, 1
        %v5412 = vrot.slane %v5007, 1
        %v5413 = vsel %vm3738, %v5411, %v5412
        %s5414 = scalar_lea.vmem %s4, 176
        %v5415 = vld [vmem:[%s5414] sm:$0xf]
        %v5416 = vld [vmem:[%s5414 + $0x4] sm:$0xf]
        %v5417 = vld [vmem:[%s5414 + $0x8] sm:$0xf]
        %v5418 = vld [vmem:[%s5414 + $0xc] sm:$0xf]
        %v5423 = vunpack.c.l.b16 %v5415
        %v5424 = vunpack.c.l.b16 %v5416
        %v5425 = vunpack.c.l.b16 %v5417
        %v5426 = vunpack.c.l.b16 %v5418
        %v5427 = vpack.c.b16 %v5424, %v5423
        %v5428 = vpack.c.b16 %v5426, %v5425
        %v5432 = vsel %vm3475, %v5392, 0
        %v5435 = vsel %vm3475, %v5395, 0
        %v5438 = vsel %vm3475, %v5398, 0
        %v5441 = vsel %vm3475, %v5401, 0
        %v5444 = vsel %vm3475, %v5404, 0
        %v5447 = vsel %vm3475, %v5407, 0
        %v5450 = vsel %vm3475, %v5410, 0
        %v5453 = vsel %vm3475, %v5413, 0
        %5455 = vmatprep.subr.bf16.mxu0 0
        %5456 = vmatpush1.bf16.msra.mxu0 0
        %5457 = vmatprep.subr.bf16.mxu0 0
        %5458 = vmatpush1.bf16.msra.mxu0 0
        %5459 = vmatprep.subr.bf16.mxu0 0
        %5460 = vmatpush1.bf16.msra.mxu0 0
        %5461 = vmatprep.subr.bf16.mxu0 0
        %5462 = vmatpush1.bf16.msra.mxu0 0
        %5463 = vmatprep.subr.bf16.mxu0 0
        %5464 = vmatpush1.bf16.msra.mxu0 0
        %5465 = vmatprep.subr.bf16.mxu0 0
        %5466 = vmatpush1.bf16.msra.mxu0 0
        %5467 = vmatprep.subr.bf16.mxu0 0
        %5468 = vmatpush1.bf16.msra.mxu0 %v5428
        %5469 = vmatprep.subr.bf16.mxu0 0
        %5470 = vmatpush1.bf16.msra.mxu0 %v5427
        %5471 = vmatprep.subr.bf16.mxu0 0
        %5472 = vmatpush2.bf16.msra.mxu0 0
        %5473 = vmatprep.subr.bf16.mxu0 0
        %5474 = vmatpush2.bf16.msra.mxu0 0
        %5475 = vmatprep.subr.bf16.mxu0 0
        %5476 = vmatpush2.bf16.msra.mxu0 0
        %5477 = vmatprep.subr.bf16.mxu0 0
        %5478 = vmatpush2.bf16.msra.mxu0 0
        %5479 = vmatprep.subr.bf16.mxu0 0
        %5480 = vmatpush2.bf16.msra.mxu0 0
        %5481 = vmatprep.subr.bf16.mxu0 0
        %5482 = vmatpush2.bf16.msra.mxu0 0
        %5483 = vmatprep.subr.bf16.mxu0 0
        %5484 = vmatpush2.bf16.msra.mxu0 0
        %5485 = vmatprep.subr.bf16.mxu0 0
        %5486 = vmatpush2.bf16.msra.mxu0 0
        %5487 = vmatprep.mubr.bf16.mxu0 0
        %5488 = vmatmul.mubr.bf16.gmra.mxu0 %v5432
        %v5489 = vpop.f32.mrf.mxu0
        %v5490 = vadd.f32 0.0, %v5489
        %v5491 = vpop.f32.mrf.mxu0
        %v5492 = vpop.f32.mrf.mxu0
        %v5493 = vadd.f32 0.0, %v5492
        %v5494 = vpop.f32.mrf.mxu0
        %5495 = vmatprep.mubr.bf16.mxu0 0
        %5496 = vmatmul.mubr.bf16.gmra.mxu0 %v5435
        %v5497 = vpop.f32.mrf.mxu0
        %v5498 = vadd.f32 0.0, %v5497
        %v5499 = vpop.f32.mrf.mxu0
        %v5500 = vpop.f32.mrf.mxu0
        %v5501 = vadd.f32 0.0, %v5500
        %v5502 = vpop.f32.mrf.mxu0
        %5503 = vmatprep.mubr.bf16.mxu0 0
        %5504 = vmatmul.mubr.bf16.gmra.mxu0 %v5438
        %v5505 = vpop.f32.mrf.mxu0
        %v5506 = vadd.f32 0.0, %v5505
        %v5507 = vpop.f32.mrf.mxu0
        %v5508 = vpop.f32.mrf.mxu0
        %v5509 = vadd.f32 0.0, %v5508
        %v5510 = vpop.f32.mrf.mxu0
        %5511 = vmatprep.mubr.bf16.mxu0 0
        %5512 = vmatmul.mubr.bf16.gmra.mxu0 %v5441
        %v5513 = vpop.f32.mrf.mxu0
        %v5514 = vadd.f32 0.0, %v5513
        %v5515 = vpop.f32.mrf.mxu0
        %v5516 = vpop.f32.mrf.mxu0
        %v5517 = vadd.f32 0.0, %v5516
        %v5518 = vpop.f32.mrf.mxu0
        %5519 = vmatprep.mubr.bf16.mxu0 0
        %5520 = vmatmul.mubr.bf16.gmra.mxu0 %v5444
        %v5521 = vpop.f32.mrf.mxu0
        %v5522 = vadd.f32 0.0, %v5521
        %v5523 = vpop.f32.mrf.mxu0
        %v5524 = vpop.f32.mrf.mxu0
        %v5525 = vadd.f32 0.0, %v5524
        %v5526 = vpop.f32.mrf.mxu0
        %5527 = vmatprep.mubr.bf16.mxu0 0
        %5528 = vmatmul.mubr.bf16.gmra.mxu0 %v5447
        %v5529 = vpop.f32.mrf.mxu0
        %v5530 = vadd.f32 0.0, %v5529
        %v5531 = vpop.f32.mrf.mxu0
        %v5532 = vpop.f32.mrf.mxu0
        %v5533 = vadd.f32 0.0, %v5532
        %v5534 = vpop.f32.mrf.mxu0
        %5535 = vmatprep.mubr.bf16.mxu0 0
        %5536 = vmatmul.mubr.bf16.gmra.mxu0 %v5450
        %v5537 = vpop.f32.mrf.mxu0
        %v5538 = vadd.f32 0.0, %v5537
        %v5539 = vpop.f32.mrf.mxu0
        %v5540 = vpop.f32.mrf.mxu0
        %v5541 = vadd.f32 0.0, %v5540
        %v5542 = vpop.f32.mrf.mxu0
        %5543 = vmatprep.mubr.bf16.mxu0 0
        %5544 = vmatmul.mubr.bf16.gmra.mxu0 %v5453
        %v5545 = vpop.f32.mrf.mxu0
        %v5546 = vadd.f32 0.0, %v5545
        %v5547 = vpop.f32.mrf.mxu0
        %v5548 = vpop.f32.mrf.mxu0
        %v5549 = vadd.f32 0.0, %v5548
        %v5550 = vpop.f32.mrf.mxu0
        %5551 = vdwg.mxu0
        %v5552 = vadd.f32 %v5312, %v5490
        %v5553 = vadd.f32 %v5315, %v5493
        %v5554 = vadd.f32 %v5320, %v5498
        %v5555 = vadd.f32 %v5323, %v5501
        %v5556 = vadd.f32 %v5328, %v5506
        %v5557 = vadd.f32 %v5331, %v5509
        %v5558 = vadd.f32 %v5336, %v5514
        %v5559 = vadd.f32 %v5339, %v5517
        %v5560 = vadd.f32 %v5344, %v5522
        %v5561 = vadd.f32 %v5347, %v5525
        %v5562 = vadd.f32 %v5352, %v5530
        %v5563 = vadd.f32 %v5355, %v5533
        %v5564 = vadd.f32 %v5360, %v5538
        %v5565 = vadd.f32 %v5363, %v5541
        %v5566 = vadd.f32 %v5368, %v5546
        %v5567 = vadd.f32 %v5371, %v5549
        %s5568 = scalar_lea.vmem %s4, 192
        %v5569 = vld [vmem:[%s5568] sm:$0xf]
        %v5570 = vld [vmem:[%s5568 + $0x4] sm:$0xf]
        %v5571 = vld [vmem:[%s5568 + $0x8] sm:$0xf]
        %v5572 = vld [vmem:[%s5568 + $0xc] sm:$0xf]
        %v5577 = vunpack.c.l.b16 %v5569
        %v5578 = vunpack.c.l.b16 %v5570
        %v5579 = vunpack.c.l.b16 %v5571
        %v5580 = vunpack.c.l.b16 %v5572
        %v5581 = vpack.c.b16 %v5578, %v5577
        %v5582 = vpack.c.b16 %v5580, %v5579
        %v5586 = vsel %vm3475, %v4998, 0
        %5588 = vmatprep.subr.bf16.mxu0 0
        %5589 = vmatpush1.bf16.msra.mxu0 0
        %5590 = vmatprep.subr.bf16.mxu0 0
        %5591 = vmatpush1.bf16.msra.mxu0 0
        %5592 = vmatprep.subr.bf16.mxu0 0
        %5593 = vmatpush1.bf16.msra.mxu0 0
        %5594 = vmatprep.subr.bf16.mxu0 0
        %5595 = vmatpush1.bf16.msra.mxu0 0
        %5596 = vmatprep.subr.bf16.mxu0 0
        %5597 = vmatpush1.bf16.msra.mxu0 0
        %5598 = vmatprep.subr.bf16.mxu0 0
        %5599 = vmatpush1.bf16.msra.mxu0 0
        %5600 = vmatprep.subr.bf16.mxu0 0
        %5601 = vmatpush1.bf16.msra.mxu0 %v5582
        %5602 = vmatprep.subr.bf16.mxu0 0
        %5603 = vmatpush1.bf16.msra.mxu0 %v5581
        %5604 = vmatprep.subr.bf16.mxu0 0
        %5605 = vmatpush2.bf16.msra.mxu0 0
        %5606 = vmatprep.subr.bf16.mxu0 0
        %5607 = vmatpush2.bf16.msra.mxu0 0
        %5608 = vmatprep.subr.bf16.mxu0 0
        %5609 = vmatpush2.bf16.msra.mxu0 0
        %5610 = vmatprep.subr.bf16.mxu0 0
        %5611 = vmatpush2.bf16.msra.mxu0 0
        %5612 = vmatprep.subr.bf16.mxu0 0
        %5613 = vmatpush2.bf16.msra.mxu0 0
        %5614 = vmatprep.subr.bf16.mxu0 0
        %5615 = vmatpush2.bf16.msra.mxu0 0
        %5616 = vmatprep.subr.bf16.mxu0 0
        %5617 = vmatpush2.bf16.msra.mxu0 0
        %5618 = vmatprep.subr.bf16.mxu0 0
        %5619 = vmatpush2.bf16.msra.mxu0 0
        %5620 = vmatprep.mubr.bf16.mxu0 0
        %5621 = vmatmul.mubr.bf16.gmra.mxu0 %v5263
        %v5622 = vpop.f32.mrf.mxu0
        %v5623 = vadd.f32 0.0, %v5622
        %v5624 = vpop.f32.mrf.mxu0
        %v5625 = vpop.f32.mrf.mxu0
        %v5626 = vadd.f32 0.0, %v5625
        %v5627 = vpop.f32.mrf.mxu0
        %5628 = vmatprep.mubr.bf16.mxu0 0
        %5629 = vmatmul.mubr.bf16.gmra.mxu0 %v5265
        %v5630 = vpop.f32.mrf.mxu0
        %v5631 = vadd.f32 0.0, %v5630
        %v5632 = vpop.f32.mrf.mxu0
        %v5633 = vpop.f32.mrf.mxu0
        %v5634 = vadd.f32 0.0, %v5633
        %v5635 = vpop.f32.mrf.mxu0
        %5636 = vmatprep.mubr.bf16.mxu0 0
        %5637 = vmatmul.mubr.bf16.gmra.mxu0 %v5267
        %v5638 = vpop.f32.mrf.mxu0
        %v5639 = vadd.f32 0.0, %v5638
        %v5640 = vpop.f32.mrf.mxu0
        %v5641 = vpop.f32.mrf.mxu0
        %v5642 = vadd.f32 0.0, %v5641
        %v5643 = vpop.f32.mrf.mxu0
        %5644 = vmatprep.mubr.bf16.mxu0 0
        %5645 = vmatmul.mubr.bf16.gmra.mxu0 %v5269
        %v5646 = vpop.f32.mrf.mxu0
        %v5647 = vadd.f32 0.0, %v5646
        %v5648 = vpop.f32.mrf.mxu0
        %v5649 = vpop.f32.mrf.mxu0
        %v5650 = vadd.f32 0.0, %v5649
        %v5651 = vpop.f32.mrf.mxu0
        %5652 = vmatprep.mubr.bf16.mxu0 0
        %5653 = vmatmul.mubr.bf16.gmra.mxu0 %v5271
        %v5654 = vpop.f32.mrf.mxu0
        %v5655 = vadd.f32 0.0, %v5654
        %v5656 = vpop.f32.mrf.mxu0
        %v5657 = vpop.f32.mrf.mxu0
        %v5658 = vadd.f32 0.0, %v5657
        %v5659 = vpop.f32.mrf.mxu0
        %5660 = vmatprep.mubr.bf16.mxu0 0
        %5661 = vmatmul.mubr.bf16.gmra.mxu0 %v5273
        %v5662 = vpop.f32.mrf.mxu0
        %v5663 = vadd.f32 0.0, %v5662
        %v5664 = vpop.f32.mrf.mxu0
        %v5665 = vpop.f32.mrf.mxu0
        %v5666 = vadd.f32 0.0, %v5665
        %v5667 = vpop.f32.mrf.mxu0
        %5668 = vmatprep.mubr.bf16.mxu0 0
        %5669 = vmatmul.mubr.bf16.gmra.mxu0 %v5275
        %v5670 = vpop.f32.mrf.mxu0
        %v5671 = vadd.f32 0.0, %v5670
        %v5672 = vpop.f32.mrf.mxu0
        %v5673 = vpop.f32.mrf.mxu0
        %v5674 = vadd.f32 0.0, %v5673
        %v5675 = vpop.f32.mrf.mxu0
        %5676 = vmatprep.mubr.bf16.mxu0 0
        %5677 = vmatmul.mubr.bf16.gmra.mxu0 %v5586
        %v5678 = vpop.f32.mrf.mxu0
        %v5679 = vadd.f32 0.0, %v5678
        %v5680 = vpop.f32.mrf.mxu0
        %v5681 = vpop.f32.mrf.mxu0
        %v5682 = vadd.f32 0.0, %v5681
        %v5683 = vpop.f32.mrf.mxu0
        %5684 = vdwg.mxu0
        %v5685 = vadd.f32 %v5552, %v5623
        %v5686 = vadd.f32 %v5553, %v5626
        %v5687 = vadd.f32 %v5554, %v5631
        %v5688 = vadd.f32 %v5555, %v5634
        %v5689 = vadd.f32 %v5556, %v5639
        %v5690 = vadd.f32 %v5557, %v5642
        %v5691 = vadd.f32 %v5558, %v5647
        %v5692 = vadd.f32 %v5559, %v5650
        %v5693 = vadd.f32 %v5560, %v5655
        %v5694 = vadd.f32 %v5561, %v5658
        %v5695 = vadd.f32 %v5562, %v5663
        %v5696 = vadd.f32 %v5563, %v5666
        %v5697 = vadd.f32 %v5564, %v5671
        %v5698 = vadd.f32 %v5565, %v5674
        %v5699 = vadd.f32 %v5566, %v5679
        %v5700 = vadd.f32 %v5567, %v5682
        %v5701 = vshrl.u32 %v4998, 16
        %v5703 = vshll.u32 %v4998, 16
        %v5705 = vrot.slane %v5703, 1
        %v5706 = vor.u32 %v5701, %v5705
        %v5708 = vshll.u32 %v5008, 16
        %v5710 = vrot.slane %v5708, 1
        %v5711 = vsel %vm3361, %v5706, %v5710
        %s5712 = scalar_lea.vmem %s4, 208
        %v5713 = vld [vmem:[%s5712] sm:$0xf]
        %v5714 = vld [vmem:[%s5712 + $0x4] sm:$0xf]
        %v5715 = vld [vmem:[%s5712 + $0x8] sm:$0xf]
        %v5716 = vld [vmem:[%s5712 + $0xc] sm:$0xf]
        %v5721 = vunpack.c.l.b16 %v5713
        %v5722 = vunpack.c.l.b16 %v5714
        %v5723 = vunpack.c.l.b16 %v5715
        %v5724 = vunpack.c.l.b16 %v5716
        %v5725 = vpack.c.b16 %v5722, %v5721
        %v5726 = vpack.c.b16 %v5724, %v5723
        %v5730 = vsel %vm3475, %v5711, 0
        %5732 = vmatprep.subr.bf16.mxu0 0
        %5733 = vmatpush1.bf16.msra.mxu0 0
        %5734 = vmatprep.subr.bf16.mxu0 0
        %5735 = vmatpush1.bf16.msra.mxu0 0
        %5736 = vmatprep.subr.bf16.mxu0 0
        %5737 = vmatpush1.bf16.msra.mxu0 0
        %5738 = vmatprep.subr.bf16.mxu0 0
        %5739 = vmatpush1.bf16.msra.mxu0 0
        %5740 = vmatprep.subr.bf16.mxu0 0
        %5741 = vmatpush1.bf16.msra.mxu0 0
        %5742 = vmatprep.subr.bf16.mxu0 0
        %5743 = vmatpush1.bf16.msra.mxu0 0
        %5744 = vmatprep.subr.bf16.mxu0 0
        %5745 = vmatpush1.bf16.msra.mxu0 %v5726
        %5746 = vmatprep.subr.bf16.mxu0 0
        %5747 = vmatpush1.bf16.msra.mxu0 %v5725
        %5748 = vmatprep.subr.bf16.mxu0 0
        %5749 = vmatpush2.bf16.msra.mxu0 0
        %5750 = vmatprep.subr.bf16.mxu0 0
        %5751 = vmatpush2.bf16.msra.mxu0 0
        %5752 = vmatprep.subr.bf16.mxu0 0
        %5753 = vmatpush2.bf16.msra.mxu0 0
        %5754 = vmatprep.subr.bf16.mxu0 0
        %5755 = vmatpush2.bf16.msra.mxu0 0
        %5756 = vmatprep.subr.bf16.mxu0 0
        %5757 = vmatpush2.bf16.msra.mxu0 0
        %5758 = vmatprep.subr.bf16.mxu0 0
        %5759 = vmatpush2.bf16.msra.mxu0 0
        %5760 = vmatprep.subr.bf16.mxu0 0
        %5761 = vmatpush2.bf16.msra.mxu0 0
        %5762 = vmatprep.subr.bf16.mxu0 0
        %5763 = vmatpush2.bf16.msra.mxu0 0
        %5764 = vmatprep.mubr.bf16.mxu0 0
        %5765 = vmatmul.mubr.bf16.gmra.mxu0 %v5132
        %v5766 = vpop.f32.mrf.mxu0
        %v5767 = vadd.f32 0.0, %v5766
        %v5768 = vpop.f32.mrf.mxu0
        %v5769 = vpop.f32.mrf.mxu0
        %v5770 = vadd.f32 0.0, %v5769
        %v5771 = vpop.f32.mrf.mxu0
        %5772 = vmatprep.mubr.bf16.mxu0 0
        %5773 = vmatmul.mubr.bf16.gmra.mxu0 %v5135
        %v5774 = vpop.f32.mrf.mxu0
        %v5775 = vadd.f32 0.0, %v5774
        %v5776 = vpop.f32.mrf.mxu0
        %v5777 = vpop.f32.mrf.mxu0
        %v5778 = vadd.f32 0.0, %v5777
        %v5779 = vpop.f32.mrf.mxu0
        %5780 = vmatprep.mubr.bf16.mxu0 0
        %5781 = vmatmul.mubr.bf16.gmra.mxu0 %v5138
        %v5782 = vpop.f32.mrf.mxu0
        %v5783 = vadd.f32 0.0, %v5782
        %v5784 = vpop.f32.mrf.mxu0
        %v5785 = vpop.f32.mrf.mxu0
        %v5786 = vadd.f32 0.0, %v5785
        %v5787 = vpop.f32.mrf.mxu0
        %5788 = vmatprep.mubr.bf16.mxu0 0
        %5789 = vmatmul.mubr.bf16.gmra.mxu0 %v5141
        %v5790 = vpop.f32.mrf.mxu0
        %v5791 = vadd.f32 0.0, %v5790
        %v5792 = vpop.f32.mrf.mxu0
        %v5793 = vpop.f32.mrf.mxu0
        %v5794 = vadd.f32 0.0, %v5793
        %v5795 = vpop.f32.mrf.mxu0
        %5796 = vmatprep.mubr.bf16.mxu0 0
        %5797 = vmatmul.mubr.bf16.gmra.mxu0 %v5144
        %v5798 = vpop.f32.mrf.mxu0
        %v5799 = vadd.f32 0.0, %v5798
        %v5800 = vpop.f32.mrf.mxu0
        %v5801 = vpop.f32.mrf.mxu0
        %v5802 = vadd.f32 0.0, %v5801
        %v5803 = vpop.f32.mrf.mxu0
        %5804 = vmatprep.mubr.bf16.mxu0 0
        %5805 = vmatmul.mubr.bf16.gmra.mxu0 %v5147
        %v5806 = vpop.f32.mrf.mxu0
        %v5807 = vadd.f32 0.0, %v5806
        %v5808 = vpop.f32.mrf.mxu0
        %v5809 = vpop.f32.mrf.mxu0
        %v5810 = vadd.f32 0.0, %v5809
        %v5811 = vpop.f32.mrf.mxu0
        %5812 = vmatprep.mubr.bf16.mxu0 0
        %5813 = vmatmul.mubr.bf16.gmra.mxu0 %v5150
        %v5814 = vpop.f32.mrf.mxu0
        %v5815 = vadd.f32 0.0, %v5814
        %v5816 = vpop.f32.mrf.mxu0
        %v5817 = vpop.f32.mrf.mxu0
        %v5818 = vadd.f32 0.0, %v5817
        %v5819 = vpop.f32.mrf.mxu0
        %5820 = vmatprep.mubr.bf16.mxu0 0
        %5821 = vmatmul.mubr.bf16.gmra.mxu0 %v5730
        %v5822 = vpop.f32.mrf.mxu0
        %v5823 = vadd.f32 0.0, %v5822
        %v5824 = vpop.f32.mrf.mxu0
        %v5825 = vpop.f32.mrf.mxu0
        %v5826 = vadd.f32 0.0, %v5825
        %v5827 = vpop.f32.mrf.mxu0
        %5828 = vdwg.mxu0
        %v5829 = vadd.f32 %v5685, %v5767
        %v5830 = vadd.f32 %v5686, %v5770
        %v5831 = vadd.f32 %v5687, %v5775
        %v5832 = vadd.f32 %v5688, %v5778
        %v5833 = vadd.f32 %v5689, %v5783
        %v5834 = vadd.f32 %v5690, %v5786
        %v5835 = vadd.f32 %v5691, %v5791
        %v5836 = vadd.f32 %v5692, %v5794
        %v5837 = vadd.f32 %v5693, %v5799
        %v5838 = vadd.f32 %v5694, %v5802
        %v5839 = vadd.f32 %v5695, %v5807
        %v5840 = vadd.f32 %v5696, %v5810
        %v5841 = vadd.f32 %v5697, %v5815
        %v5842 = vadd.f32 %v5698, %v5818
        %v5843 = vadd.f32 %v5699, %v5823
        %v5844 = vadd.f32 %v5700, %v5826
        %v5847 = vrot.slane %v4998, 1
        %v5848 = vrot.slane %v5008, 1
        %v5849 = vsel %vm3738, %v5847, %v5848
        %s5850 = scalar_lea.vmem %s4, 224
        %v5851 = vld [vmem:[%s5850] sm:$0xf]
        %v5852 = vld [vmem:[%s5850 + $0x4] sm:$0xf]
        %v5853 = vld [vmem:[%s5850 + $0x8] sm:$0xf]
        %v5854 = vld [vmem:[%s5850 + $0xc] sm:$0xf]
        %v5859 = vunpack.c.l.b16 %v5851
        %v5860 = vunpack.c.l.b16 %v5852
        %v5861 = vunpack.c.l.b16 %v5853
        %v5862 = vunpack.c.l.b16 %v5854
        %v5863 = vpack.c.b16 %v5860, %v5859
        %v5864 = vpack.c.b16 %v5862, %v5861
        %v5868 = vsel %vm3475, %v5849, 0
        %5870 = vmatprep.subr.bf16.mxu0 0
        %5871 = vmatpush1.bf16.msra.mxu0 0
        %5872 = vmatprep.subr.bf16.mxu0 0
        %5873 = vmatpush1.bf16.msra.mxu0 0
        %5874 = vmatprep.subr.bf16.mxu0 0
        %5875 = vmatpush1.bf16.msra.mxu0 0
        %5876 = vmatprep.subr.bf16.mxu0 0
        %5877 = vmatpush1.bf16.msra.mxu0 0
        %5878 = vmatprep.subr.bf16.mxu0 0
        %5879 = vmatpush1.bf16.msra.mxu0 0
        %5880 = vmatprep.subr.bf16.mxu0 0
        %5881 = vmatpush1.bf16.msra.mxu0 0
        %5882 = vmatprep.subr.bf16.mxu0 0
        %5883 = vmatpush1.bf16.msra.mxu0 %v5864
        %5884 = vmatprep.subr.bf16.mxu0 0
        %5885 = vmatpush1.bf16.msra.mxu0 %v5863
        %5886 = vmatprep.subr.bf16.mxu0 0
        %5887 = vmatpush2.bf16.msra.mxu0 0
        %5888 = vmatprep.subr.bf16.mxu0 0
        %5889 = vmatpush2.bf16.msra.mxu0 0
        %5890 = vmatprep.subr.bf16.mxu0 0
        %5891 = vmatpush2.bf16.msra.mxu0 0
        %5892 = vmatprep.subr.bf16.mxu0 0
        %5893 = vmatpush2.bf16.msra.mxu0 0
        %5894 = vmatprep.subr.bf16.mxu0 0
        %5895 = vmatpush2.bf16.msra.mxu0 0
        %5896 = vmatprep.subr.bf16.mxu0 0
        %5897 = vmatpush2.bf16.msra.mxu0 0
        %5898 = vmatprep.subr.bf16.mxu0 0
        %5899 = vmatpush2.bf16.msra.mxu0 0
        %5900 = vmatprep.subr.bf16.mxu0 0
        %5901 = vmatpush2.bf16.msra.mxu0 0
        %5902 = vmatprep.mubr.bf16.mxu0 0
        %5903 = vmatmul.mubr.bf16.gmra.mxu0 %v5435
        %v5904 = vpop.f32.mrf.mxu0
        %v5905 = vadd.f32 0.0, %v5904
        %v5906 = vpop.f32.mrf.mxu0
        %v5907 = vpop.f32.mrf.mxu0
        %v5908 = vadd.f32 0.0, %v5907
        %v5909 = vpop.f32.mrf.mxu0
        %5910 = vmatprep.mubr.bf16.mxu0 0
        %5911 = vmatmul.mubr.bf16.gmra.mxu0 %v5438
        %v5912 = vpop.f32.mrf.mxu0
        %v5913 = vadd.f32 0.0, %v5912
        %v5914 = vpop.f32.mrf.mxu0
        %v5915 = vpop.f32.mrf.mxu0
        %v5916 = vadd.f32 0.0, %v5915
        %v5917 = vpop.f32.mrf.mxu0
        %5918 = vmatprep.mubr.bf16.mxu0 0
        %5919 = vmatmul.mubr.bf16.gmra.mxu0 %v5441
        %v5920 = vpop.f32.mrf.mxu0
        %v5921 = vadd.f32 0.0, %v5920
        %v5922 = vpop.f32.mrf.mxu0
        %v5923 = vpop.f32.mrf.mxu0
        %v5924 = vadd.f32 0.0, %v5923
        %v5925 = vpop.f32.mrf.mxu0
        %5926 = vmatprep.mubr.bf16.mxu0 0
        %5927 = vmatmul.mubr.bf16.gmra.mxu0 %v5444
        %v5928 = vpop.f32.mrf.mxu0
        %v5929 = vadd.f32 0.0, %v5928
        %v5930 = vpop.f32.mrf.mxu0
        %v5931 = vpop.f32.mrf.mxu0
        %v5932 = vadd.f32 0.0, %v5931
        %v5933 = vpop.f32.mrf.mxu0
        %5934 = vmatprep.mubr.bf16.mxu0 0
        %5935 = vmatmul.mubr.bf16.gmra.mxu0 %v5447
        %v5936 = vpop.f32.mrf.mxu0
        %v5937 = vadd.f32 0.0, %v5936
        %v5938 = vpop.f32.mrf.mxu0
        %v5939 = vpop.f32.mrf.mxu0
        %v5940 = vadd.f32 0.0, %v5939
        %v5941 = vpop.f32.mrf.mxu0
        %5942 = vmatprep.mubr.bf16.mxu0 0
        %5943 = vmatmul.mubr.bf16.gmra.mxu0 %v5450
        %v5944 = vpop.f32.mrf.mxu0
        %v5945 = vadd.f32 0.0, %v5944
        %v5946 = vpop.f32.mrf.mxu0
        %v5947 = vpop.f32.mrf.mxu0
        %v5948 = vadd.f32 0.0, %v5947
        %v5949 = vpop.f32.mrf.mxu0
        %5950 = vmatprep.mubr.bf16.mxu0 0
        %5951 = vmatmul.mubr.bf16.gmra.mxu0 %v5453
        %v5952 = vpop.f32.mrf.mxu0
        %v5953 = vadd.f32 0.0, %v5952
        %v5954 = vpop.f32.mrf.mxu0
        %v5955 = vpop.f32.mrf.mxu0
        %v5956 = vadd.f32 0.0, %v5955
        %v5957 = vpop.f32.mrf.mxu0
        %5958 = vmatprep.mubr.bf16.mxu0 0
        %5959 = vmatmul.mubr.bf16.gmra.mxu0 %v5868
        %v5960 = vpop.f32.mrf.mxu0
        %v5961 = vadd.f32 0.0, %v5960
        %v5962 = vpop.f32.mrf.mxu0
        %v5963 = vpop.f32.mrf.mxu0
        %v5964 = vadd.f32 0.0, %v5963
        %v5965 = vpop.f32.mrf.mxu0
        %5966 = vdwg.mxu0
        %v5967 = vadd.f32 %v5829, %v5905
        %v5968 = vadd.f32 %v5830, %v5908
        %v5969 = vadd.f32 %v5831, %v5913
        %v5970 = vadd.f32 %v5832, %v5916
        %v5971 = vadd.f32 %v5833, %v5921
        %v5972 = vadd.f32 %v5834, %v5924
        %v5973 = vadd.f32 %v5835, %v5929
        %v5974 = vadd.f32 %v5836, %v5932
        %v5975 = vadd.f32 %v5837, %v5937
        %v5976 = vadd.f32 %v5838, %v5940
        %v5977 = vadd.f32 %v5839, %v5945
        %v5978 = vadd.f32 %v5840, %v5948
        %v5979 = vadd.f32 %v5841, %v5953
        %v5980 = vadd.f32 %v5842, %v5956
        %v5981 = vadd.f32 %v5843, %v5961
        %v5982 = vadd.f32 %v5844, %v5964
        %s5983 = scalar_lea.vmem %s4, 240
        %v5984 = vld [vmem:[%s5983] sm:$0xf]
        %v5985 = vld [vmem:[%s5983 + $0x4] sm:$0xf]
        %v5986 = vld [vmem:[%s5983 + $0x8] sm:$0xf]
        %v5987 = vld [vmem:[%s5983 + $0xc] sm:$0xf]
        %v5992 = vunpack.c.l.b16 %v5984
        %v5993 = vunpack.c.l.b16 %v5985
        %v5994 = vunpack.c.l.b16 %v5986
        %v5995 = vunpack.c.l.b16 %v5987
        %v5996 = vpack.c.b16 %v5993, %v5992
        %v5997 = vpack.c.b16 %v5995, %v5994
        %v6001 = vsel %vm3475, %v4999, 0
        %6003 = vmatprep.subr.bf16.mxu0 0
        %6004 = vmatpush1.bf16.msra.mxu0 0
        %6005 = vmatprep.subr.bf16.mxu0 0
        %6006 = vmatpush1.bf16.msra.mxu0 0
        %6007 = vmatprep.subr.bf16.mxu0 0
        %6008 = vmatpush1.bf16.msra.mxu0 0
        %6009 = vmatprep.subr.bf16.mxu0 0
        %6010 = vmatpush1.bf16.msra.mxu0 0
        %6011 = vmatprep.subr.bf16.mxu0 0
        %6012 = vmatpush1.bf16.msra.mxu0 0
        %6013 = vmatprep.subr.bf16.mxu0 0
        %6014 = vmatpush1.bf16.msra.mxu0 0
        %6015 = vmatprep.subr.bf16.mxu0 0
        %6016 = vmatpush1.bf16.msra.mxu0 %v5997
        %6017 = vmatprep.subr.bf16.mxu0 0
        %6018 = vmatpush1.bf16.msra.mxu0 %v5996
        %6019 = vmatprep.subr.bf16.mxu0 0
        %6020 = vmatpush2.bf16.msra.mxu0 0
        %6021 = vmatprep.subr.bf16.mxu0 0
        %6022 = vmatpush2.bf16.msra.mxu0 0
        %6023 = vmatprep.subr.bf16.mxu0 0
        %6024 = vmatpush2.bf16.msra.mxu0 0
        %6025 = vmatprep.subr.bf16.mxu0 0
        %6026 = vmatpush2.bf16.msra.mxu0 0
        %6027 = vmatprep.subr.bf16.mxu0 0
        %6028 = vmatpush2.bf16.msra.mxu0 0
        %6029 = vmatprep.subr.bf16.mxu0 0
        %6030 = vmatpush2.bf16.msra.mxu0 0
        %6031 = vmatprep.subr.bf16.mxu0 0
        %6032 = vmatpush2.bf16.msra.mxu0 0
        %6033 = vmatprep.subr.bf16.mxu0 0
        %6034 = vmatpush2.bf16.msra.mxu0 0
        %6035 = vmatprep.mubr.bf16.mxu0 0
        %6036 = vmatmul.mubr.bf16.gmra.mxu0 %v5265
        %v6037 = vpop.f32.mrf.mxu0
        %v6038 = vadd.f32 0.0, %v6037
        %v6039 = vpop.f32.mrf.mxu0
        %v6040 = vpop.f32.mrf.mxu0
        %v6041 = vadd.f32 0.0, %v6040
        %v6042 = vpop.f32.mrf.mxu0
        %6043 = vmatprep.mubr.bf16.mxu0 0
        %6044 = vmatmul.mubr.bf16.gmra.mxu0 %v5267
        %v6045 = vpop.f32.mrf.mxu0
        %v6046 = vadd.f32 0.0, %v6045
        %v6047 = vpop.f32.mrf.mxu0
        %v6048 = vpop.f32.mrf.mxu0
        %v6049 = vadd.f32 0.0, %v6048
        %v6050 = vpop.f32.mrf.mxu0
        %6051 = vmatprep.mubr.bf16.mxu0 0
        %6052 = vmatmul.mubr.bf16.gmra.mxu0 %v5269
        %v6053 = vpop.f32.mrf.mxu0
        %v6054 = vadd.f32 0.0, %v6053
        %v6055 = vpop.f32.mrf.mxu0
        %v6056 = vpop.f32.mrf.mxu0
        %v6057 = vadd.f32 0.0, %v6056
        %v6058 = vpop.f32.mrf.mxu0
        %6059 = vmatprep.mubr.bf16.mxu0 0
        %6060 = vmatmul.mubr.bf16.gmra.mxu0 %v5271
        %v6061 = vpop.f32.mrf.mxu0
        %v6062 = vadd.f32 0.0, %v6061
        %v6063 = vpop.f32.mrf.mxu0
        %v6064 = vpop.f32.mrf.mxu0
        %v6065 = vadd.f32 0.0, %v6064
        %v6066 = vpop.f32.mrf.mxu0
        %6067 = vmatprep.mubr.bf16.mxu0 0
        %6068 = vmatmul.mubr.bf16.gmra.mxu0 %v5273
        %v6069 = vpop.f32.mrf.mxu0
        %v6070 = vadd.f32 0.0, %v6069
        %v6071 = vpop.f32.mrf.mxu0
        %v6072 = vpop.f32.mrf.mxu0
        %v6073 = vadd.f32 0.0, %v6072
        %v6074 = vpop.f32.mrf.mxu0
        %6075 = vmatprep.mubr.bf16.mxu0 0
        %6076 = vmatmul.mubr.bf16.gmra.mxu0 %v5275
        %v6077 = vpop.f32.mrf.mxu0
        %v6078 = vadd.f32 0.0, %v6077
        %v6079 = vpop.f32.mrf.mxu0
        %v6080 = vpop.f32.mrf.mxu0
        %v6081 = vadd.f32 0.0, %v6080
        %v6082 = vpop.f32.mrf.mxu0
        %6083 = vmatprep.mubr.bf16.mxu0 0
        %6084 = vmatmul.mubr.bf16.gmra.mxu0 %v5586
        %v6085 = vpop.f32.mrf.mxu0
        %v6086 = vadd.f32 0.0, %v6085
        %v6087 = vpop.f32.mrf.mxu0
        %v6088 = vpop.f32.mrf.mxu0
        %v6089 = vadd.f32 0.0, %v6088
        %v6090 = vpop.f32.mrf.mxu0
        %6091 = vmatprep.mubr.bf16.mxu0 0
        %6092 = vmatmul.mubr.bf16.gmra.mxu0 %v6001
        %v6093 = vpop.f32.mrf.mxu0
        %v6094 = vadd.f32 0.0, %v6093
        %v6095 = vpop.f32.mrf.mxu0
        %v6096 = vpop.f32.mrf.mxu0
        %v6097 = vadd.f32 0.0, %v6096
        %v6098 = vpop.f32.mrf.mxu0
        %6099 = vdwg.mxu0
        %v6100 = vadd.f32 %v5967, %v6038
        %v6101 = vadd.f32 %v5968, %v6041
        %v6102 = vadd.f32 %v5969, %v6046
        %v6103 = vadd.f32 %v5970, %v6049
        %v6104 = vadd.f32 %v5971, %v6054
        %v6105 = vadd.f32 %v5972, %v6057
        %v6106 = vadd.f32 %v5973, %v6062
        %v6107 = vadd.f32 %v5974, %v6065
        %v6108 = vadd.f32 %v5975, %v6070
        %v6109 = vadd.f32 %v5976, %v6073
        %v6110 = vadd.f32 %v5977, %v6078
        %v6111 = vadd.f32 %v5978, %v6081
        %v6112 = vadd.f32 %v5979, %v6086
        %v6113 = vadd.f32 %v5980, %v6089
        %v6114 = vadd.f32 %v5981, %v6094
        %v6115 = vadd.f32 %v5982, %v6097
        %v6116 = vshrl.u32 %v4999, 16
        %v6118 = vshll.u32 %v4999, 16
        %v6120 = vrot.slane %v6118, 1
        %v6121 = vor.u32 %v6116, %v6120
        %v6123 = vshll.u32 %v5009, 16
        %v6125 = vrot.slane %v6123, 1
        %v6126 = vsel %vm3361, %v6121, %v6125
        %s6127 = scalar_lea.vmem %s4, 256
        %v6128 = vld [vmem:[%s6127] sm:$0xf]
        %v6129 = vld [vmem:[%s6127 + $0x4] sm:$0xf]
        %v6130 = vld [vmem:[%s6127 + $0x8] sm:$0xf]
        %v6131 = vld [vmem:[%s6127 + $0xc] sm:$0xf]
        %v6136 = vunpack.c.l.b16 %v6128
        %v6137 = vunpack.c.l.b16 %v6129
        %v6138 = vunpack.c.l.b16 %v6130
        %v6139 = vunpack.c.l.b16 %v6131
        %v6140 = vpack.c.b16 %v6137, %v6136
        %v6141 = vpack.c.b16 %v6139, %v6138
        %v6145 = vsel %vm3475, %v6126, 0
        %6147 = vmatprep.subr.bf16.mxu0 0
        %6148 = vmatpush1.bf16.msra.mxu0 0
        %6149 = vmatprep.subr.bf16.mxu0 0
        %6150 = vmatpush1.bf16.msra.mxu0 0
        %6151 = vmatprep.subr.bf16.mxu0 0
        %6152 = vmatpush1.bf16.msra.mxu0 0
        %6153 = vmatprep.subr.bf16.mxu0 0
        %6154 = vmatpush1.bf16.msra.mxu0 0
        %6155 = vmatprep.subr.bf16.mxu0 0
        %6156 = vmatpush1.bf16.msra.mxu0 0
        %6157 = vmatprep.subr.bf16.mxu0 0
        %6158 = vmatpush1.bf16.msra.mxu0 0
        %6159 = vmatprep.subr.bf16.mxu0 0
        %6160 = vmatpush1.bf16.msra.mxu0 %v6141
        %6161 = vmatprep.subr.bf16.mxu0 0
        %6162 = vmatpush1.bf16.msra.mxu0 %v6140
        %6163 = vmatprep.subr.bf16.mxu0 0
        %6164 = vmatpush2.bf16.msra.mxu0 0
        %6165 = vmatprep.subr.bf16.mxu0 0
        %6166 = vmatpush2.bf16.msra.mxu0 0
        %6167 = vmatprep.subr.bf16.mxu0 0
        %6168 = vmatpush2.bf16.msra.mxu0 0
        %6169 = vmatprep.subr.bf16.mxu0 0
        %6170 = vmatpush2.bf16.msra.mxu0 0
        %6171 = vmatprep.subr.bf16.mxu0 0
        %6172 = vmatpush2.bf16.msra.mxu0 0
        %6173 = vmatprep.subr.bf16.mxu0 0
        %6174 = vmatpush2.bf16.msra.mxu0 0
        %6175 = vmatprep.subr.bf16.mxu0 0
        %6176 = vmatpush2.bf16.msra.mxu0 0
        %6177 = vmatprep.subr.bf16.mxu0 0
        %6178 = vmatpush2.bf16.msra.mxu0 0
        %6179 = vmatprep.mubr.bf16.mxu0 0
        %6180 = vmatmul.mubr.bf16.gmra.mxu0 %v5135
        %v6181 = vpop.f32.mrf.mxu0
        %v6182 = vadd.f32 0.0, %v6181
        %v6183 = vpop.f32.mrf.mxu0
        %v6184 = vpop.f32.mrf.mxu0
        %v6185 = vadd.f32 0.0, %v6184
        %v6186 = vpop.f32.mrf.mxu0
        %6187 = vmatprep.mubr.bf16.mxu0 0
        %6188 = vmatmul.mubr.bf16.gmra.mxu0 %v5138
        %v6189 = vpop.f32.mrf.mxu0
        %v6190 = vadd.f32 0.0, %v6189
        %v6191 = vpop.f32.mrf.mxu0
        %v6192 = vpop.f32.mrf.mxu0
        %v6193 = vadd.f32 0.0, %v6192
        %v6194 = vpop.f32.mrf.mxu0
        %6195 = vmatprep.mubr.bf16.mxu0 0
        %6196 = vmatmul.mubr.bf16.gmra.mxu0 %v5141
        %v6197 = vpop.f32.mrf.mxu0
        %v6198 = vadd.f32 0.0, %v6197
        %v6199 = vpop.f32.mrf.mxu0
        %v6200 = vpop.f32.mrf.mxu0
        %v6201 = vadd.f32 0.0, %v6200
        %v6202 = vpop.f32.mrf.mxu0
        %6203 = vmatprep.mubr.bf16.mxu0 0
        %6204 = vmatmul.mubr.bf16.gmra.mxu0 %v5144
        %v6205 = vpop.f32.mrf.mxu0
        %v6206 = vadd.f32 0.0, %v6205
        %v6207 = vpop.f32.mrf.mxu0
        %v6208 = vpop.f32.mrf.mxu0
        %v6209 = vadd.f32 0.0, %v6208
        %v6210 = vpop.f32.mrf.mxu0
        %6211 = vmatprep.mubr.bf16.mxu0 0
        %6212 = vmatmul.mubr.bf16.gmra.mxu0 %v5147
        %v6213 = vpop.f32.mrf.mxu0
        %v6214 = vadd.f32 0.0, %v6213
        %v6215 = vpop.f32.mrf.mxu0
        %v6216 = vpop.f32.mrf.mxu0
        %v6217 = vadd.f32 0.0, %v6216
        %v6218 = vpop.f32.mrf.mxu0
        %6219 = vmatprep.mubr.bf16.mxu0 0
        %6220 = vmatmul.mubr.bf16.gmra.mxu0 %v5150
        %v6221 = vpop.f32.mrf.mxu0
        %v6222 = vadd.f32 0.0, %v6221
        %v6223 = vpop.f32.mrf.mxu0
        %v6224 = vpop.f32.mrf.mxu0
        %v6225 = vadd.f32 0.0, %v6224
        %v6226 = vpop.f32.mrf.mxu0
        %6227 = vmatprep.mubr.bf16.mxu0 0
        %6228 = vmatmul.mubr.bf16.gmra.mxu0 %v5730
        %v6229 = vpop.f32.mrf.mxu0
        %v6230 = vadd.f32 0.0, %v6229
        %v6231 = vpop.f32.mrf.mxu0
        %v6232 = vpop.f32.mrf.mxu0
        %v6233 = vadd.f32 0.0, %v6232
        %v6234 = vpop.f32.mrf.mxu0
        %6235 = vmatprep.mubr.bf16.mxu0 0
        %6236 = vmatmul.mubr.bf16.gmra.mxu0 %v6145
        %v6237 = vpop.f32.mrf.mxu0
        %v6238 = vadd.f32 0.0, %v6237
        %v6239 = vpop.f32.mrf.mxu0
        %v6240 = vpop.f32.mrf.mxu0
        %v6241 = vadd.f32 0.0, %v6240
        %v6242 = vpop.f32.mrf.mxu0
        %6243 = vdwg.mxu0
        %v6244 = vadd.f32 %v6100, %v6182
        %v6245 = vadd.f32 %v6101, %v6185
        %v6246 = vadd.f32 %v6102, %v6190
        %v6247 = vadd.f32 %v6103, %v6193
        %v6248 = vadd.f32 %v6104, %v6198
        %v6249 = vadd.f32 %v6105, %v6201
        %v6250 = vadd.f32 %v6106, %v6206
        %v6251 = vadd.f32 %v6107, %v6209
        %v6252 = vadd.f32 %v6108, %v6214
        %v6253 = vadd.f32 %v6109, %v6217
        %v6254 = vadd.f32 %v6110, %v6222
        %v6255 = vadd.f32 %v6111, %v6225
        %v6256 = vadd.f32 %v6112, %v6230
        %v6257 = vadd.f32 %v6113, %v6233
        %v6258 = vadd.f32 %v6114, %v6238
        %v6259 = vadd.f32 %v6115, %v6241
        %v6262 = vrot.slane %v4999, 1
        %v6263 = vrot.slane %v5009, 1
        %v6264 = vsel %vm3738, %v6262, %v6263
        %s6265 = scalar_lea.vmem %s4, 272
        %v6266 = vld [vmem:[%s6265] sm:$0xf]
        %v6267 = vld [vmem:[%s6265 + $0x4] sm:$0xf]
        %v6268 = vld [vmem:[%s6265 + $0x8] sm:$0xf]
        %v6269 = vld [vmem:[%s6265 + $0xc] sm:$0xf]
        %v6274 = vunpack.c.l.b16 %v6266
        %v6275 = vunpack.c.l.b16 %v6267
        %v6276 = vunpack.c.l.b16 %v6268
        %v6277 = vunpack.c.l.b16 %v6269
        %v6278 = vpack.c.b16 %v6275, %v6274
        %v6279 = vpack.c.b16 %v6277, %v6276
        %v6283 = vsel %vm3475, %v6264, 0
        %6285 = vmatprep.subr.bf16.mxu0 0
        %6286 = vmatpush1.bf16.msra.mxu0 0
        %6287 = vmatprep.subr.bf16.mxu0 0
        %6288 = vmatpush1.bf16.msra.mxu0 0
        %6289 = vmatprep.subr.bf16.mxu0 0
        %6290 = vmatpush1.bf16.msra.mxu0 0
        %6291 = vmatprep.subr.bf16.mxu0 0
        %6292 = vmatpush1.bf16.msra.mxu0 0
        %6293 = vmatprep.subr.bf16.mxu0 0
        %6294 = vmatpush1.bf16.msra.mxu0 0
        %6295 = vmatprep.subr.bf16.mxu0 0
        %6296 = vmatpush1.bf16.msra.mxu0 0
        %6297 = vmatprep.subr.bf16.mxu0 0
        %6298 = vmatpush1.bf16.msra.mxu0 %v6279
        %6299 = vmatprep.subr.bf16.mxu0 0
        %6300 = vmatpush1.bf16.msra.mxu0 %v6278
        %6301 = vmatprep.subr.bf16.mxu0 0
        %6302 = vmatpush2.bf16.msra.mxu0 0
        %6303 = vmatprep.subr.bf16.mxu0 0
        %6304 = vmatpush2.bf16.msra.mxu0 0
        %6305 = vmatprep.subr.bf16.mxu0 0
        %6306 = vmatpush2.bf16.msra.mxu0 0
        %6307 = vmatprep.subr.bf16.mxu0 0
        %6308 = vmatpush2.bf16.msra.mxu0 0
        %6309 = vmatprep.subr.bf16.mxu0 0
        %6310 = vmatpush2.bf16.msra.mxu0 0
        %6311 = vmatprep.subr.bf16.mxu0 0
        %6312 = vmatpush2.bf16.msra.mxu0 0
        %6313 = vmatprep.subr.bf16.mxu0 0
        %6314 = vmatpush2.bf16.msra.mxu0 0
        %6315 = vmatprep.subr.bf16.mxu0 0
        %6316 = vmatpush2.bf16.msra.mxu0 0
        %6317 = vmatprep.mubr.bf16.mxu0 0
        %6318 = vmatmul.mubr.bf16.gmra.mxu0 %v5438
        %v6319 = vpop.f32.mrf.mxu0
        %v6320 = vadd.f32 0.0, %v6319
        %v6321 = vpop.f32.mrf.mxu0
        %v6322 = vpop.f32.mrf.mxu0
        %v6323 = vadd.f32 0.0, %v6322
        %v6324 = vpop.f32.mrf.mxu0
        %6325 = vmatprep.mubr.bf16.mxu0 0
        %6326 = vmatmul.mubr.bf16.gmra.mxu0 %v5441
        %v6327 = vpop.f32.mrf.mxu0
        %v6328 = vadd.f32 0.0, %v6327
        %v6329 = vpop.f32.mrf.mxu0
        %v6330 = vpop.f32.mrf.mxu0
        %v6331 = vadd.f32 0.0, %v6330
        %v6332 = vpop.f32.mrf.mxu0
        %6333 = vmatprep.mubr.bf16.mxu0 0
        %6334 = vmatmul.mubr.bf16.gmra.mxu0 %v5444
        %v6335 = vpop.f32.mrf.mxu0
        %v6336 = vadd.f32 0.0, %v6335
        %v6337 = vpop.f32.mrf.mxu0
        %v6338 = vpop.f32.mrf.mxu0
        %v6339 = vadd.f32 0.0, %v6338
        %v6340 = vpop.f32.mrf.mxu0
        %6341 = vmatprep.mubr.bf16.mxu0 0
        %6342 = vmatmul.mubr.bf16.gmra.mxu0 %v5447
        %v6343 = vpop.f32.mrf.mxu0
        %v6344 = vadd.f32 0.0, %v6343
        %v6345 = vpop.f32.mrf.mxu0
        %v6346 = vpop.f32.mrf.mxu0
        %v6347 = vadd.f32 0.0, %v6346
        %v6348 = vpop.f32.mrf.mxu0
        %6349 = vmatprep.mubr.bf16.mxu0 0
        %6350 = vmatmul.mubr.bf16.gmra.mxu0 %v5450
        %v6351 = vpop.f32.mrf.mxu0
        %v6352 = vadd.f32 0.0, %v6351
        %v6353 = vpop.f32.mrf.mxu0
        %v6354 = vpop.f32.mrf.mxu0
        %v6355 = vadd.f32 0.0, %v6354
        %v6356 = vpop.f32.mrf.mxu0
        %6357 = vmatprep.mubr.bf16.mxu0 0
        %6358 = vmatmul.mubr.bf16.gmra.mxu0 %v5453
        %v6359 = vpop.f32.mrf.mxu0
        %v6360 = vadd.f32 0.0, %v6359
        %v6361 = vpop.f32.mrf.mxu0
        %v6362 = vpop.f32.mrf.mxu0
        %v6363 = vadd.f32 0.0, %v6362
        %v6364 = vpop.f32.mrf.mxu0
        %6365 = vmatprep.mubr.bf16.mxu0 0
        %6366 = vmatmul.mubr.bf16.gmra.mxu0 %v5868
        %v6367 = vpop.f32.mrf.mxu0
        %v6368 = vadd.f32 0.0, %v6367
        %v6369 = vpop.f32.mrf.mxu0
        %v6370 = vpop.f32.mrf.mxu0
        %v6371 = vadd.f32 0.0, %v6370
        %v6372 = vpop.f32.mrf.mxu0
        %6373 = vmatprep.mubr.bf16.mxu0 0
        %6374 = vmatmul.mubr.bf16.gmra.mxu0 %v6283
        %v6375 = vpop.f32.mrf.mxu0
        %v6376 = vadd.f32 0.0, %v6375
        %v6377 = vpop.f32.mrf.mxu0
        %v6378 = vpop.f32.mrf.mxu0
        %v6379 = vadd.f32 0.0, %v6378
        %v6380 = vpop.f32.mrf.mxu0
        %6381 = vdwg.mxu0
        %v6382 = vadd.f32 %v6244, %v6320
        %v6383 = vadd.f32 %v6245, %v6323
        %v6384 = vadd.f32 %v6246, %v6328
        %v6385 = vadd.f32 %v6247, %v6331
        %v6386 = vadd.f32 %v6248, %v6336
        %v6387 = vadd.f32 %v6249, %v6339
        %v6388 = vadd.f32 %v6250, %v6344
        %v6389 = vadd.f32 %v6251, %v6347
        %v6390 = vadd.f32 %v6252, %v6352
        %v6391 = vadd.f32 %v6253, %v6355
        %v6392 = vadd.f32 %v6254, %v6360
        %v6393 = vadd.f32 %v6255, %v6363
        %v6394 = vadd.f32 %v6256, %v6368
        %v6395 = vadd.f32 %v6257, %v6371
        %v6396 = vadd.f32 %v6258, %v6376
        %v6397 = vadd.f32 %v6259, %v6379
        %s6398 = scalar_lea.vmem %s5, 1
        %v6399 = vld [vmem:[%s6398] sm:$0x1]
        %v6401 = vlaneseq
        %v6402 = vshrl.u32 %v6401, 7
        %v6403 = vsub.s32 0, %v6402
        %v6404 = vrot.slane %v6399, %v6403
        %v6406 = vadd.f32 %v6382, %v6404
        %v6407 = vadd.f32 %v6383, %v6404
        %v6408 = vadd.f32 %v6384, %v6404
        %v6409 = vadd.f32 %v6385, %v6404
        %v6410 = vadd.f32 %v6386, %v6404
        %v6411 = vadd.f32 %v6387, %v6404
        %v6412 = vadd.f32 %v6388, %v6404
        %v6413 = vadd.f32 %v6389, %v6404
        %v6414 = vadd.f32 %v6390, %v6404
        %v6415 = vadd.f32 %v6391, %v6404
        %v6416 = vadd.f32 %v6392, %v6404
        %v6417 = vadd.f32 %v6393, %v6404
        %v6418 = vadd.f32 %v6394, %v6404
        %v6419 = vadd.f32 %v6395, %v6404
        %v6420 = vadd.f32 %v6396, %v6404
        %v6421 = vadd.f32 %v6397, %v6404
        %v6422 = vmax.f32 %v6406, 0.0
        %v6423 = vmax.f32 %v6407, 0.0
        %v6424 = vmax.f32 %v6408, 0.0
        %v6425 = vmax.f32 %v6409, 0.0
        %v6426 = vmax.f32 %v6410, 0.0
        %v6427 = vmax.f32 %v6411, 0.0
        %v6428 = vmax.f32 %v6412, 0.0
        %v6429 = vmax.f32 %v6413, 0.0
        %v6430 = vmax.f32 %v6414, 0.0
        %v6431 = vmax.f32 %v6415, 0.0
        %v6432 = vmax.f32 %v6416, 0.0
        %v6433 = vmax.f32 %v6417, 0.0
        %v6434 = vmax.f32 %v6418, 0.0
        %v6435 = vmax.f32 %v6419, 0.0
        %v6436 = vmax.f32 %v6420, 0.0
        %v6437 = vmax.f32 %v6421, 0.0
        %v6470 = vcombine.low %v2810, %v2811
        %v6471 = vcombine.low %v2812, %v2813
        %v6473 = vunpack.c.l.s4 1983009808
        %v6474 = vunpack.c.0.s8 %v6473
        %v6475 = vlaneseq
        %v6476 = vshrl.u32 %v6475, 7
        %v6477 = vsub.s32 %v6474, %v6476
        %v6478 = vrot.slane %v6470, %v6477
        %v6480 = vunpack.c.l.s4 1983009808
        %v6481 = vunpack.c.0.s8 %v6480
        %v6482 = vlaneseq
        %v6483 = vshrl.u32 %v6482, 7
        %v6484 = vsub.s32 %v6481, %v6483
        %v6485 = vrot.slane %v6471, %v6484
        %v6486 = vcombine.low %v6478, %v6485
        %v6487 = vcombine.low %v2814, %v2815
        %v6488 = vcombine.low %v2816, %v2817
        %v6490 = vunpack.c.l.s4 1983009808
        %v6491 = vunpack.c.0.s8 %v6490
        %v6492 = vlaneseq
        %v6493 = vshrl.u32 %v6492, 7
        %v6494 = vsub.s32 %v6491, %v6493
        %v6495 = vrot.slane %v6487, %v6494
        %v6497 = vunpack.c.l.s4 1983009808
        %v6498 = vunpack.c.0.s8 %v6497
        %v6499 = vlaneseq
        %v6500 = vshrl.u32 %v6499, 7
        %v6501 = vsub.s32 %v6498, %v6500
        %v6502 = vrot.slane %v6488, %v6501
        %v6503 = vcombine.low %v6495, %v6502
        %v6504 = vcombine.low %v2818, %v2819
        %v6505 = vcombine.low %v2820, %v2821
        %v6507 = vunpack.c.l.s4 1983009808
        %v6508 = vunpack.c.0.s8 %v6507
        %v6509 = vlaneseq
        %v6510 = vshrl.u32 %v6509, 7
        %v6511 = vsub.s32 %v6508, %v6510
        %v6512 = vrot.slane %v6504, %v6511
        %v6514 = vunpack.c.l.s4 1983009808
        %v6515 = vunpack.c.0.s8 %v6514
        %v6516 = vlaneseq
        %v6517 = vshrl.u32 %v6516, 7
        %v6518 = vsub.s32 %v6515, %v6517
        %v6519 = vrot.slane %v6505, %v6518
        %v6520 = vcombine.low %v6512, %v6519
        %v6521 = vcombine.low %v2822, %v2823
        %v6522 = vcombine.low %v2824, %v2825
        %v6524 = vunpack.c.l.s4 1983009808
        %v6525 = vunpack.c.0.s8 %v6524
        %v6526 = vlaneseq
        %v6527 = vshrl.u32 %v6526, 7
        %v6528 = vsub.s32 %v6525, %v6527
        %v6529 = vrot.slane %v6521, %v6528
        %v6531 = vunpack.c.l.s4 1983009808
        %v6532 = vunpack.c.0.s8 %v6531
        %v6533 = vlaneseq
        %v6534 = vshrl.u32 %v6533, 7
        %v6535 = vsub.s32 %v6532, %v6534
        %v6536 = vrot.slane %v6522, %v6535
        %v6537 = vcombine.low %v6529, %v6536
        %v6538 = vcombine.low %v2826, %v2827
        %v6539 = vcombine.low %v2828, %v2829
        %v6541 = vunpack.c.l.s4 1983009808
        %v6542 = vunpack.c.0.s8 %v6541
        %v6543 = vlaneseq
        %v6544 = vshrl.u32 %v6543, 7
        %v6545 = vsub.s32 %v6542, %v6544
        %v6546 = vrot.slane %v6538, %v6545
        %v6548 = vunpack.c.l.s4 1983009808
        %v6549 = vunpack.c.0.s8 %v6548
        %v6550 = vlaneseq
        %v6551 = vshrl.u32 %v6550, 7
        %v6552 = vsub.s32 %v6549, %v6551
        %v6553 = vrot.slane %v6539, %v6552
        %v6554 = vcombine.low %v6546, %v6553
        %v6555 = vcombine.low %v2830, %v2831
        %v6556 = vcombine.low %v2832, %v2833
        %v6558 = vunpack.c.l.s4 1983009808
        %v6559 = vunpack.c.0.s8 %v6558
        %v6560 = vlaneseq
        %v6561 = vshrl.u32 %v6560, 7
        %v6562 = vsub.s32 %v6559, %v6561
        %v6563 = vrot.slane %v6555, %v6562
        %v6565 = vunpack.c.l.s4 1983009808
        %v6566 = vunpack.c.0.s8 %v6565
        %v6567 = vlaneseq
        %v6568 = vshrl.u32 %v6567, 7
        %v6569 = vsub.s32 %v6566, %v6568
        %v6570 = vrot.slane %v6556, %v6569
        %v6571 = vcombine.low %v6563, %v6570
        %v6572 = vcombine.low %v2834, %v2835
        %v6573 = vcombine.low %v2836, %v2837
        %v6575 = vunpack.c.l.s4 1983009808
        %v6576 = vunpack.c.0.s8 %v6575
        %v6577 = vlaneseq
        %v6578 = vshrl.u32 %v6577, 7
        %v6579 = vsub.s32 %v6576, %v6578
        %v6580 = vrot.slane %v6572, %v6579
        %v6582 = vunpack.c.l.s4 1983009808
        %v6583 = vunpack.c.0.s8 %v6582
        %v6584 = vlaneseq
        %v6585 = vshrl.u32 %v6584, 7
        %v6586 = vsub.s32 %v6583, %v6585
        %v6587 = vrot.slane %v6573, %v6586
        %v6588 = vcombine.low %v6580, %v6587
        %v6589 = vcombine.low %v2838, %v2839
        %v6590 = vcombine.low %v2840, %v2841
        %v6592 = vunpack.c.l.s4 1983009808
        %v6593 = vunpack.c.0.s8 %v6592
        %v6594 = vlaneseq
        %v6595 = vshrl.u32 %v6594, 7
        %v6596 = vsub.s32 %v6593, %v6595
        %v6597 = vrot.slane %v6589, %v6596
        %v6599 = vunpack.c.l.s4 1983009808
        %v6600 = vunpack.c.0.s8 %v6599
        %v6601 = vlaneseq
        %v6602 = vshrl.u32 %v6601, 7
        %v6603 = vsub.s32 %v6600, %v6602
        %v6604 = vrot.slane %v6590, %v6603
        %v6605 = vcombine.low %v6597, %v6604
        %v6614 = vpack.c.bf16 %v6503, %v6486
        %v6615 = vpack.c.bf16 %v6537, %v6520
        %v6616 = vpack.c.bf16 %v6571, %v6554
        %v6617 = vpack.c.bf16 %v6605, %v6588
        %v6622 = vunpack.c.l.b16 %v6614
        %v6623 = vunpack.c.h.b16 %v6614
        %v6624 = vunpack.c.l.b16 %v6615
        %v6625 = vunpack.c.h.b16 %v6615
        %v6626 = vunpack.c.l.b16 %v6616
        %v6627 = vunpack.c.h.b16 %v6616
        %v6628 = vunpack.c.l.b16 %v6617
        %v6629 = vunpack.c.h.b16 %v6617
        %v6634 = vunpack.c.l.b16 %v547
        %v6635 = vunpack.c.l.b16 %v548
        %v6636 = vunpack.c.l.b16 %v553
        %v6637 = vunpack.c.l.b16 %v554
        %v6638 = vpack.c.b16 %v6635, %v6634
        %v6639 = vpack.c.b16 %v6623, %v6622
        %v6640 = vpack.c.b16 %v6625, %v6624
        %v6641 = vpack.c.b16 %v6627, %v6626
        %v6642 = vpack.c.b16 %v6629, %v6628
        %v6643 = vpack.c.b16 %v6637, %v6636
        %v6645 = vshrl.u32 %v6638, 16
        %v6647 = vrot.slane %v6645, 7
        %v6648 = vshll.u32 %v6638, 16
        %v6650 = vor.u32 %v6647, %v6648
        %v6652 = vshrl.u32 %v6639, 16
        %v6654 = vrot.slane %v6652, 7
        %v6655 = vshll.u32 %v6639, 16
        %v6657 = vor.u32 %v6654, %v6655
        %v6659 = vshrl.u32 %v6640, 16
        %v6661 = vrot.slane %v6659, 7
        %v6662 = vshll.u32 %v6640, 16
        %v6664 = vor.u32 %v6661, %v6662
        %v6666 = vshrl.u32 %v6641, 16
        %v6668 = vrot.slane %v6666, 7
        %v6669 = vshll.u32 %v6641, 16
        %v6671 = vor.u32 %v6668, %v6669
        %v6673 = vshrl.u32 %v6642, 16
        %v6675 = vrot.slane %v6673, 7
        %v6676 = vshll.u32 %v6642, 16
        %v6678 = vor.u32 %v6675, %v6676
        %v6680 = vshrl.u32 %v6643, 16
        %v6682 = vrot.slane %v6680, 7
        %v6683 = vshll.u32 %v6643, 16
        %v6685 = vor.u32 %v6682, %v6683
        %v6698 = vsel %vm3336, 0, %v6650
        %v6699 = vsel %vm3336, 0, %v6657
        %v6700 = vsel %vm3336, 0, %v6664
        %v6701 = vsel %vm3336, 0, %v6671
        %v6702 = vsel %vm3336, 0, %v6678
        %v6703 = vsel %vm3336, 0, %v6685
        %v6704 = vsel %vm3336, %v6647, 0
        %v6705 = vsel %vm3336, %v6654, 0
        %v6706 = vsel %vm3336, %v6661, 0
        %v6707 = vsel %vm3336, %v6668, 0
        %v6708 = vsel %vm3336, %v6675, 0
        %v6709 = vsel %vm3336, %v6682, 0
        %s6710 = scalar_lea.vmem %s4, 288
        %v6711 = vld [vmem:[%s6710] sm:$0xf]
        %v6712 = vld [vmem:[%s6710 + $0x4] sm:$0xf]
        %v6713 = vld [vmem:[%s6710 + $0x8] sm:$0xf]
        %v6714 = vld [vmem:[%s6710 + $0xc] sm:$0xf]
        %v6716 = vshrl.u32 %v6698, 16
        %v6718 = vshll.u32 %v6698, 16
        %v6720 = vrot.slane %v6718, 1
        %v6721 = vor.u32 %v6716, %v6720
        %v6723 = vshll.u32 %v6704, 16
        %v6725 = vrot.slane %v6723, 1
        %v6726 = vsel %vm3361, %v6721, %v6725
        %v6728 = vshrl.u32 %v6699, 16
        %v6730 = vshll.u32 %v6699, 16
        %v6732 = vrot.slane %v6730, 1
        %v6733 = vor.u32 %v6728, %v6732
        %v6735 = vshll.u32 %v6705, 16
        %v6737 = vrot.slane %v6735, 1
        %v6738 = vsel %vm3361, %v6733, %v6737
        %v6740 = vshrl.u32 %v6700, 16
        %v6742 = vshll.u32 %v6700, 16
        %v6744 = vrot.slane %v6742, 1
        %v6745 = vor.u32 %v6740, %v6744
        %v6747 = vshll.u32 %v6706, 16
        %v6749 = vrot.slane %v6747, 1
        %v6750 = vsel %vm3361, %v6745, %v6749
        %v6752 = vshrl.u32 %v6701, 16
        %v6754 = vshll.u32 %v6701, 16
        %v6756 = vrot.slane %v6754, 1
        %v6757 = vor.u32 %v6752, %v6756
        %v6759 = vshll.u32 %v6707, 16
        %v6761 = vrot.slane %v6759, 1
        %v6762 = vsel %vm3361, %v6757, %v6761
        %v6764 = vshrl.u32 %v6702, 16
        %v6766 = vshll.u32 %v6702, 16
        %v6768 = vrot.slane %v6766, 1
        %v6769 = vor.u32 %v6764, %v6768
        %v6771 = vshll.u32 %v6708, 16
        %v6773 = vrot.slane %v6771, 1
        %v6774 = vsel %vm3361, %v6769, %v6773
        %s6775 = scalar_lea.vmem %s4, 304
        %v6776 = vld [vmem:[%s6775] sm:$0xf]
        %v6777 = vld [vmem:[%s6775 + $0x4] sm:$0xf]
        %v6778 = vld [vmem:[%s6775 + $0x8] sm:$0xf]
        %v6779 = vld [vmem:[%s6775 + $0xc] sm:$0xf]
        %v6784 = vunpack.c.l.b16 %v6776
        %v6785 = vunpack.c.l.b16 %v6777
        %v6786 = vunpack.c.l.b16 %v6778
        %v6787 = vunpack.c.l.b16 %v6779
        %v6788 = vpack.c.b16 %v6785, %v6784
        %v6789 = vpack.c.b16 %v6787, %v6786
        %v6793 = vsel %vm3475, %v6726, 0
        %v6796 = vsel %vm3475, %v6738, 0
        %v6799 = vsel %vm3475, %v6750, 0
        %v6802 = vsel %vm3475, %v6762, 0
        %v6805 = vsel %vm3475, %v6774, 0
        %6807 = vmatprep.subr.bf16.mxu0 0
        %6808 = vmatpush1.bf16.msra.mxu0 0
        %6809 = vmatprep.subr.bf16.mxu0 0
        %6810 = vmatpush1.bf16.msra.mxu0 0
        %6811 = vmatprep.subr.bf16.mxu0 0
        %6812 = vmatpush1.bf16.msra.mxu0 0
        %6813 = vmatprep.subr.bf16.mxu0 0
        %6814 = vmatpush1.bf16.msra.mxu0 0
        %6815 = vmatprep.subr.bf16.mxu0 0
        %6816 = vmatpush1.bf16.msra.mxu0 0
        %6817 = vmatprep.subr.bf16.mxu0 0
        %6818 = vmatpush1.bf16.msra.mxu0 0
        %6819 = vmatprep.subr.bf16.mxu0 0
        %6820 = vmatpush1.bf16.msra.mxu0 %v6789
        %6821 = vmatprep.subr.bf16.mxu0 0
        %6822 = vmatpush1.bf16.msra.mxu0 %v6788
        %6823 = vmatprep.subr.bf16.mxu0 0
        %6824 = vmatpush2.bf16.msra.mxu0 0
        %6825 = vmatprep.subr.bf16.mxu0 0
        %6826 = vmatpush2.bf16.msra.mxu0 0
        %6827 = vmatprep.subr.bf16.mxu0 0
        %6828 = vmatpush2.bf16.msra.mxu0 0
        %6829 = vmatprep.subr.bf16.mxu0 0
        %6830 = vmatpush2.bf16.msra.mxu0 0
        %6831 = vmatprep.subr.bf16.mxu0 0
        %6832 = vmatpush2.bf16.msra.mxu0 0
        %6833 = vmatprep.subr.bf16.mxu0 0
        %6834 = vmatpush2.bf16.msra.mxu0 0
        %6835 = vmatprep.subr.bf16.mxu0 0
        %6836 = vmatpush2.bf16.msra.mxu0 0
        %6837 = vmatprep.subr.bf16.mxu0 0
        %6838 = vmatpush2.bf16.msra.mxu0 0
        %6839 = vmatprep.mubr.bf16.mxu0 0
        %6840 = vmatmul.mubr.bf16.gmra.mxu0 %v6793
        %v6841 = vpop.f32.mrf.mxu0
        %v6842 = vadd.f32 0.0, %v6841
        %v6843 = vpop.f32.mrf.mxu0
        %v6844 = vpop.f32.mrf.mxu0
        %v6845 = vadd.f32 0.0, %v6844
        %v6846 = vpop.f32.mrf.mxu0
        %6847 = vmatprep.mubr.bf16.mxu0 0
        %6848 = vmatmul.mubr.bf16.gmra.mxu0 %v6796
        %v6849 = vpop.f32.mrf.mxu0
        %v6850 = vadd.f32 0.0, %v6849
        %v6851 = vpop.f32.mrf.mxu0
        %v6852 = vpop.f32.mrf.mxu0
        %v6853 = vadd.f32 0.0, %v6852
        %v6854 = vpop.f32.mrf.mxu0
        %6855 = vmatprep.mubr.bf16.mxu0 0
        %6856 = vmatmul.mubr.bf16.gmra.mxu0 %v6796
        %v6857 = vpop.f32.mrf.mxu0
        %v6858 = vadd.f32 0.0, %v6857
        %v6859 = vpop.f32.mrf.mxu0
        %v6860 = vpop.f32.mrf.mxu0
        %v6861 = vadd.f32 0.0, %v6860
        %v6862 = vpop.f32.mrf.mxu0
        %6863 = vmatprep.mubr.bf16.mxu0 0
        %6864 = vmatmul.mubr.bf16.gmra.mxu0 %v6799
        %v6865 = vpop.f32.mrf.mxu0
        %v6866 = vadd.f32 0.0, %v6865
        %v6867 = vpop.f32.mrf.mxu0
        %v6868 = vpop.f32.mrf.mxu0
        %v6869 = vadd.f32 0.0, %v6868
        %v6870 = vpop.f32.mrf.mxu0
        %6871 = vmatprep.mubr.bf16.mxu0 0
        %6872 = vmatmul.mubr.bf16.gmra.mxu0 %v6799
        %v6873 = vpop.f32.mrf.mxu0
        %v6874 = vadd.f32 0.0, %v6873
        %v6875 = vpop.f32.mrf.mxu0
        %v6876 = vpop.f32.mrf.mxu0
        %v6877 = vadd.f32 0.0, %v6876
        %v6878 = vpop.f32.mrf.mxu0
        %6879 = vmatprep.mubr.bf16.mxu0 0
        %6880 = vmatmul.mubr.bf16.gmra.mxu0 %v6802
        %v6881 = vpop.f32.mrf.mxu0
        %v6882 = vadd.f32 0.0, %v6881
        %v6883 = vpop.f32.mrf.mxu0
        %v6884 = vpop.f32.mrf.mxu0
        %v6885 = vadd.f32 0.0, %v6884
        %v6886 = vpop.f32.mrf.mxu0
        %6887 = vmatprep.mubr.bf16.mxu0 0
        %6888 = vmatmul.mubr.bf16.gmra.mxu0 %v6802
        %v6889 = vpop.f32.mrf.mxu0
        %v6890 = vadd.f32 0.0, %v6889
        %v6891 = vpop.f32.mrf.mxu0
        %v6892 = vpop.f32.mrf.mxu0
        %v6893 = vadd.f32 0.0, %v6892
        %v6894 = vpop.f32.mrf.mxu0
        %6895 = vmatprep.mubr.bf16.mxu0 0
        %6896 = vmatmul.mubr.bf16.gmra.mxu0 %v6805
        %v6897 = vpop.f32.mrf.mxu0
        %v6898 = vadd.f32 0.0, %v6897
        %v6899 = vpop.f32.mrf.mxu0
        %v6900 = vpop.f32.mrf.mxu0
        %v6901 = vadd.f32 0.0, %v6900
        %v6902 = vpop.f32.mrf.mxu0
        %6903 = vdwg.mxu0
        %v6908 = vunpack.c.l.b16 %v6711
        %v6909 = vunpack.c.l.b16 %v6712
        %v6910 = vunpack.c.l.b16 %v6713
        %v6911 = vunpack.c.l.b16 %v6714
        %v6912 = vpack.c.b16 %v6909, %v6908
        %v6913 = vpack.c.b16 %v6911, %v6910
        %v6916 = vsel %vm3475, %v6698, 0
        %v6918 = vsel %vm3475, %v6699, 0
        %v6920 = vsel %vm3475, %v6700, 0
        %v6922 = vsel %vm3475, %v6701, 0
        %v6924 = vsel %vm3475, %v6702, 0
        %6926 = vmatprep.subr.bf16.mxu0 0
        %6927 = vmatpush1.bf16.msra.mxu0 0
        %6928 = vmatprep.subr.bf16.mxu0 0
        %6929 = vmatpush1.bf16.msra.mxu0 0
        %6930 = vmatprep.subr.bf16.mxu0 0
        %6931 = vmatpush1.bf16.msra.mxu0 0
        %6932 = vmatprep.subr.bf16.mxu0 0
        %6933 = vmatpush1.bf16.msra.mxu0 0
        %6934 = vmatprep.subr.bf16.mxu0 0
        %6935 = vmatpush1.bf16.msra.mxu0 0
        %6936 = vmatprep.subr.bf16.mxu0 0
        %6937 = vmatpush1.bf16.msra.mxu0 0
        %6938 = vmatprep.subr.bf16.mxu0 0
        %6939 = vmatpush1.bf16.msra.mxu0 %v6913
        %6940 = vmatprep.subr.bf16.mxu0 0
        %6941 = vmatpush1.bf16.msra.mxu0 %v6912
        %6942 = vmatprep.subr.bf16.mxu0 0
        %6943 = vmatpush2.bf16.msra.mxu0 0
        %6944 = vmatprep.subr.bf16.mxu0 0
        %6945 = vmatpush2.bf16.msra.mxu0 0
        %6946 = vmatprep.subr.bf16.mxu0 0
        %6947 = vmatpush2.bf16.msra.mxu0 0
        %6948 = vmatprep.subr.bf16.mxu0 0
        %6949 = vmatpush2.bf16.msra.mxu0 0
        %6950 = vmatprep.subr.bf16.mxu0 0
        %6951 = vmatpush2.bf16.msra.mxu0 0
        %6952 = vmatprep.subr.bf16.mxu0 0
        %6953 = vmatpush2.bf16.msra.mxu0 0
        %6954 = vmatprep.subr.bf16.mxu0 0
        %6955 = vmatpush2.bf16.msra.mxu0 0
        %6956 = vmatprep.subr.bf16.mxu0 0
        %6957 = vmatpush2.bf16.msra.mxu0 0
        %6958 = vmatprep.mubr.bf16.mxu0 0
        %6959 = vmatmul.mubr.bf16.gmra.mxu0 %v6916
        %v6960 = vpop.f32.mrf.mxu0
        %v6961 = vadd.f32 %v6842, %v6960
        %v6962 = vpop.f32.mrf.mxu0
        %v6963 = vpop.f32.mrf.mxu0
        %v6964 = vadd.f32 %v6845, %v6963
        %v6965 = vpop.f32.mrf.mxu0
        %6966 = vmatprep.mubr.bf16.mxu0 0
        %6967 = vmatmul.mubr.bf16.gmra.mxu0 %v6918
        %v6968 = vpop.f32.mrf.mxu0
        %v6969 = vadd.f32 %v6850, %v6968
        %v6970 = vpop.f32.mrf.mxu0
        %v6971 = vpop.f32.mrf.mxu0
        %v6972 = vadd.f32 %v6853, %v6971
        %v6973 = vpop.f32.mrf.mxu0
        %6974 = vmatprep.mubr.bf16.mxu0 0
        %6975 = vmatmul.mubr.bf16.gmra.mxu0 %v6918
        %v6976 = vpop.f32.mrf.mxu0
        %v6977 = vadd.f32 %v6858, %v6976
        %v6978 = vpop.f32.mrf.mxu0
        %v6979 = vpop.f32.mrf.mxu0
        %v6980 = vadd.f32 %v6861, %v6979
        %v6981 = vpop.f32.mrf.mxu0
        %6982 = vmatprep.mubr.bf16.mxu0 0
        %6983 = vmatmul.mubr.bf16.gmra.mxu0 %v6920
        %v6984 = vpop.f32.mrf.mxu0
        %v6985 = vadd.f32 %v6866, %v6984
        %v6986 = vpop.f32.mrf.mxu0
        %v6987 = vpop.f32.mrf.mxu0
        %v6988 = vadd.f32 %v6869, %v6987
        %v6989 = vpop.f32.mrf.mxu0
        %6990 = vmatprep.mubr.bf16.mxu0 0
        %6991 = vmatmul.mubr.bf16.gmra.mxu0 %v6920
        %v6992 = vpop.f32.mrf.mxu0
        %v6993 = vadd.f32 %v6874, %v6992
        %v6994 = vpop.f32.mrf.mxu0
        %v6995 = vpop.f32.mrf.mxu0
        %v6996 = vadd.f32 %v6877, %v6995
        %v6997 = vpop.f32.mrf.mxu0
        %6998 = vmatprep.mubr.bf16.mxu0 0
        %6999 = vmatmul.mubr.bf16.gmra.mxu0 %v6922
        %v7000 = vpop.f32.mrf.mxu0
        %v7001 = vadd.f32 %v6882, %v7000
        %v7002 = vpop.f32.mrf.mxu0
        %v7003 = vpop.f32.mrf.mxu0
        %v7004 = vadd.f32 %v6885, %v7003
        %v7005 = vpop.f32.mrf.mxu0
        %7006 = vmatprep.mubr.bf16.mxu0 0
        %7007 = vmatmul.mubr.bf16.gmra.mxu0 %v6922
        %v7008 = vpop.f32.mrf.mxu0
        %v7009 = vadd.f32 %v6890, %v7008
        %v7010 = vpop.f32.mrf.mxu0
        %v7011 = vpop.f32.mrf.mxu0
        %v7012 = vadd.f32 %v6893, %v7011
        %v7013 = vpop.f32.mrf.mxu0
        %7014 = vmatprep.mubr.bf16.mxu0 0
        %7015 = vmatmul.mubr.bf16.gmra.mxu0 %v6924
        %v7016 = vpop.f32.mrf.mxu0
        %v7017 = vadd.f32 %v6898, %v7016
        %v7018 = vpop.f32.mrf.mxu0
        %v7019 = vpop.f32.mrf.mxu0
        %v7020 = vadd.f32 %v6901, %v7019
        %v7021 = vpop.f32.mrf.mxu0
        %7022 = vdwg.mxu0
        %v7033 = vrot.slane %v6698, 1
        %v7034 = vrot.slane %v6704, 1
        %v7035 = vsel %vm3738, %v7033, %v7034
        %v7036 = vrot.slane %v6699, 1
        %v7037 = vrot.slane %v6705, 1
        %v7038 = vsel %vm3738, %v7036, %v7037
        %v7039 = vrot.slane %v6700, 1
        %v7040 = vrot.slane %v6706, 1
        %v7041 = vsel %vm3738, %v7039, %v7040
        %v7042 = vrot.slane %v6701, 1
        %v7043 = vrot.slane %v6707, 1
        %v7044 = vsel %vm3738, %v7042, %v7043
        %v7045 = vrot.slane %v6702, 1
        %v7046 = vrot.slane %v6708, 1
        %v7047 = vsel %vm3738, %v7045, %v7046
        %s7048 = scalar_lea.vmem %s4, 320
        %v7049 = vld [vmem:[%s7048] sm:$0xf]
        %v7050 = vld [vmem:[%s7048 + $0x4] sm:$0xf]
        %v7051 = vld [vmem:[%s7048 + $0x8] sm:$0xf]
        %v7052 = vld [vmem:[%s7048 + $0xc] sm:$0xf]
        %v7057 = vunpack.c.l.b16 %v7049
        %v7058 = vunpack.c.l.b16 %v7050
        %v7059 = vunpack.c.l.b16 %v7051
        %v7060 = vunpack.c.l.b16 %v7052
        %v7061 = vpack.c.b16 %v7058, %v7057
        %v7062 = vpack.c.b16 %v7060, %v7059
        %v7066 = vsel %vm3475, %v7035, 0
        %v7069 = vsel %vm3475, %v7038, 0
        %v7072 = vsel %vm3475, %v7041, 0
        %v7075 = vsel %vm3475, %v7044, 0
        %v7078 = vsel %vm3475, %v7047, 0
        %7080 = vmatprep.subr.bf16.mxu0 0
        %7081 = vmatpush1.bf16.msra.mxu0 0
        %7082 = vmatprep.subr.bf16.mxu0 0
        %7083 = vmatpush1.bf16.msra.mxu0 0
        %7084 = vmatprep.subr.bf16.mxu0 0
        %7085 = vmatpush1.bf16.msra.mxu0 0
        %7086 = vmatprep.subr.bf16.mxu0 0
        %7087 = vmatpush1.bf16.msra.mxu0 0
        %7088 = vmatprep.subr.bf16.mxu0 0
        %7089 = vmatpush1.bf16.msra.mxu0 0
        %7090 = vmatprep.subr.bf16.mxu0 0
        %7091 = vmatpush1.bf16.msra.mxu0 0
        %7092 = vmatprep.subr.bf16.mxu0 0
        %7093 = vmatpush1.bf16.msra.mxu0 %v7062
        %7094 = vmatprep.subr.bf16.mxu0 0
        %7095 = vmatpush1.bf16.msra.mxu0 %v7061
        %7096 = vmatprep.subr.bf16.mxu0 0
        %7097 = vmatpush2.bf16.msra.mxu0 0
        %7098 = vmatprep.subr.bf16.mxu0 0
        %7099 = vmatpush2.bf16.msra.mxu0 0
        %7100 = vmatprep.subr.bf16.mxu0 0
        %7101 = vmatpush2.bf16.msra.mxu0 0
        %7102 = vmatprep.subr.bf16.mxu0 0
        %7103 = vmatpush2.bf16.msra.mxu0 0
        %7104 = vmatprep.subr.bf16.mxu0 0
        %7105 = vmatpush2.bf16.msra.mxu0 0
        %7106 = vmatprep.subr.bf16.mxu0 0
        %7107 = vmatpush2.bf16.msra.mxu0 0
        %7108 = vmatprep.subr.bf16.mxu0 0
        %7109 = vmatpush2.bf16.msra.mxu0 0
        %7110 = vmatprep.subr.bf16.mxu0 0
        %7111 = vmatpush2.bf16.msra.mxu0 0
        %7112 = vmatprep.mubr.bf16.mxu0 0
        %7113 = vmatmul.mubr.bf16.gmra.mxu0 %v7066
        %v7114 = vpop.f32.mrf.mxu0
        %v7115 = vadd.f32 0.0, %v7114
        %v7116 = vpop.f32.mrf.mxu0
        %v7117 = vpop.f32.mrf.mxu0
        %v7118 = vadd.f32 0.0, %v7117
        %v7119 = vpop.f32.mrf.mxu0
        %7120 = vmatprep.mubr.bf16.mxu0 0
        %7121 = vmatmul.mubr.bf16.gmra.mxu0 %v7069
        %v7122 = vpop.f32.mrf.mxu0
        %v7123 = vadd.f32 0.0, %v7122
        %v7124 = vpop.f32.mrf.mxu0
        %v7125 = vpop.f32.mrf.mxu0
        %v7126 = vadd.f32 0.0, %v7125
        %v7127 = vpop.f32.mrf.mxu0
        %7128 = vmatprep.mubr.bf16.mxu0 0
        %7129 = vmatmul.mubr.bf16.gmra.mxu0 %v7069
        %v7130 = vpop.f32.mrf.mxu0
        %v7131 = vadd.f32 0.0, %v7130
        %v7132 = vpop.f32.mrf.mxu0
        %v7133 = vpop.f32.mrf.mxu0
        %v7134 = vadd.f32 0.0, %v7133
        %v7135 = vpop.f32.mrf.mxu0
        %7136 = vmatprep.mubr.bf16.mxu0 0
        %7137 = vmatmul.mubr.bf16.gmra.mxu0 %v7072
        %v7138 = vpop.f32.mrf.mxu0
        %v7139 = vadd.f32 0.0, %v7138
        %v7140 = vpop.f32.mrf.mxu0
        %v7141 = vpop.f32.mrf.mxu0
        %v7142 = vadd.f32 0.0, %v7141
        %v7143 = vpop.f32.mrf.mxu0
        %7144 = vmatprep.mubr.bf16.mxu0 0
        %7145 = vmatmul.mubr.bf16.gmra.mxu0 %v7072
        %v7146 = vpop.f32.mrf.mxu0
        %v7147 = vadd.f32 0.0, %v7146
        %v7148 = vpop.f32.mrf.mxu0
        %v7149 = vpop.f32.mrf.mxu0
        %v7150 = vadd.f32 0.0, %v7149
        %v7151 = vpop.f32.mrf.mxu0
        %7152 = vmatprep.mubr.bf16.mxu0 0
        %7153 = vmatmul.mubr.bf16.gmra.mxu0 %v7075
        %v7154 = vpop.f32.mrf.mxu0
        %v7155 = vadd.f32 0.0, %v7154
        %v7156 = vpop.f32.mrf.mxu0
        %v7157 = vpop.f32.mrf.mxu0
        %v7158 = vadd.f32 0.0, %v7157
        %v7159 = vpop.f32.mrf.mxu0
        %7160 = vmatprep.mubr.bf16.mxu0 0
        %7161 = vmatmul.mubr.bf16.gmra.mxu0 %v7075
        %v7162 = vpop.f32.mrf.mxu0
        %v7163 = vadd.f32 0.0, %v7162
        %v7164 = vpop.f32.mrf.mxu0
        %v7165 = vpop.f32.mrf.mxu0
        %v7166 = vadd.f32 0.0, %v7165
        %v7167 = vpop.f32.mrf.mxu0
        %7168 = vmatprep.mubr.bf16.mxu0 0
        %7169 = vmatmul.mubr.bf16.gmra.mxu0 %v7078
        %v7170 = vpop.f32.mrf.mxu0
        %v7171 = vadd.f32 0.0, %v7170
        %v7172 = vpop.f32.mrf.mxu0
        %v7173 = vpop.f32.mrf.mxu0
        %v7174 = vadd.f32 0.0, %v7173
        %v7175 = vpop.f32.mrf.mxu0
        %7176 = vdwg.mxu0
        %v7177 = vadd.f32 %v6961, %v7115
        %v7178 = vadd.f32 %v6964, %v7118
        %v7179 = vadd.f32 %v6969, %v7123
        %v7180 = vadd.f32 %v6972, %v7126
        %v7181 = vadd.f32 %v6977, %v7131
        %v7182 = vadd.f32 %v6980, %v7134
        %v7183 = vadd.f32 %v6985, %v7139
        %v7184 = vadd.f32 %v6988, %v7142
        %v7185 = vadd.f32 %v6993, %v7147
        %v7186 = vadd.f32 %v6996, %v7150
        %v7187 = vadd.f32 %v7001, %v7155
        %v7188 = vadd.f32 %v7004, %v7158
        %v7189 = vadd.f32 %v7009, %v7163
        %v7190 = vadd.f32 %v7012, %v7166
        %v7191 = vadd.f32 %v7017, %v7171
        %v7192 = vadd.f32 %v7020, %v7174
        %s7193 = scalar_lea.vmem %s4, 336
        %v7194 = vld [vmem:[%s7193] sm:$0xf]
        %v7195 = vld [vmem:[%s7193 + $0x4] sm:$0xf]
        %v7196 = vld [vmem:[%s7193 + $0x8] sm:$0xf]
        %v7197 = vld [vmem:[%s7193 + $0xc] sm:$0xf]
        %v7202 = vunpack.c.l.b16 %v7194
        %v7203 = vunpack.c.l.b16 %v7195
        %v7204 = vunpack.c.l.b16 %v7196
        %v7205 = vunpack.c.l.b16 %v7197
        %v7206 = vpack.c.b16 %v7203, %v7202
        %v7207 = vpack.c.b16 %v7205, %v7204
        %7210 = vmatprep.subr.bf16.mxu0 0
        %7211 = vmatpush1.bf16.msra.mxu0 0
        %7212 = vmatprep.subr.bf16.mxu0 0
        %7213 = vmatpush1.bf16.msra.mxu0 0
        %7214 = vmatprep.subr.bf16.mxu0 0
        %7215 = vmatpush1.bf16.msra.mxu0 0
        %7216 = vmatprep.subr.bf16.mxu0 0
        %7217 = vmatpush1.bf16.msra.mxu0 0
        %7218 = vmatprep.subr.bf16.mxu0 0
        %7219 = vmatpush1.bf16.msra.mxu0 0
        %7220 = vmatprep.subr.bf16.mxu0 0
        %7221 = vmatpush1.bf16.msra.mxu0 0
        %7222 = vmatprep.subr.bf16.mxu0 0
        %7223 = vmatpush1.bf16.msra.mxu0 %v7207
        %7224 = vmatprep.subr.bf16.mxu0 0
        %7225 = vmatpush1.bf16.msra.mxu0 %v7206
        %7226 = vmatprep.subr.bf16.mxu0 0
        %7227 = vmatpush2.bf16.msra.mxu0 0
        %7228 = vmatprep.subr.bf16.mxu0 0
        %7229 = vmatpush2.bf16.msra.mxu0 0
        %7230 = vmatprep.subr.bf16.mxu0 0
        %7231 = vmatpush2.bf16.msra.mxu0 0
        %7232 = vmatprep.subr.bf16.mxu0 0
        %7233 = vmatpush2.bf16.msra.mxu0 0
        %7234 = vmatprep.subr.bf16.mxu0 0
        %7235 = vmatpush2.bf16.msra.mxu0 0
        %7236 = vmatprep.subr.bf16.mxu0 0
        %7237 = vmatpush2.bf16.msra.mxu0 0
        %7238 = vmatprep.subr.bf16.mxu0 0
        %7239 = vmatpush2.bf16.msra.mxu0 0
        %7240 = vmatprep.subr.bf16.mxu0 0
        %7241 = vmatpush2.bf16.msra.mxu0 0
        %7242 = vmatprep.mubr.bf16.mxu0 0
        %7243 = vmatmul.mubr.bf16.gmra.mxu0 %v6918
        %v7244 = vpop.f32.mrf.mxu0
        %v7245 = vadd.f32 0.0, %v7244
        %v7246 = vpop.f32.mrf.mxu0
        %v7247 = vpop.f32.mrf.mxu0
        %v7248 = vadd.f32 0.0, %v7247
        %v7249 = vpop.f32.mrf.mxu0
        %7250 = vmatprep.mubr.bf16.mxu0 0
        %7251 = vmatmul.mubr.bf16.gmra.mxu0 %v6918
        %v7252 = vpop.f32.mrf.mxu0
        %v7253 = vadd.f32 0.0, %v7252
        %v7254 = vpop.f32.mrf.mxu0
        %v7255 = vpop.f32.mrf.mxu0
        %v7256 = vadd.f32 0.0, %v7255
        %v7257 = vpop.f32.mrf.mxu0
        %7258 = vmatprep.mubr.bf16.mxu0 0
        %7259 = vmatmul.mubr.bf16.gmra.mxu0 %v6920
        %v7260 = vpop.f32.mrf.mxu0
        %v7261 = vadd.f32 0.0, %v7260
        %v7262 = vpop.f32.mrf.mxu0
        %v7263 = vpop.f32.mrf.mxu0
        %v7264 = vadd.f32 0.0, %v7263
        %v7265 = vpop.f32.mrf.mxu0
        %7266 = vmatprep.mubr.bf16.mxu0 0
        %7267 = vmatmul.mubr.bf16.gmra.mxu0 %v6920
        %v7268 = vpop.f32.mrf.mxu0
        %v7269 = vadd.f32 0.0, %v7268
        %v7270 = vpop.f32.mrf.mxu0
        %v7271 = vpop.f32.mrf.mxu0
        %v7272 = vadd.f32 0.0, %v7271
        %v7273 = vpop.f32.mrf.mxu0
        %7274 = vmatprep.mubr.bf16.mxu0 0
        %7275 = vmatmul.mubr.bf16.gmra.mxu0 %v6922
        %v7276 = vpop.f32.mrf.mxu0
        %v7277 = vadd.f32 0.0, %v7276
        %v7278 = vpop.f32.mrf.mxu0
        %v7279 = vpop.f32.mrf.mxu0
        %v7280 = vadd.f32 0.0, %v7279
        %v7281 = vpop.f32.mrf.mxu0
        %7282 = vmatprep.mubr.bf16.mxu0 0
        %7283 = vmatmul.mubr.bf16.gmra.mxu0 %v6922
        %v7284 = vpop.f32.mrf.mxu0
        %v7285 = vadd.f32 0.0, %v7284
        %v7286 = vpop.f32.mrf.mxu0
        %v7287 = vpop.f32.mrf.mxu0
        %v7288 = vadd.f32 0.0, %v7287
        %v7289 = vpop.f32.mrf.mxu0
        %7290 = vmatprep.mubr.bf16.mxu0 0
        %7291 = vmatmul.mubr.bf16.gmra.mxu0 %v6924
        %v7292 = vpop.f32.mrf.mxu0
        %v7293 = vadd.f32 0.0, %v7292
        %v7294 = vpop.f32.mrf.mxu0
        %v7295 = vpop.f32.mrf.mxu0
        %v7296 = vadd.f32 0.0, %v7295
        %v7297 = vpop.f32.mrf.mxu0
        %7298 = vmatprep.mubr.bf16.mxu0 0
        %7299 = vmatmul.mubr.bf16.gmra.mxu0 %v6924
        %v7300 = vpop.f32.mrf.mxu0
        %v7301 = vadd.f32 0.0, %v7300
        %v7302 = vpop.f32.mrf.mxu0
        %v7303 = vpop.f32.mrf.mxu0
        %v7304 = vadd.f32 0.0, %v7303
        %v7305 = vpop.f32.mrf.mxu0
        %7306 = vdwg.mxu0
        %v7307 = vadd.f32 %v7177, %v7245
        %v7308 = vadd.f32 %v7178, %v7248
        %v7309 = vadd.f32 %v7179, %v7253
        %v7310 = vadd.f32 %v7180, %v7256
        %v7311 = vadd.f32 %v7181, %v7261
        %v7312 = vadd.f32 %v7182, %v7264
        %v7313 = vadd.f32 %v7183, %v7269
        %v7314 = vadd.f32 %v7184, %v7272
        %v7315 = vadd.f32 %v7185, %v7277
        %v7316 = vadd.f32 %v7186, %v7280
        %v7317 = vadd.f32 %v7187, %v7285
        %v7318 = vadd.f32 %v7188, %v7288
        %v7319 = vadd.f32 %v7189, %v7293
        %v7320 = vadd.f32 %v7190, %v7296
        %v7321 = vadd.f32 %v7191, %v7301
        %v7322 = vadd.f32 %v7192, %v7304
        %s7323 = scalar_lea.vmem %s4, 352
        %v7324 = vld [vmem:[%s7323] sm:$0xf]
        %v7325 = vld [vmem:[%s7323 + $0x4] sm:$0xf]
        %v7326 = vld [vmem:[%s7323 + $0x8] sm:$0xf]
        %v7327 = vld [vmem:[%s7323 + $0xc] sm:$0xf]
        %v7332 = vunpack.c.l.b16 %v7324
        %v7333 = vunpack.c.l.b16 %v7325
        %v7334 = vunpack.c.l.b16 %v7326
        %v7335 = vunpack.c.l.b16 %v7327
        %v7336 = vpack.c.b16 %v7333, %v7332
        %v7337 = vpack.c.b16 %v7335, %v7334
        %7340 = vmatprep.subr.bf16.mxu0 0
        %7341 = vmatpush1.bf16.msra.mxu0 0
        %7342 = vmatprep.subr.bf16.mxu0 0
        %7343 = vmatpush1.bf16.msra.mxu0 0
        %7344 = vmatprep.subr.bf16.mxu0 0
        %7345 = vmatpush1.bf16.msra.mxu0 0
        %7346 = vmatprep.subr.bf16.mxu0 0
        %7347 = vmatpush1.bf16.msra.mxu0 0
        %7348 = vmatprep.subr.bf16.mxu0 0
        %7349 = vmatpush1.bf16.msra.mxu0 0
        %7350 = vmatprep.subr.bf16.mxu0 0
        %7351 = vmatpush1.bf16.msra.mxu0 0
        %7352 = vmatprep.subr.bf16.mxu0 0
        %7353 = vmatpush1.bf16.msra.mxu0 %v7337
        %7354 = vmatprep.subr.bf16.mxu0 0
        %7355 = vmatpush1.bf16.msra.mxu0 %v7336
        %7356 = vmatprep.subr.bf16.mxu0 0
        %7357 = vmatpush2.bf16.msra.mxu0 0
        %7358 = vmatprep.subr.bf16.mxu0 0
        %7359 = vmatpush2.bf16.msra.mxu0 0
        %7360 = vmatprep.subr.bf16.mxu0 0
        %7361 = vmatpush2.bf16.msra.mxu0 0
        %7362 = vmatprep.subr.bf16.mxu0 0
        %7363 = vmatpush2.bf16.msra.mxu0 0
        %7364 = vmatprep.subr.bf16.mxu0 0
        %7365 = vmatpush2.bf16.msra.mxu0 0
        %7366 = vmatprep.subr.bf16.mxu0 0
        %7367 = vmatpush2.bf16.msra.mxu0 0
        %7368 = vmatprep.subr.bf16.mxu0 0
        %7369 = vmatpush2.bf16.msra.mxu0 0
        %7370 = vmatprep.subr.bf16.mxu0 0
        %7371 = vmatpush2.bf16.msra.mxu0 0
        %7372 = vmatprep.mubr.bf16.mxu0 0
        %7373 = vmatmul.mubr.bf16.gmra.mxu0 %v6796
        %v7374 = vpop.f32.mrf.mxu0
        %v7375 = vadd.f32 0.0, %v7374
        %v7376 = vpop.f32.mrf.mxu0
        %v7377 = vpop.f32.mrf.mxu0
        %v7378 = vadd.f32 0.0, %v7377
        %v7379 = vpop.f32.mrf.mxu0
        %7380 = vmatprep.mubr.bf16.mxu0 0
        %7381 = vmatmul.mubr.bf16.gmra.mxu0 %v6796
        %v7382 = vpop.f32.mrf.mxu0
        %v7383 = vadd.f32 0.0, %v7382
        %v7384 = vpop.f32.mrf.mxu0
        %v7385 = vpop.f32.mrf.mxu0
        %v7386 = vadd.f32 0.0, %v7385
        %v7387 = vpop.f32.mrf.mxu0
        %7388 = vmatprep.mubr.bf16.mxu0 0
        %7389 = vmatmul.mubr.bf16.gmra.mxu0 %v6799
        %v7390 = vpop.f32.mrf.mxu0
        %v7391 = vadd.f32 0.0, %v7390
        %v7392 = vpop.f32.mrf.mxu0
        %v7393 = vpop.f32.mrf.mxu0
        %v7394 = vadd.f32 0.0, %v7393
        %v7395 = vpop.f32.mrf.mxu0
        %7396 = vmatprep.mubr.bf16.mxu0 0
        %7397 = vmatmul.mubr.bf16.gmra.mxu0 %v6799
        %v7398 = vpop.f32.mrf.mxu0
        %v7399 = vadd.f32 0.0, %v7398
        %v7400 = vpop.f32.mrf.mxu0
        %v7401 = vpop.f32.mrf.mxu0
        %v7402 = vadd.f32 0.0, %v7401
        %v7403 = vpop.f32.mrf.mxu0
        %7404 = vmatprep.mubr.bf16.mxu0 0
        %7405 = vmatmul.mubr.bf16.gmra.mxu0 %v6802
        %v7406 = vpop.f32.mrf.mxu0
        %v7407 = vadd.f32 0.0, %v7406
        %v7408 = vpop.f32.mrf.mxu0
        %v7409 = vpop.f32.mrf.mxu0
        %v7410 = vadd.f32 0.0, %v7409
        %v7411 = vpop.f32.mrf.mxu0
        %7412 = vmatprep.mubr.bf16.mxu0 0
        %7413 = vmatmul.mubr.bf16.gmra.mxu0 %v6802
        %v7414 = vpop.f32.mrf.mxu0
        %v7415 = vadd.f32 0.0, %v7414
        %v7416 = vpop.f32.mrf.mxu0
        %v7417 = vpop.f32.mrf.mxu0
        %v7418 = vadd.f32 0.0, %v7417
        %v7419 = vpop.f32.mrf.mxu0
        %7420 = vmatprep.mubr.bf16.mxu0 0
        %7421 = vmatmul.mubr.bf16.gmra.mxu0 %v6805
        %v7422 = vpop.f32.mrf.mxu0
        %v7423 = vadd.f32 0.0, %v7422
        %v7424 = vpop.f32.mrf.mxu0
        %v7425 = vpop.f32.mrf.mxu0
        %v7426 = vadd.f32 0.0, %v7425
        %v7427 = vpop.f32.mrf.mxu0
        %7428 = vmatprep.mubr.bf16.mxu0 0
        %7429 = vmatmul.mubr.bf16.gmra.mxu0 %v6805
        %v7430 = vpop.f32.mrf.mxu0
        %v7431 = vadd.f32 0.0, %v7430
        %v7432 = vpop.f32.mrf.mxu0
        %v7433 = vpop.f32.mrf.mxu0
        %v7434 = vadd.f32 0.0, %v7433
        %v7435 = vpop.f32.mrf.mxu0
        %7436 = vdwg.mxu0
        %v7437 = vadd.f32 %v7307, %v7375
        %v7438 = vadd.f32 %v7308, %v7378
        %v7439 = vadd.f32 %v7309, %v7383
        %v7440 = vadd.f32 %v7310, %v7386
        %v7441 = vadd.f32 %v7311, %v7391
        %v7442 = vadd.f32 %v7312, %v7394
        %v7443 = vadd.f32 %v7313, %v7399
        %v7444 = vadd.f32 %v7314, %v7402
        %v7445 = vadd.f32 %v7315, %v7407
        %v7446 = vadd.f32 %v7316, %v7410
        %v7447 = vadd.f32 %v7317, %v7415
        %v7448 = vadd.f32 %v7318, %v7418
        %v7449 = vadd.f32 %v7319, %v7423
        %v7450 = vadd.f32 %v7320, %v7426
        %v7451 = vadd.f32 %v7321, %v7431
        %v7452 = vadd.f32 %v7322, %v7434
        %s7453 = scalar_lea.vmem %s4, 368
        %v7454 = vld [vmem:[%s7453] sm:$0xf]
        %v7455 = vld [vmem:[%s7453 + $0x4] sm:$0xf]
        %v7456 = vld [vmem:[%s7453 + $0x8] sm:$0xf]
        %v7457 = vld [vmem:[%s7453 + $0xc] sm:$0xf]
        %v7462 = vunpack.c.l.b16 %v7454
        %v7463 = vunpack.c.l.b16 %v7455
        %v7464 = vunpack.c.l.b16 %v7456
        %v7465 = vunpack.c.l.b16 %v7457
        %v7466 = vpack.c.b16 %v7463, %v7462
        %v7467 = vpack.c.b16 %v7465, %v7464
        %7470 = vmatprep.subr.bf16.mxu0 0
        %7471 = vmatpush1.bf16.msra.mxu0 0
        %7472 = vmatprep.subr.bf16.mxu0 0
        %7473 = vmatpush1.bf16.msra.mxu0 0
        %7474 = vmatprep.subr.bf16.mxu0 0
        %7475 = vmatpush1.bf16.msra.mxu0 0
        %7476 = vmatprep.subr.bf16.mxu0 0
        %7477 = vmatpush1.bf16.msra.mxu0 0
        %7478 = vmatprep.subr.bf16.mxu0 0
        %7479 = vmatpush1.bf16.msra.mxu0 0
        %7480 = vmatprep.subr.bf16.mxu0 0
        %7481 = vmatpush1.bf16.msra.mxu0 0
        %7482 = vmatprep.subr.bf16.mxu0 0
        %7483 = vmatpush1.bf16.msra.mxu0 %v7467
        %7484 = vmatprep.subr.bf16.mxu0 0
        %7485 = vmatpush1.bf16.msra.mxu0 %v7466
        %7486 = vmatprep.subr.bf16.mxu0 0
        %7487 = vmatpush2.bf16.msra.mxu0 0
        %7488 = vmatprep.subr.bf16.mxu0 0
        %7489 = vmatpush2.bf16.msra.mxu0 0
        %7490 = vmatprep.subr.bf16.mxu0 0
        %7491 = vmatpush2.bf16.msra.mxu0 0
        %7492 = vmatprep.subr.bf16.mxu0 0
        %7493 = vmatpush2.bf16.msra.mxu0 0
        %7494 = vmatprep.subr.bf16.mxu0 0
        %7495 = vmatpush2.bf16.msra.mxu0 0
        %7496 = vmatprep.subr.bf16.mxu0 0
        %7497 = vmatpush2.bf16.msra.mxu0 0
        %7498 = vmatprep.subr.bf16.mxu0 0
        %7499 = vmatpush2.bf16.msra.mxu0 0
        %7500 = vmatprep.subr.bf16.mxu0 0
        %7501 = vmatpush2.bf16.msra.mxu0 0
        %7502 = vmatprep.mubr.bf16.mxu0 0
        %7503 = vmatmul.mubr.bf16.gmra.mxu0 %v7069
        %v7504 = vpop.f32.mrf.mxu0
        %v7505 = vadd.f32 0.0, %v7504
        %v7506 = vpop.f32.mrf.mxu0
        %v7507 = vpop.f32.mrf.mxu0
        %v7508 = vadd.f32 0.0, %v7507
        %v7509 = vpop.f32.mrf.mxu0
        %7510 = vmatprep.mubr.bf16.mxu0 0
        %7511 = vmatmul.mubr.bf16.gmra.mxu0 %v7069
        %v7512 = vpop.f32.mrf.mxu0
        %v7513 = vadd.f32 0.0, %v7512
        %v7514 = vpop.f32.mrf.mxu0
        %v7515 = vpop.f32.mrf.mxu0
        %v7516 = vadd.f32 0.0, %v7515
        %v7517 = vpop.f32.mrf.mxu0
        %7518 = vmatprep.mubr.bf16.mxu0 0
        %7519 = vmatmul.mubr.bf16.gmra.mxu0 %v7072
        %v7520 = vpop.f32.mrf.mxu0
        %v7521 = vadd.f32 0.0, %v7520
        %v7522 = vpop.f32.mrf.mxu0
        %v7523 = vpop.f32.mrf.mxu0
        %v7524 = vadd.f32 0.0, %v7523
        %v7525 = vpop.f32.mrf.mxu0
        %7526 = vmatprep.mubr.bf16.mxu0 0
        %7527 = vmatmul.mubr.bf16.gmra.mxu0 %v7072
        %v7528 = vpop.f32.mrf.mxu0
        %v7529 = vadd.f32 0.0, %v7528
        %v7530 = vpop.f32.mrf.mxu0
        %v7531 = vpop.f32.mrf.mxu0
        %v7532 = vadd.f32 0.0, %v7531
        %v7533 = vpop.f32.mrf.mxu0
        %7534 = vmatprep.mubr.bf16.mxu0 0
        %7535 = vmatmul.mubr.bf16.gmra.mxu0 %v7075
        %v7536 = vpop.f32.mrf.mxu0
        %v7537 = vadd.f32 0.0, %v7536
        %v7538 = vpop.f32.mrf.mxu0
        %v7539 = vpop.f32.mrf.mxu0
        %v7540 = vadd.f32 0.0, %v7539
        %v7541 = vpop.f32.mrf.mxu0
        %7542 = vmatprep.mubr.bf16.mxu0 0
        %7543 = vmatmul.mubr.bf16.gmra.mxu0 %v7075
        %v7544 = vpop.f32.mrf.mxu0
        %v7545 = vadd.f32 0.0, %v7544
        %v7546 = vpop.f32.mrf.mxu0
        %v7547 = vpop.f32.mrf.mxu0
        %v7548 = vadd.f32 0.0, %v7547
        %v7549 = vpop.f32.mrf.mxu0
        %7550 = vmatprep.mubr.bf16.mxu0 0
        %7551 = vmatmul.mubr.bf16.gmra.mxu0 %v7078
        %v7552 = vpop.f32.mrf.mxu0
        %v7553 = vadd.f32 0.0, %v7552
        %v7554 = vpop.f32.mrf.mxu0
        %v7555 = vpop.f32.mrf.mxu0
        %v7556 = vadd.f32 0.0, %v7555
        %v7557 = vpop.f32.mrf.mxu0
        %7558 = vmatprep.mubr.bf16.mxu0 0
        %7559 = vmatmul.mubr.bf16.gmra.mxu0 %v7078
        %v7560 = vpop.f32.mrf.mxu0
        %v7561 = vadd.f32 0.0, %v7560
        %v7562 = vpop.f32.mrf.mxu0
        %v7563 = vpop.f32.mrf.mxu0
        %v7564 = vadd.f32 0.0, %v7563
        %v7565 = vpop.f32.mrf.mxu0
        %7566 = vdwg.mxu0
        %v7567 = vadd.f32 %v7437, %v7505
        %v7568 = vadd.f32 %v7438, %v7508
        %v7569 = vadd.f32 %v7439, %v7513
        %v7570 = vadd.f32 %v7440, %v7516
        %v7571 = vadd.f32 %v7441, %v7521
        %v7572 = vadd.f32 %v7442, %v7524
        %v7573 = vadd.f32 %v7443, %v7529
        %v7574 = vadd.f32 %v7444, %v7532
        %v7575 = vadd.f32 %v7445, %v7537
        %v7576 = vadd.f32 %v7446, %v7540
        %v7577 = vadd.f32 %v7447, %v7545
        %v7578 = vadd.f32 %v7448, %v7548
        %v7579 = vadd.f32 %v7449, %v7553
        %v7580 = vadd.f32 %v7450, %v7556
        %v7581 = vadd.f32 %v7451, %v7561
        %v7582 = vadd.f32 %v7452, %v7564
        %s7583 = scalar_lea.vmem %s4, 384
        %v7584 = vld [vmem:[%s7583] sm:$0xf]
        %v7585 = vld [vmem:[%s7583 + $0x4] sm:$0xf]
        %v7586 = vld [vmem:[%s7583 + $0x8] sm:$0xf]
        %v7587 = vld [vmem:[%s7583 + $0xc] sm:$0xf]
        %v7592 = vunpack.c.l.b16 %v7584
        %v7593 = vunpack.c.l.b16 %v7585
        %v7594 = vunpack.c.l.b16 %v7586
        %v7595 = vunpack.c.l.b16 %v7587
        %v7596 = vpack.c.b16 %v7593, %v7592
        %v7597 = vpack.c.b16 %v7595, %v7594
        %v7601 = vsel %vm3475, %v6703, 0
        %7603 = vmatprep.subr.bf16.mxu0 0
        %7604 = vmatpush1.bf16.msra.mxu0 0
        %7605 = vmatprep.subr.bf16.mxu0 0
        %7606 = vmatpush1.bf16.msra.mxu0 0
        %7607 = vmatprep.subr.bf16.mxu0 0
        %7608 = vmatpush1.bf16.msra.mxu0 0
        %7609 = vmatprep.subr.bf16.mxu0 0
        %7610 = vmatpush1.bf16.msra.mxu0 0
        %7611 = vmatprep.subr.bf16.mxu0 0
        %7612 = vmatpush1.bf16.msra.mxu0 0
        %7613 = vmatprep.subr.bf16.mxu0 0
        %7614 = vmatpush1.bf16.msra.mxu0 0
        %7615 = vmatprep.subr.bf16.mxu0 0
        %7616 = vmatpush1.bf16.msra.mxu0 %v7597
        %7617 = vmatprep.subr.bf16.mxu0 0
        %7618 = vmatpush1.bf16.msra.mxu0 %v7596
        %7619 = vmatprep.subr.bf16.mxu0 0
        %7620 = vmatpush2.bf16.msra.mxu0 0
        %7621 = vmatprep.subr.bf16.mxu0 0
        %7622 = vmatpush2.bf16.msra.mxu0 0
        %7623 = vmatprep.subr.bf16.mxu0 0
        %7624 = vmatpush2.bf16.msra.mxu0 0
        %7625 = vmatprep.subr.bf16.mxu0 0
        %7626 = vmatpush2.bf16.msra.mxu0 0
        %7627 = vmatprep.subr.bf16.mxu0 0
        %7628 = vmatpush2.bf16.msra.mxu0 0
        %7629 = vmatprep.subr.bf16.mxu0 0
        %7630 = vmatpush2.bf16.msra.mxu0 0
        %7631 = vmatprep.subr.bf16.mxu0 0
        %7632 = vmatpush2.bf16.msra.mxu0 0
        %7633 = vmatprep.subr.bf16.mxu0 0
        %7634 = vmatpush2.bf16.msra.mxu0 0
        %7635 = vmatprep.mubr.bf16.mxu0 0
        %7636 = vmatmul.mubr.bf16.gmra.mxu0 %v6918
        %v7637 = vpop.f32.mrf.mxu0
        %v7638 = vadd.f32 0.0, %v7637
        %v7639 = vpop.f32.mrf.mxu0
        %v7640 = vpop.f32.mrf.mxu0
        %v7641 = vadd.f32 0.0, %v7640
        %v7642 = vpop.f32.mrf.mxu0
        %7643 = vmatprep.mubr.bf16.mxu0 0
        %7644 = vmatmul.mubr.bf16.gmra.mxu0 %v6920
        %v7645 = vpop.f32.mrf.mxu0
        %v7646 = vadd.f32 0.0, %v7645
        %v7647 = vpop.f32.mrf.mxu0
        %v7648 = vpop.f32.mrf.mxu0
        %v7649 = vadd.f32 0.0, %v7648
        %v7650 = vpop.f32.mrf.mxu0
        %7651 = vmatprep.mubr.bf16.mxu0 0
        %7652 = vmatmul.mubr.bf16.gmra.mxu0 %v6920
        %v7653 = vpop.f32.mrf.mxu0
        %v7654 = vadd.f32 0.0, %v7653
        %v7655 = vpop.f32.mrf.mxu0
        %v7656 = vpop.f32.mrf.mxu0
        %v7657 = vadd.f32 0.0, %v7656
        %v7658 = vpop.f32.mrf.mxu0
        %7659 = vmatprep.mubr.bf16.mxu0 0
        %7660 = vmatmul.mubr.bf16.gmra.mxu0 %v6922
        %v7661 = vpop.f32.mrf.mxu0
        %v7662 = vadd.f32 0.0, %v7661
        %v7663 = vpop.f32.mrf.mxu0
        %v7664 = vpop.f32.mrf.mxu0
        %v7665 = vadd.f32 0.0, %v7664
        %v7666 = vpop.f32.mrf.mxu0
        %7667 = vmatprep.mubr.bf16.mxu0 0
        %7668 = vmatmul.mubr.bf16.gmra.mxu0 %v6922
        %v7669 = vpop.f32.mrf.mxu0
        %v7670 = vadd.f32 0.0, %v7669
        %v7671 = vpop.f32.mrf.mxu0
        %v7672 = vpop.f32.mrf.mxu0
        %v7673 = vadd.f32 0.0, %v7672
        %v7674 = vpop.f32.mrf.mxu0
        %7675 = vmatprep.mubr.bf16.mxu0 0
        %7676 = vmatmul.mubr.bf16.gmra.mxu0 %v6924
        %v7677 = vpop.f32.mrf.mxu0
        %v7678 = vadd.f32 0.0, %v7677
        %v7679 = vpop.f32.mrf.mxu0
        %v7680 = vpop.f32.mrf.mxu0
        %v7681 = vadd.f32 0.0, %v7680
        %v7682 = vpop.f32.mrf.mxu0
        %7683 = vmatprep.mubr.bf16.mxu0 0
        %7684 = vmatmul.mubr.bf16.gmra.mxu0 %v6924
        %v7685 = vpop.f32.mrf.mxu0
        %v7686 = vadd.f32 0.0, %v7685
        %v7687 = vpop.f32.mrf.mxu0
        %v7688 = vpop.f32.mrf.mxu0
        %v7689 = vadd.f32 0.0, %v7688
        %v7690 = vpop.f32.mrf.mxu0
        %7691 = vmatprep.mubr.bf16.mxu0 0
        %7692 = vmatmul.mubr.bf16.gmra.mxu0 %v7601
        %v7693 = vpop.f32.mrf.mxu0
        %v7694 = vadd.f32 0.0, %v7693
        %v7695 = vpop.f32.mrf.mxu0
        %v7696 = vpop.f32.mrf.mxu0
        %v7697 = vadd.f32 0.0, %v7696
        %v7698 = vpop.f32.mrf.mxu0
        %7699 = vdwg.mxu0
        %v7700 = vadd.f32 %v7567, %v7638
        %v7701 = vadd.f32 %v7568, %v7641
        %v7702 = vadd.f32 %v7569, %v7646
        %v7703 = vadd.f32 %v7570, %v7649
        %v7704 = vadd.f32 %v7571, %v7654
        %v7705 = vadd.f32 %v7572, %v7657
        %v7706 = vadd.f32 %v7573, %v7662
        %v7707 = vadd.f32 %v7574, %v7665
        %v7708 = vadd.f32 %v7575, %v7670
        %v7709 = vadd.f32 %v7576, %v7673
        %v7710 = vadd.f32 %v7577, %v7678
        %v7711 = vadd.f32 %v7578, %v7681
        %v7712 = vadd.f32 %v7579, %v7686
        %v7713 = vadd.f32 %v7580, %v7689
        %v7714 = vadd.f32 %v7581, %v7694
        %v7715 = vadd.f32 %v7582, %v7697
        %v7716 = vshrl.u32 %v6703, 16
        %v7718 = vshll.u32 %v6703, 16
        %v7720 = vrot.slane %v7718, 1
        %v7721 = vor.u32 %v7716, %v7720
        %v7723 = vshll.u32 %v6709, 16
        %v7725 = vrot.slane %v7723, 1
        %v7726 = vsel %vm3361, %v7721, %v7725
        %s7727 = scalar_lea.vmem %s4, 400
        %v7728 = vld [vmem:[%s7727] sm:$0xf]
        %v7729 = vld [vmem:[%s7727 + $0x4] sm:$0xf]
        %v7730 = vld [vmem:[%s7727 + $0x8] sm:$0xf]
        %v7731 = vld [vmem:[%s7727 + $0xc] sm:$0xf]
        %v7736 = vunpack.c.l.b16 %v7728
        %v7737 = vunpack.c.l.b16 %v7729
        %v7738 = vunpack.c.l.b16 %v7730
        %v7739 = vunpack.c.l.b16 %v7731
        %v7740 = vpack.c.b16 %v7737, %v7736
        %v7741 = vpack.c.b16 %v7739, %v7738
        %v7745 = vsel %vm3475, %v7726, 0
        %7747 = vmatprep.subr.bf16.mxu0 0
        %7748 = vmatpush1.bf16.msra.mxu0 0
        %7749 = vmatprep.subr.bf16.mxu0 0
        %7750 = vmatpush1.bf16.msra.mxu0 0
        %7751 = vmatprep.subr.bf16.mxu0 0
        %7752 = vmatpush1.bf16.msra.mxu0 0
        %7753 = vmatprep.subr.bf16.mxu0 0
        %7754 = vmatpush1.bf16.msra.mxu0 0
        %7755 = vmatprep.subr.bf16.mxu0 0
        %7756 = vmatpush1.bf16.msra.mxu0 0
        %7757 = vmatprep.subr.bf16.mxu0 0
        %7758 = vmatpush1.bf16.msra.mxu0 0
        %7759 = vmatprep.subr.bf16.mxu0 0
        %7760 = vmatpush1.bf16.msra.mxu0 %v7741
        %7761 = vmatprep.subr.bf16.mxu0 0
        %7762 = vmatpush1.bf16.msra.mxu0 %v7740
        %7763 = vmatprep.subr.bf16.mxu0 0
        %7764 = vmatpush2.bf16.msra.mxu0 0
        %7765 = vmatprep.subr.bf16.mxu0 0
        %7766 = vmatpush2.bf16.msra.mxu0 0
        %7767 = vmatprep.subr.bf16.mxu0 0
        %7768 = vmatpush2.bf16.msra.mxu0 0
        %7769 = vmatprep.subr.bf16.mxu0 0
        %7770 = vmatpush2.bf16.msra.mxu0 0
        %7771 = vmatprep.subr.bf16.mxu0 0
        %7772 = vmatpush2.bf16.msra.mxu0 0
        %7773 = vmatprep.subr.bf16.mxu0 0
        %7774 = vmatpush2.bf16.msra.mxu0 0
        %7775 = vmatprep.subr.bf16.mxu0 0
        %7776 = vmatpush2.bf16.msra.mxu0 0
        %7777 = vmatprep.subr.bf16.mxu0 0
        %7778 = vmatpush2.bf16.msra.mxu0 0
        %7779 = vmatprep.mubr.bf16.mxu0 0
        %7780 = vmatmul.mubr.bf16.gmra.mxu0 %v6796
        %v7781 = vpop.f32.mrf.mxu0
        %v7782 = vadd.f32 0.0, %v7781
        %v7783 = vpop.f32.mrf.mxu0
        %v7784 = vpop.f32.mrf.mxu0
        %v7785 = vadd.f32 0.0, %v7784
        %v7786 = vpop.f32.mrf.mxu0
        %7787 = vmatprep.mubr.bf16.mxu0 0
        %7788 = vmatmul.mubr.bf16.gmra.mxu0 %v6799
        %v7789 = vpop.f32.mrf.mxu0
        %v7790 = vadd.f32 0.0, %v7789
        %v7791 = vpop.f32.mrf.mxu0
        %v7792 = vpop.f32.mrf.mxu0
        %v7793 = vadd.f32 0.0, %v7792
        %v7794 = vpop.f32.mrf.mxu0
        %7795 = vmatprep.mubr.bf16.mxu0 0
        %7796 = vmatmul.mubr.bf16.gmra.mxu0 %v6799
        %v7797 = vpop.f32.mrf.mxu0
        %v7798 = vadd.f32 0.0, %v7797
        %v7799 = vpop.f32.mrf.mxu0
        %v7800 = vpop.f32.mrf.mxu0
        %v7801 = vadd.f32 0.0, %v7800
        %v7802 = vpop.f32.mrf.mxu0
        %7803 = vmatprep.mubr.bf16.mxu0 0
        %7804 = vmatmul.mubr.bf16.gmra.mxu0 %v6802
        %v7805 = vpop.f32.mrf.mxu0
        %v7806 = vadd.f32 0.0, %v7805
        %v7807 = vpop.f32.mrf.mxu0
        %v7808 = vpop.f32.mrf.mxu0
        %v7809 = vadd.f32 0.0, %v7808
        %v7810 = vpop.f32.mrf.mxu0
        %7811 = vmatprep.mubr.bf16.mxu0 0
        %7812 = vmatmul.mubr.bf16.gmra.mxu0 %v6802
        %v7813 = vpop.f32.mrf.mxu0
        %v7814 = vadd.f32 0.0, %v7813
        %v7815 = vpop.f32.mrf.mxu0
        %v7816 = vpop.f32.mrf.mxu0
        %v7817 = vadd.f32 0.0, %v7816
        %v7818 = vpop.f32.mrf.mxu0
        %7819 = vmatprep.mubr.bf16.mxu0 0
        %7820 = vmatmul.mubr.bf16.gmra.mxu0 %v6805
        %v7821 = vpop.f32.mrf.mxu0
        %v7822 = vadd.f32 0.0, %v7821
        %v7823 = vpop.f32.mrf.mxu0
        %v7824 = vpop.f32.mrf.mxu0
        %v7825 = vadd.f32 0.0, %v7824
        %v7826 = vpop.f32.mrf.mxu0
        %7827 = vmatprep.mubr.bf16.mxu0 0
        %7828 = vmatmul.mubr.bf16.gmra.mxu0 %v6805
        %v7829 = vpop.f32.mrf.mxu0
        %v7830 = vadd.f32 0.0, %v7829
        %v7831 = vpop.f32.mrf.mxu0
        %v7832 = vpop.f32.mrf.mxu0
        %v7833 = vadd.f32 0.0, %v7832
        %v7834 = vpop.f32.mrf.mxu0
        %7835 = vmatprep.mubr.bf16.mxu0 0
        %7836 = vmatmul.mubr.bf16.gmra.mxu0 %v7745
        %v7837 = vpop.f32.mrf.mxu0
        %v7838 = vadd.f32 0.0, %v7837
        %v7839 = vpop.f32.mrf.mxu0
        %v7840 = vpop.f32.mrf.mxu0
        %v7841 = vadd.f32 0.0, %v7840
        %v7842 = vpop.f32.mrf.mxu0
        %7843 = vdwg.mxu0
        %v7844 = vadd.f32 %v7700, %v7782
        %v7845 = vadd.f32 %v7701, %v7785
        %v7846 = vadd.f32 %v7702, %v7790
        %v7847 = vadd.f32 %v7703, %v7793
        %v7848 = vadd.f32 %v7704, %v7798
        %v7849 = vadd.f32 %v7705, %v7801
        %v7850 = vadd.f32 %v7706, %v7806
        %v7851 = vadd.f32 %v7707, %v7809
        %v7852 = vadd.f32 %v7708, %v7814
        %v7853 = vadd.f32 %v7709, %v7817
        %v7854 = vadd.f32 %v7710, %v7822
        %v7855 = vadd.f32 %v7711, %v7825
        %v7856 = vadd.f32 %v7712, %v7830
        %v7857 = vadd.f32 %v7713, %v7833
        %v7858 = vadd.f32 %v7714, %v7838
        %v7859 = vadd.f32 %v7715, %v7841
        %v7862 = vrot.slane %v6703, 1
        %v7863 = vrot.slane %v6709, 1
        %v7864 = vsel %vm3738, %v7862, %v7863
        %s7865 = scalar_lea.vmem %s4, 416
        %v7866 = vld [vmem:[%s7865] sm:$0xf]
        %v7867 = vld [vmem:[%s7865 + $0x4] sm:$0xf]
        %v7868 = vld [vmem:[%s7865 + $0x8] sm:$0xf]
        %v7869 = vld [vmem:[%s7865 + $0xc] sm:$0xf]
        %v7874 = vunpack.c.l.b16 %v7866
        %v7875 = vunpack.c.l.b16 %v7867
        %v7876 = vunpack.c.l.b16 %v7868
        %v7877 = vunpack.c.l.b16 %v7869
        %v7878 = vpack.c.b16 %v7875, %v7874
        %v7879 = vpack.c.b16 %v7877, %v7876
        %v7883 = vsel %vm3475, %v7864, 0
        %7885 = vmatprep.subr.bf16.mxu0 0
        %7886 = vmatpush1.bf16.msra.mxu0 0
        %7887 = vmatprep.subr.bf16.mxu0 0
        %7888 = vmatpush1.bf16.msra.mxu0 0
        %7889 = vmatprep.subr.bf16.mxu0 0
        %7890 = vmatpush1.bf16.msra.mxu0 0
        %7891 = vmatprep.subr.bf16.mxu0 0
        %7892 = vmatpush1.bf16.msra.mxu0 0
        %7893 = vmatprep.subr.bf16.mxu0 0
        %7894 = vmatpush1.bf16.msra.mxu0 0
        %7895 = vmatprep.subr.bf16.mxu0 0
        %7896 = vmatpush1.bf16.msra.mxu0 0
        %7897 = vmatprep.subr.bf16.mxu0 0
        %7898 = vmatpush1.bf16.msra.mxu0 %v7879
        %7899 = vmatprep.subr.bf16.mxu0 0
        %7900 = vmatpush1.bf16.msra.mxu0 %v7878
        %7901 = vmatprep.subr.bf16.mxu0 0
        %7902 = vmatpush2.bf16.msra.mxu0 0
        %7903 = vmatprep.subr.bf16.mxu0 0
        %7904 = vmatpush2.bf16.msra.mxu0 0
        %7905 = vmatprep.subr.bf16.mxu0 0
        %7906 = vmatpush2.bf16.msra.mxu0 0
        %7907 = vmatprep.subr.bf16.mxu0 0
        %7908 = vmatpush2.bf16.msra.mxu0 0
        %7909 = vmatprep.subr.bf16.mxu0 0
        %7910 = vmatpush2.bf16.msra.mxu0 0
        %7911 = vmatprep.subr.bf16.mxu0 0
        %7912 = vmatpush2.bf16.msra.mxu0 0
        %7913 = vmatprep.subr.bf16.mxu0 0
        %7914 = vmatpush2.bf16.msra.mxu0 0
        %7915 = vmatprep.subr.bf16.mxu0 0
        %7916 = vmatpush2.bf16.msra.mxu0 0
        %7917 = vmatprep.mubr.bf16.mxu0 0
        %7918 = vmatmul.mubr.bf16.gmra.mxu0 %v7069
        %v7919 = vpop.f32.mrf.mxu0
        %v7920 = vadd.f32 0.0, %v7919
        %v7921 = vpop.f32.mrf.mxu0
        %v7922 = vpop.f32.mrf.mxu0
        %v7923 = vadd.f32 0.0, %v7922
        %v7924 = vpop.f32.mrf.mxu0
        %7925 = vmatprep.mubr.bf16.mxu0 0
        %7926 = vmatmul.mubr.bf16.gmra.mxu0 %v7072
        %v7927 = vpop.f32.mrf.mxu0
        %v7928 = vadd.f32 0.0, %v7927
        %v7929 = vpop.f32.mrf.mxu0
        %v7930 = vpop.f32.mrf.mxu0
        %v7931 = vadd.f32 0.0, %v7930
        %v7932 = vpop.f32.mrf.mxu0
        %7933 = vmatprep.mubr.bf16.mxu0 0
        %7934 = vmatmul.mubr.bf16.gmra.mxu0 %v7072
        %v7935 = vpop.f32.mrf.mxu0
        %v7936 = vadd.f32 0.0, %v7935
        %v7937 = vpop.f32.mrf.mxu0
        %v7938 = vpop.f32.mrf.mxu0
        %v7939 = vadd.f32 0.0, %v7938
        %v7940 = vpop.f32.mrf.mxu0
        %7941 = vmatprep.mubr.bf16.mxu0 0
        %7942 = vmatmul.mubr.bf16.gmra.mxu0 %v7075
        %v7943 = vpop.f32.mrf.mxu0
        %v7944 = vadd.f32 0.0, %v7943
        %v7945 = vpop.f32.mrf.mxu0
        %v7946 = vpop.f32.mrf.mxu0
        %v7947 = vadd.f32 0.0, %v7946
        %v7948 = vpop.f32.mrf.mxu0
        %7949 = vmatprep.mubr.bf16.mxu0 0
        %7950 = vmatmul.mubr.bf16.gmra.mxu0 %v7075
        %v7951 = vpop.f32.mrf.mxu0
        %v7952 = vadd.f32 0.0, %v7951
        %v7953 = vpop.f32.mrf.mxu0
        %v7954 = vpop.f32.mrf.mxu0
        %v7955 = vadd.f32 0.0, %v7954
        %v7956 = vpop.f32.mrf.mxu0
        %7957 = vmatprep.mubr.bf16.mxu0 0
        %7958 = vmatmul.mubr.bf16.gmra.mxu0 %v7078
        %v7959 = vpop.f32.mrf.mxu0
        %v7960 = vadd.f32 0.0, %v7959
        %v7961 = vpop.f32.mrf.mxu0
        %v7962 = vpop.f32.mrf.mxu0
        %v7963 = vadd.f32 0.0, %v7962
        %v7964 = vpop.f32.mrf.mxu0
        %7965 = vmatprep.mubr.bf16.mxu0 0
        %7966 = vmatmul.mubr.bf16.gmra.mxu0 %v7078
        %v7967 = vpop.f32.mrf.mxu0
        %v7968 = vadd.f32 0.0, %v7967
        %v7969 = vpop.f32.mrf.mxu0
        %v7970 = vpop.f32.mrf.mxu0
        %v7971 = vadd.f32 0.0, %v7970
        %v7972 = vpop.f32.mrf.mxu0
        %7973 = vmatprep.mubr.bf16.mxu0 0
        %7974 = vmatmul.mubr.bf16.gmra.mxu0 %v7883
        %v7975 = vpop.f32.mrf.mxu0
        %v7976 = vadd.f32 0.0, %v7975
        %v7977 = vpop.f32.mrf.mxu0
        %v7978 = vpop.f32.mrf.mxu0
        %v7979 = vadd.f32 0.0, %v7978
        %v7980 = vpop.f32.mrf.mxu0
        %7981 = vdwg.mxu0
        %v7982 = vadd.f32 %v7844, %v7920
        %v7983 = vadd.f32 %v7845, %v7923
        %v7984 = vadd.f32 %v7846, %v7928
        %v7985 = vadd.f32 %v7847, %v7931
        %v7986 = vadd.f32 %v7848, %v7936
        %v7987 = vadd.f32 %v7849, %v7939
        %v7988 = vadd.f32 %v7850, %v7944
        %v7989 = vadd.f32 %v7851, %v7947
        %v7990 = vadd.f32 %v7852, %v7952
        %v7991 = vadd.f32 %v7853, %v7955
        %v7992 = vadd.f32 %v7854, %v7960
        %v7993 = vadd.f32 %v7855, %v7963
        %v7994 = vadd.f32 %v7856, %v7968
        %v7995 = vadd.f32 %v7857, %v7971
        %v7996 = vadd.f32 %v7858, %v7976
        %v7997 = vadd.f32 %v7859, %v7979
        %s7998 = scalar_lea.vmem %s5, 2
        %v7999 = vld [vmem:[%s7998] sm:$0x1]
        %v8001 = vlaneseq
        %v8002 = vshrl.u32 %v8001, 7
        %v8003 = vsub.s32 0, %v8002
        %v8004 = vrot.slane %v7999, %v8003
        %v8006 = vadd.f32 %v7982, %v8004
        %v8007 = vadd.f32 %v7983, %v8004
        %v8008 = vadd.f32 %v7984, %v8004
        %v8009 = vadd.f32 %v7985, %v8004
        %v8010 = vadd.f32 %v7986, %v8004
        %v8011 = vadd.f32 %v7987, %v8004
        %v8012 = vadd.f32 %v7988, %v8004
        %v8013 = vadd.f32 %v7989, %v8004
        %v8014 = vadd.f32 %v7990, %v8004
        %v8015 = vadd.f32 %v7991, %v8004
        %v8016 = vadd.f32 %v7992, %v8004
        %v8017 = vadd.f32 %v7993, %v8004
        %v8018 = vadd.f32 %v7994, %v8004
        %v8019 = vadd.f32 %v7995, %v8004
        %v8020 = vadd.f32 %v7996, %v8004
        %v8021 = vadd.f32 %v7997, %v8004
        %v8022 = vmax.f32 %v8006, 0.0
        %v8023 = vmax.f32 %v8007, 0.0
        %v8024 = vmax.f32 %v8008, 0.0
        %v8025 = vmax.f32 %v8009, 0.0
        %v8026 = vmax.f32 %v8010, 0.0
        %v8027 = vmax.f32 %v8011, 0.0
        %v8028 = vmax.f32 %v8012, 0.0
        %v8029 = vmax.f32 %v8013, 0.0
        %v8030 = vmax.f32 %v8014, 0.0
        %v8031 = vmax.f32 %v8015, 0.0
        %v8032 = vmax.f32 %v8016, 0.0
        %v8033 = vmax.f32 %v8017, 0.0
        %v8034 = vmax.f32 %v8018, 0.0
        %v8035 = vmax.f32 %v8019, 0.0
        %v8036 = vmax.f32 %v8020, 0.0
        %v8037 = vmax.f32 %v8021, 0.0
        %v8038 = vpack.c.bf16 %v4771, %v4770
        %v8039 = vpack.c.bf16 %v4773, %v4772
        %v8040 = vpack.c.bf16 %v4775, %v4774
        %v8041 = vpack.c.bf16 %v4777, %v4776
        %v8042 = vpack.c.bf16 %v4779, %v4778
        %v8043 = vpack.c.bf16 %v4781, %v4780
        %v8044 = vpack.c.bf16 %v4783, %v4782
        %v8045 = vpack.c.bf16 %v4785, %v4784
        %v8046 = vld [vmem:[%s6] sm:$0xf]
        %v8047 = vld [vmem:[%s6 + $0x4] sm:$0xf]
        %v8048 = vld [vmem:[%s6 + $0x8] sm:$0xf]
        %v8049 = vld [vmem:[%s6 + $0xc] sm:$0xf]
        %v8050 = vpack.c.bf16 %v6423, %v6422
        %v8051 = vpack.c.bf16 %v6425, %v6424
        %v8052 = vpack.c.bf16 %v6427, %v6426
        %v8053 = vpack.c.bf16 %v6429, %v6428
        %v8054 = vpack.c.bf16 %v6431, %v6430
        %v8055 = vpack.c.bf16 %v6433, %v6432
        %v8056 = vpack.c.bf16 %v6435, %v6434
        %v8057 = vpack.c.bf16 %v6437, %v6436
        %s8058 = scalar_lea.vmem %s6, 16
        %v8059 = vld [vmem:[%s8058] sm:$0xf]
        %v8060 = vld [vmem:[%s8058 + $0x4] sm:$0xf]
        %v8061 = vld [vmem:[%s8058 + $0x8] sm:$0xf]
        %v8062 = vld [vmem:[%s8058 + $0xc] sm:$0xf]
        %v8067 = vunpack.c.l.b16 %v8059
        %v8068 = vunpack.c.l.b16 %v8060
        %v8069 = vunpack.c.l.b16 %v8061
        %v8070 = vunpack.c.l.b16 %v8062
        %v8071 = vpack.c.b16 %v8068, %v8067
        %v8072 = vpack.c.b16 %v8070, %v8069
        %v8076 = vsel %vm3475, %v8050, 0
        %v8079 = vsel %vm3475, %v8051, 0
        %v8082 = vsel %vm3475, %v8052, 0
        %v8085 = vsel %vm3475, %v8053, 0
        %v8088 = vsel %vm3475, %v8054, 0
        %v8091 = vsel %vm3475, %v8055, 0
        %v8094 = vsel %vm3475, %v8056, 0
        %v8097 = vsel %vm3475, %v8057, 0
        %8099 = vmatprep.subr.bf16.mxu0 0
        %8100 = vmatpush1.bf16.msra.mxu0 0
        %8101 = vmatprep.subr.bf16.mxu0 0
        %8102 = vmatpush1.bf16.msra.mxu0 0
        %8103 = vmatprep.subr.bf16.mxu0 0
        %8104 = vmatpush1.bf16.msra.mxu0 0
        %8105 = vmatprep.subr.bf16.mxu0 0
        %8106 = vmatpush1.bf16.msra.mxu0 0
        %8107 = vmatprep.subr.bf16.mxu0 0
        %8108 = vmatpush1.bf16.msra.mxu0 0
        %8109 = vmatprep.subr.bf16.mxu0 0
        %8110 = vmatpush1.bf16.msra.mxu0 0
        %8111 = vmatprep.subr.bf16.mxu0 0
        %8112 = vmatpush1.bf16.msra.mxu0 %v8072
        %8113 = vmatprep.subr.bf16.mxu0 0
        %8114 = vmatpush1.bf16.msra.mxu0 %v8071
        %8115 = vmatprep.subr.bf16.mxu0 0
        %8116 = vmatpush2.bf16.msra.mxu0 0
        %8117 = vmatprep.subr.bf16.mxu0 0
        %8118 = vmatpush2.bf16.msra.mxu0 0
        %8119 = vmatprep.subr.bf16.mxu0 0
        %8120 = vmatpush2.bf16.msra.mxu0 0
        %8121 = vmatprep.subr.bf16.mxu0 0
        %8122 = vmatpush2.bf16.msra.mxu0 0
        %8123 = vmatprep.subr.bf16.mxu0 0
        %8124 = vmatpush2.bf16.msra.mxu0 0
        %8125 = vmatprep.subr.bf16.mxu0 0
        %8126 = vmatpush2.bf16.msra.mxu0 0
        %8127 = vmatprep.subr.bf16.mxu0 0
        %8128 = vmatpush2.bf16.msra.mxu0 0
        %8129 = vmatprep.subr.bf16.mxu0 0
        %8130 = vmatpush2.bf16.msra.mxu0 0
        %8131 = vmatprep.mubr.bf16.mxu0 0
        %8132 = vmatmul.mubr.bf16.gmra.mxu0 %v8076
        %v8133 = vpop.f32.mrf.mxu0
        %v8134 = vadd.f32 0.0, %v8133
        %v8135 = vpop.f32.mrf.mxu0
        %v8136 = vpop.f32.mrf.mxu0
        %v8137 = vadd.f32 0.0, %v8136
        %v8138 = vpop.f32.mrf.mxu0
        %8139 = vmatprep.mubr.bf16.mxu0 0
        %8140 = vmatmul.mubr.bf16.gmra.mxu0 %v8079
        %v8141 = vpop.f32.mrf.mxu0
        %v8142 = vadd.f32 0.0, %v8141
        %v8143 = vpop.f32.mrf.mxu0
        %v8144 = vpop.f32.mrf.mxu0
        %v8145 = vadd.f32 0.0, %v8144
        %v8146 = vpop.f32.mrf.mxu0
        %8147 = vmatprep.mubr.bf16.mxu0 0
        %8148 = vmatmul.mubr.bf16.gmra.mxu0 %v8082
        %v8149 = vpop.f32.mrf.mxu0
        %v8150 = vadd.f32 0.0, %v8149
        %v8151 = vpop.f32.mrf.mxu0
        %v8152 = vpop.f32.mrf.mxu0
        %v8153 = vadd.f32 0.0, %v8152
        %v8154 = vpop.f32.mrf.mxu0
        %8155 = vmatprep.mubr.bf16.mxu0 0
        %8156 = vmatmul.mubr.bf16.gmra.mxu0 %v8085
        %v8157 = vpop.f32.mrf.mxu0
        %v8158 = vadd.f32 0.0, %v8157
        %v8159 = vpop.f32.mrf.mxu0
        %v8160 = vpop.f32.mrf.mxu0
        %v8161 = vadd.f32 0.0, %v8160
        %v8162 = vpop.f32.mrf.mxu0
        %8163 = vmatprep.mubr.bf16.mxu0 0
        %8164 = vmatmul.mubr.bf16.gmra.mxu0 %v8088
        %v8165 = vpop.f32.mrf.mxu0
        %v8166 = vadd.f32 0.0, %v8165
        %v8167 = vpop.f32.mrf.mxu0
        %v8168 = vpop.f32.mrf.mxu0
        %v8169 = vadd.f32 0.0, %v8168
        %v8170 = vpop.f32.mrf.mxu0
        %8171 = vmatprep.mubr.bf16.mxu0 0
        %8172 = vmatmul.mubr.bf16.gmra.mxu0 %v8091
        %v8173 = vpop.f32.mrf.mxu0
        %v8174 = vadd.f32 0.0, %v8173
        %v8175 = vpop.f32.mrf.mxu0
        %v8176 = vpop.f32.mrf.mxu0
        %v8177 = vadd.f32 0.0, %v8176
        %v8178 = vpop.f32.mrf.mxu0
        %8179 = vmatprep.mubr.bf16.mxu0 0
        %8180 = vmatmul.mubr.bf16.gmra.mxu0 %v8094
        %v8181 = vpop.f32.mrf.mxu0
        %v8182 = vadd.f32 0.0, %v8181
        %v8183 = vpop.f32.mrf.mxu0
        %v8184 = vpop.f32.mrf.mxu0
        %v8185 = vadd.f32 0.0, %v8184
        %v8186 = vpop.f32.mrf.mxu0
        %8187 = vmatprep.mubr.bf16.mxu0 0
        %8188 = vmatmul.mubr.bf16.gmra.mxu0 %v8097
        %v8189 = vpop.f32.mrf.mxu0
        %v8190 = vadd.f32 0.0, %v8189
        %v8191 = vpop.f32.mrf.mxu0
        %v8192 = vpop.f32.mrf.mxu0
        %v8193 = vadd.f32 0.0, %v8192
        %v8194 = vpop.f32.mrf.mxu0
        %8195 = vdwg.mxu0
        %v8200 = vunpack.c.l.b16 %v8046
        %v8201 = vunpack.c.l.b16 %v8047
        %v8202 = vunpack.c.l.b16 %v8048
        %v8203 = vunpack.c.l.b16 %v8049
        %v8204 = vpack.c.b16 %v8201, %v8200
        %v8205 = vpack.c.b16 %v8203, %v8202
        %v8209 = vsel %vm3475, %v8038, 0
        %v8212 = vsel %vm3475, %v8039, 0
        %v8215 = vsel %vm3475, %v8040, 0
        %v8218 = vsel %vm3475, %v8041, 0
        %v8221 = vsel %vm3475, %v8042, 0
        %v8224 = vsel %vm3475, %v8043, 0
        %v8227 = vsel %vm3475, %v8044, 0
        %v8230 = vsel %vm3475, %v8045, 0
        %8232 = vmatprep.subr.bf16.mxu0 0
        %8233 = vmatpush1.bf16.msra.mxu0 0
        %8234 = vmatprep.subr.bf16.mxu0 0
        %8235 = vmatpush1.bf16.msra.mxu0 0
        %8236 = vmatprep.subr.bf16.mxu0 0
        %8237 = vmatpush1.bf16.msra.mxu0 0
        %8238 = vmatprep.subr.bf16.mxu0 0
        %8239 = vmatpush1.bf16.msra.mxu0 0
        %8240 = vmatprep.subr.bf16.mxu0 0
        %8241 = vmatpush1.bf16.msra.mxu0 0
        %8242 = vmatprep.subr.bf16.mxu0 0
        %8243 = vmatpush1.bf16.msra.mxu0 0
        %8244 = vmatprep.subr.bf16.mxu0 0
        %8245 = vmatpush1.bf16.msra.mxu0 %v8205
        %8246 = vmatprep.subr.bf16.mxu0 0
        %8247 = vmatpush1.bf16.msra.mxu0 %v8204
        %8248 = vmatprep.subr.bf16.mxu0 0
        %8249 = vmatpush2.bf16.msra.mxu0 0
        %8250 = vmatprep.subr.bf16.mxu0 0
        %8251 = vmatpush2.bf16.msra.mxu0 0
        %8252 = vmatprep.subr.bf16.mxu0 0
        %8253 = vmatpush2.bf16.msra.mxu0 0
        %8254 = vmatprep.subr.bf16.mxu0 0
        %8255 = vmatpush2.bf16.msra.mxu0 0
        %8256 = vmatprep.subr.bf16.mxu0 0
        %8257 = vmatpush2.bf16.msra.mxu0 0
        %8258 = vmatprep.subr.bf16.mxu0 0
        %8259 = vmatpush2.bf16.msra.mxu0 0
        %8260 = vmatprep.subr.bf16.mxu0 0
        %8261 = vmatpush2.bf16.msra.mxu0 0
        %8262 = vmatprep.subr.bf16.mxu0 0
        %8263 = vmatpush2.bf16.msra.mxu0 0
        %8264 = vmatprep.mubr.bf16.mxu0 0
        %8265 = vmatmul.mubr.bf16.gmra.mxu0 %v8209
        %v8266 = vpop.f32.mrf.mxu0
        %v8267 = vadd.f32 %v8134, %v8266
        %v8268 = vpop.f32.mrf.mxu0
        %v8269 = vpop.f32.mrf.mxu0
        %v8270 = vadd.f32 %v8137, %v8269
        %v8271 = vpop.f32.mrf.mxu0
        %8272 = vmatprep.mubr.bf16.mxu0 0
        %8273 = vmatmul.mubr.bf16.gmra.mxu0 %v8212
        %v8274 = vpop.f32.mrf.mxu0
        %v8275 = vadd.f32 %v8142, %v8274
        %v8276 = vpop.f32.mrf.mxu0
        %v8277 = vpop.f32.mrf.mxu0
        %v8278 = vadd.f32 %v8145, %v8277
        %v8279 = vpop.f32.mrf.mxu0
        %8280 = vmatprep.mubr.bf16.mxu0 0
        %8281 = vmatmul.mubr.bf16.gmra.mxu0 %v8215
        %v8282 = vpop.f32.mrf.mxu0
        %v8283 = vadd.f32 %v8150, %v8282
        %v8284 = vpop.f32.mrf.mxu0
        %v8285 = vpop.f32.mrf.mxu0
        %v8286 = vadd.f32 %v8153, %v8285
        %v8287 = vpop.f32.mrf.mxu0
        %8288 = vmatprep.mubr.bf16.mxu0 0
        %8289 = vmatmul.mubr.bf16.gmra.mxu0 %v8218
        %v8290 = vpop.f32.mrf.mxu0
        %v8291 = vadd.f32 %v8158, %v8290
        %v8292 = vpop.f32.mrf.mxu0
        %v8293 = vpop.f32.mrf.mxu0
        %v8294 = vadd.f32 %v8161, %v8293
        %v8295 = vpop.f32.mrf.mxu0
        %8296 = vmatprep.mubr.bf16.mxu0 0
        %8297 = vmatmul.mubr.bf16.gmra.mxu0 %v8221
        %v8298 = vpop.f32.mrf.mxu0
        %v8299 = vadd.f32 %v8166, %v8298
        %v8300 = vpop.f32.mrf.mxu0
        %v8301 = vpop.f32.mrf.mxu0
        %v8302 = vadd.f32 %v8169, %v8301
        %v8303 = vpop.f32.mrf.mxu0
        %8304 = vmatprep.mubr.bf16.mxu0 0
        %8305 = vmatmul.mubr.bf16.gmra.mxu0 %v8224
        %v8306 = vpop.f32.mrf.mxu0
        %v8307 = vadd.f32 %v8174, %v8306
        %v8308 = vpop.f32.mrf.mxu0
        %v8309 = vpop.f32.mrf.mxu0
        %v8310 = vadd.f32 %v8177, %v8309
        %v8311 = vpop.f32.mrf.mxu0
        %8312 = vmatprep.mubr.bf16.mxu0 0
        %8313 = vmatmul.mubr.bf16.gmra.mxu0 %v8227
        %v8314 = vpop.f32.mrf.mxu0
        %v8315 = vadd.f32 %v8182, %v8314
        %v8316 = vpop.f32.mrf.mxu0
        %v8317 = vpop.f32.mrf.mxu0
        %v8318 = vadd.f32 %v8185, %v8317
        %v8319 = vpop.f32.mrf.mxu0
        %8320 = vmatprep.mubr.bf16.mxu0 0
        %8321 = vmatmul.mubr.bf16.gmra.mxu0 %v8230
        %v8322 = vpop.f32.mrf.mxu0
        %v8323 = vadd.f32 %v8190, %v8322
        %v8324 = vpop.f32.mrf.mxu0
        %v8325 = vpop.f32.mrf.mxu0
        %v8326 = vadd.f32 %v8193, %v8325
        %v8327 = vpop.f32.mrf.mxu0
        %8328 = vdwg.mxu0
        %v8329 = vpack.c.bf16 %v8023, %v8022
        %v8330 = vpack.c.bf16 %v8025, %v8024
        %v8331 = vpack.c.bf16 %v8027, %v8026
        %v8332 = vpack.c.bf16 %v8029, %v8028
        %v8333 = vpack.c.bf16 %v8031, %v8030
        %v8334 = vpack.c.bf16 %v8033, %v8032
        %v8335 = vpack.c.bf16 %v8035, %v8034
        %v8336 = vpack.c.bf16 %v8037, %v8036
        %s8337 = scalar_lea.vmem %s6, 32
        %v8338 = vld [vmem:[%s8337] sm:$0xf]
        %v8339 = vld [vmem:[%s8337 + $0x4] sm:$0xf]
        %v8340 = vld [vmem:[%s8337 + $0x8] sm:$0xf]
        %v8341 = vld [vmem:[%s8337 + $0xc] sm:$0xf]
        %v8346 = vunpack.c.l.b16 %v8338
        %v8347 = vunpack.c.l.b16 %v8339
        %v8348 = vunpack.c.l.b16 %v8340
        %v8349 = vunpack.c.l.b16 %v8341
        %v8350 = vpack.c.b16 %v8347, %v8346
        %v8351 = vpack.c.b16 %v8349, %v8348
        %v8355 = vsel %vm3475, %v8329, 0
        %v8358 = vsel %vm3475, %v8330, 0
        %v8361 = vsel %vm3475, %v8331, 0
        %v8364 = vsel %vm3475, %v8332, 0
        %v8367 = vsel %vm3475, %v8333, 0
        %v8370 = vsel %vm3475, %v8334, 0
        %v8373 = vsel %vm3475, %v8335, 0
        %v8376 = vsel %vm3475, %v8336, 0
        %8378 = vmatprep.subr.bf16.mxu0 0
        %8379 = vmatpush1.bf16.msra.mxu0 0
        %8380 = vmatprep.subr.bf16.mxu0 0
        %8381 = vmatpush1.bf16.msra.mxu0 0
        %8382 = vmatprep.subr.bf16.mxu0 0
        %8383 = vmatpush1.bf16.msra.mxu0 0
        %8384 = vmatprep.subr.bf16.mxu0 0
        %8385 = vmatpush1.bf16.msra.mxu0 0
        %8386 = vmatprep.subr.bf16.mxu0 0
        %8387 = vmatpush1.bf16.msra.mxu0 0
        %8388 = vmatprep.subr.bf16.mxu0 0
        %8389 = vmatpush1.bf16.msra.mxu0 0
        %8390 = vmatprep.subr.bf16.mxu0 0
        %8391 = vmatpush1.bf16.msra.mxu0 %v8351
        %8392 = vmatprep.subr.bf16.mxu0 0
        %8393 = vmatpush1.bf16.msra.mxu0 %v8350
        %8394 = vmatprep.subr.bf16.mxu0 0
        %8395 = vmatpush2.bf16.msra.mxu0 0
        %8396 = vmatprep.subr.bf16.mxu0 0
        %8397 = vmatpush2.bf16.msra.mxu0 0
        %8398 = vmatprep.subr.bf16.mxu0 0
        %8399 = vmatpush2.bf16.msra.mxu0 0
        %8400 = vmatprep.subr.bf16.mxu0 0
        %8401 = vmatpush2.bf16.msra.mxu0 0
        %8402 = vmatprep.subr.bf16.mxu0 0
        %8403 = vmatpush2.bf16.msra.mxu0 0
        %8404 = vmatprep.subr.bf16.mxu0 0
        %8405 = vmatpush2.bf16.msra.mxu0 0
        %8406 = vmatprep.subr.bf16.mxu0 0
        %8407 = vmatpush2.bf16.msra.mxu0 0
        %8408 = vmatprep.subr.bf16.mxu0 0
        %8409 = vmatpush2.bf16.msra.mxu0 0
        %8410 = vmatprep.mubr.bf16.mxu0 0
        %8411 = vmatmul.mubr.bf16.gmra.mxu0 %v8355
        %v8412 = vpop.f32.mrf.mxu0
        %v8413 = vadd.f32 0.0, %v8412
        %v8414 = vpop.f32.mrf.mxu0
        %v8415 = vpop.f32.mrf.mxu0
        %v8416 = vadd.f32 0.0, %v8415
        %v8417 = vpop.f32.mrf.mxu0
        %8418 = vmatprep.mubr.bf16.mxu0 0
        %8419 = vmatmul.mubr.bf16.gmra.mxu0 %v8358
        %v8420 = vpop.f32.mrf.mxu0
        %v8421 = vadd.f32 0.0, %v8420
        %v8422 = vpop.f32.mrf.mxu0
        %v8423 = vpop.f32.mrf.mxu0
        %v8424 = vadd.f32 0.0, %v8423
        %v8425 = vpop.f32.mrf.mxu0
        %8426 = vmatprep.mubr.bf16.mxu0 0
        %8427 = vmatmul.mubr.bf16.gmra.mxu0 %v8361
        %v8428 = vpop.f32.mrf.mxu0
        %v8429 = vadd.f32 0.0, %v8428
        %v8430 = vpop.f32.mrf.mxu0
        %v8431 = vpop.f32.mrf.mxu0
        %v8432 = vadd.f32 0.0, %v8431
        %v8433 = vpop.f32.mrf.mxu0
        %8434 = vmatprep.mubr.bf16.mxu0 0
        %8435 = vmatmul.mubr.bf16.gmra.mxu0 %v8364
        %v8436 = vpop.f32.mrf.mxu0
        %v8437 = vadd.f32 0.0, %v8436
        %v8438 = vpop.f32.mrf.mxu0
        %v8439 = vpop.f32.mrf.mxu0
        %v8440 = vadd.f32 0.0, %v8439
        %v8441 = vpop.f32.mrf.mxu0
        %8442 = vmatprep.mubr.bf16.mxu0 0
        %8443 = vmatmul.mubr.bf16.gmra.mxu0 %v8367
        %v8444 = vpop.f32.mrf.mxu0
        %v8445 = vadd.f32 0.0, %v8444
        %v8446 = vpop.f32.mrf.mxu0
        %v8447 = vpop.f32.mrf.mxu0
        %v8448 = vadd.f32 0.0, %v8447
        %v8449 = vpop.f32.mrf.mxu0
        %8450 = vmatprep.mubr.bf16.mxu0 0
        %8451 = vmatmul.mubr.bf16.gmra.mxu0 %v8370
        %v8452 = vpop.f32.mrf.mxu0
        %v8453 = vadd.f32 0.0, %v8452
        %v8454 = vpop.f32.mrf.mxu0
        %v8455 = vpop.f32.mrf.mxu0
        %v8456 = vadd.f32 0.0, %v8455
        %v8457 = vpop.f32.mrf.mxu0
        %8458 = vmatprep.mubr.bf16.mxu0 0
        %8459 = vmatmul.mubr.bf16.gmra.mxu0 %v8373
        %v8460 = vpop.f32.mrf.mxu0
        %v8461 = vadd.f32 0.0, %v8460
        %v8462 = vpop.f32.mrf.mxu0
        %v8463 = vpop.f32.mrf.mxu0
        %v8464 = vadd.f32 0.0, %v8463
        %v8465 = vpop.f32.mrf.mxu0
        %8466 = vmatprep.mubr.bf16.mxu0 0
        %8467 = vmatmul.mubr.bf16.gmra.mxu0 %v8376
        %v8468 = vpop.f32.mrf.mxu0
        %v8469 = vadd.f32 0.0, %v8468
        %v8470 = vpop.f32.mrf.mxu0
        %v8471 = vpop.f32.mrf.mxu0
        %v8472 = vadd.f32 0.0, %v8471
        %v8473 = vpop.f32.mrf.mxu0
        %8474 = vdwg.mxu0
        %v8475 = vadd.f32 %v8267, %v8413
        %v8476 = vadd.f32 %v8270, %v8416
        %v8477 = vadd.f32 %v8275, %v8421
        %v8478 = vadd.f32 %v8278, %v8424
        %v8479 = vadd.f32 %v8283, %v8429
        %v8480 = vadd.f32 %v8286, %v8432
        %v8481 = vadd.f32 %v8291, %v8437
        %v8482 = vadd.f32 %v8294, %v8440
        %v8483 = vadd.f32 %v8299, %v8445
        %v8484 = vadd.f32 %v8302, %v8448
        %v8485 = vadd.f32 %v8307, %v8453
        %v8486 = vadd.f32 %v8310, %v8456
        %v8487 = vadd.f32 %v8315, %v8461
        %v8488 = vadd.f32 %v8318, %v8464
        %v8489 = vadd.f32 %v8323, %v8469
        %v8490 = vadd.f32 %v8326, %v8472
        %v8491 = vld [vmem:[%s7] sm:$0x1]
        %v8493 = vlaneseq
        %v8494 = vshrl.u32 %v8493, 7
        %v8495 = vsub.s32 0, %v8494
        %v8496 = vrot.slane %v8491, %v8495
        %v8498 = vadd.f32 %v8475, %v8496
        %v8499 = vadd.f32 %v8476, %v8496
        %v8500 = vadd.f32 %v8477, %v8496
        %v8501 = vadd.f32 %v8478, %v8496
        %v8502 = vadd.f32 %v8479, %v8496
        %v8503 = vadd.f32 %v8480, %v8496
        %v8504 = vadd.f32 %v8481, %v8496
        %v8505 = vadd.f32 %v8482, %v8496
        %v8506 = vadd.f32 %v8483, %v8496
        %v8507 = vadd.f32 %v8484, %v8496
        %v8508 = vadd.f32 %v8485, %v8496
        %v8509 = vadd.f32 %v8486, %v8496
        %v8510 = vadd.f32 %v8487, %v8496
        %v8511 = vadd.f32 %v8488, %v8496
        %v8512 = vadd.f32 %v8489, %v8496
        %v8513 = vadd.f32 %v8490, %v8496
        %v8514 = vmax.f32 %v8498, 0.0
        %v8515 = vmax.f32 %v8499, 0.0
        %v8516 = vmax.f32 %v8500, 0.0
        %v8517 = vmax.f32 %v8501, 0.0
        %v8518 = vmax.f32 %v8502, 0.0
        %v8519 = vmax.f32 %v8503, 0.0
        %v8520 = vmax.f32 %v8504, 0.0
        %v8521 = vmax.f32 %v8505, 0.0
        %v8522 = vmax.f32 %v8506, 0.0
        %v8523 = vmax.f32 %v8507, 0.0
        %v8524 = vmax.f32 %v8508, 0.0
        %v8525 = vmax.f32 %v8509, 0.0
        %v8526 = vmax.f32 %v8510, 0.0
        %v8527 = vmax.f32 %v8511, 0.0
        %v8528 = vmax.f32 %v8512, 0.0
        %v8529 = vmax.f32 %v8513, 0.0
        %v8546 = vcombine.high %v8514, %v8514
        %v8547 = vcombine.high %v8515, %v8515
        %v8548 = vcombine.high %v8516, %v8516
        %v8549 = vcombine.high %v8517, %v8517
        %v8550 = vcombine.high %v8518, %v8518
        %v8551 = vcombine.high %v8519, %v8519
        %v8552 = vcombine.high %v8520, %v8520
        %v8553 = vcombine.high %v8521, %v8521
        %v8554 = vcombine.high %v8522, %v8522
        %v8555 = vcombine.high %v8523, %v8523
        %v8556 = vcombine.high %v8524, %v8524
        %v8557 = vcombine.high %v8525, %v8525
        %v8558 = vcombine.high %v8526, %v8526
        %v8559 = vcombine.high %v8527, %v8527
        %v8560 = vcombine.high %v8528, %v8528
        %v8561 = vcombine.high %v8529, %v8529
        %v8562 = vlaneseq
        %v8563 = vshrl.u32 %v8562, 7
        %v8564 = vsub.s32 0, %v8563
        %v8565 = vrot.slane %v8514, %v8564
        %v8566 = vlaneseq
        %v8567 = vshrl.u32 %v8566, 7
        %v8568 = vsub.s32 0, %v8567
        %v8569 = vrot.slane %v8546, %v8568
        %v8570 = vlaneseq
        %v8571 = vshrl.u32 %v8570, 7
        %v8572 = vsub.s32 0, %v8571
        %v8573 = vrot.slane %v8515, %v8572
        %v8574 = vlaneseq
        %v8575 = vshrl.u32 %v8574, 7
        %v8576 = vsub.s32 0, %v8575
        %v8577 = vrot.slane %v8547, %v8576
        %v8578 = vlaneseq
        %v8579 = vshrl.u32 %v8578, 7
        %v8580 = vsub.s32 0, %v8579
        %v8581 = vrot.slane %v8516, %v8580
        %v8582 = vlaneseq
        %v8583 = vshrl.u32 %v8582, 7
        %v8584 = vsub.s32 0, %v8583
        %v8585 = vrot.slane %v8548, %v8584
        %v8586 = vlaneseq
        %v8587 = vshrl.u32 %v8586, 7
        %v8588 = vsub.s32 0, %v8587
        %v8589 = vrot.slane %v8517, %v8588
        %v8590 = vlaneseq
        %v8591 = vshrl.u32 %v8590, 7
        %v8592 = vsub.s32 0, %v8591
        %v8593 = vrot.slane %v8549, %v8592
        %v8594 = vlaneseq
        %v8595 = vshrl.u32 %v8594, 7
        %v8596 = vsub.s32 0, %v8595
        %v8597 = vrot.slane %v8518, %v8596
        %v8598 = vlaneseq
        %v8599 = vshrl.u32 %v8598, 7
        %v8600 = vsub.s32 0, %v8599
        %v8601 = vrot.slane %v8550, %v8600
        %v8602 = vlaneseq
        %v8603 = vshrl.u32 %v8602, 7
        %v8604 = vsub.s32 0, %v8603
        %v8605 = vrot.slane %v8519, %v8604
        %v8606 = vlaneseq
        %v8607 = vshrl.u32 %v8606, 7
        %v8608 = vsub.s32 0, %v8607
        %v8609 = vrot.slane %v8551, %v8608
        %v8610 = vlaneseq
        %v8611 = vshrl.u32 %v8610, 7
        %v8612 = vsub.s32 0, %v8611
        %v8613 = vrot.slane %v8520, %v8612
        %v8614 = vlaneseq
        %v8615 = vshrl.u32 %v8614, 7
        %v8616 = vsub.s32 0, %v8615
        %v8617 = vrot.slane %v8552, %v8616
        %v8618 = vlaneseq
        %v8619 = vshrl.u32 %v8618, 7
        %v8620 = vsub.s32 0, %v8619
        %v8621 = vrot.slane %v8521, %v8620
        %v8622 = vlaneseq
        %v8623 = vshrl.u32 %v8622, 7
        %v8624 = vsub.s32 0, %v8623
        %v8625 = vrot.slane %v8553, %v8624
        %v8626 = vlaneseq
        %v8627 = vshrl.u32 %v8626, 7
        %v8628 = vsub.s32 0, %v8627
        %v8629 = vrot.slane %v8522, %v8628
        %v8630 = vlaneseq
        %v8631 = vshrl.u32 %v8630, 7
        %v8632 = vsub.s32 0, %v8631
        %v8633 = vrot.slane %v8554, %v8632
        %v8634 = vlaneseq
        %v8635 = vshrl.u32 %v8634, 7
        %v8636 = vsub.s32 0, %v8635
        %v8637 = vrot.slane %v8523, %v8636
        %v8638 = vlaneseq
        %v8639 = vshrl.u32 %v8638, 7
        %v8640 = vsub.s32 0, %v8639
        %v8641 = vrot.slane %v8555, %v8640
        %v8642 = vlaneseq
        %v8643 = vshrl.u32 %v8642, 7
        %v8644 = vsub.s32 0, %v8643
        %v8645 = vrot.slane %v8524, %v8644
        %v8646 = vlaneseq
        %v8647 = vshrl.u32 %v8646, 7
        %v8648 = vsub.s32 0, %v8647
        %v8649 = vrot.slane %v8556, %v8648
        %v8650 = vlaneseq
        %v8651 = vshrl.u32 %v8650, 7
        %v8652 = vsub.s32 0, %v8651
        %v8653 = vrot.slane %v8525, %v8652
        %v8654 = vlaneseq
        %v8655 = vshrl.u32 %v8654, 7
        %v8656 = vsub.s32 0, %v8655
        %v8657 = vrot.slane %v8557, %v8656
        %v8658 = vlaneseq
        %v8659 = vshrl.u32 %v8658, 7
        %v8660 = vsub.s32 0, %v8659
        %v8661 = vrot.slane %v8526, %v8660
        %v8662 = vlaneseq
        %v8663 = vshrl.u32 %v8662, 7
        %v8664 = vsub.s32 0, %v8663
        %v8665 = vrot.slane %v8558, %v8664
        %v8666 = vlaneseq
        %v8667 = vshrl.u32 %v8666, 7
        %v8668 = vsub.s32 0, %v8667
        %v8669 = vrot.slane %v8527, %v8668
        %v8670 = vlaneseq
        %v8671 = vshrl.u32 %v8670, 7
        %v8672 = vsub.s32 0, %v8671
        %v8673 = vrot.slane %v8559, %v8672
        %v8674 = vlaneseq
        %v8675 = vshrl.u32 %v8674, 7
        %v8676 = vsub.s32 0, %v8675
        %v8677 = vrot.slane %v8528, %v8676
        %v8678 = vlaneseq
        %v8679 = vshrl.u32 %v8678, 7
        %v8680 = vsub.s32 0, %v8679
        %v8681 = vrot.slane %v8560, %v8680
        %v8682 = vlaneseq
        %v8683 = vshrl.u32 %v8682, 7
        %v8684 = vsub.s32 0, %v8683
        %v8685 = vrot.slane %v8529, %v8684
        %v8686 = vlaneseq
        %v8687 = vshrl.u32 %v8686, 7
        %v8688 = vsub.s32 0, %v8687
        %v8689 = vrot.slane %v8561, %v8688
        %vm8690 = vcmask 1041409
        %v8691 = vsel %vm8690, %v8569, %v8565
        %vm8692 = vcmask 1042434
        %v8693 = vsel %vm8692, %v8573, %v8691
        %vm8694 = vcmask 1043459
        %v8695 = vsel %vm8694, %v8577, %v8693
        %v8696 = vsel %vm8690, %v8585, %v8581
        %v8697 = vsel %vm8692, %v8589, %v8696
        %v8698 = vsel %vm8694, %v8593, %v8697
        %v8699 = vsel %vm8690, %v8601, %v8597
        %v8700 = vsel %vm8692, %v8605, %v8699
        %v8701 = vsel %vm8694, %v8609, %v8700
        %v8702 = vsel %vm8690, %v8617, %v8613
        %v8703 = vsel %vm8692, %v8621, %v8702
        %v8704 = vsel %vm8694, %v8625, %v8703
        %v8705 = vsel %vm8690, %v8633, %v8629
        %v8706 = vsel %vm8692, %v8637, %v8705
        %v8707 = vsel %vm8694, %v8641, %v8706
        %v8708 = vsel %vm8690, %v8649, %v8645
        %v8709 = vsel %vm8692, %v8653, %v8708
        %v8710 = vsel %vm8694, %v8657, %v8709
        %v8711 = vsel %vm8690, %v8665, %v8661
        %v8712 = vsel %vm8692, %v8669, %v8711
        %v8713 = vsel %vm8694, %v8673, %v8712
        %v8714 = vsel %vm8690, %v8681, %v8677
        %v8715 = vsel %vm8692, %v8685, %v8714
        %v8716 = vsel %vm8694, %v8689, %v8715
        %v8725 = vlaneseq
        %v8726 = vshrl.u32 %v8725, 7
        %v8727 = vsub.s32 1, %v8726
        %v8728 = vrot.slane %v8514, %v8727
        %v8729 = vlaneseq
        %v8730 = vshrl.u32 %v8729, 7
        %v8731 = vsub.s32 1, %v8730
        %v8732 = vrot.slane %v8546, %v8731
        %v8733 = vlaneseq
        %v8734 = vshrl.u32 %v8733, 7
        %v8735 = vsub.s32 1, %v8734
        %v8736 = vrot.slane %v8515, %v8735
        %v8737 = vlaneseq
        %v8738 = vshrl.u32 %v8737, 7
        %v8739 = vsub.s32 1, %v8738
        %v8740 = vrot.slane %v8547, %v8739
        %v8741 = vlaneseq
        %v8742 = vshrl.u32 %v8741, 7
        %v8743 = vsub.s32 1, %v8742
        %v8744 = vrot.slane %v8516, %v8743
        %v8745 = vlaneseq
        %v8746 = vshrl.u32 %v8745, 7
        %v8747 = vsub.s32 1, %v8746
        %v8748 = vrot.slane %v8548, %v8747
        %v8749 = vlaneseq
        %v8750 = vshrl.u32 %v8749, 7
        %v8751 = vsub.s32 1, %v8750
        %v8752 = vrot.slane %v8517, %v8751
        %v8753 = vlaneseq
        %v8754 = vshrl.u32 %v8753, 7
        %v8755 = vsub.s32 1, %v8754
        %v8756 = vrot.slane %v8549, %v8755
        %v8757 = vlaneseq
        %v8758 = vshrl.u32 %v8757, 7
        %v8759 = vsub.s32 1, %v8758
        %v8760 = vrot.slane %v8518, %v8759
        %v8761 = vlaneseq
        %v8762 = vshrl.u32 %v8761, 7
        %v8763 = vsub.s32 1, %v8762
        %v8764 = vrot.slane %v8550, %v8763
        %v8765 = vlaneseq
        %v8766 = vshrl.u32 %v8765, 7
        %v8767 = vsub.s32 1, %v8766
        %v8768 = vrot.slane %v8519, %v8767
        %v8769 = vlaneseq
        %v8770 = vshrl.u32 %v8769, 7
        %v8771 = vsub.s32 1, %v8770
        %v8772 = vrot.slane %v8551, %v8771
        %v8773 = vlaneseq
        %v8774 = vshrl.u32 %v8773, 7
        %v8775 = vsub.s32 1, %v8774
        %v8776 = vrot.slane %v8520, %v8775
        %v8777 = vlaneseq
        %v8778 = vshrl.u32 %v8777, 7
        %v8779 = vsub.s32 1, %v8778
        %v8780 = vrot.slane %v8552, %v8779
        %v8781 = vlaneseq
        %v8782 = vshrl.u32 %v8781, 7
        %v8783 = vsub.s32 1, %v8782
        %v8784 = vrot.slane %v8521, %v8783
        %v8785 = vlaneseq
        %v8786 = vshrl.u32 %v8785, 7
        %v8787 = vsub.s32 1, %v8786
        %v8788 = vrot.slane %v8553, %v8787
        %v8789 = vlaneseq
        %v8790 = vshrl.u32 %v8789, 7
        %v8791 = vsub.s32 1, %v8790
        %v8792 = vrot.slane %v8522, %v8791
        %v8793 = vlaneseq
        %v8794 = vshrl.u32 %v8793, 7
        %v8795 = vsub.s32 1, %v8794
        %v8796 = vrot.slane %v8554, %v8795
        %v8797 = vlaneseq
        %v8798 = vshrl.u32 %v8797, 7
        %v8799 = vsub.s32 1, %v8798
        %v8800 = vrot.slane %v8523, %v8799
        %v8801 = vlaneseq
        %v8802 = vshrl.u32 %v8801, 7
        %v8803 = vsub.s32 1, %v8802
        %v8804 = vrot.slane %v8555, %v8803
        %v8805 = vlaneseq
        %v8806 = vshrl.u32 %v8805, 7
        %v8807 = vsub.s32 1, %v8806
        %v8808 = vrot.slane %v8524, %v8807
        %v8809 = vlaneseq
        %v8810 = vshrl.u32 %v8809, 7
        %v8811 = vsub.s32 1, %v8810
        %v8812 = vrot.slane %v8556, %v8811
        %v8813 = vlaneseq
        %v8814 = vshrl.u32 %v8813, 7
        %v8815 = vsub.s32 1, %v8814
        %v8816 = vrot.slane %v8525, %v8815
        %v8817 = vlaneseq
        %v8818 = vshrl.u32 %v8817, 7
        %v8819 = vsub.s32 1, %v8818
        %v8820 = vrot.slane %v8557, %v8819
        %v8821 = vlaneseq
        %v8822 = vshrl.u32 %v8821, 7
        %v8823 = vsub.s32 1, %v8822
        %v8824 = vrot.slane %v8526, %v8823
        %v8825 = vlaneseq
        %v8826 = vshrl.u32 %v8825, 7
        %v8827 = vsub.s32 1, %v8826
        %v8828 = vrot.slane %v8558, %v8827
        %v8829 = vlaneseq
        %v8830 = vshrl.u32 %v8829, 7
        %v8831 = vsub.s32 1, %v8830
        %v8832 = vrot.slane %v8527, %v8831
        %v8833 = vlaneseq
        %v8834 = vshrl.u32 %v8833, 7
        %v8835 = vsub.s32 1, %v8834
        %v8836 = vrot.slane %v8559, %v8835
        %v8837 = vlaneseq
        %v8838 = vshrl.u32 %v8837, 7
        %v8839 = vsub.s32 1, %v8838
        %v8840 = vrot.slane %v8528, %v8839
        %v8841 = vlaneseq
        %v8842 = vshrl.u32 %v8841, 7
        %v8843 = vsub.s32 1, %v8842
        %v8844 = vrot.slane %v8560, %v8843
        %v8845 = vlaneseq
        %v8846 = vshrl.u32 %v8845, 7
        %v8847 = vsub.s32 1, %v8846
        %v8848 = vrot.slane %v8529, %v8847
        %v8849 = vlaneseq
        %v8850 = vshrl.u32 %v8849, 7
        %v8851 = vsub.s32 1, %v8850
        %v8852 = vrot.slane %v8561, %v8851
        %v8853 = vsel %vm8690, %v8732, %v8728
        %v8854 = vsel %vm8692, %v8736, %v8853
        %v8855 = vsel %vm8694, %v8740, %v8854
        %v8856 = vsel %vm8690, %v8748, %v8744
        %v8857 = vsel %vm8692, %v8752, %v8856
        %v8858 = vsel %vm8694, %v8756, %v8857
        %v8859 = vsel %vm8690, %v8764, %v8760
        %v8860 = vsel %vm8692, %v8768, %v8859
        %v8861 = vsel %vm8694, %v8772, %v8860
        %v8862 = vsel %vm8690, %v8780, %v8776
        %v8863 = vsel %vm8692, %v8784, %v8862
        %v8864 = vsel %vm8694, %v8788, %v8863
        %v8865 = vsel %vm8690, %v8796, %v8792
        %v8866 = vsel %vm8692, %v8800, %v8865
        %v8867 = vsel %vm8694, %v8804, %v8866
        %v8868 = vsel %vm8690, %v8812, %v8808
        %v8869 = vsel %vm8692, %v8816, %v8868
        %v8870 = vsel %vm8694, %v8820, %v8869
        %v8871 = vsel %vm8690, %v8828, %v8824
        %v8872 = vsel %vm8692, %v8832, %v8871
        %v8873 = vsel %vm8694, %v8836, %v8872
        %v8874 = vsel %vm8690, %v8844, %v8840
        %v8875 = vsel %vm8692, %v8848, %v8874
        %v8876 = vsel %vm8694, %v8852, %v8875
        %8877 = vrot.lane.b32.xlu0 %v8855, 32
        %v8878 = vpop.permute.xlu0 %8877
        %8879 = vrot.lane.b32.xlu0 %v8858, 32
        %v8880 = vpop.permute.xlu0 %8879
        %8881 = vrot.lane.b32.xlu0 %v8861, 32
        %v8882 = vpop.permute.xlu0 %8881
        %8883 = vrot.lane.b32.xlu0 %v8864, 32
        %v8884 = vpop.permute.xlu0 %8883
        %8885 = vrot.lane.b32.xlu0 %v8867, 32
        %v8886 = vpop.permute.xlu0 %8885
        %8887 = vrot.lane.b32.xlu0 %v8870, 32
        %v8888 = vpop.permute.xlu0 %8887
        %8889 = vrot.lane.b32.xlu0 %v8873, 32
        %v8890 = vpop.permute.xlu0 %8889
        %8891 = vrot.lane.b32.xlu0 %v8876, 32
        %v8892 = vpop.permute.xlu0 %8891
        %v8901 = vlaneseq
        %v8902 = vshrl.u32 %v8901, 7
        %v8903 = vsub.s32 2, %v8902
        %v8904 = vrot.slane %v8514, %v8903
        %v8905 = vlaneseq
        %v8906 = vshrl.u32 %v8905, 7
        %v8907 = vsub.s32 2, %v8906
        %v8908 = vrot.slane %v8546, %v8907
        %v8909 = vlaneseq
        %v8910 = vshrl.u32 %v8909, 7
        %v8911 = vsub.s32 2, %v8910
        %v8912 = vrot.slane %v8515, %v8911
        %v8913 = vlaneseq
        %v8914 = vshrl.u32 %v8913, 7
        %v8915 = vsub.s32 2, %v8914
        %v8916 = vrot.slane %v8547, %v8915
        %v8917 = vlaneseq
        %v8918 = vshrl.u32 %v8917, 7
        %v8919 = vsub.s32 2, %v8918
        %v8920 = vrot.slane %v8516, %v8919
        %v8921 = vlaneseq
        %v8922 = vshrl.u32 %v8921, 7
        %v8923 = vsub.s32 2, %v8922
        %v8924 = vrot.slane %v8548, %v8923
        %v8925 = vlaneseq
        %v8926 = vshrl.u32 %v8925, 7
        %v8927 = vsub.s32 2, %v8926
        %v8928 = vrot.slane %v8517, %v8927
        %v8929 = vlaneseq
        %v8930 = vshrl.u32 %v8929, 7
        %v8931 = vsub.s32 2, %v8930
        %v8932 = vrot.slane %v8549, %v8931
        %v8933 = vlaneseq
        %v8934 = vshrl.u32 %v8933, 7
        %v8935 = vsub.s32 2, %v8934
        %v8936 = vrot.slane %v8518, %v8935
        %v8937 = vlaneseq
        %v8938 = vshrl.u32 %v8937, 7
        %v8939 = vsub.s32 2, %v8938
        %v8940 = vrot.slane %v8550, %v8939
        %v8941 = vlaneseq
        %v8942 = vshrl.u32 %v8941, 7
        %v8943 = vsub.s32 2, %v8942
        %v8944 = vrot.slane %v8519, %v8943
        %v8945 = vlaneseq
        %v8946 = vshrl.u32 %v8945, 7
        %v8947 = vsub.s32 2, %v8946
        %v8948 = vrot.slane %v8551, %v8947
        %v8949 = vlaneseq
        %v8950 = vshrl.u32 %v8949, 7
        %v8951 = vsub.s32 2, %v8950
        %v8952 = vrot.slane %v8520, %v8951
        %v8953 = vlaneseq
        %v8954 = vshrl.u32 %v8953, 7
        %v8955 = vsub.s32 2, %v8954
        %v8956 = vrot.slane %v8552, %v8955
        %v8957 = vlaneseq
        %v8958 = vshrl.u32 %v8957, 7
        %v8959 = vsub.s32 2, %v8958
        %v8960 = vrot.slane %v8521, %v8959
        %v8961 = vlaneseq
        %v8962 = vshrl.u32 %v8961, 7
        %v8963 = vsub.s32 2, %v8962
        %v8964 = vrot.slane %v8553, %v8963
        %v8965 = vlaneseq
        %v8966 = vshrl.u32 %v8965, 7
        %v8967 = vsub.s32 2, %v8966
        %v8968 = vrot.slane %v8522, %v8967
        %v8969 = vlaneseq
        %v8970 = vshrl.u32 %v8969, 7
        %v8971 = vsub.s32 2, %v8970
        %v8972 = vrot.slane %v8554, %v8971
        %v8973 = vlaneseq
        %v8974 = vshrl.u32 %v8973, 7
        %v8975 = vsub.s32 2, %v8974
        %v8976 = vrot.slane %v8523, %v8975
        %v8977 = vlaneseq
        %v8978 = vshrl.u32 %v8977, 7
        %v8979 = vsub.s32 2, %v8978
        %v8980 = vrot.slane %v8555, %v8979
        %v8981 = vlaneseq
        %v8982 = vshrl.u32 %v8981, 7
        %v8983 = vsub.s32 2, %v8982
        %v8984 = vrot.slane %v8524, %v8983
        %v8985 = vlaneseq
        %v8986 = vshrl.u32 %v8985, 7
        %v8987 = vsub.s32 2, %v8986
        %v8988 = vrot.slane %v8556, %v8987
        %v8989 = vlaneseq
        %v8990 = vshrl.u32 %v8989, 7
        %v8991 = vsub.s32 2, %v8990
        %v8992 = vrot.slane %v8525, %v8991
        %v8993 = vlaneseq
        %v8994 = vshrl.u32 %v8993, 7
        %v8995 = vsub.s32 2, %v8994
        %v8996 = vrot.slane %v8557, %v8995
        %v8997 = vlaneseq
        %v8998 = vshrl.u32 %v8997, 7
        %v8999 = vsub.s32 2, %v8998
        %v9000 = vrot.slane %v8526, %v8999
        %v9001 = vlaneseq
        %v9002 = vshrl.u32 %v9001, 7
        %v9003 = vsub.s32 2, %v9002
        %v9004 = vrot.slane %v8558, %v9003
        %v9005 = vlaneseq
        %v9006 = vshrl.u32 %v9005, 7
        %v9007 = vsub.s32 2, %v9006
        %v9008 = vrot.slane %v8527, %v9007
        %v9009 = vlaneseq
        %v9010 = vshrl.u32 %v9009, 7
        %v9011 = vsub.s32 2, %v9010
        %v9012 = vrot.slane %v8559, %v9011
        %v9013 = vlaneseq
        %v9014 = vshrl.u32 %v9013, 7
        %v9015 = vsub.s32 2, %v9014
        %v9016 = vrot.slane %v8528, %v9015
        %v9017 = vlaneseq
        %v9018 = vshrl.u32 %v9017, 7
        %v9019 = vsub.s32 2, %v9018
        %v9020 = vrot.slane %v8560, %v9019
        %v9021 = vlaneseq
        %v9022 = vshrl.u32 %v9021, 7
        %v9023 = vsub.s32 2, %v9022
        %v9024 = vrot.slane %v8529, %v9023
        %v9025 = vlaneseq
        %v9026 = vshrl.u32 %v9025, 7
        %v9027 = vsub.s32 2, %v9026
        %v9028 = vrot.slane %v8561, %v9027
        %v9029 = vsel %vm8690, %v8908, %v8904
        %v9030 = vsel %vm8692, %v8912, %v9029
        %v9031 = vsel %vm8694, %v8916, %v9030
        %v9032 = vsel %vm8690, %v8924, %v8920
        %v9033 = vsel %vm8692, %v8928, %v9032
        %v9034 = vsel %vm8694, %v8932, %v9033
        %v9035 = vsel %vm8690, %v8940, %v8936
        %v9036 = vsel %vm8692, %v8944, %v9035
        %v9037 = vsel %vm8694, %v8948, %v9036
        %v9038 = vsel %vm8690, %v8956, %v8952
        %v9039 = vsel %vm8692, %v8960, %v9038
        %v9040 = vsel %vm8694, %v8964, %v9039
        %v9041 = vsel %vm8690, %v8972, %v8968
        %v9042 = vsel %vm8692, %v8976, %v9041
        %v9043 = vsel %vm8694, %v8980, %v9042
        %v9044 = vsel %vm8690, %v8988, %v8984
        %v9045 = vsel %vm8692, %v8992, %v9044
        %v9046 = vsel %vm8694, %v8996, %v9045
        %v9047 = vsel %vm8690, %v9004, %v9000
        %v9048 = vsel %vm8692, %v9008, %v9047
        %v9049 = vsel %vm8694, %v9012, %v9048
        %v9050 = vsel %vm8690, %v9020, %v9016
        %v9051 = vsel %vm8692, %v9024, %v9050
        %v9052 = vsel %vm8694, %v9028, %v9051
        %9053 = vrot.lane.b32.xlu0 %v9031, 64
        %v9054 = vpop.permute.xlu0 %9053
        %9055 = vrot.lane.b32.xlu0 %v9034, 64
        %v9056 = vpop.permute.xlu0 %9055
        %9057 = vrot.lane.b32.xlu0 %v9037, 64
        %v9058 = vpop.permute.xlu0 %9057
        %9059 = vrot.lane.b32.xlu0 %v9040, 64
        %v9060 = vpop.permute.xlu0 %9059
        %9061 = vrot.lane.b32.xlu0 %v9043, 64
        %v9062 = vpop.permute.xlu0 %9061
        %9063 = vrot.lane.b32.xlu0 %v9046, 64
        %v9064 = vpop.permute.xlu0 %9063
        %9065 = vrot.lane.b32.xlu0 %v9049, 64
        %v9066 = vpop.permute.xlu0 %9065
        %9067 = vrot.lane.b32.xlu0 %v9052, 64
        %v9068 = vpop.permute.xlu0 %9067
        %v9077 = vlaneseq
        %v9078 = vshrl.u32 %v9077, 7
        %v9079 = vsub.s32 3, %v9078
        %v9080 = vrot.slane %v8514, %v9079
        %v9081 = vlaneseq
        %v9082 = vshrl.u32 %v9081, 7
        %v9083 = vsub.s32 3, %v9082
        %v9084 = vrot.slane %v8546, %v9083
        %v9085 = vlaneseq
        %v9086 = vshrl.u32 %v9085, 7
        %v9087 = vsub.s32 3, %v9086
        %v9088 = vrot.slane %v8515, %v9087
        %v9089 = vlaneseq
        %v9090 = vshrl.u32 %v9089, 7
        %v9091 = vsub.s32 3, %v9090
        %v9092 = vrot.slane %v8547, %v9091
        %v9093 = vlaneseq
        %v9094 = vshrl.u32 %v9093, 7
        %v9095 = vsub.s32 3, %v9094
        %v9096 = vrot.slane %v8516, %v9095
        %v9097 = vlaneseq
        %v9098 = vshrl.u32 %v9097, 7
        %v9099 = vsub.s32 3, %v9098
        %v9100 = vrot.slane %v8548, %v9099
        %v9101 = vlaneseq
        %v9102 = vshrl.u32 %v9101, 7
        %v9103 = vsub.s32 3, %v9102
        %v9104 = vrot.slane %v8517, %v9103
        %v9105 = vlaneseq
        %v9106 = vshrl.u32 %v9105, 7
        %v9107 = vsub.s32 3, %v9106
        %v9108 = vrot.slane %v8549, %v9107
        %v9109 = vlaneseq
        %v9110 = vshrl.u32 %v9109, 7
        %v9111 = vsub.s32 3, %v9110
        %v9112 = vrot.slane %v8518, %v9111
        %v9113 = vlaneseq
        %v9114 = vshrl.u32 %v9113, 7
        %v9115 = vsub.s32 3, %v9114
        %v9116 = vrot.slane %v8550, %v9115
        %v9117 = vlaneseq
        %v9118 = vshrl.u32 %v9117, 7
        %v9119 = vsub.s32 3, %v9118
        %v9120 = vrot.slane %v8519, %v9119
        %v9121 = vlaneseq
        %v9122 = vshrl.u32 %v9121, 7
        %v9123 = vsub.s32 3, %v9122
        %v9124 = vrot.slane %v8551, %v9123
        %v9125 = vlaneseq
        %v9126 = vshrl.u32 %v9125, 7
        %v9127 = vsub.s32 3, %v9126
        %v9128 = vrot.slane %v8520, %v9127
        %v9129 = vlaneseq
        %v9130 = vshrl.u32 %v9129, 7
        %v9131 = vsub.s32 3, %v9130
        %v9132 = vrot.slane %v8552, %v9131
        %v9133 = vlaneseq
        %v9134 = vshrl.u32 %v9133, 7
        %v9135 = vsub.s32 3, %v9134
        %v9136 = vrot.slane %v8521, %v9135
        %v9137 = vlaneseq
        %v9138 = vshrl.u32 %v9137, 7
        %v9139 = vsub.s32 3, %v9138
        %v9140 = vrot.slane %v8553, %v9139
        %v9141 = vlaneseq
        %v9142 = vshrl.u32 %v9141, 7
        %v9143 = vsub.s32 3, %v9142
        %v9144 = vrot.slane %v8522, %v9143
        %v9145 = vlaneseq
        %v9146 = vshrl.u32 %v9145, 7
        %v9147 = vsub.s32 3, %v9146
        %v9148 = vrot.slane %v8554, %v9147
        %v9149 = vlaneseq
        %v9150 = vshrl.u32 %v9149, 7
        %v9151 = vsub.s32 3, %v9150
        %v9152 = vrot.slane %v8523, %v9151
        %v9153 = vlaneseq
        %v9154 = vshrl.u32 %v9153, 7
        %v9155 = vsub.s32 3, %v9154
        %v9156 = vrot.slane %v8555, %v9155
        %v9157 = vlaneseq
        %v9158 = vshrl.u32 %v9157, 7
        %v9159 = vsub.s32 3, %v9158
        %v9160 = vrot.slane %v8524, %v9159
        %v9161 = vlaneseq
        %v9162 = vshrl.u32 %v9161, 7
        %v9163 = vsub.s32 3, %v9162
        %v9164 = vrot.slane %v8556, %v9163
        %v9165 = vlaneseq
        %v9166 = vshrl.u32 %v9165, 7
        %v9167 = vsub.s32 3, %v9166
        %v9168 = vrot.slane %v8525, %v9167
        %v9169 = vlaneseq
        %v9170 = vshrl.u32 %v9169, 7
        %v9171 = vsub.s32 3, %v9170
        %v9172 = vrot.slane %v8557, %v9171
        %v9173 = vlaneseq
        %v9174 = vshrl.u32 %v9173, 7
        %v9175 = vsub.s32 3, %v9174
        %v9176 = vrot.slane %v8526, %v9175
        %v9177 = vlaneseq
        %v9178 = vshrl.u32 %v9177, 7
        %v9179 = vsub.s32 3, %v9178
        %v9180 = vrot.slane %v8558, %v9179
        %v9181 = vlaneseq
        %v9182 = vshrl.u32 %v9181, 7
        %v9183 = vsub.s32 3, %v9182
        %v9184 = vrot.slane %v8527, %v9183
        %v9185 = vlaneseq
        %v9186 = vshrl.u32 %v9185, 7
        %v9187 = vsub.s32 3, %v9186
        %v9188 = vrot.slane %v8559, %v9187
        %v9189 = vlaneseq
        %v9190 = vshrl.u32 %v9189, 7
        %v9191 = vsub.s32 3, %v9190
        %v9192 = vrot.slane %v8528, %v9191
        %v9193 = vlaneseq
        %v9194 = vshrl.u32 %v9193, 7
        %v9195 = vsub.s32 3, %v9194
        %v9196 = vrot.slane %v8560, %v9195
        %v9197 = vlaneseq
        %v9198 = vshrl.u32 %v9197, 7
        %v9199 = vsub.s32 3, %v9198
        %v9200 = vrot.slane %v8529, %v9199
        %v9201 = vlaneseq
        %v9202 = vshrl.u32 %v9201, 7
        %v9203 = vsub.s32 3, %v9202
        %v9204 = vrot.slane %v8561, %v9203
        %v9205 = vsel %vm8690, %v9084, %v9080
        %v9206 = vsel %vm8692, %v9088, %v9205
        %v9207 = vsel %vm8694, %v9092, %v9206
        %v9208 = vsel %vm8690, %v9100, %v9096
        %v9209 = vsel %vm8692, %v9104, %v9208
        %v9210 = vsel %vm8694, %v9108, %v9209
        %v9211 = vsel %vm8690, %v9116, %v9112
        %v9212 = vsel %vm8692, %v9120, %v9211
        %v9213 = vsel %vm8694, %v9124, %v9212
        %v9214 = vsel %vm8690, %v9132, %v9128
        %v9215 = vsel %vm8692, %v9136, %v9214
        %v9216 = vsel %vm8694, %v9140, %v9215
        %v9217 = vsel %vm8690, %v9148, %v9144
        %v9218 = vsel %vm8692, %v9152, %v9217
        %v9219 = vsel %vm8694, %v9156, %v9218
        %v9220 = vsel %vm8690, %v9164, %v9160
        %v9221 = vsel %vm8692, %v9168, %v9220
        %v9222 = vsel %vm8694, %v9172, %v9221
        %v9223 = vsel %vm8690, %v9180, %v9176
        %v9224 = vsel %vm8692, %v9184, %v9223
        %v9225 = vsel %vm8694, %v9188, %v9224
        %v9226 = vsel %vm8690, %v9196, %v9192
        %v9227 = vsel %vm8692, %v9200, %v9226
        %v9228 = vsel %vm8694, %v9204, %v9227
        %9229 = vrot.lane.b32.xlu0 %v9207, 96
        %v9230 = vpop.permute.xlu0 %9229
        %9231 = vrot.lane.b32.xlu0 %v9210, 96
        %v9232 = vpop.permute.xlu0 %9231
        %9233 = vrot.lane.b32.xlu0 %v9213, 96
        %v9234 = vpop.permute.xlu0 %9233
        %9235 = vrot.lane.b32.xlu0 %v9216, 96
        %v9236 = vpop.permute.xlu0 %9235
        %9237 = vrot.lane.b32.xlu0 %v9219, 96
        %v9238 = vpop.permute.xlu0 %9237
        %9239 = vrot.lane.b32.xlu0 %v9222, 96
        %v9240 = vpop.permute.xlu0 %9239
        %9241 = vrot.lane.b32.xlu0 %v9225, 96
        %v9242 = vpop.permute.xlu0 %9241
        %9243 = vrot.lane.b32.xlu0 %v9228, 96
        %v9244 = vpop.permute.xlu0 %9243
        %v9253 = vsel %vm3475, %v8695, %v8878
        %v9254 = vsel %vm3475, %v8698, %v8880
        %v9255 = vsel %vm3475, %v8701, %v8882
        %v9256 = vsel %vm3475, %v8704, %v8884
        %v9257 = vsel %vm3475, %v8707, %v8886
        %v9258 = vsel %vm3475, %v8710, %v8888
        %v9259 = vsel %vm3475, %v8713, %v8890
        %v9260 = vsel %vm3475, %v8716, %v8892
        %vm9261 = vcmask 523264
        %v9262 = vsel %vm9261, %v9253, %v9054
        %v9263 = vsel %vm9261, %v9254, %v9056
        %v9264 = vsel %vm9261, %v9255, %v9058
        %v9265 = vsel %vm9261, %v9256, %v9060
        %v9266 = vsel %vm9261, %v9257, %v9062
        %v9267 = vsel %vm9261, %v9258, %v9064
        %v9268 = vsel %vm9261, %v9259, %v9066
        %v9269 = vsel %vm9261, %v9260, %v9068
        %vm9270 = vcmask 785408
        %v9271 = vsel %vm9270, %v9262, %v9230
        %v9272 = vsel %vm9270, %v9263, %v9232
        %v9273 = vsel %vm9270, %v9264, %v9234
        %v9274 = vsel %vm9270, %v9265, %v9236
        %v9275 = vsel %vm9270, %v9266, %v9238
        %v9276 = vsel %vm9270, %v9267, %v9240
        %v9277 = vsel %vm9270, %v9268, %v9242
        %v9278 = vsel %vm9270, %v9269, %v9244
        %v9279 = vadd.f32 %v571, %v9271
        %v9280 = vadd.f32 %v572, %v9272
        %v9281 = vadd.f32 %v573, %v9273
        %v9282 = vadd.f32 %v574, %v9274
        %v9283 = vadd.f32 %v575, %v9275
        %v9284 = vadd.f32 %v576, %v9276
        %v9285 = vadd.f32 %v577, %v9277
        %v9286 = vadd.f32 %v578, %v9278
        %9287 = vst [vmem:[%s539] sm:$0xf] %v9279
        %9288 = vst [vmem:[%s539 + $0x4] sm:$0xf] %v9280
        %9289 = vst [vmem:[%s539 + $0x8] sm:$0xf] %v9281
        %9290 = vst [vmem:[%s539 + $0xc] sm:$0xf] %v9282
        %9291 = vst [vmem:[%s539 + $0x10] sm:$0xf] %v9283
        %9292 = vst [vmem:[%s539 + $0x14] sm:$0xf] %v9284
        %9293 = vst [vmem:[%s539 + $0x18] sm:$0xf] %v9285
        %9294 = vst [vmem:[%s539 + $0x1c] sm:$0xf] %v9286
        %v9296 = vunpack.c.l.s4 1983009808
        %v9297 = vunpack.c.0.s8 %v9296
        %v9298 = vlaneseq
        %v9299 = vshrl.u32 %v9298, 7
        %v9300 = vsub.s32 %v9297, %v9299
        %v9301 = vrot.slane %v8514, %v9300
        %v9303 = vunpack.c.l.s4 1983009808
        %v9304 = vunpack.c.0.s8 %v9303
        %v9305 = vlaneseq
        %v9306 = vshrl.u32 %v9305, 7
        %v9307 = vsub.s32 %v9304, %v9306
        %v9308 = vrot.slane %v8546, %v9307
        %v9309 = vcombine.high %v9301, %v9301
        %v9310 = vcombine.high %v9308, %v9308
        %v9312 = vunpack.c.l.s4 1983009808
        %v9313 = vunpack.c.0.s8 %v9312
        %v9314 = vlaneseq
        %v9315 = vshrl.u32 %v9314, 7
        %v9316 = vsub.s32 %v9313, %v9315
        %v9317 = vrot.slane %v8515, %v9316
        %v9319 = vunpack.c.l.s4 1983009808
        %v9320 = vunpack.c.0.s8 %v9319
        %v9321 = vlaneseq
        %v9322 = vshrl.u32 %v9321, 7
        %v9323 = vsub.s32 %v9320, %v9322
        %v9324 = vrot.slane %v8547, %v9323
        %v9325 = vcombine.high %v9317, %v9317
        %v9326 = vcombine.high %v9324, %v9324
        %v9328 = vunpack.c.l.s4 1983009808
        %v9329 = vunpack.c.0.s8 %v9328
        %v9330 = vlaneseq
        %v9331 = vshrl.u32 %v9330, 7
        %v9332 = vsub.s32 %v9329, %v9331
        %v9333 = vrot.slane %v8516, %v9332
        %v9335 = vunpack.c.l.s4 1983009808
        %v9336 = vunpack.c.0.s8 %v9335
        %v9337 = vlaneseq
        %v9338 = vshrl.u32 %v9337, 7
        %v9339 = vsub.s32 %v9336, %v9338
        %v9340 = vrot.slane %v8548, %v9339
        %v9341 = vcombine.high %v9333, %v9333
        %v9342 = vcombine.high %v9340, %v9340
        %v9344 = vunpack.c.l.s4 1983009808
        %v9345 = vunpack.c.0.s8 %v9344
        %v9346 = vlaneseq
        %v9347 = vshrl.u32 %v9346, 7
        %v9348 = vsub.s32 %v9345, %v9347
        %v9349 = vrot.slane %v8517, %v9348
        %v9351 = vunpack.c.l.s4 1983009808
        %v9352 = vunpack.c.0.s8 %v9351
        %v9353 = vlaneseq
        %v9354 = vshrl.u32 %v9353, 7
        %v9355 = vsub.s32 %v9352, %v9354
        %v9356 = vrot.slane %v8549, %v9355
        %v9357 = vcombine.high %v9349, %v9349
        %v9358 = vcombine.high %v9356, %v9356
        %v9360 = vunpack.c.l.s4 1983009808
        %v9361 = vunpack.c.0.s8 %v9360
        %v9362 = vlaneseq
        %v9363 = vshrl.u32 %v9362, 7
        %v9364 = vsub.s32 %v9361, %v9363
        %v9365 = vrot.slane %v8518, %v9364
        %v9367 = vunpack.c.l.s4 1983009808
        %v9368 = vunpack.c.0.s8 %v9367
        %v9369 = vlaneseq
        %v9370 = vshrl.u32 %v9369, 7
        %v9371 = vsub.s32 %v9368, %v9370
        %v9372 = vrot.slane %v8550, %v9371
        %v9373 = vcombine.high %v9365, %v9365
        %v9374 = vcombine.high %v9372, %v9372
        %v9376 = vunpack.c.l.s4 1983009808
        %v9377 = vunpack.c.0.s8 %v9376
        %v9378 = vlaneseq
        %v9379 = vshrl.u32 %v9378, 7
        %v9380 = vsub.s32 %v9377, %v9379
        %v9381 = vrot.slane %v8519, %v9380
        %v9383 = vunpack.c.l.s4 1983009808
        %v9384 = vunpack.c.0.s8 %v9383
        %v9385 = vlaneseq
        %v9386 = vshrl.u32 %v9385, 7
        %v9387 = vsub.s32 %v9384, %v9386
        %v9388 = vrot.slane %v8551, %v9387
        %v9389 = vcombine.high %v9381, %v9381
        %v9390 = vcombine.high %v9388, %v9388
        %v9392 = vunpack.c.l.s4 1983009808
        %v9393 = vunpack.c.0.s8 %v9392
        %v9394 = vlaneseq
        %v9395 = vshrl.u32 %v9394, 7
        %v9396 = vsub.s32 %v9393, %v9395
        %v9397 = vrot.slane %v8520, %v9396
        %v9399 = vunpack.c.l.s4 1983009808
        %v9400 = vunpack.c.0.s8 %v9399
        %v9401 = vlaneseq
        %v9402 = vshrl.u32 %v9401, 7
        %v9403 = vsub.s32 %v9400, %v9402
        %v9404 = vrot.slane %v8552, %v9403
        %v9405 = vcombine.high %v9397, %v9397
        %v9406 = vcombine.high %v9404, %v9404
        %v9408 = vunpack.c.l.s4 1983009808
        %v9409 = vunpack.c.0.s8 %v9408
        %v9410 = vlaneseq
        %v9411 = vshrl.u32 %v9410, 7
        %v9412 = vsub.s32 %v9409, %v9411
        %v9413 = vrot.slane %v8521, %v9412
        %v9415 = vunpack.c.l.s4 1983009808
        %v9416 = vunpack.c.0.s8 %v9415
        %v9417 = vlaneseq
        %v9418 = vshrl.u32 %v9417, 7
        %v9419 = vsub.s32 %v9416, %v9418
        %v9420 = vrot.slane %v8553, %v9419
        %v9421 = vcombine.high %v9413, %v9413
        %v9422 = vcombine.high %v9420, %v9420
        %v9424 = vunpack.c.l.s4 1983009808
        %v9425 = vunpack.c.0.s8 %v9424
        %v9426 = vlaneseq
        %v9427 = vshrl.u32 %v9426, 7
        %v9428 = vsub.s32 %v9425, %v9427
        %v9429 = vrot.slane %v8522, %v9428
        %v9431 = vunpack.c.l.s4 1983009808
        %v9432 = vunpack.c.0.s8 %v9431
        %v9433 = vlaneseq
        %v9434 = vshrl.u32 %v9433, 7
        %v9435 = vsub.s32 %v9432, %v9434
        %v9436 = vrot.slane %v8554, %v9435
        %v9437 = vcombine.high %v9429, %v9429
        %v9438 = vcombine.high %v9436, %v9436
        %v9440 = vunpack.c.l.s4 1983009808
        %v9441 = vunpack.c.0.s8 %v9440
        %v9442 = vlaneseq
        %v9443 = vshrl.u32 %v9442, 7
        %v9444 = vsub.s32 %v9441, %v9443
        %v9445 = vrot.slane %v8523, %v9444
        %v9447 = vunpack.c.l.s4 1983009808
        %v9448 = vunpack.c.0.s8 %v9447
        %v9449 = vlaneseq
        %v9450 = vshrl.u32 %v9449, 7
        %v9451 = vsub.s32 %v9448, %v9450
        %v9452 = vrot.slane %v8555, %v9451
        %v9453 = vcombine.high %v9445, %v9445
        %v9454 = vcombine.high %v9452, %v9452
        %v9456 = vunpack.c.l.s4 1983009808
        %v9457 = vunpack.c.0.s8 %v9456
        %v9458 = vlaneseq
        %v9459 = vshrl.u32 %v9458, 7
        %v9460 = vsub.s32 %v9457, %v9459
        %v9461 = vrot.slane %v8524, %v9460
        %v9463 = vunpack.c.l.s4 1983009808
        %v9464 = vunpack.c.0.s8 %v9463
        %v9465 = vlaneseq
        %v9466 = vshrl.u32 %v9465, 7
        %v9467 = vsub.s32 %v9464, %v9466
        %v9468 = vrot.slane %v8556, %v9467
        %v9469 = vcombine.high %v9461, %v9461
        %v9470 = vcombine.high %v9468, %v9468
        %v9472 = vunpack.c.l.s4 1983009808
        %v9473 = vunpack.c.0.s8 %v9472
        %v9474 = vlaneseq
        %v9475 = vshrl.u32 %v9474, 7
        %v9476 = vsub.s32 %v9473, %v9475
        %v9477 = vrot.slane %v8525, %v9476
        %v9479 = vunpack.c.l.s4 1983009808
        %v9480 = vunpack.c.0.s8 %v9479
        %v9481 = vlaneseq
        %v9482 = vshrl.u32 %v9481, 7
        %v9483 = vsub.s32 %v9480, %v9482
        %v9484 = vrot.slane %v8557, %v9483
        %v9485 = vcombine.high %v9477, %v9477
        %v9486 = vcombine.high %v9484, %v9484
        %v9488 = vunpack.c.l.s4 1983009808
        %v9489 = vunpack.c.0.s8 %v9488
        %v9490 = vlaneseq
        %v9491 = vshrl.u32 %v9490, 7
        %v9492 = vsub.s32 %v9489, %v9491
        %v9493 = vrot.slane %v8526, %v9492
        %v9495 = vunpack.c.l.s4 1983009808
        %v9496 = vunpack.c.0.s8 %v9495
        %v9497 = vlaneseq
        %v9498 = vshrl.u32 %v9497, 7
        %v9499 = vsub.s32 %v9496, %v9498
        %v9500 = vrot.slane %v8558, %v9499
        %v9501 = vcombine.high %v9493, %v9493
        %v9502 = vcombine.high %v9500, %v9500
        %v9504 = vunpack.c.l.s4 1983009808
        %v9505 = vunpack.c.0.s8 %v9504
        %v9506 = vlaneseq
        %v9507 = vshrl.u32 %v9506, 7
        %v9508 = vsub.s32 %v9505, %v9507
        %v9509 = vrot.slane %v8527, %v9508
        %v9511 = vunpack.c.l.s4 1983009808
        %v9512 = vunpack.c.0.s8 %v9511
        %v9513 = vlaneseq
        %v9514 = vshrl.u32 %v9513, 7
        %v9515 = vsub.s32 %v9512, %v9514
        %v9516 = vrot.slane %v8559, %v9515
        %v9517 = vcombine.high %v9509, %v9509
        %v9518 = vcombine.high %v9516, %v9516
        %v9520 = vunpack.c.l.s4 1983009808
        %v9521 = vunpack.c.0.s8 %v9520
        %v9522 = vlaneseq
        %v9523 = vshrl.u32 %v9522, 7
        %v9524 = vsub.s32 %v9521, %v9523
        %v9525 = vrot.slane %v8528, %v9524
        %v9527 = vunpack.c.l.s4 1983009808
        %v9528 = vunpack.c.0.s8 %v9527
        %v9529 = vlaneseq
        %v9530 = vshrl.u32 %v9529, 7
        %v9531 = vsub.s32 %v9528, %v9530
        %v9532 = vrot.slane %v8560, %v9531
        %v9533 = vcombine.high %v9525, %v9525
        %v9534 = vcombine.high %v9532, %v9532
        %v9536 = vunpack.c.l.s4 1983009808
        %v9537 = vunpack.c.0.s8 %v9536
        %v9538 = vlaneseq
        %v9539 = vshrl.u32 %v9538, 7
        %v9540 = vsub.s32 %v9537, %v9539
        %v9541 = vrot.slane %v8529, %v9540
        %v9543 = vunpack.c.l.s4 1983009808
        %v9544 = vunpack.c.0.s8 %v9543
        %v9545 = vlaneseq
        %v9546 = vshrl.u32 %v9545, 7
        %v9547 = vsub.s32 %v9544, %v9546
        %v9548 = vrot.slane %v8561, %v9547
        %v9549 = vcombine.high %v9541, %v9541
        %v9550 = vcombine.high %v9548, %v9548
        %v9615 = vrot.slane %v9301, 7
        %v9616 = vrot.slane %v9615, 2
        %v9617 = vrot.slane %v9309, 7
        %v9618 = vrot.slane %v9617, 2
        %v9619 = vrot.slane %v9308, 7
        %v9620 = vrot.slane %v9619, 2
        %v9621 = vrot.slane %v9310, 7
        %v9622 = vrot.slane %v9621, 2
        %v9623 = vrot.slane %v9317, 7
        %v9624 = vrot.slane %v9623, 2
        %v9625 = vrot.slane %v9325, 7
        %v9626 = vrot.slane %v9625, 2
        %v9627 = vrot.slane %v9324, 7
        %v9628 = vrot.slane %v9627, 2
        %v9629 = vrot.slane %v9326, 7
        %v9630 = vrot.slane %v9629, 2
        %v9631 = vrot.slane %v9365, 7
        %v9632 = vrot.slane %v9631, 2
        %v9633 = vrot.slane %v9373, 7
        %v9634 = vrot.slane %v9633, 2
        %v9635 = vrot.slane %v9372, 7
        %v9636 = vrot.slane %v9635, 2
        %v9637 = vrot.slane %v9374, 7
        %v9638 = vrot.slane %v9637, 2
        %v9639 = vrot.slane %v9381, 7
        %v9640 = vrot.slane %v9639, 2
        %v9641 = vrot.slane %v9389, 7
        %v9642 = vrot.slane %v9641, 2
        %v9643 = vrot.slane %v9388, 7
        %v9644 = vrot.slane %v9643, 2
        %v9645 = vrot.slane %v9390, 7
        %v9646 = vrot.slane %v9645, 2
        %v9647 = vrot.slane %v9429, 7
        %v9648 = vrot.slane %v9647, 2
        %v9649 = vrot.slane %v9437, 7
        %v9650 = vrot.slane %v9649, 2
        %v9651 = vrot.slane %v9436, 7
        %v9652 = vrot.slane %v9651, 2
        %v9653 = vrot.slane %v9438, 7
        %v9654 = vrot.slane %v9653, 2
        %v9655 = vrot.slane %v9445, 7
        %v9656 = vrot.slane %v9655, 2
        %v9657 = vrot.slane %v9453, 7
        %v9658 = vrot.slane %v9657, 2
        %v9659 = vrot.slane %v9452, 7
        %v9660 = vrot.slane %v9659, 2
        %v9661 = vrot.slane %v9454, 7
        %v9662 = vrot.slane %v9661, 2
        %v9663 = vrot.slane %v9493, 7
        %v9664 = vrot.slane %v9663, 2
        %v9665 = vrot.slane %v9501, 7
        %v9666 = vrot.slane %v9665, 2
        %v9667 = vrot.slane %v9500, 7
        %v9668 = vrot.slane %v9667, 2
        %v9669 = vrot.slane %v9502, 7
        %v9670 = vrot.slane %v9669, 2
        %v9671 = vrot.slane %v9509, 7
        %v9672 = vrot.slane %v9671, 2
        %v9673 = vrot.slane %v9517, 7
        %v9674 = vrot.slane %v9673, 2
        %v9675 = vrot.slane %v9516, 7
        %v9676 = vrot.slane %v9675, 2
        %v9677 = vrot.slane %v9518, 7
        %v9678 = vrot.slane %v9677, 2
        %v9711 = vadd.f32 %v9301, %v9616
        %v9712 = vadd.f32 %v9309, %v9618
        %v9713 = vadd.f32 %v9308, %v9620
        %v9714 = vadd.f32 %v9310, %v9622
        %v9715 = vadd.f32 %v9317, %v9624
        %v9716 = vadd.f32 %v9325, %v9626
        %v9717 = vadd.f32 %v9324, %v9628
        %v9718 = vadd.f32 %v9326, %v9630
        %v9719 = vadd.f32 %v9365, %v9632
        %v9720 = vadd.f32 %v9373, %v9634
        %v9721 = vadd.f32 %v9372, %v9636
        %v9722 = vadd.f32 %v9374, %v9638
        %v9723 = vadd.f32 %v9381, %v9640
        %v9724 = vadd.f32 %v9389, %v9642
        %v9725 = vadd.f32 %v9388, %v9644
        %v9726 = vadd.f32 %v9390, %v9646
        %v9727 = vadd.f32 %v9429, %v9648
        %v9728 = vadd.f32 %v9437, %v9650
        %v9729 = vadd.f32 %v9436, %v9652
        %v9730 = vadd.f32 %v9438, %v9654
        %v9731 = vadd.f32 %v9445, %v9656
        %v9732 = vadd.f32 %v9453, %v9658
        %v9733 = vadd.f32 %v9452, %v9660
        %v9734 = vadd.f32 %v9454, %v9662
        %v9735 = vadd.f32 %v9493, %v9664
        %v9736 = vadd.f32 %v9501, %v9666
        %v9737 = vadd.f32 %v9500, %v9668
        %v9738 = vadd.f32 %v9502, %v9670
        %v9739 = vadd.f32 %v9509, %v9672
        %v9740 = vadd.f32 %v9517, %v9674
        %v9741 = vadd.f32 %v9516, %v9676
        %v9742 = vadd.f32 %v9518, %v9678
        %v9743 = vadd.f32 %v9711, %v9333
        %v9744 = vadd.f32 %v9712, %v9341
        %v9745 = vadd.f32 %v9713, %v9340
        %v9746 = vadd.f32 %v9714, %v9342
        %v9747 = vadd.f32 %v9715, %v9349
        %v9748 = vadd.f32 %v9716, %v9357
        %v9749 = vadd.f32 %v9717, %v9356
        %v9750 = vadd.f32 %v9718, %v9358
        %v9751 = vadd.f32 %v9719, %v9397
        %v9752 = vadd.f32 %v9720, %v9405
        %v9753 = vadd.f32 %v9721, %v9404
        %v9754 = vadd.f32 %v9722, %v9406
        %v9755 = vadd.f32 %v9723, %v9413
        %v9756 = vadd.f32 %v9724, %v9421
        %v9757 = vadd.f32 %v9725, %v9420
        %v9758 = vadd.f32 %v9726, %v9422
        %v9759 = vadd.f32 %v9727, %v9461
        %v9760 = vadd.f32 %v9728, %v9469
        %v9761 = vadd.f32 %v9729, %v9468
        %v9762 = vadd.f32 %v9730, %v9470
        %v9763 = vadd.f32 %v9731, %v9477
        %v9764 = vadd.f32 %v9732, %v9485
        %v9765 = vadd.f32 %v9733, %v9484
        %v9766 = vadd.f32 %v9734, %v9486
        %v9767 = vadd.f32 %v9735, %v9525
        %v9768 = vadd.f32 %v9736, %v9533
        %v9769 = vadd.f32 %v9737, %v9532
        %v9770 = vadd.f32 %v9738, %v9534
        %v9771 = vadd.f32 %v9739, %v9541
        %v9772 = vadd.f32 %v9740, %v9549
        %v9773 = vadd.f32 %v9741, %v9548
        %v9774 = vadd.f32 %v9742, %v9550
        %v9775 = vrot.slane %v9333, 7
        %v9776 = vrot.slane %v9775, 2
        %v9777 = vrot.slane %v9341, 7
        %v9778 = vrot.slane %v9777, 2
        %v9779 = vrot.slane %v9340, 7
        %v9780 = vrot.slane %v9779, 2
        %v9781 = vrot.slane %v9342, 7
        %v9782 = vrot.slane %v9781, 2
        %v9783 = vrot.slane %v9349, 7
        %v9784 = vrot.slane %v9783, 2
        %v9785 = vrot.slane %v9357, 7
        %v9786 = vrot.slane %v9785, 2
        %v9787 = vrot.slane %v9356, 7
        %v9788 = vrot.slane %v9787, 2
        %v9789 = vrot.slane %v9358, 7
        %v9790 = vrot.slane %v9789, 2
        %v9791 = vrot.slane %v9397, 7
        %v9792 = vrot.slane %v9791, 2
        %v9793 = vrot.slane %v9405, 7
        %v9794 = vrot.slane %v9793, 2
        %v9795 = vrot.slane %v9404, 7
        %v9796 = vrot.slane %v9795, 2
        %v9797 = vrot.slane %v9406, 7
        %v9798 = vrot.slane %v9797, 2
        %v9799 = vrot.slane %v9413, 7
        %v9800 = vrot.slane %v9799, 2
        %v9801 = vrot.slane %v9421, 7
        %v9802 = vrot.slane %v9801, 2
        %v9803 = vrot.slane %v9420, 7
        %v9804 = vrot.slane %v9803, 2
        %v9805 = vrot.slane %v9422, 7
        %v9806 = vrot.slane %v9805, 2
        %v9807 = vrot.slane %v9461, 7
        %v9808 = vrot.slane %v9807, 2
        %v9809 = vrot.slane %v9469, 7
        %v9810 = vrot.slane %v9809, 2
        %v9811 = vrot.slane %v9468, 7
        %v9812 = vrot.slane %v9811, 2
        %v9813 = vrot.slane %v9470, 7
        %v9814 = vrot.slane %v9813, 2
        %v9815 = vrot.slane %v9477, 7
        %v9816 = vrot.slane %v9815, 2
        %v9817 = vrot.slane %v9485, 7
        %v9818 = vrot.slane %v9817, 2
        %v9819 = vrot.slane %v9484, 7
        %v9820 = vrot.slane %v9819, 2
        %v9821 = vrot.slane %v9486, 7
        %v9822 = vrot.slane %v9821, 2
        %v9823 = vrot.slane %v9525, 7
        %v9824 = vrot.slane %v9823, 2
        %v9825 = vrot.slane %v9533, 7
        %v9826 = vrot.slane %v9825, 2
        %v9827 = vrot.slane %v9532, 7
        %v9828 = vrot.slane %v9827, 2
        %v9829 = vrot.slane %v9534, 7
        %v9830 = vrot.slane %v9829, 2
        %v9831 = vrot.slane %v9541, 7
        %v9832 = vrot.slane %v9831, 2
        %v9833 = vrot.slane %v9549, 7
        %v9834 = vrot.slane %v9833, 2
        %v9835 = vrot.slane %v9548, 7
        %v9836 = vrot.slane %v9835, 2
        %v9837 = vrot.slane %v9550, 7
        %v9838 = vrot.slane %v9837, 2
        %v9871 = vadd.f32 %v9743, %v9776
        %v9872 = vadd.f32 %v9744, %v9778
        %v9873 = vadd.f32 %v9745, %v9780
        %v9874 = vadd.f32 %v9746, %v9782
        %v9875 = vadd.f32 %v9747, %v9784
        %v9876 = vadd.f32 %v9748, %v9786
        %v9877 = vadd.f32 %v9749, %v9788
        %v9878 = vadd.f32 %v9750, %v9790
        %v9879 = vadd.f32 %v9751, %v9792
        %v9880 = vadd.f32 %v9752, %v9794
        %v9881 = vadd.f32 %v9753, %v9796
        %v9882 = vadd.f32 %v9754, %v9798
        %v9883 = vadd.f32 %v9755, %v9800
        %v9884 = vadd.f32 %v9756, %v9802
        %v9885 = vadd.f32 %v9757, %v9804
        %v9886 = vadd.f32 %v9758, %v9806
        %v9887 = vadd.f32 %v9759, %v9808
        %v9888 = vadd.f32 %v9760, %v9810
        %v9889 = vadd.f32 %v9761, %v9812
        %v9890 = vadd.f32 %v9762, %v9814
        %v9891 = vadd.f32 %v9763, %v9816
        %v9892 = vadd.f32 %v9764, %v9818
        %v9893 = vadd.f32 %v9765, %v9820
        %v9894 = vadd.f32 %v9766, %v9822
        %v9895 = vadd.f32 %v9767, %v9824
        %v9896 = vadd.f32 %v9768, %v9826
        %v9897 = vadd.f32 %v9769, %v9828
        %v9898 = vadd.f32 %v9770, %v9830
        %v9899 = vadd.f32 %v9771, %v9832
        %v9900 = vadd.f32 %v9772, %v9834
        %v9901 = vadd.f32 %v9773, %v9836
        %v9902 = vadd.f32 %v9774, %v9838
        %v9903 = vmul.f32 %v9871, 0.25
        %v9904 = vmul.f32 %v9872, 0.25
        %v9905 = vmul.f32 %v9873, 0.25
        %v9906 = vmul.f32 %v9874, 0.25
        %v9907 = vmul.f32 %v9875, 0.25
        %v9908 = vmul.f32 %v9876, 0.25
        %v9909 = vmul.f32 %v9877, 0.25
        %v9910 = vmul.f32 %v9878, 0.25
        %v9911 = vmul.f32 %v9879, 0.25
        %v9912 = vmul.f32 %v9880, 0.25
        %v9913 = vmul.f32 %v9881, 0.25
        %v9914 = vmul.f32 %v9882, 0.25
        %v9915 = vmul.f32 %v9883, 0.25
        %v9916 = vmul.f32 %v9884, 0.25
        %v9917 = vmul.f32 %v9885, 0.25
        %v9918 = vmul.f32 %v9886, 0.25
        %v9919 = vmul.f32 %v9887, 0.25
        %v9920 = vmul.f32 %v9888, 0.25
        %v9921 = vmul.f32 %v9889, 0.25
        %v9922 = vmul.f32 %v9890, 0.25
        %v9923 = vmul.f32 %v9891, 0.25
        %v9924 = vmul.f32 %v9892, 0.25
        %v9925 = vmul.f32 %v9893, 0.25
        %v9926 = vmul.f32 %v9894, 0.25
        %v9927 = vmul.f32 %v9895, 0.25
        %v9928 = vmul.f32 %v9896, 0.25
        %v9929 = vmul.f32 %v9897, 0.25
        %v9930 = vmul.f32 %v9898, 0.25
        %v9931 = vmul.f32 %v9899, 0.25
        %v9932 = vmul.f32 %v9900, 0.25
        %v9933 = vmul.f32 %v9901, 0.25
        %v9934 = vmul.f32 %v9902, 0.25
        %v9967 = vlaneseq
        %v9968 = vshrl.u32 %v9967, 7
        %v9969 = vsub.s32 0, %v9968
        %v9970 = vrot.slane %v9903, %v9969
        %v9971 = vlaneseq
        %v9972 = vshrl.u32 %v9971, 7
        %v9973 = vsub.s32 0, %v9972
        %v9974 = vrot.slane %v9904, %v9973
        %v9975 = vlaneseq
        %v9976 = vshrl.u32 %v9975, 7
        %v9977 = vsub.s32 0, %v9976
        %v9978 = vrot.slane %v9905, %v9977
        %v9979 = vlaneseq
        %v9980 = vshrl.u32 %v9979, 7
        %v9981 = vsub.s32 0, %v9980
        %v9982 = vrot.slane %v9906, %v9981
        %v9983 = vlaneseq
        %v9984 = vshrl.u32 %v9983, 7
        %v9985 = vsub.s32 0, %v9984
        %v9986 = vrot.slane %v9907, %v9985
        %v9987 = vlaneseq
        %v9988 = vshrl.u32 %v9987, 7
        %v9989 = vsub.s32 0, %v9988
        %v9990 = vrot.slane %v9908, %v9989
        %v9991 = vlaneseq
        %v9992 = vshrl.u32 %v9991, 7
        %v9993 = vsub.s32 0, %v9992
        %v9994 = vrot.slane %v9909, %v9993
        %v9995 = vlaneseq
        %v9996 = vshrl.u32 %v9995, 7
        %v9997 = vsub.s32 0, %v9996
        %v9998 = vrot.slane %v9910, %v9997
        %v9999 = vlaneseq
        %v10000 = vshrl.u32 %v9999, 7
        %v10001 = vsub.s32 0, %v10000
        %v10002 = vrot.slane %v9911, %v10001
        %v10003 = vlaneseq
        %v10004 = vshrl.u32 %v10003, 7
        %v10005 = vsub.s32 0, %v10004
        %v10006 = vrot.slane %v9912, %v10005
        %v10007 = vlaneseq
        %v10008 = vshrl.u32 %v10007, 7
        %v10009 = vsub.s32 0, %v10008
        %v10010 = vrot.slane %v9913, %v10009
        %v10011 = vlaneseq
        %v10012 = vshrl.u32 %v10011, 7
        %v10013 = vsub.s32 0, %v10012
        %v10014 = vrot.slane %v9914, %v10013
        %v10015 = vlaneseq
        %v10016 = vshrl.u32 %v10015, 7
        %v10017 = vsub.s32 0, %v10016
        %v10018 = vrot.slane %v9915, %v10017
        %v10019 = vlaneseq
        %v10020 = vshrl.u32 %v10019, 7
        %v10021 = vsub.s32 0, %v10020
        %v10022 = vrot.slane %v9916, %v10021
        %v10023 = vlaneseq
        %v10024 = vshrl.u32 %v10023, 7
        %v10025 = vsub.s32 0, %v10024
        %v10026 = vrot.slane %v9917, %v10025
        %v10027 = vlaneseq
        %v10028 = vshrl.u32 %v10027, 7
        %v10029 = vsub.s32 0, %v10028
        %v10030 = vrot.slane %v9918, %v10029
        %v10031 = vlaneseq
        %v10032 = vshrl.u32 %v10031, 7
        %v10033 = vsub.s32 0, %v10032
        %v10034 = vrot.slane %v9919, %v10033
        %v10035 = vlaneseq
        %v10036 = vshrl.u32 %v10035, 7
        %v10037 = vsub.s32 0, %v10036
        %v10038 = vrot.slane %v9920, %v10037
        %v10039 = vlaneseq
        %v10040 = vshrl.u32 %v10039, 7
        %v10041 = vsub.s32 0, %v10040
        %v10042 = vrot.slane %v9921, %v10041
        %v10043 = vlaneseq
        %v10044 = vshrl.u32 %v10043, 7
        %v10045 = vsub.s32 0, %v10044
        %v10046 = vrot.slane %v9922, %v10045
        %v10047 = vlaneseq
        %v10048 = vshrl.u32 %v10047, 7
        %v10049 = vsub.s32 0, %v10048
        %v10050 = vrot.slane %v9923, %v10049
        %v10051 = vlaneseq
        %v10052 = vshrl.u32 %v10051, 7
        %v10053 = vsub.s32 0, %v10052
        %v10054 = vrot.slane %v9924, %v10053
        %v10055 = vlaneseq
        %v10056 = vshrl.u32 %v10055, 7
        %v10057 = vsub.s32 0, %v10056
        %v10058 = vrot.slane %v9925, %v10057
        %v10059 = vlaneseq
        %v10060 = vshrl.u32 %v10059, 7
        %v10061 = vsub.s32 0, %v10060
        %v10062 = vrot.slane %v9926, %v10061
        %v10063 = vlaneseq
        %v10064 = vshrl.u32 %v10063, 7
        %v10065 = vsub.s32 0, %v10064
        %v10066 = vrot.slane %v9927, %v10065
        %v10067 = vlaneseq
        %v10068 = vshrl.u32 %v10067, 7
        %v10069 = vsub.s32 0, %v10068
        %v10070 = vrot.slane %v9928, %v10069
        %v10071 = vlaneseq
        %v10072 = vshrl.u32 %v10071, 7
        %v10073 = vsub.s32 0, %v10072
        %v10074 = vrot.slane %v9929, %v10073
        %v10075 = vlaneseq
        %v10076 = vshrl.u32 %v10075, 7
        %v10077 = vsub.s32 0, %v10076
        %v10078 = vrot.slane %v9930, %v10077
        %v10079 = vlaneseq
        %v10080 = vshrl.u32 %v10079, 7
        %v10081 = vsub.s32 0, %v10080
        %v10082 = vrot.slane %v9931, %v10081
        %v10083 = vlaneseq
        %v10084 = vshrl.u32 %v10083, 7
        %v10085 = vsub.s32 0, %v10084
        %v10086 = vrot.slane %v9932, %v10085
        %v10087 = vlaneseq
        %v10088 = vshrl.u32 %v10087, 7
        %v10089 = vsub.s32 0, %v10088
        %v10090 = vrot.slane %v9933, %v10089
        %v10091 = vlaneseq
        %v10092 = vshrl.u32 %v10091, 7
        %v10093 = vsub.s32 0, %v10092
        %v10094 = vrot.slane %v9934, %v10093
        %v10095 = vsel %vm8690, %v9974, %v9970
        %v10096 = vsel %vm8692, %v9978, %v10095
        %v10097 = vsel %vm8694, %v9982, %v10096
        %vm10098 = vcmask 1044484
        %v10099 = vsel %vm10098, %v9986, %v10097
        %vm10100 = vcmask 1045509
        %v10101 = vsel %vm10100, %v9990, %v10099
        %vm10102 = vcmask 1046534
        %v10103 = vsel %vm10102, %v9994, %v10101
        %vm10104 = vcmask 1047559
        %v10105 = vsel %vm10104, %v9998, %v10103
        %v10106 = vsel %vm8690, %v10006, %v10002
        %v10107 = vsel %vm8692, %v10010, %v10106
        %v10108 = vsel %vm8694, %v10014, %v10107
        %v10109 = vsel %vm10098, %v10018, %v10108
        %v10110 = vsel %vm10100, %v10022, %v10109
        %v10111 = vsel %vm10102, %v10026, %v10110
        %v10112 = vsel %vm10104, %v10030, %v10111
        %v10113 = vsel %vm8690, %v10038, %v10034
        %v10114 = vsel %vm8692, %v10042, %v10113
        %v10115 = vsel %vm8694, %v10046, %v10114
        %v10116 = vsel %vm10098, %v10050, %v10115
        %v10117 = vsel %vm10100, %v10054, %v10116
        %v10118 = vsel %vm10102, %v10058, %v10117
        %v10119 = vsel %vm10104, %v10062, %v10118
        %v10120 = vsel %vm8690, %v10070, %v10066
        %v10121 = vsel %vm8692, %v10074, %v10120
        %v10122 = vsel %vm8694, %v10078, %v10121
        %v10123 = vsel %vm10098, %v10082, %v10122
        %v10124 = vsel %vm10100, %v10086, %v10123
        %v10125 = vsel %vm10102, %v10090, %v10124
        %v10126 = vsel %vm10104, %v10094, %v10125
        %v10131 = vadd.f32 %v579, %v10105
        %v10132 = vadd.f32 %v580, %v10112
        %v10133 = vadd.f32 %v581, %v10119
        %v10134 = vadd.f32 %v582, %v10126
        %10135 = vst.msk [vmem:[%s481] sm:$0xff] %vm3475, %v10131
        %10136 = vst.msk [vmem:[%s481 + $0x8] sm:$0xff] %vm3475, %v10132
        %10137 = vst.msk [vmem:[%s481 + $0x10] sm:$0xff] %vm3475, %v10133
        %10138 = vst.msk [vmem:[%s481 + $0x18] sm:$0xff] %vm3475, %v10134
        %v10139 = vlaneseq
        %v10140 = vshrl.u32 %v10139, 7
        %v10141 = vsub.s32 0, %v10140
        %v10142 = vrot.slane %v9301, %v10141
        %v10143 = vlaneseq
        %v10144 = vshrl.u32 %v10143, 7
        %v10145 = vsub.s32 0, %v10144
        %v10146 = vrot.slane %v9309, %v10145
        %v10147 = vlaneseq
        %v10148 = vshrl.u32 %v10147, 7
        %v10149 = vsub.s32 0, %v10148
        %v10150 = vrot.slane %v9308, %v10149
        %v10151 = vlaneseq
        %v10152 = vshrl.u32 %v10151, 7
        %v10153 = vsub.s32 0, %v10152
        %v10154 = vrot.slane %v9310, %v10153
        %v10155 = vlaneseq
        %v10156 = vshrl.u32 %v10155, 7
        %v10157 = vsub.s32 0, %v10156
        %v10158 = vrot.slane %v9317, %v10157
        %v10159 = vlaneseq
        %v10160 = vshrl.u32 %v10159, 7
        %v10161 = vsub.s32 0, %v10160
        %v10162 = vrot.slane %v9325, %v10161
        %v10163 = vlaneseq
        %v10164 = vshrl.u32 %v10163, 7
        %v10165 = vsub.s32 0, %v10164
        %v10166 = vrot.slane %v9324, %v10165
        %v10167 = vlaneseq
        %v10168 = vshrl.u32 %v10167, 7
        %v10169 = vsub.s32 0, %v10168
        %v10170 = vrot.slane %v9326, %v10169
        %v10171 = vlaneseq
        %v10172 = vshrl.u32 %v10171, 7
        %v10173 = vsub.s32 0, %v10172
        %v10174 = vrot.slane %v9333, %v10173
        %v10175 = vlaneseq
        %v10176 = vshrl.u32 %v10175, 7
        %v10177 = vsub.s32 0, %v10176
        %v10178 = vrot.slane %v9341, %v10177
        %v10179 = vlaneseq
        %v10180 = vshrl.u32 %v10179, 7
        %v10181 = vsub.s32 0, %v10180
        %v10182 = vrot.slane %v9340, %v10181
        %v10183 = vlaneseq
        %v10184 = vshrl.u32 %v10183, 7
        %v10185 = vsub.s32 0, %v10184
        %v10186 = vrot.slane %v9342, %v10185
        %v10187 = vlaneseq
        %v10188 = vshrl.u32 %v10187, 7
        %v10189 = vsub.s32 0, %v10188
        %v10190 = vrot.slane %v9349, %v10189
        %v10191 = vlaneseq
        %v10192 = vshrl.u32 %v10191, 7
        %v10193 = vsub.s32 0, %v10192
        %v10194 = vrot.slane %v9357, %v10193
        %v10195 = vlaneseq
        %v10196 = vshrl.u32 %v10195, 7
        %v10197 = vsub.s32 0, %v10196
        %v10198 = vrot.slane %v9356, %v10197
        %v10199 = vlaneseq
        %v10200 = vshrl.u32 %v10199, 7
        %v10201 = vsub.s32 0, %v10200
        %v10202 = vrot.slane %v9358, %v10201
        %v10203 = vlaneseq
        %v10204 = vshrl.u32 %v10203, 7
        %v10205 = vsub.s32 0, %v10204
        %v10206 = vrot.slane %v9365, %v10205
        %v10207 = vlaneseq
        %v10208 = vshrl.u32 %v10207, 7
        %v10209 = vsub.s32 0, %v10208
        %v10210 = vrot.slane %v9373, %v10209
        %v10211 = vlaneseq
        %v10212 = vshrl.u32 %v10211, 7
        %v10213 = vsub.s32 0, %v10212
        %v10214 = vrot.slane %v9372, %v10213
        %v10215 = vlaneseq
        %v10216 = vshrl.u32 %v10215, 7
        %v10217 = vsub.s32 0, %v10216
        %v10218 = vrot.slane %v9374, %v10217
        %v10219 = vlaneseq
        %v10220 = vshrl.u32 %v10219, 7
        %v10221 = vsub.s32 0, %v10220
        %v10222 = vrot.slane %v9381, %v10221
        %v10223 = vlaneseq
        %v10224 = vshrl.u32 %v10223, 7
        %v10225 = vsub.s32 0, %v10224
        %v10226 = vrot.slane %v9389, %v10225
        %v10227 = vlaneseq
        %v10228 = vshrl.u32 %v10227, 7
        %v10229 = vsub.s32 0, %v10228
        %v10230 = vrot.slane %v9388, %v10229
        %v10231 = vlaneseq
        %v10232 = vshrl.u32 %v10231, 7
        %v10233 = vsub.s32 0, %v10232
        %v10234 = vrot.slane %v9390, %v10233
        %v10235 = vlaneseq
        %v10236 = vshrl.u32 %v10235, 7
        %v10237 = vsub.s32 0, %v10236
        %v10238 = vrot.slane %v9397, %v10237
        %v10239 = vlaneseq
        %v10240 = vshrl.u32 %v10239, 7
        %v10241 = vsub.s32 0, %v10240
        %v10242 = vrot.slane %v9405, %v10241
        %v10243 = vlaneseq
        %v10244 = vshrl.u32 %v10243, 7
        %v10245 = vsub.s32 0, %v10244
        %v10246 = vrot.slane %v9404, %v10245
        %v10247 = vlaneseq
        %v10248 = vshrl.u32 %v10247, 7
        %v10249 = vsub.s32 0, %v10248
        %v10250 = vrot.slane %v9406, %v10249
        %v10251 = vlaneseq
        %v10252 = vshrl.u32 %v10251, 7
        %v10253 = vsub.s32 0, %v10252
        %v10254 = vrot.slane %v9413, %v10253
        %v10255 = vlaneseq
        %v10256 = vshrl.u32 %v10255, 7
        %v10257 = vsub.s32 0, %v10256
        %v10258 = vrot.slane %v9421, %v10257
        %v10259 = vlaneseq
        %v10260 = vshrl.u32 %v10259, 7
        %v10261 = vsub.s32 0, %v10260
        %v10262 = vrot.slane %v9420, %v10261
        %v10263 = vlaneseq
        %v10264 = vshrl.u32 %v10263, 7
        %v10265 = vsub.s32 0, %v10264
        %v10266 = vrot.slane %v9422, %v10265
        %v10267 = vlaneseq
        %v10268 = vshrl.u32 %v10267, 7
        %v10269 = vsub.s32 0, %v10268
        %v10270 = vrot.slane %v9429, %v10269
        %v10271 = vlaneseq
        %v10272 = vshrl.u32 %v10271, 7
        %v10273 = vsub.s32 0, %v10272
        %v10274 = vrot.slane %v9437, %v10273
        %v10275 = vlaneseq
        %v10276 = vshrl.u32 %v10275, 7
        %v10277 = vsub.s32 0, %v10276
        %v10278 = vrot.slane %v9436, %v10277
        %v10279 = vlaneseq
        %v10280 = vshrl.u32 %v10279, 7
        %v10281 = vsub.s32 0, %v10280
        %v10282 = vrot.slane %v9438, %v10281
        %v10283 = vlaneseq
        %v10284 = vshrl.u32 %v10283, 7
        %v10285 = vsub.s32 0, %v10284
        %v10286 = vrot.slane %v9445, %v10285
        %v10287 = vlaneseq
        %v10288 = vshrl.u32 %v10287, 7
        %v10289 = vsub.s32 0, %v10288
        %v10290 = vrot.slane %v9453, %v10289
        %v10291 = vlaneseq
        %v10292 = vshrl.u32 %v10291, 7
        %v10293 = vsub.s32 0, %v10292
        %v10294 = vrot.slane %v9452, %v10293
        %v10295 = vlaneseq
        %v10296 = vshrl.u32 %v10295, 7
        %v10297 = vsub.s32 0, %v10296
        %v10298 = vrot.slane %v9454, %v10297
        %v10299 = vlaneseq
        %v10300 = vshrl.u32 %v10299, 7
        %v10301 = vsub.s32 0, %v10300
        %v10302 = vrot.slane %v9461, %v10301
        %v10303 = vlaneseq
        %v10304 = vshrl.u32 %v10303, 7
        %v10305 = vsub.s32 0, %v10304
        %v10306 = vrot.slane %v9469, %v10305
        %v10307 = vlaneseq
        %v10308 = vshrl.u32 %v10307, 7
        %v10309 = vsub.s32 0, %v10308
        %v10310 = vrot.slane %v9468, %v10309
        %v10311 = vlaneseq
        %v10312 = vshrl.u32 %v10311, 7
        %v10313 = vsub.s32 0, %v10312
        %v10314 = vrot.slane %v9470, %v10313
        %v10315 = vlaneseq
        %v10316 = vshrl.u32 %v10315, 7
        %v10317 = vsub.s32 0, %v10316
        %v10318 = vrot.slane %v9477, %v10317
        %v10319 = vlaneseq
        %v10320 = vshrl.u32 %v10319, 7
        %v10321 = vsub.s32 0, %v10320
        %v10322 = vrot.slane %v9485, %v10321
        %v10323 = vlaneseq
        %v10324 = vshrl.u32 %v10323, 7
        %v10325 = vsub.s32 0, %v10324
        %v10326 = vrot.slane %v9484, %v10325
        %v10327 = vlaneseq
        %v10328 = vshrl.u32 %v10327, 7
        %v10329 = vsub.s32 0, %v10328
        %v10330 = vrot.slane %v9486, %v10329
        %v10331 = vlaneseq
        %v10332 = vshrl.u32 %v10331, 7
        %v10333 = vsub.s32 0, %v10332
        %v10334 = vrot.slane %v9493, %v10333
        %v10335 = vlaneseq
        %v10336 = vshrl.u32 %v10335, 7
        %v10337 = vsub.s32 0, %v10336
        %v10338 = vrot.slane %v9501, %v10337
        %v10339 = vlaneseq
        %v10340 = vshrl.u32 %v10339, 7
        %v10341 = vsub.s32 0, %v10340
        %v10342 = vrot.slane %v9500, %v10341
        %v10343 = vlaneseq
        %v10344 = vshrl.u32 %v10343, 7
        %v10345 = vsub.s32 0, %v10344
        %v10346 = vrot.slane %v9502, %v10345
        %v10347 = vlaneseq
        %v10348 = vshrl.u32 %v10347, 7
        %v10349 = vsub.s32 0, %v10348
        %v10350 = vrot.slane %v9509, %v10349
        %v10351 = vlaneseq
        %v10352 = vshrl.u32 %v10351, 7
        %v10353 = vsub.s32 0, %v10352
        %v10354 = vrot.slane %v9517, %v10353
        %v10355 = vlaneseq
        %v10356 = vshrl.u32 %v10355, 7
        %v10357 = vsub.s32 0, %v10356
        %v10358 = vrot.slane %v9516, %v10357
        %v10359 = vlaneseq
        %v10360 = vshrl.u32 %v10359, 7
        %v10361 = vsub.s32 0, %v10360
        %v10362 = vrot.slane %v9518, %v10361
        %v10363 = vlaneseq
        %v10364 = vshrl.u32 %v10363, 7
        %v10365 = vsub.s32 0, %v10364
        %v10366 = vrot.slane %v9525, %v10365
        %v10367 = vlaneseq
        %v10368 = vshrl.u32 %v10367, 7
        %v10369 = vsub.s32 0, %v10368
        %v10370 = vrot.slane %v9533, %v10369
        %v10371 = vlaneseq
        %v10372 = vshrl.u32 %v10371, 7
        %v10373 = vsub.s32 0, %v10372
        %v10374 = vrot.slane %v9532, %v10373
        %v10375 = vlaneseq
        %v10376 = vshrl.u32 %v10375, 7
        %v10377 = vsub.s32 0, %v10376
        %v10378 = vrot.slane %v9534, %v10377
        %v10379 = vlaneseq
        %v10380 = vshrl.u32 %v10379, 7
        %v10381 = vsub.s32 0, %v10380
        %v10382 = vrot.slane %v9541, %v10381
        %v10383 = vlaneseq
        %v10384 = vshrl.u32 %v10383, 7
        %v10385 = vsub.s32 0, %v10384
        %v10386 = vrot.slane %v9549, %v10385
        %v10387 = vlaneseq
        %v10388 = vshrl.u32 %v10387, 7
        %v10389 = vsub.s32 0, %v10388
        %v10390 = vrot.slane %v9548, %v10389
        %v10391 = vlaneseq
        %v10392 = vshrl.u32 %v10391, 7
        %v10393 = vsub.s32 0, %v10392
        %v10394 = vrot.slane %v9550, %v10393
        %v10395 = vsel %vm8690, %v10146, %v10142
        %v10396 = vsel %vm8692, %v10150, %v10395
        %v10397 = vsel %vm8694, %v10154, %v10396
        %v10398 = vsel %vm10098, %v10158, %v10397
        %v10399 = vsel %vm10100, %v10162, %v10398
        %v10400 = vsel %vm10102, %v10166, %v10399
        %v10401 = vsel %vm10104, %v10170, %v10400
        %v10402 = vsel %vm8690, %v10178, %v10174
        %v10403 = vsel %vm8692, %v10182, %v10402
        %v10404 = vsel %vm8694, %v10186, %v10403
        %v10405 = vsel %vm10098, %v10190, %v10404
        %v10406 = vsel %vm10100, %v10194, %v10405
        %v10407 = vsel %vm10102, %v10198, %v10406
        %v10408 = vsel %vm10104, %v10202, %v10407
        %v10409 = vsel %vm8690, %v10210, %v10206
        %v10410 = vsel %vm8692, %v10214, %v10409
        %v10411 = vsel %vm8694, %v10218, %v10410
        %v10412 = vsel %vm10098, %v10222, %v10411
        %v10413 = vsel %vm10100, %v10226, %v10412
        %v10414 = vsel %vm10102, %v10230, %v10413
        %v10415 = vsel %vm10104, %v10234, %v10414
        %v10416 = vsel %vm8690, %v10242, %v10238
        %v10417 = vsel %vm8692, %v10246, %v10416
        %v10418 = vsel %vm8694, %v10250, %v10417
        %v10419 = vsel %vm10098, %v10254, %v10418
        %v10420 = vsel %vm10100, %v10258, %v10419
        %v10421 = vsel %vm10102, %v10262, %v10420
        %v10422 = vsel %vm10104, %v10266, %v10421
        %v10423 = vsel %vm8690, %v10274, %v10270
        %v10424 = vsel %vm8692, %v10278, %v10423
        %v10425 = vsel %vm8694, %v10282, %v10424
        %v10426 = vsel %vm10098, %v10286, %v10425
        %v10427 = vsel %vm10100, %v10290, %v10426
        %v10428 = vsel %vm10102, %v10294, %v10427
        %v10429 = vsel %vm10104, %v10298, %v10428
        %v10430 = vsel %vm8690, %v10306, %v10302
        %v10431 = vsel %vm8692, %v10310, %v10430
        %v10432 = vsel %vm8694, %v10314, %v10431
        %v10433 = vsel %vm10098, %v10318, %v10432
        %v10434 = vsel %vm10100, %v10322, %v10433
        %v10435 = vsel %vm10102, %v10326, %v10434
        %v10436 = vsel %vm10104, %v10330, %v10435
        %v10437 = vsel %vm8690, %v10338, %v10334
        %v10438 = vsel %vm8692, %v10342, %v10437
        %v10439 = vsel %vm8694, %v10346, %v10438
        %v10440 = vsel %vm10098, %v10350, %v10439
        %v10441 = vsel %vm10100, %v10354, %v10440
        %v10442 = vsel %vm10102, %v10358, %v10441
        %v10443 = vsel %vm10104, %v10362, %v10442
        %v10444 = vsel %vm8690, %v10370, %v10366
        %v10445 = vsel %vm8692, %v10374, %v10444
        %v10446 = vsel %vm8694, %v10378, %v10445
        %v10447 = vsel %vm10098, %v10382, %v10446
        %v10448 = vsel %vm10100, %v10386, %v10447
        %v10449 = vsel %vm10102, %v10390, %v10448
        %v10450 = vsel %vm10104, %v10394, %v10449
        %v10459 = vlaneseq
        %v10460 = vshrl.u32 %v10459, 7
        %v10461 = vsub.s32 1, %v10460
        %v10462 = vrot.slane %v9301, %v10461
        %v10463 = vlaneseq
        %v10464 = vshrl.u32 %v10463, 7
        %v10465 = vsub.s32 1, %v10464
        %v10466 = vrot.slane %v9309, %v10465
        %v10467 = vlaneseq
        %v10468 = vshrl.u32 %v10467, 7
        %v10469 = vsub.s32 1, %v10468
        %v10470 = vrot.slane %v9308, %v10469
        %v10471 = vlaneseq
        %v10472 = vshrl.u32 %v10471, 7
        %v10473 = vsub.s32 1, %v10472
        %v10474 = vrot.slane %v9310, %v10473
        %v10475 = vlaneseq
        %v10476 = vshrl.u32 %v10475, 7
        %v10477 = vsub.s32 1, %v10476
        %v10478 = vrot.slane %v9317, %v10477
        %v10479 = vlaneseq
        %v10480 = vshrl.u32 %v10479, 7
        %v10481 = vsub.s32 1, %v10480
        %v10482 = vrot.slane %v9325, %v10481
        %v10483 = vlaneseq
        %v10484 = vshrl.u32 %v10483, 7
        %v10485 = vsub.s32 1, %v10484
        %v10486 = vrot.slane %v9324, %v10485
        %v10487 = vlaneseq
        %v10488 = vshrl.u32 %v10487, 7
        %v10489 = vsub.s32 1, %v10488
        %v10490 = vrot.slane %v9326, %v10489
        %v10491 = vlaneseq
        %v10492 = vshrl.u32 %v10491, 7
        %v10493 = vsub.s32 1, %v10492
        %v10494 = vrot.slane %v9333, %v10493
        %v10495 = vlaneseq
        %v10496 = vshrl.u32 %v10495, 7
        %v10497 = vsub.s32 1, %v10496
        %v10498 = vrot.slane %v9341, %v10497
        %v10499 = vlaneseq
        %v10500 = vshrl.u32 %v10499, 7
        %v10501 = vsub.s32 1, %v10500
        %v10502 = vrot.slane %v9340, %v10501
        %v10503 = vlaneseq
        %v10504 = vshrl.u32 %v10503, 7
        %v10505 = vsub.s32 1, %v10504
        %v10506 = vrot.slane %v9342, %v10505
        %v10507 = vlaneseq
        %v10508 = vshrl.u32 %v10507, 7
        %v10509 = vsub.s32 1, %v10508
        %v10510 = vrot.slane %v9349, %v10509
        %v10511 = vlaneseq
        %v10512 = vshrl.u32 %v10511, 7
        %v10513 = vsub.s32 1, %v10512
        %v10514 = vrot.slane %v9357, %v10513
        %v10515 = vlaneseq
        %v10516 = vshrl.u32 %v10515, 7
        %v10517 = vsub.s32 1, %v10516
        %v10518 = vrot.slane %v9356, %v10517
        %v10519 = vlaneseq
        %v10520 = vshrl.u32 %v10519, 7
        %v10521 = vsub.s32 1, %v10520
        %v10522 = vrot.slane %v9358, %v10521
        %v10523 = vlaneseq
        %v10524 = vshrl.u32 %v10523, 7
        %v10525 = vsub.s32 1, %v10524
        %v10526 = vrot.slane %v9365, %v10525
        %v10527 = vlaneseq
        %v10528 = vshrl.u32 %v10527, 7
        %v10529 = vsub.s32 1, %v10528
        %v10530 = vrot.slane %v9373, %v10529
        %v10531 = vlaneseq
        %v10532 = vshrl.u32 %v10531, 7
        %v10533 = vsub.s32 1, %v10532
        %v10534 = vrot.slane %v9372, %v10533
        %v10535 = vlaneseq
        %v10536 = vshrl.u32 %v10535, 7
        %v10537 = vsub.s32 1, %v10536
        %v10538 = vrot.slane %v9374, %v10537
        %v10539 = vlaneseq
        %v10540 = vshrl.u32 %v10539, 7
        %v10541 = vsub.s32 1, %v10540
        %v10542 = vrot.slane %v9381, %v10541
        %v10543 = vlaneseq
        %v10544 = vshrl.u32 %v10543, 7
        %v10545 = vsub.s32 1, %v10544
        %v10546 = vrot.slane %v9389, %v10545
        %v10547 = vlaneseq
        %v10548 = vshrl.u32 %v10547, 7
        %v10549 = vsub.s32 1, %v10548
        %v10550 = vrot.slane %v9388, %v10549
        %v10551 = vlaneseq
        %v10552 = vshrl.u32 %v10551, 7
        %v10553 = vsub.s32 1, %v10552
        %v10554 = vrot.slane %v9390, %v10553
        %v10555 = vlaneseq
        %v10556 = vshrl.u32 %v10555, 7
        %v10557 = vsub.s32 1, %v10556
        %v10558 = vrot.slane %v9397, %v10557
        %v10559 = vlaneseq
        %v10560 = vshrl.u32 %v10559, 7
        %v10561 = vsub.s32 1, %v10560
        %v10562 = vrot.slane %v9405, %v10561
        %v10563 = vlaneseq
        %v10564 = vshrl.u32 %v10563, 7
        %v10565 = vsub.s32 1, %v10564
        %v10566 = vrot.slane %v9404, %v10565
        %v10567 = vlaneseq
        %v10568 = vshrl.u32 %v10567, 7
        %v10569 = vsub.s32 1, %v10568
        %v10570 = vrot.slane %v9406, %v10569
        %v10571 = vlaneseq
        %v10572 = vshrl.u32 %v10571, 7
        %v10573 = vsub.s32 1, %v10572
        %v10574 = vrot.slane %v9413, %v10573
        %v10575 = vlaneseq
        %v10576 = vshrl.u32 %v10575, 7
        %v10577 = vsub.s32 1, %v10576
        %v10578 = vrot.slane %v9421, %v10577
        %v10579 = vlaneseq
        %v10580 = vshrl.u32 %v10579, 7
        %v10581 = vsub.s32 1, %v10580
        %v10582 = vrot.slane %v9420, %v10581
        %v10583 = vlaneseq
        %v10584 = vshrl.u32 %v10583, 7
        %v10585 = vsub.s32 1, %v10584
        %v10586 = vrot.slane %v9422, %v10585
        %v10587 = vlaneseq
        %v10588 = vshrl.u32 %v10587, 7
        %v10589 = vsub.s32 1, %v10588
        %v10590 = vrot.slane %v9429, %v10589
        %v10591 = vlaneseq
        %v10592 = vshrl.u32 %v10591, 7
        %v10593 = vsub.s32 1, %v10592
        %v10594 = vrot.slane %v9437, %v10593
        %v10595 = vlaneseq
        %v10596 = vshrl.u32 %v10595, 7
        %v10597 = vsub.s32 1, %v10596
        %v10598 = vrot.slane %v9436, %v10597
        %v10599 = vlaneseq
        %v10600 = vshrl.u32 %v10599, 7
        %v10601 = vsub.s32 1, %v10600
        %v10602 = vrot.slane %v9438, %v10601
        %v10603 = vlaneseq
        %v10604 = vshrl.u32 %v10603, 7
        %v10605 = vsub.s32 1, %v10604
        %v10606 = vrot.slane %v9445, %v10605
        %v10607 = vlaneseq
        %v10608 = vshrl.u32 %v10607, 7
        %v10609 = vsub.s32 1, %v10608
        %v10610 = vrot.slane %v9453, %v10609
        %v10611 = vlaneseq
        %v10612 = vshrl.u32 %v10611, 7
        %v10613 = vsub.s32 1, %v10612
        %v10614 = vrot.slane %v9452, %v10613
        %v10615 = vlaneseq
        %v10616 = vshrl.u32 %v10615, 7
        %v10617 = vsub.s32 1, %v10616
        %v10618 = vrot.slane %v9454, %v10617
        %v10619 = vlaneseq
        %v10620 = vshrl.u32 %v10619, 7
        %v10621 = vsub.s32 1, %v10620
        %v10622 = vrot.slane %v9461, %v10621
        %v10623 = vlaneseq
        %v10624 = vshrl.u32 %v10623, 7
        %v10625 = vsub.s32 1, %v10624
        %v10626 = vrot.slane %v9469, %v10625
        %v10627 = vlaneseq
        %v10628 = vshrl.u32 %v10627, 7
        %v10629 = vsub.s32 1, %v10628
        %v10630 = vrot.slane %v9468, %v10629
        %v10631 = vlaneseq
        %v10632 = vshrl.u32 %v10631, 7
        %v10633 = vsub.s32 1, %v10632
        %v10634 = vrot.slane %v9470, %v10633
        %v10635 = vlaneseq
        %v10636 = vshrl.u32 %v10635, 7
        %v10637 = vsub.s32 1, %v10636
        %v10638 = vrot.slane %v9477, %v10637
        %v10639 = vlaneseq
        %v10640 = vshrl.u32 %v10639, 7
        %v10641 = vsub.s32 1, %v10640
        %v10642 = vrot.slane %v9485, %v10641
        %v10643 = vlaneseq
        %v10644 = vshrl.u32 %v10643, 7
        %v10645 = vsub.s32 1, %v10644
        %v10646 = vrot.slane %v9484, %v10645
        %v10647 = vlaneseq
        %v10648 = vshrl.u32 %v10647, 7
        %v10649 = vsub.s32 1, %v10648
        %v10650 = vrot.slane %v9486, %v10649
        %v10651 = vlaneseq
        %v10652 = vshrl.u32 %v10651, 7
        %v10653 = vsub.s32 1, %v10652
        %v10654 = vrot.slane %v9493, %v10653
        %v10655 = vlaneseq
        %v10656 = vshrl.u32 %v10655, 7
        %v10657 = vsub.s32 1, %v10656
        %v10658 = vrot.slane %v9501, %v10657
        %v10659 = vlaneseq
        %v10660 = vshrl.u32 %v10659, 7
        %v10661 = vsub.s32 1, %v10660
        %v10662 = vrot.slane %v9500, %v10661
        %v10663 = vlaneseq
        %v10664 = vshrl.u32 %v10663, 7
        %v10665 = vsub.s32 1, %v10664
        %v10666 = vrot.slane %v9502, %v10665
        %v10667 = vlaneseq
        %v10668 = vshrl.u32 %v10667, 7
        %v10669 = vsub.s32 1, %v10668
        %v10670 = vrot.slane %v9509, %v10669
        %v10671 = vlaneseq
        %v10672 = vshrl.u32 %v10671, 7
        %v10673 = vsub.s32 1, %v10672
        %v10674 = vrot.slane %v9517, %v10673
        %v10675 = vlaneseq
        %v10676 = vshrl.u32 %v10675, 7
        %v10677 = vsub.s32 1, %v10676
        %v10678 = vrot.slane %v9516, %v10677
        %v10679 = vlaneseq
        %v10680 = vshrl.u32 %v10679, 7
        %v10681 = vsub.s32 1, %v10680
        %v10682 = vrot.slane %v9518, %v10681
        %v10683 = vlaneseq
        %v10684 = vshrl.u32 %v10683, 7
        %v10685 = vsub.s32 1, %v10684
        %v10686 = vrot.slane %v9525, %v10685
        %v10687 = vlaneseq
        %v10688 = vshrl.u32 %v10687, 7
        %v10689 = vsub.s32 1, %v10688
        %v10690 = vrot.slane %v9533, %v10689
        %v10691 = vlaneseq
        %v10692 = vshrl.u32 %v10691, 7
        %v10693 = vsub.s32 1, %v10692
        %v10694 = vrot.slane %v9532, %v10693
        %v10695 = vlaneseq
        %v10696 = vshrl.u32 %v10695, 7
        %v10697 = vsub.s32 1, %v10696
        %v10698 = vrot.slane %v9534, %v10697
        %v10699 = vlaneseq
        %v10700 = vshrl.u32 %v10699, 7
        %v10701 = vsub.s32 1, %v10700
        %v10702 = vrot.slane %v9541, %v10701
        %v10703 = vlaneseq
        %v10704 = vshrl.u32 %v10703, 7
        %v10705 = vsub.s32 1, %v10704
        %v10706 = vrot.slane %v9549, %v10705
        %v10707 = vlaneseq
        %v10708 = vshrl.u32 %v10707, 7
        %v10709 = vsub.s32 1, %v10708
        %v10710 = vrot.slane %v9548, %v10709
        %v10711 = vlaneseq
        %v10712 = vshrl.u32 %v10711, 7
        %v10713 = vsub.s32 1, %v10712
        %v10714 = vrot.slane %v9550, %v10713
        %v10715 = vsel %vm8690, %v10466, %v10462
        %v10716 = vsel %vm8692, %v10470, %v10715
        %v10717 = vsel %vm8694, %v10474, %v10716
        %v10718 = vsel %vm10098, %v10478, %v10717
        %v10719 = vsel %vm10100, %v10482, %v10718
        %v10720 = vsel %vm10102, %v10486, %v10719
        %v10721 = vsel %vm10104, %v10490, %v10720
        %v10722 = vsel %vm8690, %v10498, %v10494
        %v10723 = vsel %vm8692, %v10502, %v10722
        %v10724 = vsel %vm8694, %v10506, %v10723
        %v10725 = vsel %vm10098, %v10510, %v10724
        %v10726 = vsel %vm10100, %v10514, %v10725
        %v10727 = vsel %vm10102, %v10518, %v10726
        %v10728 = vsel %vm10104, %v10522, %v10727
        %v10729 = vsel %vm8690, %v10530, %v10526
        %v10730 = vsel %vm8692, %v10534, %v10729
        %v10731 = vsel %vm8694, %v10538, %v10730
        %v10732 = vsel %vm10098, %v10542, %v10731
        %v10733 = vsel %vm10100, %v10546, %v10732
        %v10734 = vsel %vm10102, %v10550, %v10733
        %v10735 = vsel %vm10104, %v10554, %v10734
        %v10736 = vsel %vm8690, %v10562, %v10558
        %v10737 = vsel %vm8692, %v10566, %v10736
        %v10738 = vsel %vm8694, %v10570, %v10737
        %v10739 = vsel %vm10098, %v10574, %v10738
        %v10740 = vsel %vm10100, %v10578, %v10739
        %v10741 = vsel %vm10102, %v10582, %v10740
        %v10742 = vsel %vm10104, %v10586, %v10741
        %v10743 = vsel %vm8690, %v10594, %v10590
        %v10744 = vsel %vm8692, %v10598, %v10743
        %v10745 = vsel %vm8694, %v10602, %v10744
        %v10746 = vsel %vm10098, %v10606, %v10745
        %v10747 = vsel %vm10100, %v10610, %v10746
        %v10748 = vsel %vm10102, %v10614, %v10747
        %v10749 = vsel %vm10104, %v10618, %v10748
        %v10750 = vsel %vm8690, %v10626, %v10622
        %v10751 = vsel %vm8692, %v10630, %v10750
        %v10752 = vsel %vm8694, %v10634, %v10751
        %v10753 = vsel %vm10098, %v10638, %v10752
        %v10754 = vsel %vm10100, %v10642, %v10753
        %v10755 = vsel %vm10102, %v10646, %v10754
        %v10756 = vsel %vm10104, %v10650, %v10755
        %v10757 = vsel %vm8690, %v10658, %v10654
        %v10758 = vsel %vm8692, %v10662, %v10757
        %v10759 = vsel %vm8694, %v10666, %v10758
        %v10760 = vsel %vm10098, %v10670, %v10759
        %v10761 = vsel %vm10100, %v10674, %v10760
        %v10762 = vsel %vm10102, %v10678, %v10761
        %v10763 = vsel %vm10104, %v10682, %v10762
        %v10764 = vsel %vm8690, %v10690, %v10686
        %v10765 = vsel %vm8692, %v10694, %v10764
        %v10766 = vsel %vm8694, %v10698, %v10765
        %v10767 = vsel %vm10098, %v10702, %v10766
        %v10768 = vsel %vm10100, %v10706, %v10767
        %v10769 = vsel %vm10102, %v10710, %v10768
        %v10770 = vsel %vm10104, %v10714, %v10769
        %10771 = vrot.lane.b32.xlu0 %v10721, 64
        %v10772 = vpop.permute.xlu0 %10771
        %10773 = vrot.lane.b32.xlu0 %v10728, 64
        %v10774 = vpop.permute.xlu0 %10773
        %10775 = vrot.lane.b32.xlu0 %v10735, 64
        %v10776 = vpop.permute.xlu0 %10775
        %10777 = vrot.lane.b32.xlu0 %v10742, 64
        %v10778 = vpop.permute.xlu0 %10777
        %10779 = vrot.lane.b32.xlu0 %v10749, 64
        %v10780 = vpop.permute.xlu0 %10779
        %10781 = vrot.lane.b32.xlu0 %v10756, 64
        %v10782 = vpop.permute.xlu0 %10781
        %10783 = vrot.lane.b32.xlu0 %v10763, 64
        %v10784 = vpop.permute.xlu0 %10783
        %10785 = vrot.lane.b32.xlu0 %v10770, 64
        %v10786 = vpop.permute.xlu0 %10785
        %v10795 = vsel %vm9261, %v10401, %v10772
        %v10796 = vsel %vm9261, %v10408, %v10774
        %v10797 = vsel %vm9261, %v10415, %v10776
        %v10798 = vsel %vm9261, %v10422, %v10778
        %v10799 = vsel %vm9261, %v10429, %v10780
        %v10800 = vsel %vm9261, %v10436, %v10782
        %v10801 = vsel %vm9261, %v10443, %v10784
        %v10802 = vsel %vm9261, %v10450, %v10786
        %v10803 = vadd.f32 %v555, %v10795
        %v10804 = vadd.f32 %v556, %v10795
        %v10805 = vadd.f32 %v557, %v10796
        %v10806 = vadd.f32 %v558, %v10796
        %v10807 = vadd.f32 %v559, %v10797
        %v10808 = vadd.f32 %v560, %v10797
        %v10809 = vadd.f32 %v561, %v10798
        %v10810 = vadd.f32 %v562, %v10798
        %v10811 = vadd.f32 %v563, %v10799
        %v10812 = vadd.f32 %v564, %v10799
        %v10813 = vadd.f32 %v565, %v10800
        %v10814 = vadd.f32 %v566, %v10800
        %v10815 = vadd.f32 %v567, %v10801
        %v10816 = vadd.f32 %v568, %v10801
        %v10817 = vadd.f32 %v569, %v10802
        %v10818 = vadd.f32 %v570, %v10802
        %10819 = vst [vmem:[%s529] sm:$0xff] %v10803
        %10820 = vst [vmem:[%s529 + $0x8] sm:$0xff] %v10804
        %10821 = vst [vmem:[%s529 + $0x10] sm:$0xff] %v10805
        %10822 = vst [vmem:[%s529 + $0x18] sm:$0xff] %v10806
        %10823 = vst [vmem:[%s529 + $0x20] sm:$0xff] %v10807
        %10824 = vst [vmem:[%s529 + $0x28] sm:$0xff] %v10808
        %10825 = vst [vmem:[%s529 + $0x30] sm:$0xff] %v10809
        %10826 = vst [vmem:[%s529 + $0x38] sm:$0xff] %v10810
        %10827 = vst [vmem:[%s529 + $0x40] sm:$0xff] %v10811
        %10828 = vst [vmem:[%s529 + $0x48] sm:$0xff] %v10812
        %10829 = vst [vmem:[%s529 + $0x50] sm:$0xff] %v10813
        %10830 = vst [vmem:[%s529 + $0x58] sm:$0xff] %v10814
        %10831 = vst [vmem:[%s529 + $0x60] sm:$0xff] %v10815
        %10832 = vst [vmem:[%s529 + $0x68] sm:$0xff] %v10816
        %10833 = vst [vmem:[%s529 + $0x70] sm:$0xff] %v10817
        %10834 = vst [vmem:[%s529 + $0x78] sm:$0xff] %v10818
        %s10835 = smul.u32 16, %s30
        %p10836 = scmp.lt.s32.totalorder %s29, 1
        %s10837 = scalar_select %p10836, %s29, 1
        %p10838 = scmp.lt.s32.totalorder %s10835, 31
        %s10839 = scalar_select %p10838, %s10835, 31
        %s10840 = smul.addr %s10837, 32
        %s10841 = sadd.s32 %s10839, %s10840
        %s10842 = smul.addr %s10841, 8
        %s10843 = scalar_lea.vmem %s8, %s10842
        %s10844 = smul.u32 8, %s30
        %p10845 = scmp.lt.s32.totalorder %s29, 1
        %s10846 = scalar_select %p10845, %s29, 1
        %p10847 = scmp.lt.s32.totalorder %s10844, 15
        %s10848 = scalar_select %p10847, %s10844, 15
        %s10849 = smul.addr %s10846, 16
        %s10850 = sadd.s32 %s10848, %s10849
        %s10851 = smul.addr %s10850, 4
        %s10852 = scalar_lea.vmem %s9, %s10851
        %s10853 = sand.u32 %s301, 1
        %s10854 = scalar_lea.sflag [#allocation3], %s10853
        %s10855 = sand.u32 %s301, 1
        %s10856 = smul.addr %s10855, 32
        %s10857 = scalar_lea.vmem [#allocation2], %s10856
        // Predicated region
        $region53: #{iam_forward.1} parent=51 // pred_check
          %p10858 = pneg %p255
        $region54: #{iam_forward.1} parent=51 // pred_check_branch
          %10860 = sbr.rel (%p10858) target = $region56
        $region55: #{iam_forward.1} parent=51 // pred_region
          %s10861 = smul.u32 16, %s30
        $region56: #{iam_forward.1} parent=51 // pred_fallthru
          _
        // Predicated region
        $region57: #{iam_forward.1} parent=51 // pred_check
          %p10862 = pneg %p283
        $region58: #{iam_forward.1} parent=51 // pred_check_branch
          %10864 = sbr.rel (%p10862) target = $region60
        $region59: #{iam_forward.1} parent=51 // pred_region
          %s10865 = smul.u32 8, %s30
        $region60: #{iam_forward.1} parent=51 // pred_fallthru
          _
        // Predicated region
        $region61: #{iam_forward.1} parent=51 // pred_check
          %p10866 = pneg %p311
        $region62: #{iam_forward.1} parent=51 // pred_check_branch
          %10868 = sbr.rel (%p10866) target = $region64
        $region63: #{iam_forward.1} parent=51 // pred_region
          %s10869 = smul.u32 4, %s30
          %s10871 = ssub.s32 512, 512
          %10872 = vsyncadd %s10854, %s10871
          %s10873 = smul.addr %s29, 8
          %s10874 = sadd.s32 %s10869, %s10873
          %s10875 = smul.addr %s10874, 128
          %s10876 = scalar_lea.hbm %s10, %s10875
          %s10877 = sshll.u32 %s10857, 4
          %s10878 = int_to_ptr.vmem [resolvable:$true] %s10877
          %10883 = dma.vmem_to_hbm [thread:$0]  %s10878, 512, %s10876, %s10854, 128, 128, 8
        $region64: #{iam_forward.1} parent=51 // pred_fallthru
          _
      $region52: #{iam_forward.1} parent=5 // pred_fallthru
        _
      %p10884 = scmp.le.s32.totalorder 2, %s20
      // Predicated region
      $region65: #{iam_forward.1} parent=5 // pred_check
        %p10885 = pneg %p10884
      $region66: #{iam_forward.1} parent=5 // pred_check_branch
        %10887 = sbr.rel (%p10885) target = $region68
      $region67: #{iam_forward.1} parent=5 // pred_region
        %s10888 = ssub.s32 %s20, 2
        // Predicated region
        $region69: #{iam_forward.1} parent=67 // pred_check
          %p10889 = pneg %p261
        $region70: #{iam_forward.1} parent=67 // pred_check_branch
          %10891 = sbr.rel (%p10889) target = $region72
        $region71: #{iam_forward.1} parent=67 // pred_region
          %s10892 = smul.u32 16, %s32
          %p10893 = scmp.lt.s32.totalorder %s31, 1
          %s10894 = scalar_select %p10893, %s31, 1
          %p10895 = scmp.lt.s32.totalorder %s10892, 31
          %s10896 = scalar_select %p10895, %s10892, 31
          %s10897 = smul.addr %s10894, 32
          %s10898 = sadd.s32 %s10896, %s10897
          %s10899 = smul.addr %s10898, 8
          %s10900 = scalar_lea.vmem %s8, %s10899
        $region72: #{iam_forward.1} parent=67 // pred_fallthru
          _
        // Predicated region
        $region73: #{iam_forward.1} parent=67 // pred_check
          %p10901 = pneg %p289
        $region74: #{iam_forward.1} parent=67 // pred_check_branch
          %10903 = sbr.rel (%p10901) target = $region76
        $region75: #{iam_forward.1} parent=67 // pred_region
          %s10904 = smul.u32 8, %s32
          %p10905 = scmp.lt.s32.totalorder %s31, 1
          %s10906 = scalar_select %p10905, %s31, 1
          %p10907 = scmp.lt.s32.totalorder %s10904, 15
          %s10908 = scalar_select %p10907, %s10904, 15
          %s10909 = smul.addr %s10906, 16
          %s10910 = sadd.s32 %s10908, %s10909
          %s10911 = smul.addr %s10910, 4
          %s10912 = scalar_lea.vmem %s9, %s10911
        $region76: #{iam_forward.1} parent=67 // pred_fallthru
          _
        // Predicated region
        $region77: #{iam_forward.1} parent=67 // pred_check
          %p10913 = pneg %p317
        $region78: #{iam_forward.1} parent=67 // pred_check_branch
          %10915 = sbr.rel (%p10913) target = $region80
        $region79: #{iam_forward.1} parent=67 // pred_region
          %s10916 = sand.u32 %s302, 1
          %s10917 = scalar_lea.sflag [#allocation3], %s10916
          %s10918 = sand.u32 %s302, 1
          %s10919 = smul.addr %s10918, 32
          %s10920 = scalar_lea.vmem [#allocation2], %s10919
          %10921 = dma.done %s10917, 512
        $region80: #{iam_forward.1} parent=67 // pred_fallthru
          _
      $region68: #{iam_forward.1} parent=5 // pred_fallthru
        _
    $region6: #{iam_forward.1} parent=1 // loop_footer
      %s24 = sadd.s32 1, %s20
    $region7: #{iam_forward.1} parent=1 // loop_footer_branch
      %19 = sbr.rel target = $region3
    $region8: #{iam_forward.1} parent=1 // loop_exit
      _
    %10922 = vsyncpa [#allocation3], 1
    %s10923 = scalar_lea.sflag [#allocation3], 1
    %10924 = vsyncpa %s10923, 1

</llo_original>
